<compile_context>
chip_gen: v7x
topology: tpu7x:2x2x1
jax: 0.10.0
libtpu: 0.0.40
codegen_flags: <defaults>
</compile_context>

<pallas_src>
import numpy as np

import jax
import jax.numpy as jnp
from jax.experimental import pallas as pl
from jax.experimental.pallas import tpu as pltpu

TEXT_DIM = 768
IMAGE_DIM = 1024
AUDIO_DIM = 512
COMMON_DIM = 256
UNIQUE_DIM = 256
CU_DIM = COMMON_DIM + UNIQUE_DIM            # 512
FUSION_HIDDEN = 1024
FUSED_DIM = TEXT_DIM + IMAGE_DIM            # 1792

BP = 8                                      # batch padded to one f32 sublane
WEIGHT_DTYPE = jnp.bfloat16                 # streamed weights
ACC_DTYPE = jnp.float32                     # MXU accumulation


# ----------------------------------------------------------------------------
# The single fused kernel
# ----------------------------------------------------------------------------
def _cufa_fused_kernel(
    # inputs: activations (VMEM, bf16, BP rows)
    xt_ref, xi_ref, xa_ref,
    # inputs: biases (VMEM, f32)
    b_tenc_ref, b_ienc_ref, b_aenc_ref,
    b_trec_ref, b_irec_ref, b_arec_ref,
    b_f0_ref, b_f1_ref,
    # inputs: weights left in HBM (memory_space=pl.ANY, bf16)
    w_tenc_hbm, w_ienc_hbm, w_aenc_hbm,
    w_trec_hbm, w_irec_hbm, w_arec_hbm,
    w_f0_hbm, w_f1_hbm,
    # outputs (VMEM, f32, BP rows)
    tc_ref, tu_ref, ic_ref, iu_ref, ac_ref, au_ref,
    tri_ref, tra_ref, irt_ref, ira_ref, art_ref, ari_ref,
    tfused_ref, ifused_ref,
    # scratch: VMEM weight buffers + DMA semaphores
    w_tenc, w_ienc, w_aenc, w_trec, w_irec, w_arec, w_f0, w_f1, dma_sems,
):
    hbm = (w_tenc_hbm, w_ienc_hbm, w_aenc_hbm, w_trec_hbm,
           w_irec_hbm, w_arec_hbm, w_f0_hbm, w_f1_hbm)
    vmem = (w_tenc, w_ienc, w_aenc, w_trec, w_irec, w_arec, w_f0, w_f1)

    # Kick off the full ~11.5 MiB weight stream at once (dependency order);
    # the waits below only gate the tiny compute.
    copies = [pltpu.make_async_copy(hbm[i], vmem[i], dma_sems.at[i])
              for i in range(8)]
    for c in copies:
        c.start()

    def dot(x, w):
        # bf16 x bf16 matmul with f32 accumulation on the MXU.
        return jnp.dot(x.astype(WEIGHT_DTYPE), w, preferred_element_type=ACC_DTYPE)

    # ---- encoders (common | unique fused along N) -------------------------
    copies[0].wait()
    text_cu = dot(xt_ref[...], w_tenc[...]) + b_tenc_ref[...]
    copies[1].wait()
    image_cu = dot(xi_ref[...], w_ienc[...]) + b_ienc_ref[...]
    copies[2].wait()
    audio_cu = dot(xa_ref[...], w_aenc[...]) + b_aenc_ref[...]

    text_c, text_u = text_cu[:, :COMMON_DIM], text_cu[:, COMMON_DIM:]
    image_c, image_u = image_cu[:, :COMMON_DIM], image_cu[:, COMMON_DIM:]
    audio_c, audio_u = audio_cu[:, :COMMON_DIM], audio_cu[:, COMMON_DIM:]

    tc_ref[...] = text_c
    tu_ref[...] = text_u
    ic_ref[...] = image_c
    iu_ref[...] = image_u
    ac_ref[...] = audio_c
    au_ref[...] = audio_u

    # ---- reconstructors ----------------------------------------------------
    # cat([common, unique], -1) @ W  ==  common @ W[:256] + unique @ W[256:]
    def recon(common, unique, w_ref, b_ref):
        return (dot(common, w_ref[:COMMON_DIM, :])
                + dot(unique, w_ref[COMMON_DIM:, :])
                + b_ref[...])

    copies[3].wait()   # text reconstructor, applied twice
    tri_ref[...] = recon(image_c, text_u, w_trec, b_trec_ref)
    tra_ref[...] = recon(audio_c, text_u, w_trec, b_trec_ref)
    copies[4].wait()   # image reconstructor, applied twice
    irt_ref[...] = recon(text_c, image_u, w_irec, b_irec_ref)
    ira_ref[...] = recon(audio_c, image_u, w_irec, b_irec_ref)
    copies[5].wait()   # audio reconstructor, applied twice
    art_ref[...] = recon(text_c, audio_u, w_arec, b_arec_ref)
    ari_ref[...] = recon(image_c, audio_u, w_arec, b_arec_ref)

    # ---- fusion MLP ---------------------------------------------------------
    # all_features = [text_cu | image_cu | audio_cu]  ->  split matmul.
    copies[6].wait()
    hidden = (dot(text_cu, w_f0[0:CU_DIM, :])
              + dot(image_cu, w_f0[CU_DIM:2 * CU_DIM, :])
              + dot(audio_cu, w_f0[2 * CU_DIM:, :])
              + b_f0_ref[...])
    hidden = jnp.maximum(hidden, 0.0)
    copies[7].wait()
    fused = dot(hidden, w_f1[...]) + b_f1_ref[...]
    tfused_ref[...] = fused[:, :TEXT_DIM]
    ifused_ref[...] = fused[:, TEXT_DIM:]


# ----------------------------------------------------------------------------
# Wrapper: one pallas_call for the entire forward
# ----------------------------------------------------------------------------
def cufusion_forward(params, text_feat, image_feat, audio_feat):
    B = text_feat.shape[0]
    assert B <= BP

    def pad_cast(x):
        return jnp.pad(x, ((0, BP - B), (0, 0))).astype(WEIGHT_DTYPE)

    xt = pad_cast(text_feat)
    xi = pad_cast(image_feat)
    xa = pad_cast(audio_feat)

    f32 = jnp.float32
    out_shapes = (
        jax.ShapeDtypeStruct((BP, COMMON_DIM), f32),   # text_common
        jax.ShapeDtypeStruct((BP, UNIQUE_DIM), f32),   # text_unique
        jax.ShapeDtypeStruct((BP, COMMON_DIM), f32),   # image_common
        jax.ShapeDtypeStruct((BP, UNIQUE_DIM), f32),   # image_unique
        jax.ShapeDtypeStruct((BP, COMMON_DIM), f32),   # audio_common
        jax.ShapeDtypeStruct((BP, UNIQUE_DIM), f32),   # audio_unique
        jax.ShapeDtypeStruct((BP, TEXT_DIM), f32),     # text_recon_from_image
        jax.ShapeDtypeStruct((BP, TEXT_DIM), f32),     # text_recon_from_audio
        jax.ShapeDtypeStruct((BP, IMAGE_DIM), f32),    # image_recon_from_text
        jax.ShapeDtypeStruct((BP, IMAGE_DIM), f32),    # image_recon_from_audio
        jax.ShapeDtypeStruct((BP, AUDIO_DIM), f32),    # audio_recon_from_text
        jax.ShapeDtypeStruct((BP, AUDIO_DIM), f32),    # audio_recon_from_image
        jax.ShapeDtypeStruct((BP, TEXT_DIM), f32),     # text_fused
        jax.ShapeDtypeStruct((BP, IMAGE_DIM), f32),    # image_fused
    )

    def vblock(shape):
        return pl.BlockSpec(shape, lambda i: (0, 0))

    any_spec = pl.BlockSpec(memory_space=pl.ANY)

    in_specs = [
        # activations
        vblock((BP, TEXT_DIM)), vblock((BP, IMAGE_DIM)), vblock((BP, AUDIO_DIM)),
        # biases
        vblock((1, CU_DIM)), vblock((1, CU_DIM)), vblock((1, CU_DIM)),
        vblock((1, TEXT_DIM)), vblock((1, IMAGE_DIM)), vblock((1, AUDIO_DIM)),
        vblock((1, FUSION_HIDDEN)), vblock((1, FUSED_DIM)),
        # weights stay in HBM, DMA'd manually inside the kernel
        any_spec, any_spec, any_spec, any_spec,
        any_spec, any_spec, any_spec, any_spec,
    ]
    out_specs = tuple(vblock(s.shape) for s in out_shapes)

    scratch_shapes = [
        pltpu.VMEM((TEXT_DIM, CU_DIM), WEIGHT_DTYPE),        # text enc
        pltpu.VMEM((IMAGE_DIM, CU_DIM), WEIGHT_DTYPE),       # image enc
        pltpu.VMEM((AUDIO_DIM, CU_DIM), WEIGHT_DTYPE),       # audio enc
        pltpu.VMEM((CU_DIM, TEXT_DIM), WEIGHT_DTYPE),        # text rec
        pltpu.VMEM((CU_DIM, IMAGE_DIM), WEIGHT_DTYPE),       # image rec
        pltpu.VMEM((CU_DIM, AUDIO_DIM), WEIGHT_DTYPE),       # audio rec
        pltpu.VMEM((3 * CU_DIM, FUSION_HIDDEN), WEIGHT_DTYPE),  # fusion_0
        pltpu.VMEM((FUSION_HIDDEN, FUSED_DIM), WEIGHT_DTYPE),   # fusion_1
        pltpu.SemaphoreType.DMA((8,)),
    ]

    # Cost hint: memory-heavy, compute-light.
    kn_per_row = (TEXT_DIM * CU_DIM + IMAGE_DIM * CU_DIM + AUDIO_DIM * CU_DIM
                  + 2 * CU_DIM * TEXT_DIM + 2 * CU_DIM * IMAGE_DIM
                  + 2 * CU_DIM * AUDIO_DIM
                  + 3 * CU_DIM * FUSION_HIDDEN + FUSION_HIDDEN * FUSED_DIM)
    weight_elems = ((TEXT_DIM + IMAGE_DIM + AUDIO_DIM) * CU_DIM
                    + CU_DIM * (TEXT_DIM + IMAGE_DIM + AUDIO_DIM)
                    + 3 * CU_DIM * FUSION_HIDDEN + FUSION_HIDDEN * FUSED_DIM)
    out_elems = sum(int(np.prod(s.shape)) for s in out_shapes)
    bytes_accessed = (2 * weight_elems                               # bf16 weights
                      + 2 * BP * (TEXT_DIM + IMAGE_DIM + AUDIO_DIM)  # bf16 acts
                      + 4 * out_elems)                               # f32 outs
    cost = pl.CostEstimate(flops=2 * BP * kn_per_row, transcendentals=0,
                           bytes_accessed=bytes_accessed)

    outs = pl.pallas_call(
        _cufa_fused_kernel,
        out_shape=out_shapes,
        grid_spec=pltpu.PrefetchScalarGridSpec(
            num_scalar_prefetch=0,
            grid=(1,),
            in_specs=in_specs,
            out_specs=out_specs,
            scratch_shapes=scratch_shapes,
        ),
        compiler_params=pltpu.CompilerParams(
            dimension_semantics=("arbitrary",),
            vmem_limit_bytes=32 * 1024 * 1024,
        ),
        cost_estimate=cost,
    )(
        xt, xi, xa,
        params["text_enc"]["b"], params["image_enc"]["b"], params["audio_enc"]["b"],
        params["text_rec"]["b"], params["image_rec"]["b"], params["audio_rec"]["b"],
        params["fusion_0"]["b"], params["fusion_1"]["b"],
        params["text_enc"]["w"], params["image_enc"]["w"], params["audio_enc"]["w"],
        params["text_rec"]["w"], params["image_rec"]["w"], params["audio_rec"]["w"],
        params["fusion_0"]["w"], params["fusion_1"]["w"],
    )

    (tc, tu, ic, iu, ac, au,
     tri, tra, irt, ira, art, ari, tfused, ifused) = outs

    s = lambda x: x[:B]
    features = {
        "text_common": s(tc), "text_unique": s(tu),
        "image_common": s(ic), "image_unique": s(iu),
        "audio_common": s(ac), "audio_unique": s(au),
    }
    reconstructions = {
        "text_recon_from_image": s(tri),
        "image_recon_from_text": s(irt),
        "text_recon_from_audio": s(tra),
        "audio_recon_from_text": s(art),
        "image_recon_from_audio": s(ira),
        "audio_recon_from_image": s(ari),
    }
    return {
        "text_fused": s(tfused),
        "image_fused": s(ifused),
        "reconstructions": reconstructions,
        "features": features,
    }


# ----------------------------------------------------------------------------
# Deterministic synthetic parameters (no checkpoint loading)
# ----------------------------------------------------------------------------
def _init_linear(key, in_dim, out_dim):
    kw, kb = jax.random.split(key)
    w = jax.random.normal(kw, (in_dim, out_dim), jnp.float32) * 0.02
    b = jax.random.normal(kb, (out_dim,), jnp.float32) * 0.01
    return {"w": w, "b": b.reshape(1, out_dim)}


def init_params(key):
    keys = jax.random.split(key, 11)
    raw = {
        "text_common_encoder": _init_linear(keys[0], TEXT_DIM, COMMON_DIM),
        "text_unique_encoder": _init_linear(keys[1], TEXT_DIM, UNIQUE_DIM),
        "text_reconstructor": _init_linear(keys[2], CU_DIM, TEXT_DIM),
        "image_common_encoder": _init_linear(keys[3], IMAGE_DIM, COMMON_DIM),
        "image_unique_encoder": _init_linear(keys[4], IMAGE_DIM, UNIQUE_DIM),
        "image_reconstructor": _init_linear(keys[5], CU_DIM, IMAGE_DIM),
        "audio_common_encoder": _init_linear(keys[6], AUDIO_DIM, COMMON_DIM),
        "audio_unique_encoder": _init_linear(keys[7], AUDIO_DIM, UNIQUE_DIM),
        "audio_reconstructor": _init_linear(keys[8], CU_DIM, AUDIO_DIM),
        "fusion_0": _init_linear(keys[9], 3 * CU_DIM, FUSION_HIDDEN),
        "fusion_1": _init_linear(keys[10], FUSION_HIDDEN, FUSED_DIM),
    }

    def fuse_n(*ls):
        return {"w": jnp.concatenate([l["w"] for l in ls], axis=1),
                "b": jnp.concatenate([l["b"] for l in ls], axis=1)}

    def cast(p):  # weights bf16 (streamed), biases stay f32
        return {"w": p["w"].astype(WEIGHT_DTYPE), "b": p["b"]}

    return {
        "text_enc": cast(fuse_n(raw["text_common_encoder"], raw["text_unique_encoder"])),
        "image_enc": cast(fuse_n(raw["image_common_encoder"], raw["image_unique_encoder"])),
        "audio_enc": cast(fuse_n(raw["audio_common_encoder"], raw["audio_unique_encoder"])),
        "text_rec": cast(raw["text_reconstructor"]),
        "image_rec": cast(raw["image_reconstructor"]),
        "audio_rec": cast(raw["audio_reconstructor"]),
        "fusion_0": cast(raw["fusion_0"]),
        "fusion_1": cast(raw["fusion_1"]),
    }


# ----------------------------------------------------------------------------
# Pure-JAX reference (same bf16 weights, f32 accumulation) for validation
# ----------------------------------------------------------------------------
def cufusion_reference(params, text_feat, image_feat, audio_feat):
    def lin(x, layer):
        return jnp.dot(x.astype(WEIGHT_DTYPE), layer["w"],
                       preferred_element_type=jnp.float32) + layer["b"]

    text_cu = lin(text_feat, params["text_enc"])
    image_cu = lin(image_feat, params["image_enc"])
    audio_cu = lin(audio_feat, params["audio_enc"])
    features = {
        "text_common": text_cu[:, :COMMON_DIM], "text_unique": text_cu[:, COMMON_DIM:],
        "image_common": image_cu[:, :COMMON_DIM], "image_unique": image_cu[:, COMMON_DIM:],
        "audio_common": audio_cu[:, :COMMON_DIM], "audio_unique": audio_cu[:, COMMON_DIM:],
    }
    cat = lambda a, b: jnp.concatenate([a, b], axis=-1)
    reconstructions = {
        "text_recon_from_image": lin(cat(features["image_common"], features["text_unique"]), params["text_rec"]),
        "image_recon_from_text": lin(cat(features["text_common"], features["image_unique"]), params["image_rec"]),
        "text_recon_from_audio": lin(cat(features["audio_common"], features["text_unique"]), params["text_rec"]),
        "audio_recon_from_text": lin(cat(features["text_common"], features["audio_unique"]), params["audio_rec"]),
        "image_recon_from_audio": lin(cat(features["audio_common"], features["image_unique"]), params["image_rec"]),
        "audio_recon_from_image": lin(cat(features["image_common"], features["audio_unique"]), params["audio_rec"]),
    }
    all_features = jnp.concatenate([text_cu, image_cu, audio_cu], axis=-1)
    hidden = jnp.maximum(lin(all_features, params["fusion_0"]), 0.0)
    fused = lin(hidden, params["fusion_1"])
    return {
        "text_fused": fused[:, :TEXT_DIM],
        "image_fused": fused[:, TEXT_DIM:],
        "reconstructions": reconstructions,
        "features": features,
    }


# ----------------------------------------------------------------------------
# Driver
# ----------------------------------------------------------------------------
if __name__ == "__main__":
    key = jax.random.PRNGKey(0)
    k_params, k_text, k_image, k_audio = jax.random.split(key, 4)

    params = init_params(k_params)

    B = 2
    text_feat = jax.random.normal(k_text, (B, TEXT_DIM), jnp.float32)
    image_feat = jax.random.normal(k_image, (B, IMAGE_DIM), jnp.float32)
    audio_feat = jax.random.normal(k_audio, (B, AUDIO_DIM), jnp.float32)

    out = jax.jit(cufusion_forward)(params, text_feat, image_feat, audio_feat)
    jax.block_until_ready(out)

    # Shape sanity checks.
    assert out["text_fused"].shape == (B, TEXT_DIM)
    assert out["image_fused"].shape == (B, IMAGE_DIM)
    assert out["features"]["text_common"].shape == (B, COMMON_DIM)
    assert out["reconstructions"]["text_recon_from_image"].shape == (B, TEXT_DIM)
    assert out["reconstructions"]["image_recon_from_audio"].shape == (B, IMAGE_DIM)
    assert out["reconstructions"]["audio_recon_from_text"].shape == (B, AUDIO_DIM)

    # Numerical check against a pure-JAX reference using the same bf16 weights.
    ref = jax.jit(cufusion_reference)(params, text_feat, image_feat, audio_feat)
    out_flat, out_tree = jax.tree_util.tree_flatten(out)
    ref_flat, ref_tree = jax.tree_util.tree_flatten(ref)
    assert out_tree == ref_tree
    for o, r in zip(out_flat, ref_flat):
        np.testing.assert_allclose(np.asarray(o), np.asarray(r), rtol=2e-2, atol=2e-2)

    print("KERNEL_OK")
</pallas_src>

<mosaic_0001>
module attributes {stable_mosaic.version = 11 : i64} {
  func.func @_cufa_fused_kernel(%arg0: i32, %arg1: memref<8x768xbf16, #tpu.memory_space<vmem>>, %arg2: memref<8x1024xbf16, #tpu.memory_space<vmem>>, %arg3: memref<8x512xbf16, #tpu.memory_space<vmem>>, %arg4: memref<1x512xf32, #tpu.memory_space<vmem>>, %arg5: memref<1x512xf32, #tpu.memory_space<vmem>>, %arg6: memref<1x512xf32, #tpu.memory_space<vmem>>, %arg7: memref<1x768xf32, #tpu.memory_space<vmem>>, %arg8: memref<1x1024xf32, #tpu.memory_space<vmem>>, %arg9: memref<1x512xf32, #tpu.memory_space<vmem>>, %arg10: memref<1x1024xf32, #tpu.memory_space<vmem>>, %arg11: memref<1x1792xf32, #tpu.memory_space<vmem>>, %arg12: memref<768x512xbf16, #tpu.memory_space<any>>, %arg13: memref<1024x512xbf16, #tpu.memory_space<any>>, %arg14: memref<512x512xbf16, #tpu.memory_space<any>>, %arg15: memref<512x768xbf16, #tpu.memory_space<any>>, %arg16: memref<512x1024xbf16, #tpu.memory_space<any>>, %arg17: memref<512x512xbf16, #tpu.memory_space<any>>, %arg18: memref<1536x1024xbf16, #tpu.memory_space<any>>, %arg19: memref<1024x1792xbf16, #tpu.memory_space<any>>, %arg20: memref<8x256xf32, #tpu.memory_space<vmem>>, %arg21: memref<8x256xf32, #tpu.memory_space<vmem>>, %arg22: memref<8x256xf32, #tpu.memory_space<vmem>>, %arg23: memref<8x256xf32, #tpu.memory_space<vmem>>, %arg24: memref<8x256xf32, #tpu.memory_space<vmem>>, %arg25: memref<8x256xf32, #tpu.memory_space<vmem>>, %arg26: memref<8x768xf32, #tpu.memory_space<vmem>>, %arg27: memref<8x768xf32, #tpu.memory_space<vmem>>, %arg28: memref<8x1024xf32, #tpu.memory_space<vmem>>, %arg29: memref<8x1024xf32, #tpu.memory_space<vmem>>, %arg30: memref<8x512xf32, #tpu.memory_space<vmem>>, %arg31: memref<8x512xf32, #tpu.memory_space<vmem>>, %arg32: memref<8x768xf32, #tpu.memory_space<vmem>>, %arg33: memref<8x1024xf32, #tpu.memory_space<vmem>>, %arg34: memref<768x512xbf16, #tpu.memory_space<vmem>>, %arg35: memref<1024x512xbf16, #tpu.memory_space<vmem>>, %arg36: memref<512x512xbf16, #tpu.memory_space<vmem>>, %arg37: memref<512x768xbf16, #tpu.memory_space<vmem>>, %arg38: memref<512x1024xbf16, #tpu.memory_space<vmem>>, %arg39: memref<512x512xbf16, #tpu.memory_space<vmem>>, %arg40: memref<1536x1024xbf16, #tpu.memory_space<vmem>>, %arg41: memref<1024x1792xbf16, #tpu.memory_space<vmem>>, %arg42: memref<8x!tpu.dma_semaphore, #tpu.memory_space<semaphore_mem>>) attributes {dimension_semantics = [#tpu.dimension_semantics<arbitrary>], iteration_bounds = array<i64: 1>, scalar_prefetch = 0 : i64, scratch_operands = 9 : i64, tpu.core_type = #tpu.core_type<tc>, window_params = [{pipeline_mode = #tpu.pipeline_mode<synchronous>, transform_indices = @transform_0, window_bounds = array<i64: 8, 768>}, {pipeline_mode = #tpu.pipeline_mode<synchronous>, transform_indices = @transform_1, window_bounds = array<i64: 8, 1024>}, {pipeline_mode = #tpu.pipeline_mode<synchronous>, transform_indices = @transform_2, window_bounds = array<i64: 8, 512>}, {pipeline_mode = #tpu.pipeline_mode<synchronous>, transform_indices = @transform_3, window_bounds = array<i64: 1, 512>}, {pipeline_mode = #tpu.pipeline_mode<synchronous>, transform_indices = @transform_4, window_bounds = array<i64: 1, 512>}, {pipeline_mode = #tpu.pipeline_mode<synchronous>, transform_indices = @transform_5, window_bounds = array<i64: 1, 512>}, {pipeline_mode = #tpu.pipeline_mode<synchronous>, transform_indices = @transform_6, window_bounds = array<i64: 1, 768>}, {pipeline_mode = #tpu.pipeline_mode<synchronous>, transform_indices = @transform_7, window_bounds = array<i64: 1, 1024>}, {pipeline_mode = #tpu.pipeline_mode<synchronous>, transform_indices = @transform_8, window_bounds = array<i64: 1, 512>}, {pipeline_mode = #tpu.pipeline_mode<synchronous>, transform_indices = @transform_9, window_bounds = array<i64: 1, 1024>}, {pipeline_mode = #tpu.pipeline_mode<synchronous>, transform_indices = @transform_10, window_bounds = array<i64: 1, 1792>}, {}, {}, {}, {}, {}, {}, {}, {}, {pipeline_mode = #tpu.pipeline_mode<synchronous>, transform_indices = @transform_19, window_bounds = array<i64: 8, 256>}, {pipeline_mode = #tpu.pipeline_mode<synchronous>, transform_indices = @transform_20, window_bounds = array<i64: 8, 256>}, {pipeline_mode = #tpu.pipeline_mode<synchronous>, transform_indices = @transform_21, window_bounds = array<i64: 8, 256>}, {pipeline_mode = #tpu.pipeline_mode<synchronous>, transform_indices = @transform_22, window_bounds = array<i64: 8, 256>}, {pipeline_mode = #tpu.pipeline_mode<synchronous>, transform_indices = @transform_23, window_bounds = array<i64: 8, 256>}, {pipeline_mode = #tpu.pipeline_mode<synchronous>, transform_indices = @transform_24, window_bounds = array<i64: 8, 256>}, {pipeline_mode = #tpu.pipeline_mode<synchronous>, transform_indices = @transform_25, window_bounds = array<i64: 8, 768>}, {pipeline_mode = #tpu.pipeline_mode<synchronous>, transform_indices = @transform_26, window_bounds = array<i64: 8, 768>}, {pipeline_mode = #tpu.pipeline_mode<synchronous>, transform_indices = @transform_27, window_bounds = array<i64: 8, 1024>}, {pipeline_mode = #tpu.pipeline_mode<synchronous>, transform_indices = @transform_28, window_bounds = array<i64: 8, 1024>}, {pipeline_mode = #tpu.pipeline_mode<synchronous>, transform_indices = @transform_29, window_bounds = array<i64: 8, 512>}, {pipeline_mode = #tpu.pipeline_mode<synchronous>, transform_indices = @transform_30, window_bounds = array<i64: 8, 512>}, {pipeline_mode = #tpu.pipeline_mode<synchronous>, transform_indices = @transform_31, window_bounds = array<i64: 8, 768>}, {pipeline_mode = #tpu.pipeline_mode<synchronous>, transform_indices = @transform_32, window_bounds = array<i64: 8, 1024>}]} {
    %c0_i32 = arith.constant 0 : i32
    %0 = tpu.memref_slice %arg42[%c0_i32] : memref<8x!tpu.dma_semaphore, #tpu.memory_space<semaphore_mem>> -> memref<1x!tpu.dma_semaphore, #tpu.memory_space<semaphore_mem>>
    %1 = tpu.memref_squeeze %0 : memref<1x!tpu.dma_semaphore, #tpu.memory_space<semaphore_mem>> -> memref<!tpu.dma_semaphore, #tpu.memory_space<semaphore_mem>>
    tpu.enqueue_dma source(%arg12 : memref<768x512xbf16, #tpu.memory_space<any>>) target(%arg34 : memref<768x512xbf16, #tpu.memory_space<vmem>>) target_semaphore(%1 : memref<!tpu.dma_semaphore, #tpu.memory_space<semaphore_mem>>)
    %c1_i32 = arith.constant 1 : i32
    %2 = tpu.memref_slice %arg42[%c1_i32] : memref<8x!tpu.dma_semaphore, #tpu.memory_space<semaphore_mem>> -> memref<1x!tpu.dma_semaphore, #tpu.memory_space<semaphore_mem>>
    %3 = tpu.memref_squeeze %2 : memref<1x!tpu.dma_semaphore, #tpu.memory_space<semaphore_mem>> -> memref<!tpu.dma_semaphore, #tpu.memory_space<semaphore_mem>>
    tpu.enqueue_dma source(%arg13 : memref<1024x512xbf16, #tpu.memory_space<any>>) target(%arg35 : memref<1024x512xbf16, #tpu.memory_space<vmem>>) target_semaphore(%3 : memref<!tpu.dma_semaphore, #tpu.memory_space<semaphore_mem>>)
    %c2_i32 = arith.constant 2 : i32
    %4 = tpu.memref_slice %arg42[%c2_i32] : memref<8x!tpu.dma_semaphore, #tpu.memory_space<semaphore_mem>> -> memref<1x!tpu.dma_semaphore, #tpu.memory_space<semaphore_mem>>
    %5 = tpu.memref_squeeze %4 : memref<1x!tpu.dma_semaphore, #tpu.memory_space<semaphore_mem>> -> memref<!tpu.dma_semaphore, #tpu.memory_space<semaphore_mem>>
    tpu.enqueue_dma source(%arg14 : memref<512x512xbf16, #tpu.memory_space<any>>) target(%arg36 : memref<512x512xbf16, #tpu.memory_space<vmem>>) target_semaphore(%5 : memref<!tpu.dma_semaphore, #tpu.memory_space<semaphore_mem>>)
    %c3_i32 = arith.constant 3 : i32
    %6 = tpu.memref_slice %arg42[%c3_i32] : memref<8x!tpu.dma_semaphore, #tpu.memory_space<semaphore_mem>> -> memref<1x!tpu.dma_semaphore, #tpu.memory_space<semaphore_mem>>
    %7 = tpu.memref_squeeze %6 : memref<1x!tpu.dma_semaphore, #tpu.memory_space<semaphore_mem>> -> memref<!tpu.dma_semaphore, #tpu.memory_space<semaphore_mem>>
    tpu.enqueue_dma source(%arg15 : memref<512x768xbf16, #tpu.memory_space<any>>) target(%arg37 : memref<512x768xbf16, #tpu.memory_space<vmem>>) target_semaphore(%7 : memref<!tpu.dma_semaphore, #tpu.memory_space<semaphore_mem>>)
    %c4_i32 = arith.constant 4 : i32
    %8 = tpu.memref_slice %arg42[%c4_i32] : memref<8x!tpu.dma_semaphore, #tpu.memory_space<semaphore_mem>> -> memref<1x!tpu.dma_semaphore, #tpu.memory_space<semaphore_mem>>
    %9 = tpu.memref_squeeze %8 : memref<1x!tpu.dma_semaphore, #tpu.memory_space<semaphore_mem>> -> memref<!tpu.dma_semaphore, #tpu.memory_space<semaphore_mem>>
    tpu.enqueue_dma source(%arg16 : memref<512x1024xbf16, #tpu.memory_space<any>>) target(%arg38 : memref<512x1024xbf16, #tpu.memory_space<vmem>>) target_semaphore(%9 : memref<!tpu.dma_semaphore, #tpu.memory_space<semaphore_mem>>)
    %c5_i32 = arith.constant 5 : i32
    %10 = tpu.memref_slice %arg42[%c5_i32] : memref<8x!tpu.dma_semaphore, #tpu.memory_space<semaphore_mem>> -> memref<1x!tpu.dma_semaphore, #tpu.memory_space<semaphore_mem>>
    %11 = tpu.memref_squeeze %10 : memref<1x!tpu.dma_semaphore, #tpu.memory_space<semaphore_mem>> -> memref<!tpu.dma_semaphore, #tpu.memory_space<semaphore_mem>>
    tpu.enqueue_dma source(%arg17 : memref<512x512xbf16, #tpu.memory_space<any>>) target(%arg39 : memref<512x512xbf16, #tpu.memory_space<vmem>>) target_semaphore(%11 : memref<!tpu.dma_semaphore, #tpu.memory_space<semaphore_mem>>)
    %c6_i32 = arith.constant 6 : i32
    %12 = tpu.memref_slice %arg42[%c6_i32] : memref<8x!tpu.dma_semaphore, #tpu.memory_space<semaphore_mem>> -> memref<1x!tpu.dma_semaphore, #tpu.memory_space<semaphore_mem>>
    %13 = tpu.memref_squeeze %12 : memref<1x!tpu.dma_semaphore, #tpu.memory_space<semaphore_mem>> -> memref<!tpu.dma_semaphore, #tpu.memory_space<semaphore_mem>>
    tpu.enqueue_dma source(%arg18 : memref<1536x1024xbf16, #tpu.memory_space<any>>) target(%arg40 : memref<1536x1024xbf16, #tpu.memory_space<vmem>>) target_semaphore(%13 : memref<!tpu.dma_semaphore, #tpu.memory_space<semaphore_mem>>)
    %c7_i32 = arith.constant 7 : i32
    %14 = tpu.memref_slice %arg42[%c7_i32] : memref<8x!tpu.dma_semaphore, #tpu.memory_space<semaphore_mem>> -> memref<1x!tpu.dma_semaphore, #tpu.memory_space<semaphore_mem>>
    %15 = tpu.memref_squeeze %14 : memref<1x!tpu.dma_semaphore, #tpu.memory_space<semaphore_mem>> -> memref<!tpu.dma_semaphore, #tpu.memory_space<semaphore_mem>>
    tpu.enqueue_dma source(%arg19 : memref<1024x1792xbf16, #tpu.memory_space<any>>) target(%arg41 : memref<1024x1792xbf16, #tpu.memory_space<vmem>>) target_semaphore(%15 : memref<!tpu.dma_semaphore, #tpu.memory_space<semaphore_mem>>)
    %c0_i32_0 = arith.constant 0 : i32
    %16 = tpu.memref_slice %arg42[%c0_i32_0] : memref<8x!tpu.dma_semaphore, #tpu.memory_space<semaphore_mem>> -> memref<1x!tpu.dma_semaphore, #tpu.memory_space<semaphore_mem>>
    %17 = tpu.memref_squeeze %16 : memref<1x!tpu.dma_semaphore, #tpu.memory_space<semaphore_mem>> -> memref<!tpu.dma_semaphore, #tpu.memory_space<semaphore_mem>>
    tpu.wait_dma2 semaphore(%17 : memref<!tpu.dma_semaphore, #tpu.memory_space<semaphore_mem>>) src(%arg12 : memref<768x512xbf16, #tpu.memory_space<any>>) dst(%arg34 : memref<768x512xbf16, #tpu.memory_space<vmem>>)
    %c0 = arith.constant 0 : index
    %c0_1 = arith.constant 0 : index
    %18 = vector.load %arg1[%c0, %c0_1] : memref<8x768xbf16, #tpu.memory_space<vmem>>, vector<8x768xbf16>
    %c0_2 = arith.constant 0 : index
    %c0_3 = arith.constant 0 : index
    %19 = vector.load %arg34[%c0_2, %c0_3] : memref<768x512xbf16, #tpu.memory_space<vmem>>, vector<768x512xbf16>
    %cst = arith.constant dense<0.000000e+00> : vector<8x512xf32>
    %20 = tpu.matmul %18, %19, %cst {dimension_numbers = #tpu.dot_dimension_numbers<[1], [0], [0], [1], [0, 0, 1, 1], [], []>} : vector<8x768xbf16>, vector<768x512xbf16>, vector<8x512xf32> -> vector<8x512xf32>
    %c0_4 = arith.constant 0 : index
    %c0_5 = arith.constant 0 : index
    %21 = vector.load %arg4[%c0_4, %c0_5] : memref<1x512xf32, #tpu.memory_space<vmem>>, vector<1x512xf32>
    %22 = vector.broadcast %21 : vector<1x512xf32> to vector<8x512xf32>
    %23 = arith.addf %20, %22 : vector<8x512xf32>
    %c1_i32_6 = arith.constant 1 : i32
    %24 = tpu.memref_slice %arg42[%c1_i32_6] : memref<8x!tpu.dma_semaphore, #tpu.memory_space<semaphore_mem>> -> memref<1x!tpu.dma_semaphore, #tpu.memory_space<semaphore_mem>>
    %25 = tpu.memref_squeeze %24 : memref<1x!tpu.dma_semaphore, #tpu.memory_space<semaphore_mem>> -> memref<!tpu.dma_semaphore, #tpu.memory_space<semaphore_mem>>
    tpu.wait_dma2 semaphore(%25 : memref<!tpu.dma_semaphore, #tpu.memory_space<semaphore_mem>>) src(%arg13 : memref<1024x512xbf16, #tpu.memory_space<any>>) dst(%arg35 : memref<1024x512xbf16, #tpu.memory_space<vmem>>)
    %c0_7 = arith.constant 0 : index
    %c0_8 = arith.constant 0 : index
    %26 = vector.load %arg2[%c0_7, %c0_8] : memref<8x1024xbf16, #tpu.memory_space<vmem>>, vector<8x1024xbf16>
    %c0_9 = arith.constant 0 : index
    %c0_10 = arith.constant 0 : index
    %27 = vector.load %arg35[%c0_9, %c0_10] : memref<1024x512xbf16, #tpu.memory_space<vmem>>, vector<1024x512xbf16>
    %cst_11 = arith.constant dense<0.000000e+00> : vector<8x512xf32>
    %28 = tpu.matmul %26, %27, %cst_11 {dimension_numbers = #tpu.dot_dimension_numbers<[1], [0], [0], [1], [0, 0, 1, 1], [], []>} : vector<8x1024xbf16>, vector<1024x512xbf16>, vector<8x512xf32> -> vector<8x512xf32>
    %c0_12 = arith.constant 0 : index
    %c0_13 = arith.constant 0 : index
    %29 = vector.load %arg5[%c0_12, %c0_13] : memref<1x512xf32, #tpu.memory_space<vmem>>, vector<1x512xf32>
    %30 = vector.broadcast %29 : vector<1x512xf32> to vector<8x512xf32>
    %31 = arith.addf %28, %30 : vector<8x512xf32>
    %c2_i32_14 = arith.constant 2 : i32
    %32 = tpu.memref_slice %arg42[%c2_i32_14] : memref<8x!tpu.dma_semaphore, #tpu.memory_space<semaphore_mem>> -> memref<1x!tpu.dma_semaphore, #tpu.memory_space<semaphore_mem>>
    %33 = tpu.memref_squeeze %32 : memref<1x!tpu.dma_semaphore, #tpu.memory_space<semaphore_mem>> -> memref<!tpu.dma_semaphore, #tpu.memory_space<semaphore_mem>>
    tpu.wait_dma2 semaphore(%33 : memref<!tpu.dma_semaphore, #tpu.memory_space<semaphore_mem>>) src(%arg14 : memref<512x512xbf16, #tpu.memory_space<any>>) dst(%arg36 : memref<512x512xbf16, #tpu.memory_space<vmem>>)
    %c0_15 = arith.constant 0 : index
    %c0_16 = arith.constant 0 : index
    %34 = vector.load %arg3[%c0_15, %c0_16] : memref<8x512xbf16, #tpu.memory_space<vmem>>, vector<8x512xbf16>
    %c0_17 = arith.constant 0 : index
    %c0_18 = arith.constant 0 : index
    %35 = vector.load %arg36[%c0_17, %c0_18] : memref<512x512xbf16, #tpu.memory_space<vmem>>, vector<512x512xbf16>
    %cst_19 = arith.constant dense<0.000000e+00> : vector<8x512xf32>
    %36 = tpu.matmul %34, %35, %cst_19 {dimension_numbers = #tpu.dot_dimension_numbers<[1], [0], [0], [1], [0, 0, 1, 1], [], []>} : vector<8x512xbf16>, vector<512x512xbf16>, vector<8x512xf32> -> vector<8x512xf32>
    %c0_20 = arith.constant 0 : index
    %c0_21 = arith.constant 0 : index
    %37 = vector.load %arg6[%c0_20, %c0_21] : memref<1x512xf32, #tpu.memory_space<vmem>>, vector<1x512xf32>
    %38 = vector.broadcast %37 : vector<1x512xf32> to vector<8x512xf32>
    %39 = arith.addf %36, %38 : vector<8x512xf32>
    %40 = vector.extract_strided_slice %23 {offsets = [0, 0], sizes = [8, 256], strides = [1, 1]} : vector<8x512xf32> to vector<8x256xf32>
    %41 = vector.extract_strided_slice %23 {offsets = [0, 256], sizes = [8, 256], strides = [1, 1]} : vector<8x512xf32> to vector<8x256xf32>
    %42 = vector.extract_strided_slice %31 {offsets = [0, 0], sizes = [8, 256], strides = [1, 1]} : vector<8x512xf32> to vector<8x256xf32>
    %43 = vector.extract_strided_slice %31 {offsets = [0, 256], sizes = [8, 256], strides = [1, 1]} : vector<8x512xf32> to vector<8x256xf32>
    %44 = vector.extract_strided_slice %39 {offsets = [0, 0], sizes = [8, 256], strides = [1, 1]} : vector<8x512xf32> to vector<8x256xf32>
    %45 = vector.extract_strided_slice %39 {offsets = [0, 256], sizes = [8, 256], strides = [1, 1]} : vector<8x512xf32> to vector<8x256xf32>
    %c0_22 = arith.constant 0 : index
    %c0_23 = arith.constant 0 : index
    %46 = vector.load %arg20[%c0_22, %c0_23] : memref<8x256xf32, #tpu.memory_space<vmem>>, vector<8x256xf32>
    tpu.vector_store %arg20[%c0_22, %c0_23], %40 {strides = array<i32>} : memref<8x256xf32, #tpu.memory_space<vmem>>, vector<8x256xf32>,
    %c0_24 = arith.constant 0 : index
    %c0_25 = arith.constant 0 : index
    %47 = vector.load %arg21[%c0_24, %c0_25] : memref<8x256xf32, #tpu.memory_space<vmem>>, vector<8x256xf32>
    tpu.vector_store %arg21[%c0_24, %c0_25], %41 {strides = array<i32>} : memref<8x256xf32, #tpu.memory_space<vmem>>, vector<8x256xf32>,
    %c0_26 = arith.constant 0 : index
    %c0_27 = arith.constant 0 : index
    %48 = vector.load %arg22[%c0_26, %c0_27] : memref<8x256xf32, #tpu.memory_space<vmem>>, vector<8x256xf32>
    tpu.vector_store %arg22[%c0_26, %c0_27], %42 {strides = array<i32>} : memref<8x256xf32, #tpu.memory_space<vmem>>, vector<8x256xf32>,
    %c0_28 = arith.constant 0 : index
    %c0_29 = arith.constant 0 : index
    %49 = vector.load %arg23[%c0_28, %c0_29] : memref<8x256xf32, #tpu.memory_space<vmem>>, vector<8x256xf32>
    tpu.vector_store %arg23[%c0_28, %c0_29], %43 {strides = array<i32>} : memref<8x256xf32, #tpu.memory_space<vmem>>, vector<8x256xf32>,
    %c0_30 = arith.constant 0 : index
    %c0_31 = arith.constant 0 : index
    %50 = vector.load %arg24[%c0_30, %c0_31] : memref<8x256xf32, #tpu.memory_space<vmem>>, vector<8x256xf32>
    tpu.vector_store %arg24[%c0_30, %c0_31], %44 {strides = array<i32>} : memref<8x256xf32, #tpu.memory_space<vmem>>, vector<8x256xf32>,
    %c0_32 = arith.constant 0 : index
    %c0_33 = arith.constant 0 : index
    %51 = vector.load %arg25[%c0_32, %c0_33] : memref<8x256xf32, #tpu.memory_space<vmem>>, vector<8x256xf32>
    tpu.vector_store %arg25[%c0_32, %c0_33], %45 {strides = array<i32>} : memref<8x256xf32, #tpu.memory_space<vmem>>, vector<8x256xf32>,
    %c3_i32_34 = arith.constant 3 : i32
    %52 = tpu.memref_slice %arg42[%c3_i32_34] : memref<8x!tpu.dma_semaphore, #tpu.memory_space<semaphore_mem>> -> memref<1x!tpu.dma_semaphore, #tpu.memory_space<semaphore_mem>>
    %53 = tpu.memref_squeeze %52 : memref<1x!tpu.dma_semaphore, #tpu.memory_space<semaphore_mem>> -> memref<!tpu.dma_semaphore, #tpu.memory_space<semaphore_mem>>
    tpu.wait_dma2 semaphore(%53 : memref<!tpu.dma_semaphore, #tpu.memory_space<semaphore_mem>>) src(%arg15 : memref<512x768xbf16, #tpu.memory_space<any>>) dst(%arg37 : memref<512x768xbf16, #tpu.memory_space<vmem>>)
    %c0_35 = arith.constant 0 : index
    %c0_36 = arith.constant 0 : index
    %54 = vector.load %arg37[%c0_35, %c0_36] : memref<512x768xbf16, #tpu.memory_space<vmem>>, vector<256x768xbf16>
    %55 = arith.truncf %42 : vector<8x256xf32> to vector<8x256xbf16>
    %cst_37 = arith.constant dense<0.000000e+00> : vector<8x768xf32>
    %56 = tpu.matmul %55, %54, %cst_37 {dimension_numbers = #tpu.dot_dimension_numbers<[1], [0], [0], [1], [0, 0, 1, 1], [], []>} : vector<8x256xbf16>, vector<256x768xbf16>, vector<8x768xf32> -> vector<8x768xf32>
    %c256 = arith.constant 256 : index
    %c0_38 = arith.constant 0 : index
    %57 = vector.load %arg37[%c256, %c0_38] : memref<512x768xbf16, #tpu.memory_space<vmem>>, vector<256x768xbf16>
    %58 = arith.truncf %41 : vector<8x256xf32> to vector<8x256xbf16>
    %cst_39 = arith.constant dense<0.000000e+00> : vector<8x768xf32>
    %59 = tpu.matmul %58, %57, %cst_39 {dimension_numbers = #tpu.dot_dimension_numbers<[1], [0], [0], [1], [0, 0, 1, 1], [], []>} : vector<8x256xbf16>, vector<256x768xbf16>, vector<8x768xf32> -> vector<8x768xf32>
    %60 = arith.addf %56, %59 : vector<8x768xf32>
    %c0_40 = arith.constant 0 : index
    %c0_41 = arith.constant 0 : index
    %61 = vector.load %arg7[%c0_40, %c0_41] : memref<1x768xf32, #tpu.memory_space<vmem>>, vector<1x768xf32>
    %62 = vector.broadcast %61 : vector<1x768xf32> to vector<8x768xf32>
    %63 = arith.addf %60, %62 : vector<8x768xf32>
    %c0_42 = arith.constant 0 : index
    %c0_43 = arith.constant 0 : index
    %64 = vector.load %arg26[%c0_42, %c0_43] : memref<8x768xf32, #tpu.memory_space<vmem>>, vector<8x768xf32>
    tpu.vector_store %arg26[%c0_42, %c0_43], %63 {strides = array<i32>} : memref<8x768xf32, #tpu.memory_space<vmem>>, vector<8x768xf32>,
    %c0_44 = arith.constant 0 : index
    %c0_45 = arith.constant 0 : index
    %65 = vector.load %arg37[%c0_44, %c0_45] : memref<512x768xbf16, #tpu.memory_space<vmem>>, vector<256x768xbf16>
    %66 = arith.truncf %44 : vector<8x256xf32> to vector<8x256xbf16>
    %cst_46 = arith.constant dense<0.000000e+00> : vector<8x768xf32>
    %67 = tpu.matmul %66, %65, %cst_46 {dimension_numbers = #tpu.dot_dimension_numbers<[1], [0], [0], [1], [0, 0, 1, 1], [], []>} : vector<8x256xbf16>, vector<256x768xbf16>, vector<8x768xf32> -> vector<8x768xf32>
    %c256_47 = arith.constant 256 : index
    %c0_48 = arith.constant 0 : index
    %68 = vector.load %arg37[%c256_47, %c0_48] : memref<512x768xbf16, #tpu.memory_space<vmem>>, vector<256x768xbf16>
    %69 = arith.truncf %41 : vector<8x256xf32> to vector<8x256xbf16>
    %cst_49 = arith.constant dense<0.000000e+00> : vector<8x768xf32>
    %70 = tpu.matmul %69, %68, %cst_49 {dimension_numbers = #tpu.dot_dimension_numbers<[1], [0], [0], [1], [0, 0, 1, 1], [], []>} : vector<8x256xbf16>, vector<256x768xbf16>, vector<8x768xf32> -> vector<8x768xf32>
    %71 = arith.addf %67, %70 : vector<8x768xf32>
    %c0_50 = arith.constant 0 : index
    %c0_51 = arith.constant 0 : index
    %72 = vector.load %arg7[%c0_50, %c0_51] : memref<1x768xf32, #tpu.memory_space<vmem>>, vector<1x768xf32>
    %73 = vector.broadcast %72 : vector<1x768xf32> to vector<8x768xf32>
    %74 = arith.addf %71, %73 : vector<8x768xf32>
    %c0_52 = arith.constant 0 : index
    %c0_53 = arith.constant 0 : index
    %75 = vector.load %arg27[%c0_52, %c0_53] : memref<8x768xf32, #tpu.memory_space<vmem>>, vector<8x768xf32>
    tpu.vector_store %arg27[%c0_52, %c0_53], %74 {strides = array<i32>} : memref<8x768xf32, #tpu.memory_space<vmem>>, vector<8x768xf32>,
    %c4_i32_54 = arith.constant 4 : i32
    %76 = tpu.memref_slice %arg42[%c4_i32_54] : memref<8x!tpu.dma_semaphore, #tpu.memory_space<semaphore_mem>> -> memref<1x!tpu.dma_semaphore, #tpu.memory_space<semaphore_mem>>
    %77 = tpu.memref_squeeze %76 : memref<1x!tpu.dma_semaphore, #tpu.memory_space<semaphore_mem>> -> memref<!tpu.dma_semaphore, #tpu.memory_space<semaphore_mem>>
    tpu.wait_dma2 semaphore(%77 : memref<!tpu.dma_semaphore, #tpu.memory_space<semaphore_mem>>) src(%arg16 : memref<512x1024xbf16, #tpu.memory_space<any>>) dst(%arg38 : memref<512x1024xbf16, #tpu.memory_space<vmem>>)
    %c0_55 = arith.constant 0 : index
    %c0_56 = arith.constant 0 : index
    %78 = vector.load %arg38[%c0_55, %c0_56] : memref<512x1024xbf16, #tpu.memory_space<vmem>>, vector<256x1024xbf16>
    %79 = arith.truncf %40 : vector<8x256xf32> to vector<8x256xbf16>
    %cst_57 = arith.constant dense<0.000000e+00> : vector<8x1024xf32>
    %80 = tpu.matmul %79, %78, %cst_57 {dimension_numbers = #tpu.dot_dimension_numbers<[1], [0], [0], [1], [0, 0, 1, 1], [], []>} : vector<8x256xbf16>, vector<256x1024xbf16>, vector<8x1024xf32> -> vector<8x1024xf32>
    %c256_58 = arith.constant 256 : index
    %c0_59 = arith.constant 0 : index
    %81 = vector.load %arg38[%c256_58, %c0_59] : memref<512x1024xbf16, #tpu.memory_space<vmem>>, vector<256x1024xbf16>
    %82 = arith.truncf %43 : vector<8x256xf32> to vector<8x256xbf16>
    %cst_60 = arith.constant dense<0.000000e+00> : vector<8x1024xf32>
    %83 = tpu.matmul %82, %81, %cst_60 {dimension_numbers = #tpu.dot_dimension_numbers<[1], [0], [0], [1], [0, 0, 1, 1], [], []>} : vector<8x256xbf16>, vector<256x1024xbf16>, vector<8x1024xf32> -> vector<8x1024xf32>
    %84 = arith.addf %80, %83 : vector<8x1024xf32>
    %c0_61 = arith.constant 0 : index
    %c0_62 = arith.constant 0 : index
    %85 = vector.load %arg8[%c0_61, %c0_62] : memref<1x1024xf32, #tpu.memory_space<vmem>>, vector<1x1024xf32>
    %86 = vector.broadcast %85 : vector<1x1024xf32> to vector<8x1024xf32>
    %87 = arith.addf %84, %86 : vector<8x1024xf32>
    %c0_63 = arith.constant 0 : index
    %c0_64 = arith.constant 0 : index
    %88 = vector.load %arg28[%c0_63, %c0_64] : memref<8x1024xf32, #tpu.memory_space<vmem>>, vector<8x1024xf32>
    tpu.vector_store %arg28[%c0_63, %c0_64], %87 {strides = array<i32>} : memref<8x1024xf32, #tpu.memory_space<vmem>>, vector<8x1024xf32>,
    %c0_65 = arith.constant 0 : index
    %c0_66 = arith.constant 0 : index
    %89 = vector.load %arg38[%c0_65, %c0_66] : memref<512x1024xbf16, #tpu.memory_space<vmem>>, vector<256x1024xbf16>
    %90 = arith.truncf %44 : vector<8x256xf32> to vector<8x256xbf16>
    %cst_67 = arith.constant dense<0.000000e+00> : vector<8x1024xf32>
    %91 = tpu.matmul %90, %89, %cst_67 {dimension_numbers = #tpu.dot_dimension_numbers<[1], [0], [0], [1], [0, 0, 1, 1], [], []>} : vector<8x256xbf16>, vector<256x1024xbf16>, vector<8x1024xf32> -> vector<8x1024xf32>
    %c256_68 = arith.constant 256 : index
    %c0_69 = arith.constant 0 : index
    %92 = vector.load %arg38[%c256_68, %c0_69] : memref<512x1024xbf16, #tpu.memory_space<vmem>>, vector<256x1024xbf16>
    %93 = arith.truncf %43 : vector<8x256xf32> to vector<8x256xbf16>
    %cst_70 = arith.constant dense<0.000000e+00> : vector<8x1024xf32>
    %94 = tpu.matmul %93, %92, %cst_70 {dimension_numbers = #tpu.dot_dimension_numbers<[1], [0], [0], [1], [0, 0, 1, 1], [], []>} : vector<8x256xbf16>, vector<256x1024xbf16>, vector<8x1024xf32> -> vector<8x1024xf32>
    %95 = arith.addf %91, %94 : vector<8x1024xf32>
    %c0_71 = arith.constant 0 : index
    %c0_72 = arith.constant 0 : index
    %96 = vector.load %arg8[%c0_71, %c0_72] : memref<1x1024xf32, #tpu.memory_space<vmem>>, vector<1x1024xf32>
    %97 = vector.broadcast %96 : vector<1x1024xf32> to vector<8x1024xf32>
    %98 = arith.addf %95, %97 : vector<8x1024xf32>
    %c0_73 = arith.constant 0 : index
    %c0_74 = arith.constant 0 : index
    %99 = vector.load %arg29[%c0_73, %c0_74] : memref<8x1024xf32, #tpu.memory_space<vmem>>, vector<8x1024xf32>
    tpu.vector_store %arg29[%c0_73, %c0_74], %98 {strides = array<i32>} : memref<8x1024xf32, #tpu.memory_space<vmem>>, vector<8x1024xf32>,
    %c5_i32_75 = arith.constant 5 : i32
    %100 = tpu.memref_slice %arg42[%c5_i32_75] : memref<8x!tpu.dma_semaphore, #tpu.memory_space<semaphore_mem>> -> memref<1x!tpu.dma_semaphore, #tpu.memory_space<semaphore_mem>>
    %101 = tpu.memref_squeeze %100 : memref<1x!tpu.dma_semaphore, #tpu.memory_space<semaphore_mem>> -> memref<!tpu.dma_semaphore, #tpu.memory_space<semaphore_mem>>
    tpu.wait_dma2 semaphore(%101 : memref<!tpu.dma_semaphore, #tpu.memory_space<semaphore_mem>>) src(%arg17 : memref<512x512xbf16, #tpu.memory_space<any>>) dst(%arg39 : memref<512x512xbf16, #tpu.memory_space<vmem>>)
    %c0_76 = arith.constant 0 : index
    %c0_77 = arith.constant 0 : index
    %102 = vector.load %arg39[%c0_76, %c0_77] : memref<512x512xbf16, #tpu.memory_space<vmem>>, vector<256x512xbf16>
    %103 = arith.truncf %40 : vector<8x256xf32> to vector<8x256xbf16>
    %cst_78 = arith.constant dense<0.000000e+00> : vector<8x512xf32>
    %104 = tpu.matmul %103, %102, %cst_78 {dimension_numbers = #tpu.dot_dimension_numbers<[1], [0], [0], [1], [0, 0, 1, 1], [], []>} : vector<8x256xbf16>, vector<256x512xbf16>, vector<8x512xf32> -> vector<8x512xf32>
    %c256_79 = arith.constant 256 : index
    %c0_80 = arith.constant 0 : index
    %105 = vector.load %arg39[%c256_79, %c0_80] : memref<512x512xbf16, #tpu.memory_space<vmem>>, vector<256x512xbf16>
    %106 = arith.truncf %45 : vector<8x256xf32> to vector<8x256xbf16>
    %cst_81 = arith.constant dense<0.000000e+00> : vector<8x512xf32>
    %107 = tpu.matmul %106, %105, %cst_81 {dimension_numbers = #tpu.dot_dimension_numbers<[1], [0], [0], [1], [0, 0, 1, 1], [], []>} : vector<8x256xbf16>, vector<256x512xbf16>, vector<8x512xf32> -> vector<8x512xf32>
    %108 = arith.addf %104, %107 : vector<8x512xf32>
    %c0_82 = arith.constant 0 : index
    %c0_83 = arith.constant 0 : index
    %109 = vector.load %arg9[%c0_82, %c0_83] : memref<1x512xf32, #tpu.memory_space<vmem>>, vector<1x512xf32>
    %110 = vector.broadcast %109 : vector<1x512xf32> to vector<8x512xf32>
    %111 = arith.addf %108, %110 : vector<8x512xf32>
    %c0_84 = arith.constant 0 : index
    %c0_85 = arith.constant 0 : index
    %112 = vector.load %arg30[%c0_84, %c0_85] : memref<8x512xf32, #tpu.memory_space<vmem>>, vector<8x512xf32>
    tpu.vector_store %arg30[%c0_84, %c0_85], %111 {strides = array<i32>} : memref<8x512xf32, #tpu.memory_space<vmem>>, vector<8x512xf32>,
    %c0_86 = arith.constant 0 : index
    %c0_87 = arith.constant 0 : index
    %113 = vector.load %arg39[%c0_86, %c0_87] : memref<512x512xbf16, #tpu.memory_space<vmem>>, vector<256x512xbf16>
    %114 = arith.truncf %42 : vector<8x256xf32> to vector<8x256xbf16>
    %cst_88 = arith.constant dense<0.000000e+00> : vector<8x512xf32>
    %115 = tpu.matmul %114, %113, %cst_88 {dimension_numbers = #tpu.dot_dimension_numbers<[1], [0], [0], [1], [0, 0, 1, 1], [], []>} : vector<8x256xbf16>, vector<256x512xbf16>, vector<8x512xf32> -> vector<8x512xf32>
    %c256_89 = arith.constant 256 : index
    %c0_90 = arith.constant 0 : index
    %116 = vector.load %arg39[%c256_89, %c0_90] : memref<512x512xbf16, #tpu.memory_space<vmem>>, vector<256x512xbf16>
    %117 = arith.truncf %45 : vector<8x256xf32> to vector<8x256xbf16>
    %cst_91 = arith.constant dense<0.000000e+00> : vector<8x512xf32>
    %118 = tpu.matmul %117, %116, %cst_91 {dimension_numbers = #tpu.dot_dimension_numbers<[1], [0], [0], [1], [0, 0, 1, 1], [], []>} : vector<8x256xbf16>, vector<256x512xbf16>, vector<8x512xf32> -> vector<8x512xf32>
    %119 = arith.addf %115, %118 : vector<8x512xf32>
    %c0_92 = arith.constant 0 : index
    %c0_93 = arith.constant 0 : index
    %120 = vector.load %arg9[%c0_92, %c0_93] : memref<1x512xf32, #tpu.memory_space<vmem>>, vector<1x512xf32>
    %121 = vector.broadcast %120 : vector<1x512xf32> to vector<8x512xf32>
    %122 = arith.addf %119, %121 : vector<8x512xf32>
    %c0_94 = arith.constant 0 : index
    %c0_95 = arith.constant 0 : index
    %123 = vector.load %arg31[%c0_94, %c0_95] : memref<8x512xf32, #tpu.memory_space<vmem>>, vector<8x512xf32>
    tpu.vector_store %arg31[%c0_94, %c0_95], %122 {strides = array<i32>} : memref<8x512xf32, #tpu.memory_space<vmem>>, vector<8x512xf32>,
    %c6_i32_96 = arith.constant 6 : i32
    %124 = tpu.memref_slice %arg42[%c6_i32_96] : memref<8x!tpu.dma_semaphore, #tpu.memory_space<semaphore_mem>> -> memref<1x!tpu.dma_semaphore, #tpu.memory_space<semaphore_mem>>
    %125 = tpu.memref_squeeze %124 : memref<1x!tpu.dma_semaphore, #tpu.memory_space<semaphore_mem>> -> memref<!tpu.dma_semaphore, #tpu.memory_space<semaphore_mem>>
    tpu.wait_dma2 semaphore(%125 : memref<!tpu.dma_semaphore, #tpu.memory_space<semaphore_mem>>) src(%arg18 : memref<1536x1024xbf16, #tpu.memory_space<any>>) dst(%arg40 : memref<1536x1024xbf16, #tpu.memory_space<vmem>>)
    %c0_97 = arith.constant 0 : index
    %c0_98 = arith.constant 0 : index
    %126 = vector.load %arg40[%c0_97, %c0_98] : memref<1536x1024xbf16, #tpu.memory_space<vmem>>, vector<512x1024xbf16>
    %127 = arith.truncf %23 : vector<8x512xf32> to vector<8x512xbf16>
    %cst_99 = arith.constant dense<0.000000e+00> : vector<8x1024xf32>
    %128 = tpu.matmul %127, %126, %cst_99 {dimension_numbers = #tpu.dot_dimension_numbers<[1], [0], [0], [1], [0, 0, 1, 1], [], []>} : vector<8x512xbf16>, vector<512x1024xbf16>, vector<8x1024xf32> -> vector<8x1024xf32>
    %c512 = arith.constant 512 : index
    %c0_100 = arith.constant 0 : index
    %129 = vector.load %arg40[%c512, %c0_100] : memref<1536x1024xbf16, #tpu.memory_space<vmem>>, vector<512x1024xbf16>
    %130 = arith.truncf %31 : vector<8x512xf32> to vector<8x512xbf16>
    %cst_101 = arith.constant dense<0.000000e+00> : vector<8x1024xf32>
    %131 = tpu.matmul %130, %129, %cst_101 {dimension_numbers = #tpu.dot_dimension_numbers<[1], [0], [0], [1], [0, 0, 1, 1], [], []>} : vector<8x512xbf16>, vector<512x1024xbf16>, vector<8x1024xf32> -> vector<8x1024xf32>
    %132 = arith.addf %128, %131 : vector<8x1024xf32>
    %c1024 = arith.constant 1024 : index
    %c0_102 = arith.constant 0 : index
    %133 = vector.load %arg40[%c1024, %c0_102] : memref<1536x1024xbf16, #tpu.memory_space<vmem>>, vector<512x1024xbf16>
    %134 = arith.truncf %39 : vector<8x512xf32> to vector<8x512xbf16>
    %cst_103 = arith.constant dense<0.000000e+00> : vector<8x1024xf32>
    %135 = tpu.matmul %134, %133, %cst_103 {dimension_numbers = #tpu.dot_dimension_numbers<[1], [0], [0], [1], [0, 0, 1, 1], [], []>} : vector<8x512xbf16>, vector<512x1024xbf16>, vector<8x1024xf32> -> vector<8x1024xf32>
    %136 = arith.addf %132, %135 : vector<8x1024xf32>
    %c0_104 = arith.constant 0 : index
    %c0_105 = arith.constant 0 : index
    %137 = vector.load %arg10[%c0_104, %c0_105] : memref<1x1024xf32, #tpu.memory_space<vmem>>, vector<1x1024xf32>
    %138 = vector.broadcast %137 : vector<1x1024xf32> to vector<8x1024xf32>
    %139 = arith.addf %136, %138 : vector<8x1024xf32>
    %cst_106 = arith.constant 0.000000e+00 : f32
    %140 = vector.broadcast %cst_106 : f32 to vector<8x1024xf32>
    %141 = arith.maximumf %139, %140 : vector<8x1024xf32>
    %c7_i32_107 = arith.constant 7 : i32
    %142 = tpu.memref_slice %arg42[%c7_i32_107] : memref<8x!tpu.dma_semaphore, #tpu.memory_space<semaphore_mem>> -> memref<1x!tpu.dma_semaphore, #tpu.memory_space<semaphore_mem>>
    %143 = tpu.memref_squeeze %142 : memref<1x!tpu.dma_semaphore, #tpu.memory_space<semaphore_mem>> -> memref<!tpu.dma_semaphore, #tpu.memory_space<semaphore_mem>>
    tpu.wait_dma2 semaphore(%143 : memref<!tpu.dma_semaphore, #tpu.memory_space<semaphore_mem>>) src(%arg19 : memref<1024x1792xbf16, #tpu.memory_space<any>>) dst(%arg41 : memref<1024x1792xbf16, #tpu.memory_space<vmem>>)
    %c0_108 = arith.constant 0 : index
    %c0_109 = arith.constant 0 : index
    %144 = vector.load %arg41[%c0_108, %c0_109] : memref<1024x1792xbf16, #tpu.memory_space<vmem>>, vector<1024x1792xbf16>
    %145 = arith.truncf %141 : vector<8x1024xf32> to vector<8x1024xbf16>
    %cst_110 = arith.constant dense<0.000000e+00> : vector<8x1792xf32>
    %146 = tpu.matmul %145, %144, %cst_110 {dimension_numbers = #tpu.dot_dimension_numbers<[1], [0], [0], [1], [0, 0, 1, 1], [], []>} : vector<8x1024xbf16>, vector<1024x1792xbf16>, vector<8x1792xf32> -> vector<8x1792xf32>
    %c0_111 = arith.constant 0 : index
    %c0_112 = arith.constant 0 : index
    %147 = vector.load %arg11[%c0_111, %c0_112] : memref<1x1792xf32, #tpu.memory_space<vmem>>, vector<1x1792xf32>
    %148 = vector.broadcast %147 : vector<1x1792xf32> to vector<8x1792xf32>
    %149 = arith.addf %146, %148 : vector<8x1792xf32>
    %150 = vector.extract_strided_slice %149 {offsets = [0, 0], sizes = [8, 768], strides = [1, 1]} : vector<8x1792xf32> to vector<8x768xf32>
    %c0_113 = arith.constant 0 : index
    %c0_114 = arith.constant 0 : index
    %151 = vector.load %arg32[%c0_113, %c0_114] : memref<8x768xf32, #tpu.memory_space<vmem>>, vector<8x768xf32>
    tpu.vector_store %arg32[%c0_113, %c0_114], %150 {strides = array<i32>} : memref<8x768xf32, #tpu.memory_space<vmem>>, vector<8x768xf32>,
    %152 = vector.extract_strided_slice %149 {offsets = [0, 768], sizes = [8, 1024], strides = [1, 1]} : vector<8x1792xf32> to vector<8x1024xf32>
    %c0_115 = arith.constant 0 : index
    %c0_116 = arith.constant 0 : index
    %153 = vector.load %arg33[%c0_115, %c0_116] : memref<8x1024xf32, #tpu.memory_space<vmem>>, vector<8x1024xf32>
    tpu.vector_store %arg33[%c0_115, %c0_116], %152 {strides = array<i32>} : memref<8x1024xf32, #tpu.memory_space<vmem>>, vector<8x1024xf32>,
    return
  }
  func.func @transform_0(%arg0: i32) -> (i32, i32) {
    %c0_i32 = arith.constant 0 : i32
    %c0_i32_0 = arith.constant 0 : i32
    %c0_i32_1 = arith.constant 0 : i32
    return %c0_i32, %c0_i32_0 : i32, i32
  }
  func.func @transform_1(%arg0: i32) -> (i32, i32) {
    %c0_i32 = arith.constant 0 : i32
    %c0_i32_0 = arith.constant 0 : i32
    %c0_i32_1 = arith.constant 0 : i32
    return %c0_i32, %c0_i32_0 : i32, i32
  }
  func.func @transform_2(%arg0: i32) -> (i32, i32) {
    %c0_i32 = arith.constant 0 : i32
    %c0_i32_0 = arith.constant 0 : i32
    %c0_i32_1 = arith.constant 0 : i32
    return %c0_i32, %c0_i32_0 : i32, i32
  }
  func.func @transform_3(%arg0: i32) -> (i32, i32) {
    %c0_i32 = arith.constant 0 : i32
    %c0_i32_0 = arith.constant 0 : i32
    %c0_i32_1 = arith.constant 0 : i32
    return %c0_i32, %c0_i32_0 : i32, i32
  }
  func.func @transform_4(%arg0: i32) -> (i32, i32) {
    %c0_i32 = arith.constant 0 : i32
    %c0_i32_0 = arith.constant 0 : i32
    %c0_i32_1 = arith.constant 0 : i32
    return %c0_i32, %c0_i32_0 : i32, i32
  }
  func.func @transform_5(%arg0: i32) -> (i32, i32) {
    %c0_i32 = arith.constant 0 : i32
    %c0_i32_0 = arith.constant 0 : i32
    %c0_i32_1 = arith.constant 0 : i32
    return %c0_i32, %c0_i32_0 : i32, i32
  }
  func.func @transform_6(%arg0: i32) -> (i32, i32) {
    %c0_i32 = arith.constant 0 : i32
    %c0_i32_0 = arith.constant 0 : i32
    %c0_i32_1 = arith.constant 0 : i32
    return %c0_i32, %c0_i32_0 : i32, i32
  }
  func.func @transform_7(%arg0: i32) -> (i32, i32) {
    %c0_i32 = arith.constant 0 : i32
    %c0_i32_0 = arith.constant 0 : i32
    %c0_i32_1 = arith.constant 0 : i32
    return %c0_i32, %c0_i32_0 : i32, i32
  }
  func.func @transform_8(%arg0: i32) -> (i32, i32) {
    %c0_i32 = arith.constant 0 : i32
    %c0_i32_0 = arith.constant 0 : i32
    %c0_i32_1 = arith.constant 0 : i32
    return %c0_i32, %c0_i32_0 : i32, i32
  }
  func.func @transform_9(%arg0: i32) -> (i32, i32) {
    %c0_i32 = arith.constant 0 : i32
    %c0_i32_0 = arith.constant 0 : i32
    %c0_i32_1 = arith.constant 0 : i32
    return %c0_i32, %c0_i32_0 : i32, i32
  }
  func.func @transform_10(%arg0: i32) -> (i32, i32) {
    %c0_i32 = arith.constant 0 : i32
    %c0_i32_0 = arith.constant 0 : i32
    %c0_i32_1 = arith.constant 0 : i32
    return %c0_i32, %c0_i32_0 : i32, i32
  }
  func.func @transform_19(%arg0: i32) -> (i32, i32) {
    %c0_i32 = arith.constant 0 : i32
    %c0_i32_0 = arith.constant 0 : i32
    %c0_i32_1 = arith.constant 0 : i32
    return %c0_i32, %c0_i32_0 : i32, i32
  }
  func.func @transform_20(%arg0: i32) -> (i32, i32) {
    %c0_i32 = arith.constant 0 : i32
    %c0_i32_0 = arith.constant 0 : i32
    %c0_i32_1 = arith.constant 0 : i32
    return %c0_i32, %c0_i32_0 : i32, i32
  }
  func.func @transform_21(%arg0: i32) -> (i32, i32) {
    %c0_i32 = arith.constant 0 : i32
    %c0_i32_0 = arith.constant 0 : i32
    %c0_i32_1 = arith.constant 0 : i32
    return %c0_i32, %c0_i32_0 : i32, i32
  }
  func.func @transform_22(%arg0: i32) -> (i32, i32) {
    %c0_i32 = arith.constant 0 : i32
    %c0_i32_0 = arith.constant 0 : i32
    %c0_i32_1 = arith.constant 0 : i32
    return %c0_i32, %c0_i32_0 : i32, i32
  }
  func.func @transform_23(%arg0: i32) -> (i32, i32) {
    %c0_i32 = arith.constant 0 : i32
    %c0_i32_0 = arith.constant 0 : i32
    %c0_i32_1 = arith.constant 0 : i32
    return %c0_i32, %c0_i32_0 : i32, i32
  }
  func.func @transform_24(%arg0: i32) -> (i32, i32) {
    %c0_i32 = arith.constant 0 : i32
    %c0_i32_0 = arith.constant 0 : i32
    %c0_i32_1 = arith.constant 0 : i32
    return %c0_i32, %c0_i32_0 : i32, i32
  }
  func.func @transform_25(%arg0: i32) -> (i32, i32) {
    %c0_i32 = arith.constant 0 : i32
    %c0_i32_0 = arith.constant 0 : i32
    %c0_i32_1 = arith.constant 0 : i32
    return %c0_i32, %c0_i32_0 : i32, i32
  }
  func.func @transform_26(%arg0: i32) -> (i32, i32) {
    %c0_i32 = arith.constant 0 : i32
    %c0_i32_0 = arith.constant 0 : i32
    %c0_i32_1 = arith.constant 0 : i32
    return %c0_i32, %c0_i32_0 : i32, i32
  }
  func.func @transform_27(%arg0: i32) -> (i32, i32) {
    %c0_i32 = arith.constant 0 : i32
    %c0_i32_0 = arith.constant 0 : i32
    %c0_i32_1 = arith.constant 0 : i32
    return %c0_i32, %c0_i32_0 : i32, i32
  }
  func.func @transform_28(%arg0: i32) -> (i32, i32) {
    %c0_i32 = arith.constant 0 : i32
    %c0_i32_0 = arith.constant 0 : i32
    %c0_i32_1 = arith.constant 0 : i32
    return %c0_i32, %c0_i32_0 : i32, i32
  }
  func.func @transform_29(%arg0: i32) -> (i32, i32) {
    %c0_i32 = arith.constant 0 : i32
    %c0_i32_0 = arith.constant 0 : i32
    %c0_i32_1 = arith.constant 0 : i32
    return %c0_i32, %c0_i32_0 : i32, i32
  }
  func.func @transform_30(%arg0: i32) -> (i32, i32) {
    %c0_i32 = arith.constant 0 : i32
    %c0_i32_0 = arith.constant 0 : i32
    %c0_i32_1 = arith.constant 0 : i32
    return %c0_i32, %c0_i32_0 : i32, i32
  }
  func.func @transform_31(%arg0: i32) -> (i32, i32) {
    %c0_i32 = arith.constant 0 : i32
    %c0_i32_0 = arith.constant 0 : i32
    %c0_i32_1 = arith.constant 0 : i32
    return %c0_i32, %c0_i32_0 : i32, i32
  }
  func.func @transform_32(%arg0: i32) -> (i32, i32) {
    %c0_i32 = arith.constant 0 : i32
    %c0_i32_0 = arith.constant 0 : i32
    %c0_i32_1 = arith.constant 0 : i32
    return %c0_i32, %c0_i32_0 : i32, i32
  }
}

</mosaic_0001>

<llo_original>
// kernel: cufusion_forward.1
$region0: #{cufusion_forward.1}
  #allocation0 [shape = 'u32[]', space=smem, size = 0x4, offset = 0x4, fixed_abs, tag = 'smem constant byte address 0x4 - core index']
  #allocation1 [shape = 'u32[144,128]{1,0:T(1,128)}', space=vmem, size = 0x12000, scoped, tag = 'internal scratch']
  #allocation2 [shape = 'bf16[768,512]{1,0:T(16,128)(2,1)}', space=vmem, size = 0xc0000, scoped, tag = 'scratch operand']
  #allocation3 [shape = 'bf16[1024,512]{1,0:T(16,128)(2,1)}', space=vmem, size = 0x100000, scoped, tag = 'scratch operand']
  #allocation4 [shape = 'bf16[512,512]{1,0:T(16,128)(2,1)}', space=vmem, size = 0x80000, scoped, tag = 'scratch operand']
  #allocation5 [shape = 'bf16[512,768]{1,0:T(16,128)(2,1)}', space=vmem, size = 0xc0000, scoped, tag = 'scratch operand']
  #allocation6 [shape = 'bf16[512,1024]{1,0:T(16,128)(2,1)}', space=vmem, size = 0x100000, scoped, tag = 'scratch operand']
  #allocation7 [shape = 'bf16[512,512]{1,0:T(16,128)(2,1)}', space=vmem, size = 0x80000, scoped, tag = 'scratch operand']
  #allocation8 [shape = 'bf16[1536,1024]{1,0:T(16,128)(2,1)}', space=vmem, size = 0x300000, scoped, tag = 'scratch operand']
  #allocation9 [shape = 'bf16[1024,1792]{1,0:T(16,128)(2,1)}', space=vmem, size = 0x380000, scoped, tag = 'scratch operand']
  #allocation10 [shape = 's32[8]{0}', space=sflag, size = 0x20, scoped, tag = 'scratch operand']
  #allocation24 [shape = 's32[]', space=sflag, size = 0x4, offset = 0, fixed_abs, tag = 'sflag constant byte address 0x0 - dummy sync flag']
  #allocation26 [shape = 's32[]', space=sflag, size = 0x4, offset = 0, fixed_abs, tag = 'sflag constant byte address 0x0 - dummy sync flag']
  #allocation28 [shape = 's32[]', space=sflag, size = 0x4, offset = 0, fixed_abs, tag = 'sflag constant byte address 0x0 - dummy sync flag']
  #allocation30 [shape = 's32[]', space=sflag, size = 0x4, offset = 0, fixed_abs, tag = 'sflag constant byte address 0x0 - dummy sync flag']
  #allocation32 [shape = 's32[]', space=sflag, size = 0x4, offset = 0, fixed_abs, tag = 'sflag constant byte address 0x0 - dummy sync flag']
  #allocation34 [shape = 's32[]', space=sflag, size = 0x4, offset = 0, fixed_abs, tag = 'sflag constant byte address 0x0 - dummy sync flag']
  #allocation36 [shape = 's32[]', space=sflag, size = 0x4, offset = 0, fixed_abs, tag = 'sflag constant byte address 0x0 - dummy sync flag']
  #allocation38 [shape = 's32[]', space=sflag, size = 0x4, offset = 0, fixed_abs, tag = 'sflag constant byte address 0x0 - dummy sync flag']
  %s0 = inlined_call_operand.smem [shape: u32[33], index: -1, kind: input, shape index: {}]
  %s1 = sld [smem:[%s0]]
  %s2 = scalar_lea.smem %s0, 1
  %s3 = sld [smem:[%s2]]
  %s4 = scalar_lea.smem %s0, 2
  %s5 = sld [smem:[%s4]]
  %s6 = scalar_lea.smem %s0, 3
  %s7 = sld [smem:[%s6]]
  %s8 = scalar_lea.smem %s0, 4
  %s9 = sld [smem:[%s8]]
  %s10 = scalar_lea.smem %s0, 5
  %s11 = sld [smem:[%s10]]
  %s12 = scalar_lea.smem %s0, 6
  %s13 = sld [smem:[%s12]]
  %s14 = scalar_lea.smem %s0, 7
  %s15 = sld [smem:[%s14]]
  %s16 = scalar_lea.smem %s0, 8
  %s17 = sld [smem:[%s16]]
  %s18 = scalar_lea.smem %s0, 9
  %s19 = sld [smem:[%s18]]
  %s20 = scalar_lea.smem %s0, 10
  %s21 = sld [smem:[%s20]]
  %s22 = scalar_lea.smem %s0, 11
  %s23 = sld [smem:[%s22]]
  %s24 = scalar_lea.smem %s0, 12
  %s25 = sld [smem:[%s24]]
  %s26 = scalar_lea.smem %s0, 13
  %s27 = sld [smem:[%s26]]
  %s28 = scalar_lea.smem %s0, 14
  %s29 = sld [smem:[%s28]]
  %s30 = scalar_lea.smem %s0, 15
  %s31 = sld [smem:[%s30]]
  %s32 = scalar_lea.smem %s0, 16
  %s33 = sld [smem:[%s32]]
  %s34 = scalar_lea.smem %s0, 17
  %s35 = sld [smem:[%s34]]
  %s36 = scalar_lea.smem %s0, 18
  %s37 = sld [smem:[%s36]]
  %s38 = scalar_lea.smem %s0, 19
  %s39 = sld [smem:[%s38]]
  %s40 = scalar_lea.smem %s0, 20
  %s41 = sld [smem:[%s40]]
  %s42 = scalar_lea.smem %s0, 21
  %s43 = sld [smem:[%s42]]
  %s44 = scalar_lea.smem %s0, 22
  %s45 = sld [smem:[%s44]]
  %s46 = scalar_lea.smem %s0, 23
  %s47 = sld [smem:[%s46]]
  %s48 = scalar_lea.smem %s0, 24
  %s49 = sld [smem:[%s48]]
  %s50 = scalar_lea.smem %s0, 25
  %s51 = sld [smem:[%s50]]
  %s52 = scalar_lea.smem %s0, 26
  %s53 = sld [smem:[%s52]]
  %s54 = scalar_lea.smem %s0, 27
  %s55 = sld [smem:[%s54]]
  %s56 = scalar_lea.smem %s0, 28
  %s57 = sld [smem:[%s56]]
  %s58 = scalar_lea.smem %s0, 29
  %s59 = sld [smem:[%s58]]
  %s60 = scalar_lea.smem %s0, 30
  %s61 = sld [smem:[%s60]]
  %s62 = scalar_lea.smem %s0, 31
  %s63 = sld [smem:[%s62]]
  %s64 = scalar_lea.smem %s0, 32
  %s65 = sld [smem:[%s64]]
  %66 = xla_tuple %s39, %s41, %s43, %s45, %s47, %s49, %s51, %s53, %s55, %s57, %s59, %s61, %s63, %s65
  %s67 = sld [smem:[#allocation0]]
  $region190: #{cufusion_forward.1} parent=0
    _
  %s69 = ssub.s32 1, %s67
  %s70 = scalar_select 0, %s69, %s67
  $region1: #{cufusion_forward.1} parent=0
    #allocation11 [shape = 'u8[2048]{0}', space=vmem, size = 0x800, scoped, tag = 'input window, operand 3, single buffered']
    #allocation12 [shape = 's32[1]{0}', space=sflag, size = 0x4, scoped, tag = 'scoped memory for cufusion_forward.1']
    #allocation13 [shape = 'u8[2048]{0}', space=vmem, size = 0x800, scoped, tag = 'input window, operand 4, single buffered']
    #allocation14 [shape = 's32[1]{0}', space=sflag, size = 0x4, scoped, tag = 'scoped memory for cufusion_forward.1']
    #allocation15 [shape = 'u8[2048]{0}', space=vmem, size = 0x800, scoped, tag = 'input window, operand 5, single buffered']
    #allocation16 [shape = 'u8[3072]{0}', space=vmem, size = 0xc00, scoped, tag = 'input window, operand 6, single buffered']
    #allocation17 [shape = 's32[1]{0}', space=sflag, size = 0x4, scoped, tag = 'scoped memory for cufusion_forward.1']
    #allocation18 [shape = 'u8[4096]{0}', space=vmem, size = 0x1000, scoped, tag = 'input window, operand 7, single buffered']
    #allocation19 [shape = 'u8[2048]{0}', space=vmem, size = 0x800, scoped, tag = 'input window, operand 8, single buffered']
    #allocation20 [shape = 's32[1]{0}', space=sflag, size = 0x4, scoped, tag = 'scoped memory for cufusion_forward.1']
    #allocation21 [shape = 'u8[4096]{0}', space=vmem, size = 0x1000, scoped, tag = 'input window, operand 9, single buffered']
    #allocation22 [shape = 'u8[7168]{0}', space=vmem, size = 0x1c00, scoped, tag = 'input window, operand 10, single buffered']
    #allocation23 [shape = 's32[1]{0}', space=sflag, size = 0x4, scoped, tag = 'scoped memory for cufusion_forward.1']
    #allocation25 [shape = 'u32[9]{0}', space=smem, size = 0x24, scoped, tag = 'DMA stride descriptor']
    #allocation27 [shape = 'u32[9]{0}', space=smem, size = 0x24, scoped, tag = 'DMA stride descriptor']
    #allocation29 [shape = 'u32[9]{0}', space=smem, size = 0x24, scoped, tag = 'DMA stride descriptor']
    #allocation31 [shape = 'u32[9]{0}', space=smem, size = 0x24, scoped, tag = 'DMA stride descriptor']
    #allocation33 [shape = 'u32[9]{0}', space=smem, size = 0x24, scoped, tag = 'DMA stride descriptor']
    #allocation35 [shape = 'u32[9]{0}', space=smem, size = 0x24, scoped, tag = 'DMA stride descriptor']
    #allocation37 [shape = 'u32[9]{0}', space=smem, size = 0x24, scoped, tag = 'DMA stride descriptor']
    #allocation39 [shape = 'u32[9]{0}', space=smem, size = 0x24, scoped, tag = 'DMA stride descriptor']
    %71 = vsyncpa [#allocation12], 0
    %72 = vsyncpa [#allocation14], 0
    %73 = vsyncpa [#allocation17], 0
    %74 = vsyncpa [#allocation20], 0
    %75 = vsyncpa [#allocation23], 0
    // Predicated region
    $region2: #{cufusion_forward.1} parent=1 // pred_check
      _
    $region3: #{cufusion_forward.1} parent=1 // pred_check_branch
      %77 = sbr.rel (0) target = $region5
    $region4: #{cufusion_forward.1} parent=1 // pred_region
      _
    $region5: #{cufusion_forward.1} parent=1 // pred_fallthru
      _
    // Predicated region
    $region6: #{cufusion_forward.1} parent=1 // pred_check
      _
    $region7: #{cufusion_forward.1} parent=1 // pred_check_branch
      %79 = sbr.rel (0) target = $region9
    $region8: #{cufusion_forward.1} parent=1 // pred_region
      _
    $region9: #{cufusion_forward.1} parent=1 // pred_fallthru
      _
    // Predicated region
    $region10: #{cufusion_forward.1} parent=1 // pred_check
      _
    $region11: #{cufusion_forward.1} parent=1 // pred_check_branch
      %81 = sbr.rel (0) target = $region13
    $region12: #{cufusion_forward.1} parent=1 // pred_region
      _
    $region13: #{cufusion_forward.1} parent=1 // pred_fallthru
      _
    // Predicated region
    $region14: #{cufusion_forward.1} parent=1 // pred_check
      _
    $region15: #{cufusion_forward.1} parent=1 // pred_check_branch
      %83 = sbr.rel (0) target = $region17
    $region16: #{cufusion_forward.1} parent=1 // pred_region
      %s85 = ssub.s32 64, 64
      %86 = vsyncadd [#allocation12], %s85
      %s88 = sshll.u32 [#allocation11], 4
      %s89 = int_to_ptr.vmem [resolvable:$true] %s88
      %91 = dma.hbm_to_vmem [thread:$0]  %s7, 64, %s89, [#allocation12]
    $region17: #{cufusion_forward.1} parent=1 // pred_fallthru
      _
    // Predicated region
    $region18: #{cufusion_forward.1} parent=1 // pred_check
      _
    $region19: #{cufusion_forward.1} parent=1 // pred_check_branch
      %93 = sbr.rel (0) target = $region21
    $region20: #{cufusion_forward.1} parent=1 // pred_region
      %s95 = ssub.s32 64, 64
      %96 = vsyncadd [#allocation14], %s95
      %s98 = sshll.u32 [#allocation13], 4
      %s99 = int_to_ptr.vmem [resolvable:$true] %s98
      %101 = dma.hbm_to_vmem [thread:$0]  %s9, 64, %s99, [#allocation14]
    $region21: #{cufusion_forward.1} parent=1 // pred_fallthru
      _
    // Predicated region
    $region22: #{cufusion_forward.1} parent=1 // pred_check
      _
    $region23: #{cufusion_forward.1} parent=1 // pred_check_branch
      %103 = sbr.rel (0) target = $region25
    $region24: #{cufusion_forward.1} parent=1 // pred_region
      %s105 = ssub.s32 64, 64
      %106 = vsyncadd [#allocation14], %s105
      %s108 = sshll.u32 [#allocation15], 4
      %s109 = int_to_ptr.vmem [resolvable:$true] %s108
      %111 = dma.hbm_to_vmem [thread:$0]  %s11, 64, %s109, [#allocation14]
    $region25: #{cufusion_forward.1} parent=1 // pred_fallthru
      _
    // Predicated region
    $region26: #{cufusion_forward.1} parent=1 // pred_check
      _
    $region27: #{cufusion_forward.1} parent=1 // pred_check_branch
      %113 = sbr.rel (0) target = $region29
    $region28: #{cufusion_forward.1} parent=1 // pred_region
      %s115 = ssub.s32 96, 96
      %116 = vsyncadd [#allocation17], %s115
      %s118 = sshll.u32 [#allocation16], 4
      %s119 = int_to_ptr.vmem [resolvable:$true] %s118
      %121 = dma.hbm_to_vmem [thread:$0]  %s13, 96, %s119, [#allocation17]
    $region29: #{cufusion_forward.1} parent=1 // pred_fallthru
      _
    // Predicated region
    $region30: #{cufusion_forward.1} parent=1 // pred_check
      _
    $region31: #{cufusion_forward.1} parent=1 // pred_check_branch
      %123 = sbr.rel (0) target = $region33
    $region32: #{cufusion_forward.1} parent=1 // pred_region
      %s125 = ssub.s32 128, 128
      %126 = vsyncadd [#allocation17], %s125
      %s128 = sshll.u32 [#allocation18], 4
      %s129 = int_to_ptr.vmem [resolvable:$true] %s128
      %131 = dma.hbm_to_vmem [thread:$0]  %s15, 128, %s129, [#allocation17]
    $region33: #{cufusion_forward.1} parent=1 // pred_fallthru
      _
    // Predicated region
    $region34: #{cufusion_forward.1} parent=1 // pred_check
      _
    $region35: #{cufusion_forward.1} parent=1 // pred_check_branch
      %133 = sbr.rel (0) target = $region37
    $region36: #{cufusion_forward.1} parent=1 // pred_region
      %s135 = ssub.s32 64, 64
      %136 = vsyncadd [#allocation20], %s135
      %s138 = sshll.u32 [#allocation19], 4
      %s139 = int_to_ptr.vmem [resolvable:$true] %s138
      %141 = dma.hbm_to_vmem [thread:$0]  %s17, 64, %s139, [#allocation20]
    $region37: #{cufusion_forward.1} parent=1 // pred_fallthru
      _
    // Predicated region
    $region38: #{cufusion_forward.1} parent=1 // pred_check
      _
    $region39: #{cufusion_forward.1} parent=1 // pred_check_branch
      %143 = sbr.rel (0) target = $region41
    $region40: #{cufusion_forward.1} parent=1 // pred_region
      %s145 = ssub.s32 128, 128
      %146 = vsyncadd [#allocation20], %s145
      %s148 = sshll.u32 [#allocation21], 4
      %s149 = int_to_ptr.vmem [resolvable:$true] %s148
      %151 = dma.hbm_to_vmem [thread:$0]  %s19, 128, %s149, [#allocation20]
    $region41: #{cufusion_forward.1} parent=1 // pred_fallthru
      _
    // Predicated region
    $region42: #{cufusion_forward.1} parent=1 // pred_check
      _
    $region43: #{cufusion_forward.1} parent=1 // pred_check_branch
      %153 = sbr.rel (0) target = $region45
    $region44: #{cufusion_forward.1} parent=1 // pred_region
      %s155 = ssub.s32 224, 224
      %156 = vsyncadd [#allocation23], %s155
      %s158 = sshll.u32 [#allocation22], 4
      %s159 = int_to_ptr.vmem [resolvable:$true] %s158
      %161 = dma.hbm_to_vmem [thread:$0]  %s21, 224, %s159, [#allocation23]
    $region45: #{cufusion_forward.1} parent=1 // pred_fallthru
      _
    // Predicated region
    $region46: #{cufusion_forward.1} parent=1 // pred_check
      _
    $region47: #{cufusion_forward.1} parent=1 // pred_check_branch
      %163 = sbr.rel (0) target = $region49
    $region48: #{cufusion_forward.1} parent=1 // pred_region
      %164 = dma.done [#allocation12], 64
    $region49: #{cufusion_forward.1} parent=1 // pred_fallthru
      _
    // Predicated region
    $region50: #{cufusion_forward.1} parent=1 // pred_check
      _
    $region51: #{cufusion_forward.1} parent=1 // pred_check_branch
      %166 = sbr.rel (0) target = $region53
    $region52: #{cufusion_forward.1} parent=1 // pred_region
      %167 = dma.done [#allocation14], 64
    $region53: #{cufusion_forward.1} parent=1 // pred_fallthru
      _
    // Predicated region
    $region54: #{cufusion_forward.1} parent=1 // pred_check
      _
    $region55: #{cufusion_forward.1} parent=1 // pred_check_branch
      %169 = sbr.rel (0) target = $region57
    $region56: #{cufusion_forward.1} parent=1 // pred_region
      %170 = dma.done [#allocation14], 64
    $region57: #{cufusion_forward.1} parent=1 // pred_fallthru
      _
    // Predicated region
    $region58: #{cufusion_forward.1} parent=1 // pred_check
      _
    $region59: #{cufusion_forward.1} parent=1 // pred_check_branch
      %172 = sbr.rel (0) target = $region61
    $region60: #{cufusion_forward.1} parent=1 // pred_region
      %173 = dma.done [#allocation17], 96
    $region61: #{cufusion_forward.1} parent=1 // pred_fallthru
      _
    // Predicated region
    $region62: #{cufusion_forward.1} parent=1 // pred_check
      _
    $region63: #{cufusion_forward.1} parent=1 // pred_check_branch
      %175 = sbr.rel (0) target = $region65
    $region64: #{cufusion_forward.1} parent=1 // pred_region
      %176 = dma.done [#allocation17], 128
    $region65: #{cufusion_forward.1} parent=1 // pred_fallthru
      _
    // Predicated region
    $region66: #{cufusion_forward.1} parent=1 // pred_check
      _
    $region67: #{cufusion_forward.1} parent=1 // pred_check_branch
      %178 = sbr.rel (0) target = $region69
    $region68: #{cufusion_forward.1} parent=1 // pred_region
      %179 = dma.done [#allocation20], 64
    $region69: #{cufusion_forward.1} parent=1 // pred_fallthru
      _
    // Predicated region
    $region70: #{cufusion_forward.1} parent=1 // pred_check
      _
    $region71: #{cufusion_forward.1} parent=1 // pred_check_branch
      %181 = sbr.rel (0) target = $region73
    $region72: #{cufusion_forward.1} parent=1 // pred_region
      %182 = dma.done [#allocation20], 128
    $region73: #{cufusion_forward.1} parent=1 // pred_fallthru
      _
    // Predicated region
    $region74: #{cufusion_forward.1} parent=1 // pred_check
      _
    $region75: #{cufusion_forward.1} parent=1 // pred_check_branch
      %184 = sbr.rel (0) target = $region77
    $region76: #{cufusion_forward.1} parent=1 // pred_region
      %185 = dma.done [#allocation23], 224
    $region77: #{cufusion_forward.1} parent=1 // pred_fallthru
      _
    %s187 = sshll.u32 1, 14
    %s188 = sxor.u32 4294967295, %s187
    %s190 = sld [smem:[#allocation0]]
    %s191 = sadd.s32 2, %s190
    %s193 = sshll.u32 7, 26
    %s194 = sxor.u32 4294967295, %s193
    %s195 = sand.u32 0, %s194
    %s196 = sshll.u32 %s191, 26
    %s197 = sor.u32 %s195, %s196
    %s198 = sshll.u32 [#allocation2], 4
    %s199 = int_to_ptr.vmem [resolvable:$true] %s198
    %202 = sst [smem:[#allocation25]] 512
    %s203 = scalar_lea.smem [#allocation25], 1
    %204 = sst [smem:[%s203]] 512
    %s205 = scalar_lea.smem [#allocation25], 2
    %206 = sst [smem:[%s205]] 4
    %s207 = scalar_lea.smem [#allocation25], 3
    %208 = sst [smem:[%s207]] 64
    %s209 = scalar_lea.smem [#allocation25], 4
    %210 = sst [smem:[%s209]] 128
    %s211 = scalar_lea.smem [#allocation25], 5
    %212 = sst [smem:[%s211]] 2
    %s213 = scalar_lea.smem [#allocation25], 6
    %214 = sst [smem:[%s213]] 256
    %s215 = scalar_lea.smem [#allocation25], 7
    %216 = sst [smem:[%s215]] 64
    %s217 = scalar_lea.smem [#allocation25], 8
    %218 = sst [smem:[%s217]] 4
    %220 = dma.general %s23, 24576, %s199, [#allocation10], [#allocation24], [#allocation25], %s197, 0
    %s221 = scalar_lea.sflag [#allocation10], 1
    %s223 = sshll.u32 1, 14
    %s224 = sxor.u32 4294967295, %s223
    %s226 = sadd.s32 2, %s190
    %s228 = sshll.u32 7, 26
    %s229 = sxor.u32 4294967295, %s228
    %s230 = sand.u32 0, %s229
    %s231 = sshll.u32 %s226, 26
    %s232 = sor.u32 %s230, %s231
    %s233 = sshll.u32 [#allocation3], 4
    %s234 = int_to_ptr.vmem [resolvable:$true] %s233
    %237 = sst [smem:[#allocation27]] 512
    %s238 = scalar_lea.smem [#allocation27], 1
    %239 = sst [smem:[%s238]] 512
    %s240 = scalar_lea.smem [#allocation27], 2
    %241 = sst [smem:[%s240]] 4
    %s242 = scalar_lea.smem [#allocation27], 3
    %243 = sst [smem:[%s242]] 64
    %s244 = scalar_lea.smem [#allocation27], 4
    %245 = sst [smem:[%s244]] 128
    %s246 = scalar_lea.smem [#allocation27], 5
    %247 = sst [smem:[%s246]] 2
    %s248 = scalar_lea.smem [#allocation27], 6
    %249 = sst [smem:[%s248]] 256
    %s250 = scalar_lea.smem [#allocation27], 7
    %251 = sst [smem:[%s250]] 64
    %s252 = scalar_lea.smem [#allocation27], 8
    %253 = sst [smem:[%s252]] 4
    %255 = dma.general %s25, 32768, %s234, %s221, [#allocation26], [#allocation27], %s232, 0
    %s256 = scalar_lea.sflag [#allocation10], 2
    %s258 = sshll.u32 1, 14
    %s259 = sxor.u32 4294967295, %s258
    %s261 = sadd.s32 2, %s190
    %s263 = sshll.u32 7, 26
    %s264 = sxor.u32 4294967295, %s263
    %s265 = sand.u32 0, %s264
    %s266 = sshll.u32 %s261, 26
    %s267 = sor.u32 %s265, %s266
    %s268 = sshll.u32 [#allocation4], 4
    %s269 = int_to_ptr.vmem [resolvable:$true] %s268
    %272 = sst [smem:[#allocation29]] 512
    %s273 = scalar_lea.smem [#allocation29], 1
    %274 = sst [smem:[%s273]] 512
    %s275 = scalar_lea.smem [#allocation29], 2
    %276 = sst [smem:[%s275]] 4
    %s277 = scalar_lea.smem [#allocation29], 3
    %278 = sst [smem:[%s277]] 64
    %s279 = scalar_lea.smem [#allocation29], 4
    %280 = sst [smem:[%s279]] 128
    %s281 = scalar_lea.smem [#allocation29], 5
    %282 = sst [smem:[%s281]] 2
    %s283 = scalar_lea.smem [#allocation29], 6
    %284 = sst [smem:[%s283]] 256
    %s285 = scalar_lea.smem [#allocation29], 7
    %286 = sst [smem:[%s285]] 64
    %s287 = scalar_lea.smem [#allocation29], 8
    %288 = sst [smem:[%s287]] 4
    %290 = dma.general %s27, 16384, %s269, %s256, [#allocation28], [#allocation29], %s267, 0
    %s291 = scalar_lea.sflag [#allocation10], 3
    %s293 = sshll.u32 1, 14
    %s294 = sxor.u32 4294967295, %s293
    %s296 = sadd.s32 2, %s190
    %s298 = sshll.u32 7, 26
    %s299 = sxor.u32 4294967295, %s298
    %s300 = sand.u32 0, %s299
    %s301 = sshll.u32 %s296, 26
    %s302 = sor.u32 %s300, %s301
    %s303 = sshll.u32 [#allocation5], 4
    %s304 = int_to_ptr.vmem [resolvable:$true] %s303
    %307 = sst [smem:[#allocation31]] 768
    %s308 = scalar_lea.smem [#allocation31], 1
    %309 = sst [smem:[%s308]] 768
    %s310 = scalar_lea.smem [#allocation31], 2
    %311 = sst [smem:[%s310]] 6
    %s312 = scalar_lea.smem [#allocation31], 3
    %313 = sst [smem:[%s312]] 64
    %s314 = scalar_lea.smem [#allocation31], 4
    %315 = sst [smem:[%s314]] 128
    %s316 = scalar_lea.smem [#allocation31], 5
    %317 = sst [smem:[%s316]] 2
    %s318 = scalar_lea.smem [#allocation31], 6
    %319 = sst [smem:[%s318]] 384
    %s320 = scalar_lea.smem [#allocation31], 7
    %321 = sst [smem:[%s320]] 64
    %s322 = scalar_lea.smem [#allocation31], 8
    %323 = sst [smem:[%s322]] 4
    %325 = dma.general %s29, 24576, %s304, %s291, [#allocation30], [#allocation31], %s302, 0
    %s326 = scalar_lea.sflag [#allocation10], 4
    %s328 = sshll.u32 1, 14
    %s329 = sxor.u32 4294967295, %s328
    %s331 = sadd.s32 2, %s190
    %s333 = sshll.u32 7, 26
    %s334 = sxor.u32 4294967295, %s333
    %s335 = sand.u32 0, %s334
    %s336 = sshll.u32 %s331, 26
    %s337 = sor.u32 %s335, %s336
    %s338 = sshll.u32 [#allocation6], 4
    %s339 = int_to_ptr.vmem [resolvable:$true] %s338
    %342 = sst [smem:[#allocation33]] 1024
    %s343 = scalar_lea.smem [#allocation33], 1
    %344 = sst [smem:[%s343]] 1024
    %s345 = scalar_lea.smem [#allocation33], 2
    %346 = sst [smem:[%s345]] 8
    %s347 = scalar_lea.smem [#allocation33], 3
    %348 = sst [smem:[%s347]] 64
    %s349 = scalar_lea.smem [#allocation33], 4
    %350 = sst [smem:[%s349]] 128
    %s351 = scalar_lea.smem [#allocation33], 5
    %352 = sst [smem:[%s351]] 2
    %s353 = scalar_lea.smem [#allocation33], 6
    %354 = sst [smem:[%s353]] 512
    %s355 = scalar_lea.smem [#allocation33], 7
    %356 = sst [smem:[%s355]] 64
    %s357 = scalar_lea.smem [#allocation33], 8
    %358 = sst [smem:[%s357]] 4
    %360 = dma.general %s31, 32768, %s339, %s326, [#allocation32], [#allocation33], %s337, 0
    %s361 = scalar_lea.sflag [#allocation10], 5
    %s363 = sshll.u32 1, 14
    %s364 = sxor.u32 4294967295, %s363
    %s366 = sadd.s32 2, %s190
    %s368 = sshll.u32 7, 26
    %s369 = sxor.u32 4294967295, %s368
    %s370 = sand.u32 0, %s369
    %s371 = sshll.u32 %s366, 26
    %s372 = sor.u32 %s370, %s371
    %s373 = sshll.u32 [#allocation7], 4
    %s374 = int_to_ptr.vmem [resolvable:$true] %s373
    %377 = sst [smem:[#allocation35]] 512
    %s378 = scalar_lea.smem [#allocation35], 1
    %379 = sst [smem:[%s378]] 512
    %s380 = scalar_lea.smem [#allocation35], 2
    %381 = sst [smem:[%s380]] 4
    %s382 = scalar_lea.smem [#allocation35], 3
    %383 = sst [smem:[%s382]] 64
    %s384 = scalar_lea.smem [#allocation35], 4
    %385 = sst [smem:[%s384]] 128
    %s386 = scalar_lea.smem [#allocation35], 5
    %387 = sst [smem:[%s386]] 2
    %s388 = scalar_lea.smem [#allocation35], 6
    %389 = sst [smem:[%s388]] 256
    %s390 = scalar_lea.smem [#allocation35], 7
    %391 = sst [smem:[%s390]] 64
    %s392 = scalar_lea.smem [#allocation35], 8
    %393 = sst [smem:[%s392]] 4
    %395 = dma.general %s33, 16384, %s374, %s361, [#allocation34], [#allocation35], %s372, 0
    %s396 = scalar_lea.sflag [#allocation10], 6
    %s398 = sshll.u32 1, 14
    %s399 = sxor.u32 4294967295, %s398
    %s401 = sadd.s32 2, %s190
    %s403 = sshll.u32 7, 26
    %s404 = sxor.u32 4294967295, %s403
    %s405 = sand.u32 0, %s404
    %s406 = sshll.u32 %s401, 26
    %s407 = sor.u32 %s405, %s406
    %s408 = sshll.u32 [#allocation8], 4
    %s409 = int_to_ptr.vmem [resolvable:$true] %s408
    %412 = sst [smem:[#allocation37]] 1024
    %s413 = scalar_lea.smem [#allocation37], 1
    %414 = sst [smem:[%s413]] 1024
    %s415 = scalar_lea.smem [#allocation37], 2
    %416 = sst [smem:[%s415]] 8
    %s417 = scalar_lea.smem [#allocation37], 3
    %418 = sst [smem:[%s417]] 64
    %s419 = scalar_lea.smem [#allocation37], 4
    %420 = sst [smem:[%s419]] 128
    %s421 = scalar_lea.smem [#allocation37], 5
    %422 = sst [smem:[%s421]] 2
    %s423 = scalar_lea.smem [#allocation37], 6
    %424 = sst [smem:[%s423]] 512
    %s425 = scalar_lea.smem [#allocation37], 7
    %426 = sst [smem:[%s425]] 64
    %s427 = scalar_lea.smem [#allocation37], 8
    %428 = sst [smem:[%s427]] 4
    %430 = dma.general %s35, 98304, %s409, %s396, [#allocation36], [#allocation37], %s407, 0
    %s431 = scalar_lea.sflag [#allocation10], 7
    %s433 = sshll.u32 1, 14
    %s434 = sxor.u32 4294967295, %s433
    %s436 = sadd.s32 2, %s190
    %s438 = sshll.u32 7, 26
    %s439 = sxor.u32 4294967295, %s438
    %s440 = sand.u32 0, %s439
    %s441 = sshll.u32 %s436, 26
    %s442 = sor.u32 %s440, %s441
    %s443 = sshll.u32 [#allocation9], 4
    %s444 = int_to_ptr.vmem [resolvable:$true] %s443
    %447 = sst [smem:[#allocation39]] 1792
    %s448 = scalar_lea.smem [#allocation39], 1
    %449 = sst [smem:[%s448]] 1792
    %s450 = scalar_lea.smem [#allocation39], 2
    %451 = sst [smem:[%s450]] 14
    %s452 = scalar_lea.smem [#allocation39], 3
    %453 = sst [smem:[%s452]] 64
    %s454 = scalar_lea.smem [#allocation39], 4
    %455 = sst [smem:[%s454]] 128
    %s456 = scalar_lea.smem [#allocation39], 5
    %457 = sst [smem:[%s456]] 2
    %s458 = scalar_lea.smem [#allocation39], 6
    %459 = sst [smem:[%s458]] 896
    %s460 = scalar_lea.smem [#allocation39], 7
    %461 = sst [smem:[%s460]] 64
    %s462 = scalar_lea.smem [#allocation39], 8
    %463 = sst [smem:[%s462]] 4
    %465 = dma.general %s37, 114688, %s444, %s431, [#allocation38], [#allocation39], %s442, 0
    %s466 = smul.u32 4, 96
    %s467 = smul.u32 %s466, 4
    %s468 = sshll.u32 %s467, 4
    %469 = dma.done [#allocation10], %s468
    %v470 = vld [vmem:[%s1] sm:$0xff]
    %v471 = vld [vmem:[%s1 + $0x8] sm:$0xff]
    %v472 = vld [vmem:[%s1 + $0x10] sm:$0xff]
    %v473 = vld [vmem:[#allocation2] sm:$0xff]
    %v474 = vld [vmem:[#allocation2 + $0x8] sm:$0xff]
    %v475 = vld [vmem:[#allocation2 + $0x10] sm:$0xff]
    %v476 = vld [vmem:[#allocation2 + $0x18] sm:$0xff]
    %v477 = vld [vmem:[#allocation2 + $0x20] sm:$0xff]
    %v478 = vld [vmem:[#allocation2 + $0x28] sm:$0xff]
    %v479 = vld [vmem:[#allocation2 + $0x30] sm:$0xff]
    %v480 = vld [vmem:[#allocation2 + $0x38] sm:$0xff]
    %v481 = vld [vmem:[#allocation2 + $0x40] sm:$0xff]
    %v482 = vld [vmem:[#allocation2 + $0x48] sm:$0xff]
    %v483 = vld [vmem:[#allocation2 + $0x50] sm:$0xff]
    %v484 = vld [vmem:[#allocation2 + $0x58] sm:$0xff]
    %v485 = vld [vmem:[#allocation2 + $0x60] sm:$0xff]
    %v486 = vld [vmem:[#allocation2 + $0x68] sm:$0xff]
    %v487 = vld [vmem:[#allocation2 + $0x70] sm:$0xff]
    %v488 = vld [vmem:[#allocation2 + $0x78] sm:$0xff]
    %v489 = vld [vmem:[#allocation2 + $0x80] sm:$0xff]
    %v490 = vld [vmem:[#allocation2 + $0x88] sm:$0xff]
    %v491 = vld [vmem:[#allocation2 + $0x90] sm:$0xff]
    %v492 = vld [vmem:[#allocation2 + $0x98] sm:$0xff]
    %v493 = vld [vmem:[#allocation2 + $0xa0] sm:$0xff]
    %v494 = vld [vmem:[#allocation2 + $0xa8] sm:$0xff]
    %v495 = vld [vmem:[#allocation2 + $0xb0] sm:$0xff]
    %v496 = vld [vmem:[#allocation2 + $0xb8] sm:$0xff]
    %v497 = vld [vmem:[#allocation2 + $0xc0] sm:$0xff]
    %v498 = vld [vmem:[#allocation2 + $0xc8] sm:$0xff]
    %v499 = vld [vmem:[#allocation2 + $0xd0] sm:$0xff]
    %v500 = vld [vmem:[#allocation2 + $0xd8] sm:$0xff]
    %v501 = vld [vmem:[#allocation2 + $0xe0] sm:$0xff]
    %v502 = vld [vmem:[#allocation2 + $0xe8] sm:$0xff]
    %v503 = vld [vmem:[#allocation2 + $0xf0] sm:$0xff]
    %v504 = vld [vmem:[#allocation2 + $0xf8] sm:$0xff]
    %v505 = vld [vmem:[#allocation2 + $0x100] sm:$0xff]
    %v506 = vld [vmem:[#allocation2 + $0x108] sm:$0xff]
    %v507 = vld [vmem:[#allocation2 + $0x110] sm:$0xff]
    %v508 = vld [vmem:[#allocation2 + $0x118] sm:$0xff]
    %v509 = vld [vmem:[#allocation2 + $0x120] sm:$0xff]
    %v510 = vld [vmem:[#allocation2 + $0x128] sm:$0xff]
    %v511 = vld [vmem:[#allocation2 + $0x130] sm:$0xff]
    %v512 = vld [vmem:[#allocation2 + $0x138] sm:$0xff]
    %v513 = vld [vmem:[#allocation2 + $0x140] sm:$0xff]
    %v514 = vld [vmem:[#allocation2 + $0x148] sm:$0xff]
    %v515 = vld [vmem:[#allocation2 + $0x150] sm:$0xff]
    %v516 = vld [vmem:[#allocation2 + $0x158] sm:$0xff]
    %v517 = vld [vmem:[#allocation2 + $0x160] sm:$0xff]
    %v518 = vld [vmem:[#allocation2 + $0x168] sm:$0xff]
    %v519 = vld [vmem:[#allocation2 + $0x170] sm:$0xff]
    %v520 = vld [vmem:[#allocation2 + $0x178] sm:$0xff]
    %v521 = vld [vmem:[#allocation2 + $0x180] sm:$0xff]
    %v522 = vld [vmem:[#allocation2 + $0x188] sm:$0xff]
    %v523 = vld [vmem:[#allocation2 + $0x190] sm:$0xff]
    %v524 = vld [vmem:[#allocation2 + $0x198] sm:$0xff]
    %v525 = vld [vmem:[#allocation2 + $0x1a0] sm:$0xff]
    %v526 = vld [vmem:[#allocation2 + $0x1a8] sm:$0xff]
    %v527 = vld [vmem:[#allocation2 + $0x1b0] sm:$0xff]
    %v528 = vld [vmem:[#allocation2 + $0x1b8] sm:$0xff]
    %v529 = vld [vmem:[#allocation2 + $0x1c0] sm:$0xff]
    %v530 = vld [vmem:[#allocation2 + $0x1c8] sm:$0xff]
    %v531 = vld [vmem:[#allocation2 + $0x1d0] sm:$0xff]
    %v532 = vld [vmem:[#allocation2 + $0x1d8] sm:$0xff]
    %v533 = vld [vmem:[#allocation2 + $0x1e0] sm:$0xff]
    %v534 = vld [vmem:[#allocation2 + $0x1e8] sm:$0xff]
    %v535 = vld [vmem:[#allocation2 + $0x1f0] sm:$0xff]
    %v536 = vld [vmem:[#allocation2 + $0x1f8] sm:$0xff]
    %v537 = vld [vmem:[#allocation2 + $0x200] sm:$0xff]
    %v538 = vld [vmem:[#allocation2 + $0x208] sm:$0xff]
    %v539 = vld [vmem:[#allocation2 + $0x210] sm:$0xff]
    %v540 = vld [vmem:[#allocation2 + $0x218] sm:$0xff]
    %v541 = vld [vmem:[#allocation2 + $0x220] sm:$0xff]
    %v542 = vld [vmem:[#allocation2 + $0x228] sm:$0xff]
    %v543 = vld [vmem:[#allocation2 + $0x230] sm:$0xff]
    %v544 = vld [vmem:[#allocation2 + $0x238] sm:$0xff]
    %v545 = vld [vmem:[#allocation2 + $0x240] sm:$0xff]
    %v546 = vld [vmem:[#allocation2 + $0x248] sm:$0xff]
    %v547 = vld [vmem:[#allocation2 + $0x250] sm:$0xff]
    %v548 = vld [vmem:[#allocation2 + $0x258] sm:$0xff]
    %v549 = vld [vmem:[#allocation2 + $0x260] sm:$0xff]
    %v550 = vld [vmem:[#allocation2 + $0x268] sm:$0xff]
    %v551 = vld [vmem:[#allocation2 + $0x270] sm:$0xff]
    %v552 = vld [vmem:[#allocation2 + $0x278] sm:$0xff]
    %v553 = vld [vmem:[#allocation2 + $0x280] sm:$0xff]
    %v554 = vld [vmem:[#allocation2 + $0x288] sm:$0xff]
    %v555 = vld [vmem:[#allocation2 + $0x290] sm:$0xff]
    %v556 = vld [vmem:[#allocation2 + $0x298] sm:$0xff]
    %v557 = vld [vmem:[#allocation2 + $0x2a0] sm:$0xff]
    %v558 = vld [vmem:[#allocation2 + $0x2a8] sm:$0xff]
    %v559 = vld [vmem:[#allocation2 + $0x2b0] sm:$0xff]
    %v560 = vld [vmem:[#allocation2 + $0x2b8] sm:$0xff]
    %v561 = vld [vmem:[#allocation2 + $0x2c0] sm:$0xff]
    %v562 = vld [vmem:[#allocation2 + $0x2c8] sm:$0xff]
    %v563 = vld [vmem:[#allocation2 + $0x2d0] sm:$0xff]
    %v564 = vld [vmem:[#allocation2 + $0x2d8] sm:$0xff]
    %v565 = vld [vmem:[#allocation2 + $0x2e0] sm:$0xff]
    %v566 = vld [vmem:[#allocation2 + $0x2e8] sm:$0xff]
    %v567 = vld [vmem:[#allocation2 + $0x2f0] sm:$0xff]
    %v568 = vld [vmem:[#allocation2 + $0x2f8] sm:$0xff]
    %v569 = vld [vmem:[#allocation2 + $0x300] sm:$0xff]
    %v570 = vld [vmem:[#allocation2 + $0x308] sm:$0xff]
    %v571 = vld [vmem:[#allocation2 + $0x310] sm:$0xff]
    %v572 = vld [vmem:[#allocation2 + $0x318] sm:$0xff]
    %v573 = vld [vmem:[#allocation2 + $0x320] sm:$0xff]
    %v574 = vld [vmem:[#allocation2 + $0x328] sm:$0xff]
    %v575 = vld [vmem:[#allocation2 + $0x330] sm:$0xff]
    %v576 = vld [vmem:[#allocation2 + $0x338] sm:$0xff]
    %v577 = vld [vmem:[#allocation2 + $0x340] sm:$0xff]
    %v578 = vld [vmem:[#allocation2 + $0x348] sm:$0xff]
    %v579 = vld [vmem:[#allocation2 + $0x350] sm:$0xff]
    %v580 = vld [vmem:[#allocation2 + $0x358] sm:$0xff]
    %v581 = vld [vmem:[#allocation2 + $0x360] sm:$0xff]
    %v582 = vld [vmem:[#allocation2 + $0x368] sm:$0xff]
    %v583 = vld [vmem:[#allocation2 + $0x370] sm:$0xff]
    %v584 = vld [vmem:[#allocation2 + $0x378] sm:$0xff]
    %v585 = vld [vmem:[#allocation2 + $0x380] sm:$0xff]
    %v586 = vld [vmem:[#allocation2 + $0x388] sm:$0xff]
    %v587 = vld [vmem:[#allocation2 + $0x390] sm:$0xff]
    %v588 = vld [vmem:[#allocation2 + $0x398] sm:$0xff]
    %v589 = vld [vmem:[#allocation2 + $0x3a0] sm:$0xff]
    %v590 = vld [vmem:[#allocation2 + $0x3a8] sm:$0xff]
    %v591 = vld [vmem:[#allocation2 + $0x3b0] sm:$0xff]
    %v592 = vld [vmem:[#allocation2 + $0x3b8] sm:$0xff]
    %v593 = vld [vmem:[#allocation2 + $0x3c0] sm:$0xff]
    %v594 = vld [vmem:[#allocation2 + $0x3c8] sm:$0xff]
    %v595 = vld [vmem:[#allocation2 + $0x3d0] sm:$0xff]
    %v596 = vld [vmem:[#allocation2 + $0x3d8] sm:$0xff]
    %v597 = vld [vmem:[#allocation2 + $0x3e0] sm:$0xff]
    %v598 = vld [vmem:[#allocation2 + $0x3e8] sm:$0xff]
    %v599 = vld [vmem:[#allocation2 + $0x3f0] sm:$0xff]
    %v600 = vld [vmem:[#allocation2 + $0x3f8] sm:$0xff]
    %v601 = vld [vmem:[#allocation2 + $0x400] sm:$0xff]
    %v602 = vld [vmem:[#allocation2 + $0x408] sm:$0xff]
    %v603 = vld [vmem:[#allocation2 + $0x410] sm:$0xff]
    %v604 = vld [vmem:[#allocation2 + $0x418] sm:$0xff]
    %v605 = vld [vmem:[#allocation2 + $0x420] sm:$0xff]
    %v606 = vld [vmem:[#allocation2 + $0x428] sm:$0xff]
    %v607 = vld [vmem:[#allocation2 + $0x430] sm:$0xff]
    %v608 = vld [vmem:[#allocation2 + $0x438] sm:$0xff]
    %v609 = vld [vmem:[#allocation2 + $0x440] sm:$0xff]
    %v610 = vld [vmem:[#allocation2 + $0x448] sm:$0xff]
    %v611 = vld [vmem:[#allocation2 + $0x450] sm:$0xff]
    %v612 = vld [vmem:[#allocation2 + $0x458] sm:$0xff]
    %v613 = vld [vmem:[#allocation2 + $0x460] sm:$0xff]
    %v614 = vld [vmem:[#allocation2 + $0x468] sm:$0xff]
    %v615 = vld [vmem:[#allocation2 + $0x470] sm:$0xff]
    %v616 = vld [vmem:[#allocation2 + $0x478] sm:$0xff]
    %v617 = vld [vmem:[#allocation2 + $0x480] sm:$0xff]
    %v618 = vld [vmem:[#allocation2 + $0x488] sm:$0xff]
    %v619 = vld [vmem:[#allocation2 + $0x490] sm:$0xff]
    %v620 = vld [vmem:[#allocation2 + $0x498] sm:$0xff]
    %v621 = vld [vmem:[#allocation2 + $0x4a0] sm:$0xff]
    %v622 = vld [vmem:[#allocation2 + $0x4a8] sm:$0xff]
    %v623 = vld [vmem:[#allocation2 + $0x4b0] sm:$0xff]
    %v624 = vld [vmem:[#allocation2 + $0x4b8] sm:$0xff]
    %v625 = vld [vmem:[#allocation2 + $0x4c0] sm:$0xff]
    %v626 = vld [vmem:[#allocation2 + $0x4c8] sm:$0xff]
    %v627 = vld [vmem:[#allocation2 + $0x4d0] sm:$0xff]
    %v628 = vld [vmem:[#allocation2 + $0x4d8] sm:$0xff]
    %v629 = vld [vmem:[#allocation2 + $0x4e0] sm:$0xff]
    %v630 = vld [vmem:[#allocation2 + $0x4e8] sm:$0xff]
    %v631 = vld [vmem:[#allocation2 + $0x4f0] sm:$0xff]
    %v632 = vld [vmem:[#allocation2 + $0x4f8] sm:$0xff]
    %v633 = vld [vmem:[#allocation2 + $0x500] sm:$0xff]
    %v634 = vld [vmem:[#allocation2 + $0x508] sm:$0xff]
    %v635 = vld [vmem:[#allocation2 + $0x510] sm:$0xff]
    %v636 = vld [vmem:[#allocation2 + $0x518] sm:$0xff]
    %v637 = vld [vmem:[#allocation2 + $0x520] sm:$0xff]
    %v638 = vld [vmem:[#allocation2 + $0x528] sm:$0xff]
    %v639 = vld [vmem:[#allocation2 + $0x530] sm:$0xff]
    %v640 = vld [vmem:[#allocation2 + $0x538] sm:$0xff]
    %v641 = vld [vmem:[#allocation2 + $0x540] sm:$0xff]
    %v642 = vld [vmem:[#allocation2 + $0x548] sm:$0xff]
    %v643 = vld [vmem:[#allocation2 + $0x550] sm:$0xff]
    %v644 = vld [vmem:[#allocation2 + $0x558] sm:$0xff]
    %v645 = vld [vmem:[#allocation2 + $0x560] sm:$0xff]
    %v646 = vld [vmem:[#allocation2 + $0x568] sm:$0xff]
    %v647 = vld [vmem:[#allocation2 + $0x570] sm:$0xff]
    %v648 = vld [vmem:[#allocation2 + $0x578] sm:$0xff]
    %v649 = vld [vmem:[#allocation2 + $0x580] sm:$0xff]
    %v650 = vld [vmem:[#allocation2 + $0x588] sm:$0xff]
    %v651 = vld [vmem:[#allocation2 + $0x590] sm:$0xff]
    %v652 = vld [vmem:[#allocation2 + $0x598] sm:$0xff]
    %v653 = vld [vmem:[#allocation2 + $0x5a0] sm:$0xff]
    %v654 = vld [vmem:[#allocation2 + $0x5a8] sm:$0xff]
    %v655 = vld [vmem:[#allocation2 + $0x5b0] sm:$0xff]
    %v656 = vld [vmem:[#allocation2 + $0x5b8] sm:$0xff]
    %v657 = vld [vmem:[#allocation2 + $0x5c0] sm:$0xff]
    %v658 = vld [vmem:[#allocation2 + $0x5c8] sm:$0xff]
    %v659 = vld [vmem:[#allocation2 + $0x5d0] sm:$0xff]
    %v660 = vld [vmem:[#allocation2 + $0x5d8] sm:$0xff]
    %v661 = vld [vmem:[#allocation2 + $0x5e0] sm:$0xff]
    %v662 = vld [vmem:[#allocation2 + $0x5e8] sm:$0xff]
    %v663 = vld [vmem:[#allocation2 + $0x5f0] sm:$0xff]
    %v664 = vld [vmem:[#allocation2 + $0x5f8] sm:$0xff]
    %v665 = vld [vmem:[#allocation11] sm:$0xf]
    %v667 = vlaneseq
    %v668 = vshrl.u32 %v667, 7
    %v669 = vsub.s32 0, %v668
    %v670 = vrot.slane %v665, %v669
    %v671 = vlaneseq
    %v672 = vshrl.u32 %v671, 7
    %v673 = vsub.s32 1, %v672
    %v674 = vrot.slane %v665, %v673
    %v675 = vlaneseq
    %v676 = vshrl.u32 %v675, 7
    %v677 = vsub.s32 2, %v676
    %v678 = vrot.slane %v665, %v677
    %v679 = vlaneseq
    %v680 = vshrl.u32 %v679, 7
    %v681 = vsub.s32 3, %v680
    %v682 = vrot.slane %v665, %v681
    %v690 = vunpack.c.l.b16 %v470
    %v691 = vunpack.c.h.b16 %v470
    %v692 = vunpack.c.l.b16 %v471
    %v693 = vunpack.c.h.b16 %v471
    %v694 = vunpack.c.l.b16 %v472
    %v695 = vunpack.c.h.b16 %v472
    %v696 = vpack.c.b16 %v690, %v690
    %v697 = vpack.c.b16 %v691, %v691
    %v698 = vpack.c.b16 %v692, %v692
    %v699 = vpack.c.b16 %v693, %v693
    %v700 = vpack.c.b16 %v694, %v694
    %v701 = vpack.c.b16 %v695, %v695
    %708 = vmatprep.subr.bf16.mxu0 %v474
    %709 = vmatpush1.bf16.msra.mxu0 %v473
    %710 = vmatprep.subr.bf16.mxu0 %v478
    %711 = vmatpush1.bf16.msra.mxu0 %v477
    %712 = vmatprep.subr.bf16.mxu0 %v482
    %713 = vmatpush1.bf16.msra.mxu0 %v481
    %714 = vmatprep.subr.bf16.mxu0 %v486
    %715 = vmatpush1.bf16.msra.mxu0 %v485
    %716 = vmatprep.subr.bf16.mxu0 %v490
    %717 = vmatpush1.bf16.msra.mxu0 %v489
    %718 = vmatprep.subr.bf16.mxu0 %v494
    %719 = vmatpush1.bf16.msra.mxu0 %v493
    %720 = vmatprep.subr.bf16.mxu0 %v498
    %721 = vmatpush1.bf16.msra.mxu0 %v497
    %722 = vmatprep.subr.bf16.mxu0 %v502
    %723 = vmatpush1.bf16.msra.mxu0 %v501
    %724 = vmatprep.subr.bf16.mxu0 %v506
    %725 = vmatpush1.bf16.msra.mxu0 %v505
    %726 = vmatprep.subr.bf16.mxu0 %v510
    %727 = vmatpush1.bf16.msra.mxu0 %v509
    %728 = vmatprep.subr.bf16.mxu0 %v514
    %729 = vmatpush1.bf16.msra.mxu0 %v513
    %730 = vmatprep.subr.bf16.mxu0 %v518
    %731 = vmatpush1.bf16.msra.mxu0 %v517
    %732 = vmatprep.subr.bf16.mxu0 %v522
    %733 = vmatpush1.bf16.msra.mxu0 %v521
    %734 = vmatprep.subr.bf16.mxu0 %v526
    %735 = vmatpush1.bf16.msra.mxu0 %v525
    %736 = vmatprep.subr.bf16.mxu0 %v530
    %737 = vmatpush1.bf16.msra.mxu0 %v529
    %738 = vmatprep.subr.bf16.mxu0 %v534
    %739 = vmatpush1.bf16.msra.mxu0 %v533
    %740 = vmatprep.mubr.bf16.mxu0 %v697
    %741 = vmatmul.mubr.bf16.gmra.mrb[0].mxu0 %v696
    %v742 = vpop.f32.mrb[0].mxu0
    %v743 = vadd.f32 %v670, %v742
    %v744 = vpop.f32.mrb[0].mxu0
    %v745 = vadd.f32 %v674, %v744
    %v746 = vpop.f32.mrb[0].mxu0
    %v747 = vpop.f32.mrb[0].mxu0
    %748 = vdwg.mxu0
    %749 = vmatprep.subr.bf16.mxu0 %v538
    %750 = vmatpush1.bf16.msra.mxu0 %v537
    %751 = vmatprep.subr.bf16.mxu0 %v542
    %752 = vmatpush1.bf16.msra.mxu0 %v541
    %753 = vmatprep.subr.bf16.mxu0 %v546
    %754 = vmatpush1.bf16.msra.mxu0 %v545
    %755 = vmatprep.subr.bf16.mxu0 %v550
    %756 = vmatpush1.bf16.msra.mxu0 %v549
    %757 = vmatprep.subr.bf16.mxu0 %v554
    %758 = vmatpush1.bf16.msra.mxu0 %v553
    %759 = vmatprep.subr.bf16.mxu0 %v558
    %760 = vmatpush1.bf16.msra.mxu0 %v557
    %761 = vmatprep.subr.bf16.mxu0 %v562
    %762 = vmatpush1.bf16.msra.mxu0 %v561
    %763 = vmatprep.subr.bf16.mxu0 %v566
    %764 = vmatpush1.bf16.msra.mxu0 %v565
    %765 = vmatprep.subr.bf16.mxu0 %v570
    %766 = vmatpush1.bf16.msra.mxu0 %v569
    %767 = vmatprep.subr.bf16.mxu0 %v574
    %768 = vmatpush1.bf16.msra.mxu0 %v573
    %769 = vmatprep.subr.bf16.mxu0 %v578
    %770 = vmatpush1.bf16.msra.mxu0 %v577
    %771 = vmatprep.subr.bf16.mxu0 %v582
    %772 = vmatpush1.bf16.msra.mxu0 %v581
    %773 = vmatprep.subr.bf16.mxu0 %v586
    %774 = vmatpush1.bf16.msra.mxu0 %v585
    %775 = vmatprep.subr.bf16.mxu0 %v590
    %776 = vmatpush1.bf16.msra.mxu0 %v589
    %777 = vmatprep.subr.bf16.mxu0 %v594
    %778 = vmatpush1.bf16.msra.mxu0 %v593
    %779 = vmatprep.subr.bf16.mxu0 %v598
    %780 = vmatpush1.bf16.msra.mxu0 %v597
    %781 = vmatprep.mubr.bf16.mxu0 %v699
    %782 = vmatmul.mubr.bf16.gmra.mrb[0].mxu0 %v698
    %v783 = vpop.f32.mrb[0].mxu0
    %v784 = vadd.f32 %v743, %v783
    %v785 = vpop.f32.mrb[0].mxu0
    %v786 = vadd.f32 %v745, %v785
    %v787 = vpop.f32.mrb[0].mxu0
    %v788 = vpop.f32.mrb[0].mxu0
    %789 = vdwg.mxu0
    %790 = vmatprep.subr.bf16.mxu0 %v602
    %791 = vmatpush1.bf16.msra.mxu0 %v601
    %792 = vmatprep.subr.bf16.mxu0 %v606
    %793 = vmatpush1.bf16.msra.mxu0 %v605
    %794 = vmatprep.subr.bf16.mxu0 %v610
    %795 = vmatpush1.bf16.msra.mxu0 %v609
    %796 = vmatprep.subr.bf16.mxu0 %v614
    %797 = vmatpush1.bf16.msra.mxu0 %v613
    %798 = vmatprep.subr.bf16.mxu0 %v618
    %799 = vmatpush1.bf16.msra.mxu0 %v617
    %800 = vmatprep.subr.bf16.mxu0 %v622
    %801 = vmatpush1.bf16.msra.mxu0 %v621
    %802 = vmatprep.subr.bf16.mxu0 %v626
    %803 = vmatpush1.bf16.msra.mxu0 %v625
    %804 = vmatprep.subr.bf16.mxu0 %v630
    %805 = vmatpush1.bf16.msra.mxu0 %v629
    %806 = vmatprep.subr.bf16.mxu0 %v634
    %807 = vmatpush1.bf16.msra.mxu0 %v633
    %808 = vmatprep.subr.bf16.mxu0 %v638
    %809 = vmatpush1.bf16.msra.mxu0 %v637
    %810 = vmatprep.subr.bf16.mxu0 %v642
    %811 = vmatpush1.bf16.msra.mxu0 %v641
    %812 = vmatprep.subr.bf16.mxu0 %v646
    %813 = vmatpush1.bf16.msra.mxu0 %v645
    %814 = vmatprep.subr.bf16.mxu0 %v650
    %815 = vmatpush1.bf16.msra.mxu0 %v649
    %816 = vmatprep.subr.bf16.mxu0 %v654
    %817 = vmatpush1.bf16.msra.mxu0 %v653
    %818 = vmatprep.subr.bf16.mxu0 %v658
    %819 = vmatpush1.bf16.msra.mxu0 %v657
    %820 = vmatprep.subr.bf16.mxu0 %v662
    %821 = vmatpush1.bf16.msra.mxu0 %v661
    %822 = vmatprep.mubr.bf16.mxu0 %v701
    %823 = vmatmul.mubr.bf16.gmra.mrb[0].mxu0 %v700
    %v824 = vpop.f32.mrb[0].mxu0
    %v825 = vadd.f32 %v784, %v824
    %v826 = vpop.f32.mrb[0].mxu0
    %v827 = vadd.f32 %v786, %v826
    %v828 = vpop.f32.mrb[0].mxu0
    %v829 = vpop.f32.mrb[0].mxu0
    %830 = vdwg.mxu0
    %831 = vmatprep.subr.bf16.mxu0 %v476
    %832 = vmatpush1.bf16.msra.mxu0 %v475
    %833 = vmatprep.subr.bf16.mxu0 %v480
    %834 = vmatpush1.bf16.msra.mxu0 %v479
    %835 = vmatprep.subr.bf16.mxu0 %v484
    %836 = vmatpush1.bf16.msra.mxu0 %v483
    %837 = vmatprep.subr.bf16.mxu0 %v488
    %838 = vmatpush1.bf16.msra.mxu0 %v487
    %839 = vmatprep.subr.bf16.mxu0 %v492
    %840 = vmatpush1.bf16.msra.mxu0 %v491
    %841 = vmatprep.subr.bf16.mxu0 %v496
    %842 = vmatpush1.bf16.msra.mxu0 %v495
    %843 = vmatprep.subr.bf16.mxu0 %v500
    %844 = vmatpush1.bf16.msra.mxu0 %v499
    %845 = vmatprep.subr.bf16.mxu0 %v504
    %846 = vmatpush1.bf16.msra.mxu0 %v503
    %847 = vmatprep.subr.bf16.mxu0 %v508
    %848 = vmatpush1.bf16.msra.mxu0 %v507
    %849 = vmatprep.subr.bf16.mxu0 %v512
    %850 = vmatpush1.bf16.msra.mxu0 %v511
    %851 = vmatprep.subr.bf16.mxu0 %v516
    %852 = vmatpush1.bf16.msra.mxu0 %v515
    %853 = vmatprep.subr.bf16.mxu0 %v520
    %854 = vmatpush1.bf16.msra.mxu0 %v519
    %855 = vmatprep.subr.bf16.mxu0 %v524
    %856 = vmatpush1.bf16.msra.mxu0 %v523
    %857 = vmatprep.subr.bf16.mxu0 %v528
    %858 = vmatpush1.bf16.msra.mxu0 %v527
    %859 = vmatprep.subr.bf16.mxu0 %v532
    %860 = vmatpush1.bf16.msra.mxu0 %v531
    %861 = vmatprep.subr.bf16.mxu0 %v536
    %862 = vmatpush1.bf16.msra.mxu0 %v535
    %863 = vmatprep.mubr.bf16.mxu0 %v697
    %864 = vmatmul.mubr.bf16.gmra.mrb[0].mxu0 %v696
    %v865 = vpop.f32.mrb[0].mxu0
    %v866 = vadd.f32 %v678, %v865
    %v867 = vpop.f32.mrb[0].mxu0
    %v868 = vadd.f32 %v682, %v867
    %v869 = vpop.f32.mrb[0].mxu0
    %v870 = vpop.f32.mrb[0].mxu0
    %871 = vdwg.mxu0
    %872 = vmatprep.subr.bf16.mxu0 %v540
    %873 = vmatpush1.bf16.msra.mxu0 %v539
    %874 = vmatprep.subr.bf16.mxu0 %v544
    %875 = vmatpush1.bf16.msra.mxu0 %v543
    %876 = vmatprep.subr.bf16.mxu0 %v548
    %877 = vmatpush1.bf16.msra.mxu0 %v547
    %878 = vmatprep.subr.bf16.mxu0 %v552
    %879 = vmatpush1.bf16.msra.mxu0 %v551
    %880 = vmatprep.subr.bf16.mxu0 %v556
    %881 = vmatpush1.bf16.msra.mxu0 %v555
    %882 = vmatprep.subr.bf16.mxu0 %v560
    %883 = vmatpush1.bf16.msra.mxu0 %v559
    %884 = vmatprep.subr.bf16.mxu0 %v564
    %885 = vmatpush1.bf16.msra.mxu0 %v563
    %886 = vmatprep.subr.bf16.mxu0 %v568
    %887 = vmatpush1.bf16.msra.mxu0 %v567
    %888 = vmatprep.subr.bf16.mxu0 %v572
    %889 = vmatpush1.bf16.msra.mxu0 %v571
    %890 = vmatprep.subr.bf16.mxu0 %v576
    %891 = vmatpush1.bf16.msra.mxu0 %v575
    %892 = vmatprep.subr.bf16.mxu0 %v580
    %893 = vmatpush1.bf16.msra.mxu0 %v579
    %894 = vmatprep.subr.bf16.mxu0 %v584
    %895 = vmatpush1.bf16.msra.mxu0 %v583
    %896 = vmatprep.subr.bf16.mxu0 %v588
    %897 = vmatpush1.bf16.msra.mxu0 %v587
    %898 = vmatprep.subr.bf16.mxu0 %v592
    %899 = vmatpush1.bf16.msra.mxu0 %v591
    %900 = vmatprep.subr.bf16.mxu0 %v596
    %901 = vmatpush1.bf16.msra.mxu0 %v595
    %902 = vmatprep.subr.bf16.mxu0 %v600
    %903 = vmatpush1.bf16.msra.mxu0 %v599
    %904 = vmatprep.mubr.bf16.mxu0 %v699
    %905 = vmatmul.mubr.bf16.gmra.mrb[0].mxu0 %v698
    %v906 = vpop.f32.mrb[0].mxu0
    %v907 = vadd.f32 %v866, %v906
    %v908 = vpop.f32.mrb[0].mxu0
    %v909 = vadd.f32 %v868, %v908
    %v910 = vpop.f32.mrb[0].mxu0
    %v911 = vpop.f32.mrb[0].mxu0
    %912 = vdwg.mxu0
    %913 = vmatprep.subr.bf16.mxu0 %v604
    %914 = vmatpush1.bf16.msra.mxu0 %v603
    %915 = vmatprep.subr.bf16.mxu0 %v608
    %916 = vmatpush1.bf16.msra.mxu0 %v607
    %917 = vmatprep.subr.bf16.mxu0 %v612
    %918 = vmatpush1.bf16.msra.mxu0 %v611
    %919 = vmatprep.subr.bf16.mxu0 %v616
    %920 = vmatpush1.bf16.msra.mxu0 %v615
    %921 = vmatprep.subr.bf16.mxu0 %v620
    %922 = vmatpush1.bf16.msra.mxu0 %v619
    %923 = vmatprep.subr.bf16.mxu0 %v624
    %924 = vmatpush1.bf16.msra.mxu0 %v623
    %925 = vmatprep.subr.bf16.mxu0 %v628
    %926 = vmatpush1.bf16.msra.mxu0 %v627
    %927 = vmatprep.subr.bf16.mxu0 %v632
    %928 = vmatpush1.bf16.msra.mxu0 %v631
    %929 = vmatprep.subr.bf16.mxu0 %v636
    %930 = vmatpush1.bf16.msra.mxu0 %v635
    %931 = vmatprep.subr.bf16.mxu0 %v640
    %932 = vmatpush1.bf16.msra.mxu0 %v639
    %933 = vmatprep.subr.bf16.mxu0 %v644
    %934 = vmatpush1.bf16.msra.mxu0 %v643
    %935 = vmatprep.subr.bf16.mxu0 %v648
    %936 = vmatpush1.bf16.msra.mxu0 %v647
    %937 = vmatprep.subr.bf16.mxu0 %v652
    %938 = vmatpush1.bf16.msra.mxu0 %v651
    %939 = vmatprep.subr.bf16.mxu0 %v656
    %940 = vmatpush1.bf16.msra.mxu0 %v655
    %941 = vmatprep.subr.bf16.mxu0 %v660
    %942 = vmatpush1.bf16.msra.mxu0 %v659
    %943 = vmatprep.subr.bf16.mxu0 %v664
    %944 = vmatpush1.bf16.msra.mxu0 %v663
    %945 = vmatprep.mubr.bf16.mxu0 %v701
    %946 = vmatmul.mubr.bf16.gmra.mrb[0].mxu0 %v700
    %v947 = vpop.f32.mrb[0].mxu0
    %v948 = vadd.f32 %v907, %v947
    %v949 = vpop.f32.mrb[0].mxu0
    %v950 = vadd.f32 %v909, %v949
    %v951 = vpop.f32.mrb[0].mxu0
    %v952 = vpop.f32.mrb[0].mxu0
    %953 = vdwg.mxu0
    %s954 = smul.u32 4, 128
    %s955 = smul.u32 %s954, 4
    %s956 = sshll.u32 %s955, 4
    %957 = dma.done %s221, %s956
    %v958 = vld [vmem:[%s3] sm:$0xff]
    %v959 = vld [vmem:[%s3 + $0x8] sm:$0xff]
    %v960 = vld [vmem:[%s3 + $0x10] sm:$0xff]
    %v961 = vld [vmem:[%s3 + $0x18] sm:$0xff]
    %v962 = vld [vmem:[#allocation3] sm:$0xff]
    %v963 = vld [vmem:[#allocation3 + $0x8] sm:$0xff]
    %v964 = vld [vmem:[#allocation3 + $0x10] sm:$0xff]
    %v965 = vld [vmem:[#allocation3 + $0x18] sm:$0xff]
    %v966 = vld [vmem:[#allocation3 + $0x20] sm:$0xff]
    %v967 = vld [vmem:[#allocation3 + $0x28] sm:$0xff]
    %v968 = vld [vmem:[#allocation3 + $0x30] sm:$0xff]
    %v969 = vld [vmem:[#allocation3 + $0x38] sm:$0xff]
    %v970 = vld [vmem:[#allocation3 + $0x40] sm:$0xff]
    %v971 = vld [vmem:[#allocation3 + $0x48] sm:$0xff]
    %v972 = vld [vmem:[#allocation3 + $0x50] sm:$0xff]
    %v973 = vld [vmem:[#allocation3 + $0x58] sm:$0xff]
    %v974 = vld [vmem:[#allocation3 + $0x60] sm:$0xff]
    %v975 = vld [vmem:[#allocation3 + $0x68] sm:$0xff]
    %v976 = vld [vmem:[#allocation3 + $0x70] sm:$0xff]
    %v977 = vld [vmem:[#allocation3 + $0x78] sm:$0xff]
    %v978 = vld [vmem:[#allocation3 + $0x80] sm:$0xff]
    %v979 = vld [vmem:[#allocation3 + $0x88] sm:$0xff]
    %v980 = vld [vmem:[#allocation3 + $0x90] sm:$0xff]
    %v981 = vld [vmem:[#allocation3 + $0x98] sm:$0xff]
    %v982 = vld [vmem:[#allocation3 + $0xa0] sm:$0xff]
    %v983 = vld [vmem:[#allocation3 + $0xa8] sm:$0xff]
    %v984 = vld [vmem:[#allocation3 + $0xb0] sm:$0xff]
    %v985 = vld [vmem:[#allocation3 + $0xb8] sm:$0xff]
    %v986 = vld [vmem:[#allocation3 + $0xc0] sm:$0xff]
    %v987 = vld [vmem:[#allocation3 + $0xc8] sm:$0xff]
    %v988 = vld [vmem:[#allocation3 + $0xd0] sm:$0xff]
    %v989 = vld [vmem:[#allocation3 + $0xd8] sm:$0xff]
    %v990 = vld [vmem:[#allocation3 + $0xe0] sm:$0xff]
    %v991 = vld [vmem:[#allocation3 + $0xe8] sm:$0xff]
    %v992 = vld [vmem:[#allocation3 + $0xf0] sm:$0xff]
    %v993 = vld [vmem:[#allocation3 + $0xf8] sm:$0xff]
    %v994 = vld [vmem:[#allocation3 + $0x100] sm:$0xff]
    %v995 = vld [vmem:[#allocation3 + $0x108] sm:$0xff]
    %v996 = vld [vmem:[#allocation3 + $0x110] sm:$0xff]
    %v997 = vld [vmem:[#allocation3 + $0x118] sm:$0xff]
    %v998 = vld [vmem:[#allocation3 + $0x120] sm:$0xff]
    %v999 = vld [vmem:[#allocation3 + $0x128] sm:$0xff]
    %v1000 = vld [vmem:[#allocation3 + $0x130] sm:$0xff]
    %v1001 = vld [vmem:[#allocation3 + $0x138] sm:$0xff]
    %v1002 = vld [vmem:[#allocation3 + $0x140] sm:$0xff]
    %v1003 = vld [vmem:[#allocation3 + $0x148] sm:$0xff]
    %v1004 = vld [vmem:[#allocation3 + $0x150] sm:$0xff]
    %v1005 = vld [vmem:[#allocation3 + $0x158] sm:$0xff]
    %v1006 = vld [vmem:[#allocation3 + $0x160] sm:$0xff]
    %v1007 = vld [vmem:[#allocation3 + $0x168] sm:$0xff]
    %v1008 = vld [vmem:[#allocation3 + $0x170] sm:$0xff]
    %v1009 = vld [vmem:[#allocation3 + $0x178] sm:$0xff]
    %v1010 = vld [vmem:[#allocation3 + $0x180] sm:$0xff]
    %v1011 = vld [vmem:[#allocation3 + $0x188] sm:$0xff]
    %v1012 = vld [vmem:[#allocation3 + $0x190] sm:$0xff]
    %v1013 = vld [vmem:[#allocation3 + $0x198] sm:$0xff]
    %v1014 = vld [vmem:[#allocation3 + $0x1a0] sm:$0xff]
    %v1015 = vld [vmem:[#allocation3 + $0x1a8] sm:$0xff]
    %v1016 = vld [vmem:[#allocation3 + $0x1b0] sm:$0xff]
    %v1017 = vld [vmem:[#allocation3 + $0x1b8] sm:$0xff]
    %v1018 = vld [vmem:[#allocation3 + $0x1c0] sm:$0xff]
    %v1019 = vld [vmem:[#allocation3 + $0x1c8] sm:$0xff]
    %v1020 = vld [vmem:[#allocation3 + $0x1d0] sm:$0xff]
    %v1021 = vld [vmem:[#allocation3 + $0x1d8] sm:$0xff]
    %v1022 = vld [vmem:[#allocation3 + $0x1e0] sm:$0xff]
    %v1023 = vld [vmem:[#allocation3 + $0x1e8] sm:$0xff]
    %v1024 = vld [vmem:[#allocation3 + $0x1f0] sm:$0xff]
    %v1025 = vld [vmem:[#allocation3 + $0x1f8] sm:$0xff]
    %v1026 = vld [vmem:[#allocation3 + $0x200] sm:$0xff]
    %v1027 = vld [vmem:[#allocation3 + $0x208] sm:$0xff]
    %v1028 = vld [vmem:[#allocation3 + $0x210] sm:$0xff]
    %v1029 = vld [vmem:[#allocation3 + $0x218] sm:$0xff]
    %v1030 = vld [vmem:[#allocation3 + $0x220] sm:$0xff]
    %v1031 = vld [vmem:[#allocation3 + $0x228] sm:$0xff]
    %v1032 = vld [vmem:[#allocation3 + $0x230] sm:$0xff]
    %v1033 = vld [vmem:[#allocation3 + $0x238] sm:$0xff]
    %v1034 = vld [vmem:[#allocation3 + $0x240] sm:$0xff]
    %v1035 = vld [vmem:[#allocation3 + $0x248] sm:$0xff]
    %v1036 = vld [vmem:[#allocation3 + $0x250] sm:$0xff]
    %v1037 = vld [vmem:[#allocation3 + $0x258] sm:$0xff]
    %v1038 = vld [vmem:[#allocation3 + $0x260] sm:$0xff]
    %v1039 = vld [vmem:[#allocation3 + $0x268] sm:$0xff]
    %v1040 = vld [vmem:[#allocation3 + $0x270] sm:$0xff]
    %v1041 = vld [vmem:[#allocation3 + $0x278] sm:$0xff]
    %v1042 = vld [vmem:[#allocation3 + $0x280] sm:$0xff]
    %v1043 = vld [vmem:[#allocation3 + $0x288] sm:$0xff]
    %v1044 = vld [vmem:[#allocation3 + $0x290] sm:$0xff]
    %v1045 = vld [vmem:[#allocation3 + $0x298] sm:$0xff]
    %v1046 = vld [vmem:[#allocation3 + $0x2a0] sm:$0xff]
    %v1047 = vld [vmem:[#allocation3 + $0x2a8] sm:$0xff]
    %v1048 = vld [vmem:[#allocation3 + $0x2b0] sm:$0xff]
    %v1049 = vld [vmem:[#allocation3 + $0x2b8] sm:$0xff]
    %v1050 = vld [vmem:[#allocation3 + $0x2c0] sm:$0xff]
    %v1051 = vld [vmem:[#allocation3 + $0x2c8] sm:$0xff]
    %v1052 = vld [vmem:[#allocation3 + $0x2d0] sm:$0xff]
    %v1053 = vld [vmem:[#allocation3 + $0x2d8] sm:$0xff]
    %v1054 = vld [vmem:[#allocation3 + $0x2e0] sm:$0xff]
    %v1055 = vld [vmem:[#allocation3 + $0x2e8] sm:$0xff]
    %v1056 = vld [vmem:[#allocation3 + $0x2f0] sm:$0xff]
    %v1057 = vld [vmem:[#allocation3 + $0x2f8] sm:$0xff]
    %v1058 = vld [vmem:[#allocation3 + $0x300] sm:$0xff]
    %v1059 = vld [vmem:[#allocation3 + $0x308] sm:$0xff]
    %v1060 = vld [vmem:[#allocation3 + $0x310] sm:$0xff]
    %v1061 = vld [vmem:[#allocation3 + $0x318] sm:$0xff]
    %v1062 = vld [vmem:[#allocation3 + $0x320] sm:$0xff]
    %v1063 = vld [vmem:[#allocation3 + $0x328] sm:$0xff]
    %v1064 = vld [vmem:[#allocation3 + $0x330] sm:$0xff]
    %v1065 = vld [vmem:[#allocation3 + $0x338] sm:$0xff]
    %v1066 = vld [vmem:[#allocation3 + $0x340] sm:$0xff]
    %v1067 = vld [vmem:[#allocation3 + $0x348] sm:$0xff]
    %v1068 = vld [vmem:[#allocation3 + $0x350] sm:$0xff]
    %v1069 = vld [vmem:[#allocation3 + $0x358] sm:$0xff]
    %v1070 = vld [vmem:[#allocation3 + $0x360] sm:$0xff]
    %v1071 = vld [vmem:[#allocation3 + $0x368] sm:$0xff]
    %v1072 = vld [vmem:[#allocation3 + $0x370] sm:$0xff]
    %v1073 = vld [vmem:[#allocation3 + $0x378] sm:$0xff]
    %v1074 = vld [vmem:[#allocation3 + $0x380] sm:$0xff]
    %v1075 = vld [vmem:[#allocation3 + $0x388] sm:$0xff]
    %v1076 = vld [vmem:[#allocation3 + $0x390] sm:$0xff]
    %v1077 = vld [vmem:[#allocation3 + $0x398] sm:$0xff]
    %v1078 = vld [vmem:[#allocation3 + $0x3a0] sm:$0xff]
    %v1079 = vld [vmem:[#allocation3 + $0x3a8] sm:$0xff]
    %v1080 = vld [vmem:[#allocation3 + $0x3b0] sm:$0xff]
    %v1081 = vld [vmem:[#allocation3 + $0x3b8] sm:$0xff]
    %v1082 = vld [vmem:[#allocation3 + $0x3c0] sm:$0xff]
    %v1083 = vld [vmem:[#allocation3 + $0x3c8] sm:$0xff]
    %v1084 = vld [vmem:[#allocation3 + $0x3d0] sm:$0xff]
    %v1085 = vld [vmem:[#allocation3 + $0x3d8] sm:$0xff]
    %v1086 = vld [vmem:[#allocation3 + $0x3e0] sm:$0xff]
    %v1087 = vld [vmem:[#allocation3 + $0x3e8] sm:$0xff]
    %v1088 = vld [vmem:[#allocation3 + $0x3f0] sm:$0xff]
    %v1089 = vld [vmem:[#allocation3 + $0x3f8] sm:$0xff]
    %v1090 = vld [vmem:[#allocation3 + $0x400] sm:$0xff]
    %v1091 = vld [vmem:[#allocation3 + $0x408] sm:$0xff]
    %v1092 = vld [vmem:[#allocation3 + $0x410] sm:$0xff]
    %v1093 = vld [vmem:[#allocation3 + $0x418] sm:$0xff]
    %v1094 = vld [vmem:[#allocation3 + $0x420] sm:$0xff]
    %v1095 = vld [vmem:[#allocation3 + $0x428] sm:$0xff]
    %v1096 = vld [vmem:[#allocation3 + $0x430] sm:$0xff]
    %v1097 = vld [vmem:[#allocation3 + $0x438] sm:$0xff]
    %v1098 = vld [vmem:[#allocation3 + $0x440] sm:$0xff]
    %v1099 = vld [vmem:[#allocation3 + $0x448] sm:$0xff]
    %v1100 = vld [vmem:[#allocation3 + $0x450] sm:$0xff]
    %v1101 = vld [vmem:[#allocation3 + $0x458] sm:$0xff]
    %v1102 = vld [vmem:[#allocation3 + $0x460] sm:$0xff]
    %v1103 = vld [vmem:[#allocation3 + $0x468] sm:$0xff]
    %v1104 = vld [vmem:[#allocation3 + $0x470] sm:$0xff]
    %v1105 = vld [vmem:[#allocation3 + $0x478] sm:$0xff]
    %v1106 = vld [vmem:[#allocation3 + $0x480] sm:$0xff]
    %v1107 = vld [vmem:[#allocation3 + $0x488] sm:$0xff]
    %v1108 = vld [vmem:[#allocation3 + $0x490] sm:$0xff]
    %v1109 = vld [vmem:[#allocation3 + $0x498] sm:$0xff]
    %v1110 = vld [vmem:[#allocation3 + $0x4a0] sm:$0xff]
    %v1111 = vld [vmem:[#allocation3 + $0x4a8] sm:$0xff]
    %v1112 = vld [vmem:[#allocation3 + $0x4b0] sm:$0xff]
    %v1113 = vld [vmem:[#allocation3 + $0x4b8] sm:$0xff]
    %v1114 = vld [vmem:[#allocation3 + $0x4c0] sm:$0xff]
    %v1115 = vld [vmem:[#allocation3 + $0x4c8] sm:$0xff]
    %v1116 = vld [vmem:[#allocation3 + $0x4d0] sm:$0xff]
    %v1117 = vld [vmem:[#allocation3 + $0x4d8] sm:$0xff]
    %v1118 = vld [vmem:[#allocation3 + $0x4e0] sm:$0xff]
    %v1119 = vld [vmem:[#allocation3 + $0x4e8] sm:$0xff]
    %v1120 = vld [vmem:[#allocation3 + $0x4f0] sm:$0xff]
    %v1121 = vld [vmem:[#allocation3 + $0x4f8] sm:$0xff]
    %v1122 = vld [vmem:[#allocation3 + $0x500] sm:$0xff]
    %v1123 = vld [vmem:[#allocation3 + $0x508] sm:$0xff]
    %v1124 = vld [vmem:[#allocation3 + $0x510] sm:$0xff]
    %v1125 = vld [vmem:[#allocation3 + $0x518] sm:$0xff]
    %v1126 = vld [vmem:[#allocation3 + $0x520] sm:$0xff]
    %v1127 = vld [vmem:[#allocation3 + $0x528] sm:$0xff]
    %v1128 = vld [vmem:[#allocation3 + $0x530] sm:$0xff]
    %v1129 = vld [vmem:[#allocation3 + $0x538] sm:$0xff]
    %v1130 = vld [vmem:[#allocation3 + $0x540] sm:$0xff]
    %v1131 = vld [vmem:[#allocation3 + $0x548] sm:$0xff]
    %v1132 = vld [vmem:[#allocation3 + $0x550] sm:$0xff]
    %v1133 = vld [vmem:[#allocation3 + $0x558] sm:$0xff]
    %v1134 = vld [vmem:[#allocation3 + $0x560] sm:$0xff]
    %v1135 = vld [vmem:[#allocation3 + $0x568] sm:$0xff]
    %v1136 = vld [vmem:[#allocation3 + $0x570] sm:$0xff]
    %v1137 = vld [vmem:[#allocation3 + $0x578] sm:$0xff]
    %v1138 = vld [vmem:[#allocation3 + $0x580] sm:$0xff]
    %v1139 = vld [vmem:[#allocation3 + $0x588] sm:$0xff]
    %v1140 = vld [vmem:[#allocation3 + $0x590] sm:$0xff]
    %v1141 = vld [vmem:[#allocation3 + $0x598] sm:$0xff]
    %v1142 = vld [vmem:[#allocation3 + $0x5a0] sm:$0xff]
    %v1143 = vld [vmem:[#allocation3 + $0x5a8] sm:$0xff]
    %v1144 = vld [vmem:[#allocation3 + $0x5b0] sm:$0xff]
    %v1145 = vld [vmem:[#allocation3 + $0x5b8] sm:$0xff]
    %v1146 = vld [vmem:[#allocation3 + $0x5c0] sm:$0xff]
    %v1147 = vld [vmem:[#allocation3 + $0x5c8] sm:$0xff]
    %v1148 = vld [vmem:[#allocation3 + $0x5d0] sm:$0xff]
    %v1149 = vld [vmem:[#allocation3 + $0x5d8] sm:$0xff]
    %v1150 = vld [vmem:[#allocation3 + $0x5e0] sm:$0xff]
    %v1151 = vld [vmem:[#allocation3 + $0x5e8] sm:$0xff]
    %v1152 = vld [vmem:[#allocation3 + $0x5f0] sm:$0xff]
    %v1153 = vld [vmem:[#allocation3 + $0x5f8] sm:$0xff]
    %v1154 = vld [vmem:[#allocation3 + $0x600] sm:$0xff]
    %v1155 = vld [vmem:[#allocation3 + $0x608] sm:$0xff]
    %v1156 = vld [vmem:[#allocation3 + $0x610] sm:$0xff]
    %v1157 = vld [vmem:[#allocation3 + $0x618] sm:$0xff]
    %v1158 = vld [vmem:[#allocation3 + $0x620] sm:$0xff]
    %v1159 = vld [vmem:[#allocation3 + $0x628] sm:$0xff]
    %v1160 = vld [vmem:[#allocation3 + $0x630] sm:$0xff]
    %v1161 = vld [vmem:[#allocation3 + $0x638] sm:$0xff]
    %v1162 = vld [vmem:[#allocation3 + $0x640] sm:$0xff]
    %v1163 = vld [vmem:[#allocation3 + $0x648] sm:$0xff]
    %v1164 = vld [vmem:[#allocation3 + $0x650] sm:$0xff]
    %v1165 = vld [vmem:[#allocation3 + $0x658] sm:$0xff]
    %v1166 = vld [vmem:[#allocation3 + $0x660] sm:$0xff]
    %v1167 = vld [vmem:[#allocation3 + $0x668] sm:$0xff]
    %v1168 = vld [vmem:[#allocation3 + $0x670] sm:$0xff]
    %v1169 = vld [vmem:[#allocation3 + $0x678] sm:$0xff]
    %v1170 = vld [vmem:[#allocation3 + $0x680] sm:$0xff]
    %v1171 = vld [vmem:[#allocation3 + $0x688] sm:$0xff]
    %v1172 = vld [vmem:[#allocation3 + $0x690] sm:$0xff]
    %v1173 = vld [vmem:[#allocation3 + $0x698] sm:$0xff]
    %v1174 = vld [vmem:[#allocation3 + $0x6a0] sm:$0xff]
    %v1175 = vld [vmem:[#allocation3 + $0x6a8] sm:$0xff]
    %v1176 = vld [vmem:[#allocation3 + $0x6b0] sm:$0xff]
    %v1177 = vld [vmem:[#allocation3 + $0x6b8] sm:$0xff]
    %v1178 = vld [vmem:[#allocation3 + $0x6c0] sm:$0xff]
    %v1179 = vld [vmem:[#allocation3 + $0x6c8] sm:$0xff]
    %v1180 = vld [vmem:[#allocation3 + $0x6d0] sm:$0xff]
    %v1181 = vld [vmem:[#allocation3 + $0x6d8] sm:$0xff]
    %v1182 = vld [vmem:[#allocation3 + $0x6e0] sm:$0xff]
    %v1183 = vld [vmem:[#allocation3 + $0x6e8] sm:$0xff]
    %v1184 = vld [vmem:[#allocation3 + $0x6f0] sm:$0xff]
    %v1185 = vld [vmem:[#allocation3 + $0x6f8] sm:$0xff]
    %v1186 = vld [vmem:[#allocation3 + $0x700] sm:$0xff]
    %v1187 = vld [vmem:[#allocation3 + $0x708] sm:$0xff]
    %v1188 = vld [vmem:[#allocation3 + $0x710] sm:$0xff]
    %v1189 = vld [vmem:[#allocation3 + $0x718] sm:$0xff]
    %v1190 = vld [vmem:[#allocation3 + $0x720] sm:$0xff]
    %v1191 = vld [vmem:[#allocation3 + $0x728] sm:$0xff]
    %v1192 = vld [vmem:[#allocation3 + $0x730] sm:$0xff]
    %v1193 = vld [vmem:[#allocation3 + $0x738] sm:$0xff]
    %v1194 = vld [vmem:[#allocation3 + $0x740] sm:$0xff]
    %v1195 = vld [vmem:[#allocation3 + $0x748] sm:$0xff]
    %v1196 = vld [vmem:[#allocation3 + $0x750] sm:$0xff]
    %v1197 = vld [vmem:[#allocation3 + $0x758] sm:$0xff]
    %v1198 = vld [vmem:[#allocation3 + $0x760] sm:$0xff]
    %v1199 = vld [vmem:[#allocation3 + $0x768] sm:$0xff]
    %v1200 = vld [vmem:[#allocation3 + $0x770] sm:$0xff]
    %v1201 = vld [vmem:[#allocation3 + $0x778] sm:$0xff]
    %v1202 = vld [vmem:[#allocation3 + $0x780] sm:$0xff]
    %v1203 = vld [vmem:[#allocation3 + $0x788] sm:$0xff]
    %v1204 = vld [vmem:[#allocation3 + $0x790] sm:$0xff]
    %v1205 = vld [vmem:[#allocation3 + $0x798] sm:$0xff]
    %v1206 = vld [vmem:[#allocation3 + $0x7a0] sm:$0xff]
    %v1207 = vld [vmem:[#allocation3 + $0x7a8] sm:$0xff]
    %v1208 = vld [vmem:[#allocation3 + $0x7b0] sm:$0xff]
    %v1209 = vld [vmem:[#allocation3 + $0x7b8] sm:$0xff]
    %v1210 = vld [vmem:[#allocation3 + $0x7c0] sm:$0xff]
    %v1211 = vld [vmem:[#allocation3 + $0x7c8] sm:$0xff]
    %v1212 = vld [vmem:[#allocation3 + $0x7d0] sm:$0xff]
    %v1213 = vld [vmem:[#allocation3 + $0x7d8] sm:$0xff]
    %v1214 = vld [vmem:[#allocation3 + $0x7e0] sm:$0xff]
    %v1215 = vld [vmem:[#allocation3 + $0x7e8] sm:$0xff]
    %v1216 = vld [vmem:[#allocation3 + $0x7f0] sm:$0xff]
    %v1217 = vld [vmem:[#allocation3 + $0x7f8] sm:$0xff]
    %v1218 = vld [vmem:[#allocation13] sm:$0xf]
    %v1220 = vlaneseq
    %v1221 = vshrl.u32 %v1220, 7
    %v1222 = vsub.s32 0, %v1221
    %v1223 = vrot.slane %v1218, %v1222
    %v1224 = vlaneseq
    %v1225 = vshrl.u32 %v1224, 7
    %v1226 = vsub.s32 1, %v1225
    %v1227 = vrot.slane %v1218, %v1226
    %v1228 = vlaneseq
    %v1229 = vshrl.u32 %v1228, 7
    %v1230 = vsub.s32 2, %v1229
    %v1231 = vrot.slane %v1218, %v1230
    %v1232 = vlaneseq
    %v1233 = vshrl.u32 %v1232, 7
    %v1234 = vsub.s32 3, %v1233
    %v1235 = vrot.slane %v1218, %v1234
    %v1244 = vunpack.c.l.b16 %v958
    %v1245 = vunpack.c.h.b16 %v958
    %v1246 = vunpack.c.l.b16 %v959
    %v1247 = vunpack.c.h.b16 %v959
    %v1248 = vunpack.c.l.b16 %v960
    %v1249 = vunpack.c.h.b16 %v960
    %v1250 = vunpack.c.l.b16 %v961
    %v1251 = vunpack.c.h.b16 %v961
    %v1252 = vpack.c.b16 %v1244, %v1244
    %v1253 = vpack.c.b16 %v1245, %v1245
    %v1254 = vpack.c.b16 %v1246, %v1246
    %v1255 = vpack.c.b16 %v1247, %v1247
    %v1256 = vpack.c.b16 %v1248, %v1248
    %v1257 = vpack.c.b16 %v1249, %v1249
    %v1258 = vpack.c.b16 %v1250, %v1250
    %v1259 = vpack.c.b16 %v1251, %v1251
    %1268 = vmatprep.subr.bf16.mxu0 %v963
    %1269 = vmatpush1.bf16.msra.mxu0 %v962
    %1270 = vmatprep.subr.bf16.mxu0 %v967
    %1271 = vmatpush1.bf16.msra.mxu0 %v966
    %1272 = vmatprep.subr.bf16.mxu0 %v971
    %1273 = vmatpush1.bf16.msra.mxu0 %v970
    %1274 = vmatprep.subr.bf16.mxu0 %v975
    %1275 = vmatpush1.bf16.msra.mxu0 %v974
    %1276 = vmatprep.subr.bf16.mxu0 %v979
    %1277 = vmatpush1.bf16.msra.mxu0 %v978
    %1278 = vmatprep.subr.bf16.mxu0 %v983
    %1279 = vmatpush1.bf16.msra.mxu0 %v982
    %1280 = vmatprep.subr.bf16.mxu0 %v987
    %1281 = vmatpush1.bf16.msra.mxu0 %v986
    %1282 = vmatprep.subr.bf16.mxu0 %v991
    %1283 = vmatpush1.bf16.msra.mxu0 %v990
    %1284 = vmatprep.subr.bf16.mxu0 %v995
    %1285 = vmatpush1.bf16.msra.mxu0 %v994
    %1286 = vmatprep.subr.bf16.mxu0 %v999
    %1287 = vmatpush1.bf16.msra.mxu0 %v998
    %1288 = vmatprep.subr.bf16.mxu0 %v1003
    %1289 = vmatpush1.bf16.msra.mxu0 %v1002
    %1290 = vmatprep.subr.bf16.mxu0 %v1007
    %1291 = vmatpush1.bf16.msra.mxu0 %v1006
    %1292 = vmatprep.subr.bf16.mxu0 %v1011
    %1293 = vmatpush1.bf16.msra.mxu0 %v1010
    %1294 = vmatprep.subr.bf16.mxu0 %v1015
    %1295 = vmatpush1.bf16.msra.mxu0 %v1014
    %1296 = vmatprep.subr.bf16.mxu0 %v1019
    %1297 = vmatpush1.bf16.msra.mxu0 %v1018
    %1298 = vmatprep.subr.bf16.mxu0 %v1023
    %1299 = vmatpush1.bf16.msra.mxu0 %v1022
    %1300 = vmatprep.mubr.bf16.mxu0 %v1253
    %1301 = vmatmul.mubr.bf16.gmra.mrb[0].mxu0 %v1252
    %v1302 = vpop.f32.mrb[0].mxu0
    %v1303 = vadd.f32 %v1223, %v1302
    %v1304 = vpop.f32.mrb[0].mxu0
    %v1305 = vadd.f32 %v1227, %v1304
    %v1306 = vpop.f32.mrb[0].mxu0
    %v1307 = vpop.f32.mrb[0].mxu0
    %1308 = vdwg.mxu0
    %1309 = vmatprep.subr.bf16.mxu0 %v1027
    %1310 = vmatpush1.bf16.msra.mxu0 %v1026
    %1311 = vmatprep.subr.bf16.mxu0 %v1031
    %1312 = vmatpush1.bf16.msra.mxu0 %v1030
    %1313 = vmatprep.subr.bf16.mxu0 %v1035
    %1314 = vmatpush1.bf16.msra.mxu0 %v1034
    %1315 = vmatprep.subr.bf16.mxu0 %v1039
    %1316 = vmatpush1.bf16.msra.mxu0 %v1038
    %1317 = vmatprep.subr.bf16.mxu0 %v1043
    %1318 = vmatpush1.bf16.msra.mxu0 %v1042
    %1319 = vmatprep.subr.bf16.mxu0 %v1047
    %1320 = vmatpush1.bf16.msra.mxu0 %v1046
    %1321 = vmatprep.subr.bf16.mxu0 %v1051
    %1322 = vmatpush1.bf16.msra.mxu0 %v1050
    %1323 = vmatprep.subr.bf16.mxu0 %v1055
    %1324 = vmatpush1.bf16.msra.mxu0 %v1054
    %1325 = vmatprep.subr.bf16.mxu0 %v1059
    %1326 = vmatpush1.bf16.msra.mxu0 %v1058
    %1327 = vmatprep.subr.bf16.mxu0 %v1063
    %1328 = vmatpush1.bf16.msra.mxu0 %v1062
    %1329 = vmatprep.subr.bf16.mxu0 %v1067
    %1330 = vmatpush1.bf16.msra.mxu0 %v1066
    %1331 = vmatprep.subr.bf16.mxu0 %v1071
    %1332 = vmatpush1.bf16.msra.mxu0 %v1070
    %1333 = vmatprep.subr.bf16.mxu0 %v1075
    %1334 = vmatpush1.bf16.msra.mxu0 %v1074
    %1335 = vmatprep.subr.bf16.mxu0 %v1079
    %1336 = vmatpush1.bf16.msra.mxu0 %v1078
    %1337 = vmatprep.subr.bf16.mxu0 %v1083
    %1338 = vmatpush1.bf16.msra.mxu0 %v1082
    %1339 = vmatprep.subr.bf16.mxu0 %v1087
    %1340 = vmatpush1.bf16.msra.mxu0 %v1086
    %1341 = vmatprep.mubr.bf16.mxu0 %v1255
    %1342 = vmatmul.mubr.bf16.gmra.mrb[0].mxu0 %v1254
    %v1343 = vpop.f32.mrb[0].mxu0
    %v1344 = vadd.f32 %v1303, %v1343
    %v1345 = vpop.f32.mrb[0].mxu0
    %v1346 = vadd.f32 %v1305, %v1345
    %v1347 = vpop.f32.mrb[0].mxu0
    %v1348 = vpop.f32.mrb[0].mxu0
    %1349 = vdwg.mxu0
    %1350 = vmatprep.subr.bf16.mxu0 %v1091
    %1351 = vmatpush1.bf16.msra.mxu0 %v1090
    %1352 = vmatprep.subr.bf16.mxu0 %v1095
    %1353 = vmatpush1.bf16.msra.mxu0 %v1094
    %1354 = vmatprep.subr.bf16.mxu0 %v1099
    %1355 = vmatpush1.bf16.msra.mxu0 %v1098
    %1356 = vmatprep.subr.bf16.mxu0 %v1103
    %1357 = vmatpush1.bf16.msra.mxu0 %v1102
    %1358 = vmatprep.subr.bf16.mxu0 %v1107
    %1359 = vmatpush1.bf16.msra.mxu0 %v1106
    %1360 = vmatprep.subr.bf16.mxu0 %v1111
    %1361 = vmatpush1.bf16.msra.mxu0 %v1110
    %1362 = vmatprep.subr.bf16.mxu0 %v1115
    %1363 = vmatpush1.bf16.msra.mxu0 %v1114
    %1364 = vmatprep.subr.bf16.mxu0 %v1119
    %1365 = vmatpush1.bf16.msra.mxu0 %v1118
    %1366 = vmatprep.subr.bf16.mxu0 %v1123
    %1367 = vmatpush1.bf16.msra.mxu0 %v1122
    %1368 = vmatprep.subr.bf16.mxu0 %v1127
    %1369 = vmatpush1.bf16.msra.mxu0 %v1126
    %1370 = vmatprep.subr.bf16.mxu0 %v1131
    %1371 = vmatpush1.bf16.msra.mxu0 %v1130
    %1372 = vmatprep.subr.bf16.mxu0 %v1135
    %1373 = vmatpush1.bf16.msra.mxu0 %v1134
    %1374 = vmatprep.subr.bf16.mxu0 %v1139
    %1375 = vmatpush1.bf16.msra.mxu0 %v1138
    %1376 = vmatprep.subr.bf16.mxu0 %v1143
    %1377 = vmatpush1.bf16.msra.mxu0 %v1142
    %1378 = vmatprep.subr.bf16.mxu0 %v1147
    %1379 = vmatpush1.bf16.msra.mxu0 %v1146
    %1380 = vmatprep.subr.bf16.mxu0 %v1151
    %1381 = vmatpush1.bf16.msra.mxu0 %v1150
    %1382 = vmatprep.mubr.bf16.mxu0 %v1257
    %1383 = vmatmul.mubr.bf16.gmra.mrb[0].mxu0 %v1256
    %v1384 = vpop.f32.mrb[0].mxu0
    %v1385 = vadd.f32 %v1344, %v1384
    %v1386 = vpop.f32.mrb[0].mxu0
    %v1387 = vadd.f32 %v1346, %v1386
    %v1388 = vpop.f32.mrb[0].mxu0
    %v1389 = vpop.f32.mrb[0].mxu0
    %1390 = vdwg.mxu0
    %1391 = vmatprep.subr.bf16.mxu0 %v1155
    %1392 = vmatpush1.bf16.msra.mxu0 %v1154
    %1393 = vmatprep.subr.bf16.mxu0 %v1159
    %1394 = vmatpush1.bf16.msra.mxu0 %v1158
    %1395 = vmatprep.subr.bf16.mxu0 %v1163
    %1396 = vmatpush1.bf16.msra.mxu0 %v1162
    %1397 = vmatprep.subr.bf16.mxu0 %v1167
    %1398 = vmatpush1.bf16.msra.mxu0 %v1166
    %1399 = vmatprep.subr.bf16.mxu0 %v1171
    %1400 = vmatpush1.bf16.msra.mxu0 %v1170
    %1401 = vmatprep.subr.bf16.mxu0 %v1175
    %1402 = vmatpush1.bf16.msra.mxu0 %v1174
    %1403 = vmatprep.subr.bf16.mxu0 %v1179
    %1404 = vmatpush1.bf16.msra.mxu0 %v1178
    %1405 = vmatprep.subr.bf16.mxu0 %v1183
    %1406 = vmatpush1.bf16.msra.mxu0 %v1182
    %1407 = vmatprep.subr.bf16.mxu0 %v1187
    %1408 = vmatpush1.bf16.msra.mxu0 %v1186
    %1409 = vmatprep.subr.bf16.mxu0 %v1191
    %1410 = vmatpush1.bf16.msra.mxu0 %v1190
    %1411 = vmatprep.subr.bf16.mxu0 %v1195
    %1412 = vmatpush1.bf16.msra.mxu0 %v1194
    %1413 = vmatprep.subr.bf16.mxu0 %v1199
    %1414 = vmatpush1.bf16.msra.mxu0 %v1198
    %1415 = vmatprep.subr.bf16.mxu0 %v1203
    %1416 = vmatpush1.bf16.msra.mxu0 %v1202
    %1417 = vmatprep.subr.bf16.mxu0 %v1207
    %1418 = vmatpush1.bf16.msra.mxu0 %v1206
    %1419 = vmatprep.subr.bf16.mxu0 %v1211
    %1420 = vmatpush1.bf16.msra.mxu0 %v1210
    %1421 = vmatprep.subr.bf16.mxu0 %v1215
    %1422 = vmatpush1.bf16.msra.mxu0 %v1214
    %1423 = vmatprep.mubr.bf16.mxu0 %v1259
    %1424 = vmatmul.mubr.bf16.gmra.mrb[0].mxu0 %v1258
    %v1425 = vpop.f32.mrb[0].mxu0
    %v1426 = vadd.f32 %v1385, %v1425
    %v1427 = vpop.f32.mrb[0].mxu0
    %v1428 = vadd.f32 %v1387, %v1427
    %v1429 = vpop.f32.mrb[0].mxu0
    %v1430 = vpop.f32.mrb[0].mxu0
    %1431 = vdwg.mxu0
    %1432 = vmatprep.subr.bf16.mxu0 %v965
    %1433 = vmatpush1.bf16.msra.mxu0 %v964
    %1434 = vmatprep.subr.bf16.mxu0 %v969
    %1435 = vmatpush1.bf16.msra.mxu0 %v968
    %1436 = vmatprep.subr.bf16.mxu0 %v973
    %1437 = vmatpush1.bf16.msra.mxu0 %v972
    %1438 = vmatprep.subr.bf16.mxu0 %v977
    %1439 = vmatpush1.bf16.msra.mxu0 %v976
    %1440 = vmatprep.subr.bf16.mxu0 %v981
    %1441 = vmatpush1.bf16.msra.mxu0 %v980
    %1442 = vmatprep.subr.bf16.mxu0 %v985
    %1443 = vmatpush1.bf16.msra.mxu0 %v984
    %1444 = vmatprep.subr.bf16.mxu0 %v989
    %1445 = vmatpush1.bf16.msra.mxu0 %v988
    %1446 = vmatprep.subr.bf16.mxu0 %v993
    %1447 = vmatpush1.bf16.msra.mxu0 %v992
    %1448 = vmatprep.subr.bf16.mxu0 %v997
    %1449 = vmatpush1.bf16.msra.mxu0 %v996
    %1450 = vmatprep.subr.bf16.mxu0 %v1001
    %1451 = vmatpush1.bf16.msra.mxu0 %v1000
    %1452 = vmatprep.subr.bf16.mxu0 %v1005
    %1453 = vmatpush1.bf16.msra.mxu0 %v1004
    %1454 = vmatprep.subr.bf16.mxu0 %v1009
    %1455 = vmatpush1.bf16.msra.mxu0 %v1008
    %1456 = vmatprep.subr.bf16.mxu0 %v1013
    %1457 = vmatpush1.bf16.msra.mxu0 %v1012
    %1458 = vmatprep.subr.bf16.mxu0 %v1017
    %1459 = vmatpush1.bf16.msra.mxu0 %v1016
    %1460 = vmatprep.subr.bf16.mxu0 %v1021
    %1461 = vmatpush1.bf16.msra.mxu0 %v1020
    %1462 = vmatprep.subr.bf16.mxu0 %v1025
    %1463 = vmatpush1.bf16.msra.mxu0 %v1024
    %1464 = vmatprep.mubr.bf16.mxu0 %v1253
    %1465 = vmatmul.mubr.bf16.gmra.mrb[0].mxu0 %v1252
    %v1466 = vpop.f32.mrb[0].mxu0
    %v1467 = vadd.f32 %v1231, %v1466
    %v1468 = vpop.f32.mrb[0].mxu0
    %v1469 = vadd.f32 %v1235, %v1468
    %v1470 = vpop.f32.mrb[0].mxu0
    %v1471 = vpop.f32.mrb[0].mxu0
    %1472 = vdwg.mxu0
    %1473 = vmatprep.subr.bf16.mxu0 %v1029
    %1474 = vmatpush1.bf16.msra.mxu0 %v1028
    %1475 = vmatprep.subr.bf16.mxu0 %v1033
    %1476 = vmatpush1.bf16.msra.mxu0 %v1032
    %1477 = vmatprep.subr.bf16.mxu0 %v1037
    %1478 = vmatpush1.bf16.msra.mxu0 %v1036
    %1479 = vmatprep.subr.bf16.mxu0 %v1041
    %1480 = vmatpush1.bf16.msra.mxu0 %v1040
    %1481 = vmatprep.subr.bf16.mxu0 %v1045
    %1482 = vmatpush1.bf16.msra.mxu0 %v1044
    %1483 = vmatprep.subr.bf16.mxu0 %v1049
    %1484 = vmatpush1.bf16.msra.mxu0 %v1048
    %1485 = vmatprep.subr.bf16.mxu0 %v1053
    %1486 = vmatpush1.bf16.msra.mxu0 %v1052
    %1487 = vmatprep.subr.bf16.mxu0 %v1057
    %1488 = vmatpush1.bf16.msra.mxu0 %v1056
    %1489 = vmatprep.subr.bf16.mxu0 %v1061
    %1490 = vmatpush1.bf16.msra.mxu0 %v1060
    %1491 = vmatprep.subr.bf16.mxu0 %v1065
    %1492 = vmatpush1.bf16.msra.mxu0 %v1064
    %1493 = vmatprep.subr.bf16.mxu0 %v1069
    %1494 = vmatpush1.bf16.msra.mxu0 %v1068
    %1495 = vmatprep.subr.bf16.mxu0 %v1073
    %1496 = vmatpush1.bf16.msra.mxu0 %v1072
    %1497 = vmatprep.subr.bf16.mxu0 %v1077
    %1498 = vmatpush1.bf16.msra.mxu0 %v1076
    %1499 = vmatprep.subr.bf16.mxu0 %v1081
    %1500 = vmatpush1.bf16.msra.mxu0 %v1080
    %1501 = vmatprep.subr.bf16.mxu0 %v1085
    %1502 = vmatpush1.bf16.msra.mxu0 %v1084
    %1503 = vmatprep.subr.bf16.mxu0 %v1089
    %1504 = vmatpush1.bf16.msra.mxu0 %v1088
    %1505 = vmatprep.mubr.bf16.mxu0 %v1255
    %1506 = vmatmul.mubr.bf16.gmra.mrb[0].mxu0 %v1254
    %v1507 = vpop.f32.mrb[0].mxu0
    %v1508 = vadd.f32 %v1467, %v1507
    %v1509 = vpop.f32.mrb[0].mxu0
    %v1510 = vadd.f32 %v1469, %v1509
    %v1511 = vpop.f32.mrb[0].mxu0
    %v1512 = vpop.f32.mrb[0].mxu0
    %1513 = vdwg.mxu0
    %1514 = vmatprep.subr.bf16.mxu0 %v1093
    %1515 = vmatpush1.bf16.msra.mxu0 %v1092
    %1516 = vmatprep.subr.bf16.mxu0 %v1097
    %1517 = vmatpush1.bf16.msra.mxu0 %v1096
    %1518 = vmatprep.subr.bf16.mxu0 %v1101
    %1519 = vmatpush1.bf16.msra.mxu0 %v1100
    %1520 = vmatprep.subr.bf16.mxu0 %v1105
    %1521 = vmatpush1.bf16.msra.mxu0 %v1104
    %1522 = vmatprep.subr.bf16.mxu0 %v1109
    %1523 = vmatpush1.bf16.msra.mxu0 %v1108
    %1524 = vmatprep.subr.bf16.mxu0 %v1113
    %1525 = vmatpush1.bf16.msra.mxu0 %v1112
    %1526 = vmatprep.subr.bf16.mxu0 %v1117
    %1527 = vmatpush1.bf16.msra.mxu0 %v1116
    %1528 = vmatprep.subr.bf16.mxu0 %v1121
    %1529 = vmatpush1.bf16.msra.mxu0 %v1120
    %1530 = vmatprep.subr.bf16.mxu0 %v1125
    %1531 = vmatpush1.bf16.msra.mxu0 %v1124
    %1532 = vmatprep.subr.bf16.mxu0 %v1129
    %1533 = vmatpush1.bf16.msra.mxu0 %v1128
    %1534 = vmatprep.subr.bf16.mxu0 %v1133
    %1535 = vmatpush1.bf16.msra.mxu0 %v1132
    %1536 = vmatprep.subr.bf16.mxu0 %v1137
    %1537 = vmatpush1.bf16.msra.mxu0 %v1136
    %1538 = vmatprep.subr.bf16.mxu0 %v1141
    %1539 = vmatpush1.bf16.msra.mxu0 %v1140
    %1540 = vmatprep.subr.bf16.mxu0 %v1145
    %1541 = vmatpush1.bf16.msra.mxu0 %v1144
    %1542 = vmatprep.subr.bf16.mxu0 %v1149
    %1543 = vmatpush1.bf16.msra.mxu0 %v1148
    %1544 = vmatprep.subr.bf16.mxu0 %v1153
    %1545 = vmatpush1.bf16.msra.mxu0 %v1152
    %1546 = vmatprep.mubr.bf16.mxu0 %v1257
    %1547 = vmatmul.mubr.bf16.gmra.mrb[0].mxu0 %v1256
    %v1548 = vpop.f32.mrb[0].mxu0
    %v1549 = vadd.f32 %v1508, %v1548
    %v1550 = vpop.f32.mrb[0].mxu0
    %v1551 = vadd.f32 %v1510, %v1550
    %v1552 = vpop.f32.mrb[0].mxu0
    %v1553 = vpop.f32.mrb[0].mxu0
    %1554 = vdwg.mxu0
    %1555 = vmatprep.subr.bf16.mxu0 %v1157
    %1556 = vmatpush1.bf16.msra.mxu0 %v1156
    %1557 = vmatprep.subr.bf16.mxu0 %v1161
    %1558 = vmatpush1.bf16.msra.mxu0 %v1160
    %1559 = vmatprep.subr.bf16.mxu0 %v1165
    %1560 = vmatpush1.bf16.msra.mxu0 %v1164
    %1561 = vmatprep.subr.bf16.mxu0 %v1169
    %1562 = vmatpush1.bf16.msra.mxu0 %v1168
    %1563 = vmatprep.subr.bf16.mxu0 %v1173
    %1564 = vmatpush1.bf16.msra.mxu0 %v1172
    %1565 = vmatprep.subr.bf16.mxu0 %v1177
    %1566 = vmatpush1.bf16.msra.mxu0 %v1176
    %1567 = vmatprep.subr.bf16.mxu0 %v1181
    %1568 = vmatpush1.bf16.msra.mxu0 %v1180
    %1569 = vmatprep.subr.bf16.mxu0 %v1185
    %1570 = vmatpush1.bf16.msra.mxu0 %v1184
    %1571 = vmatprep.subr.bf16.mxu0 %v1189
    %1572 = vmatpush1.bf16.msra.mxu0 %v1188
    %1573 = vmatprep.subr.bf16.mxu0 %v1193
    %1574 = vmatpush1.bf16.msra.mxu0 %v1192
    %1575 = vmatprep.subr.bf16.mxu0 %v1197
    %1576 = vmatpush1.bf16.msra.mxu0 %v1196
    %1577 = vmatprep.subr.bf16.mxu0 %v1201
    %1578 = vmatpush1.bf16.msra.mxu0 %v1200
    %1579 = vmatprep.subr.bf16.mxu0 %v1205
    %1580 = vmatpush1.bf16.msra.mxu0 %v1204
    %1581 = vmatprep.subr.bf16.mxu0 %v1209
    %1582 = vmatpush1.bf16.msra.mxu0 %v1208
    %1583 = vmatprep.subr.bf16.mxu0 %v1213
    %1584 = vmatpush1.bf16.msra.mxu0 %v1212
    %1585 = vmatprep.subr.bf16.mxu0 %v1217
    %1586 = vmatpush1.bf16.msra.mxu0 %v1216
    %1587 = vmatprep.mubr.bf16.mxu0 %v1259
    %1588 = vmatmul.mubr.bf16.gmra.mrb[0].mxu0 %v1258
    %v1589 = vpop.f32.mrb[0].mxu0
    %v1590 = vadd.f32 %v1549, %v1589
    %v1591 = vpop.f32.mrb[0].mxu0
    %v1592 = vadd.f32 %v1551, %v1591
    %v1593 = vpop.f32.mrb[0].mxu0
    %v1594 = vpop.f32.mrb[0].mxu0
    %1595 = vdwg.mxu0
    %s1596 = smul.u32 4, 64
    %s1597 = smul.u32 %s1596, 4
    %s1598 = sshll.u32 %s1597, 4
    %1599 = dma.done %s256, %s1598
    %v1600 = vld [vmem:[%s5] sm:$0xff]
    %v1601 = vld [vmem:[%s5 + $0x8] sm:$0xff]
    %v1602 = vld [vmem:[#allocation4] sm:$0xff]
    %v1603 = vld [vmem:[#allocation4 + $0x8] sm:$0xff]
    %v1604 = vld [vmem:[#allocation4 + $0x10] sm:$0xff]
    %v1605 = vld [vmem:[#allocation4 + $0x18] sm:$0xff]
    %v1606 = vld [vmem:[#allocation4 + $0x20] sm:$0xff]
    %v1607 = vld [vmem:[#allocation4 + $0x28] sm:$0xff]
    %v1608 = vld [vmem:[#allocation4 + $0x30] sm:$0xff]
    %v1609 = vld [vmem:[#allocation4 + $0x38] sm:$0xff]
    %v1610 = vld [vmem:[#allocation4 + $0x40] sm:$0xff]
    %v1611 = vld [vmem:[#allocation4 + $0x48] sm:$0xff]
    %v1612 = vld [vmem:[#allocation4 + $0x50] sm:$0xff]
    %v1613 = vld [vmem:[#allocation4 + $0x58] sm:$0xff]
    %v1614 = vld [vmem:[#allocation4 + $0x60] sm:$0xff]
    %v1615 = vld [vmem:[#allocation4 + $0x68] sm:$0xff]
    %v1616 = vld [vmem:[#allocation4 + $0x70] sm:$0xff]
    %v1617 = vld [vmem:[#allocation4 + $0x78] sm:$0xff]
    %v1618 = vld [vmem:[#allocation4 + $0x80] sm:$0xff]
    %v1619 = vld [vmem:[#allocation4 + $0x88] sm:$0xff]
    %v1620 = vld [vmem:[#allocation4 + $0x90] sm:$0xff]
    %v1621 = vld [vmem:[#allocation4 + $0x98] sm:$0xff]
    %v1622 = vld [vmem:[#allocation4 + $0xa0] sm:$0xff]
    %v1623 = vld [vmem:[#allocation4 + $0xa8] sm:$0xff]
    %v1624 = vld [vmem:[#allocation4 + $0xb0] sm:$0xff]
    %v1625 = vld [vmem:[#allocation4 + $0xb8] sm:$0xff]
    %v1626 = vld [vmem:[#allocation4 + $0xc0] sm:$0xff]
    %v1627 = vld [vmem:[#allocation4 + $0xc8] sm:$0xff]
    %v1628 = vld [vmem:[#allocation4 + $0xd0] sm:$0xff]
    %v1629 = vld [vmem:[#allocation4 + $0xd8] sm:$0xff]
    %v1630 = vld [vmem:[#allocation4 + $0xe0] sm:$0xff]
    %v1631 = vld [vmem:[#allocation4 + $0xe8] sm:$0xff]
    %v1632 = vld [vmem:[#allocation4 + $0xf0] sm:$0xff]
    %v1633 = vld [vmem:[#allocation4 + $0xf8] sm:$0xff]
    %v1634 = vld [vmem:[#allocation4 + $0x100] sm:$0xff]
    %v1635 = vld [vmem:[#allocation4 + $0x108] sm:$0xff]
    %v1636 = vld [vmem:[#allocation4 + $0x110] sm:$0xff]
    %v1637 = vld [vmem:[#allocation4 + $0x118] sm:$0xff]
    %v1638 = vld [vmem:[#allocation4 + $0x120] sm:$0xff]
    %v1639 = vld [vmem:[#allocation4 + $0x128] sm:$0xff]
    %v1640 = vld [vmem:[#allocation4 + $0x130] sm:$0xff]
    %v1641 = vld [vmem:[#allocation4 + $0x138] sm:$0xff]
    %v1642 = vld [vmem:[#allocation4 + $0x140] sm:$0xff]
    %v1643 = vld [vmem:[#allocation4 + $0x148] sm:$0xff]
    %v1644 = vld [vmem:[#allocation4 + $0x150] sm:$0xff]
    %v1645 = vld [vmem:[#allocation4 + $0x158] sm:$0xff]
    %v1646 = vld [vmem:[#allocation4 + $0x160] sm:$0xff]
    %v1647 = vld [vmem:[#allocation4 + $0x168] sm:$0xff]
    %v1648 = vld [vmem:[#allocation4 + $0x170] sm:$0xff]
    %v1649 = vld [vmem:[#allocation4 + $0x178] sm:$0xff]
    %v1650 = vld [vmem:[#allocation4 + $0x180] sm:$0xff]
    %v1651 = vld [vmem:[#allocation4 + $0x188] sm:$0xff]
    %v1652 = vld [vmem:[#allocation4 + $0x190] sm:$0xff]
    %v1653 = vld [vmem:[#allocation4 + $0x198] sm:$0xff]
    %v1654 = vld [vmem:[#allocation4 + $0x1a0] sm:$0xff]
    %v1655 = vld [vmem:[#allocation4 + $0x1a8] sm:$0xff]
    %v1656 = vld [vmem:[#allocation4 + $0x1b0] sm:$0xff]
    %v1657 = vld [vmem:[#allocation4 + $0x1b8] sm:$0xff]
    %v1658 = vld [vmem:[#allocation4 + $0x1c0] sm:$0xff]
    %v1659 = vld [vmem:[#allocation4 + $0x1c8] sm:$0xff]
    %v1660 = vld [vmem:[#allocation4 + $0x1d0] sm:$0xff]
    %v1661 = vld [vmem:[#allocation4 + $0x1d8] sm:$0xff]
    %v1662 = vld [vmem:[#allocation4 + $0x1e0] sm:$0xff]
    %v1663 = vld [vmem:[#allocation4 + $0x1e8] sm:$0xff]
    %v1664 = vld [vmem:[#allocation4 + $0x1f0] sm:$0xff]
    %v1665 = vld [vmem:[#allocation4 + $0x1f8] sm:$0xff]
    %v1666 = vld [vmem:[#allocation4 + $0x200] sm:$0xff]
    %v1667 = vld [vmem:[#allocation4 + $0x208] sm:$0xff]
    %v1668 = vld [vmem:[#allocation4 + $0x210] sm:$0xff]
    %v1669 = vld [vmem:[#allocation4 + $0x218] sm:$0xff]
    %v1670 = vld [vmem:[#allocation4 + $0x220] sm:$0xff]
    %v1671 = vld [vmem:[#allocation4 + $0x228] sm:$0xff]
    %v1672 = vld [vmem:[#allocation4 + $0x230] sm:$0xff]
    %v1673 = vld [vmem:[#allocation4 + $0x238] sm:$0xff]
    %v1674 = vld [vmem:[#allocation4 + $0x240] sm:$0xff]
    %v1675 = vld [vmem:[#allocation4 + $0x248] sm:$0xff]
    %v1676 = vld [vmem:[#allocation4 + $0x250] sm:$0xff]
    %v1677 = vld [vmem:[#allocation4 + $0x258] sm:$0xff]
    %v1678 = vld [vmem:[#allocation4 + $0x260] sm:$0xff]
    %v1679 = vld [vmem:[#allocation4 + $0x268] sm:$0xff]
    %v1680 = vld [vmem:[#allocation4 + $0x270] sm:$0xff]
    %v1681 = vld [vmem:[#allocation4 + $0x278] sm:$0xff]
    %v1682 = vld [vmem:[#allocation4 + $0x280] sm:$0xff]
    %v1683 = vld [vmem:[#allocation4 + $0x288] sm:$0xff]
    %v1684 = vld [vmem:[#allocation4 + $0x290] sm:$0xff]
    %v1685 = vld [vmem:[#allocation4 + $0x298] sm:$0xff]
    %v1686 = vld [vmem:[#allocation4 + $0x2a0] sm:$0xff]
    %v1687 = vld [vmem:[#allocation4 + $0x2a8] sm:$0xff]
    %v1688 = vld [vmem:[#allocation4 + $0x2b0] sm:$0xff]
    %v1689 = vld [vmem:[#allocation4 + $0x2b8] sm:$0xff]
    %v1690 = vld [vmem:[#allocation4 + $0x2c0] sm:$0xff]
    %v1691 = vld [vmem:[#allocation4 + $0x2c8] sm:$0xff]
    %v1692 = vld [vmem:[#allocation4 + $0x2d0] sm:$0xff]
    %v1693 = vld [vmem:[#allocation4 + $0x2d8] sm:$0xff]
    %v1694 = vld [vmem:[#allocation4 + $0x2e0] sm:$0xff]
    %v1695 = vld [vmem:[#allocation4 + $0x2e8] sm:$0xff]
    %v1696 = vld [vmem:[#allocation4 + $0x2f0] sm:$0xff]
    %v1697 = vld [vmem:[#allocation4 + $0x2f8] sm:$0xff]
    %v1698 = vld [vmem:[#allocation4 + $0x300] sm:$0xff]
    %v1699 = vld [vmem:[#allocation4 + $0x308] sm:$0xff]
    %v1700 = vld [vmem:[#allocation4 + $0x310] sm:$0xff]
    %v1701 = vld [vmem:[#allocation4 + $0x318] sm:$0xff]
    %v1702 = vld [vmem:[#allocation4 + $0x320] sm:$0xff]
    %v1703 = vld [vmem:[#allocation4 + $0x328] sm:$0xff]
    %v1704 = vld [vmem:[#allocation4 + $0x330] sm:$0xff]
    %v1705 = vld [vmem:[#allocation4 + $0x338] sm:$0xff]
    %v1706 = vld [vmem:[#allocation4 + $0x340] sm:$0xff]
    %v1707 = vld [vmem:[#allocation4 + $0x348] sm:$0xff]
    %v1708 = vld [vmem:[#allocation4 + $0x350] sm:$0xff]
    %v1709 = vld [vmem:[#allocation4 + $0x358] sm:$0xff]
    %v1710 = vld [vmem:[#allocation4 + $0x360] sm:$0xff]
    %v1711 = vld [vmem:[#allocation4 + $0x368] sm:$0xff]
    %v1712 = vld [vmem:[#allocation4 + $0x370] sm:$0xff]
    %v1713 = vld [vmem:[#allocation4 + $0x378] sm:$0xff]
    %v1714 = vld [vmem:[#allocation4 + $0x380] sm:$0xff]
    %v1715 = vld [vmem:[#allocation4 + $0x388] sm:$0xff]
    %v1716 = vld [vmem:[#allocation4 + $0x390] sm:$0xff]
    %v1717 = vld [vmem:[#allocation4 + $0x398] sm:$0xff]
    %v1718 = vld [vmem:[#allocation4 + $0x3a0] sm:$0xff]
    %v1719 = vld [vmem:[#allocation4 + $0x3a8] sm:$0xff]
    %v1720 = vld [vmem:[#allocation4 + $0x3b0] sm:$0xff]
    %v1721 = vld [vmem:[#allocation4 + $0x3b8] sm:$0xff]
    %v1722 = vld [vmem:[#allocation4 + $0x3c0] sm:$0xff]
    %v1723 = vld [vmem:[#allocation4 + $0x3c8] sm:$0xff]
    %v1724 = vld [vmem:[#allocation4 + $0x3d0] sm:$0xff]
    %v1725 = vld [vmem:[#allocation4 + $0x3d8] sm:$0xff]
    %v1726 = vld [vmem:[#allocation4 + $0x3e0] sm:$0xff]
    %v1727 = vld [vmem:[#allocation4 + $0x3e8] sm:$0xff]
    %v1728 = vld [vmem:[#allocation4 + $0x3f0] sm:$0xff]
    %v1729 = vld [vmem:[#allocation4 + $0x3f8] sm:$0xff]
    %v1730 = vld [vmem:[#allocation15] sm:$0xf]
    %v1732 = vlaneseq
    %v1733 = vshrl.u32 %v1732, 7
    %v1734 = vsub.s32 0, %v1733
    %v1735 = vrot.slane %v1730, %v1734
    %v1736 = vlaneseq
    %v1737 = vshrl.u32 %v1736, 7
    %v1738 = vsub.s32 1, %v1737
    %v1739 = vrot.slane %v1730, %v1738
    %v1740 = vlaneseq
    %v1741 = vshrl.u32 %v1740, 7
    %v1742 = vsub.s32 2, %v1741
    %v1743 = vrot.slane %v1730, %v1742
    %v1744 = vlaneseq
    %v1745 = vshrl.u32 %v1744, 7
    %v1746 = vsub.s32 3, %v1745
    %v1747 = vrot.slane %v1730, %v1746
    %v1754 = vunpack.c.l.b16 %v1600
    %v1755 = vunpack.c.h.b16 %v1600
    %v1756 = vunpack.c.l.b16 %v1601
    %v1757 = vunpack.c.h.b16 %v1601
    %v1758 = vpack.c.b16 %v1754, %v1754
    %v1759 = vpack.c.b16 %v1755, %v1755
    %v1760 = vpack.c.b16 %v1756, %v1756
    %v1761 = vpack.c.b16 %v1757, %v1757
    %1766 = vmatprep.subr.bf16.mxu0 %v1603
    %1767 = vmatpush1.bf16.msra.mxu0 %v1602
    %1768 = vmatprep.subr.bf16.mxu0 %v1607
    %1769 = vmatpush1.bf16.msra.mxu0 %v1606
    %1770 = vmatprep.subr.bf16.mxu0 %v1611
    %1771 = vmatpush1.bf16.msra.mxu0 %v1610
    %1772 = vmatprep.subr.bf16.mxu0 %v1615
    %1773 = vmatpush1.bf16.msra.mxu0 %v1614
    %1774 = vmatprep.subr.bf16.mxu0 %v1619
    %1775 = vmatpush1.bf16.msra.mxu0 %v1618
    %1776 = vmatprep.subr.bf16.mxu0 %v1623
    %1777 = vmatpush1.bf16.msra.mxu0 %v1622
    %1778 = vmatprep.subr.bf16.mxu0 %v1627
    %1779 = vmatpush1.bf16.msra.mxu0 %v1626
    %1780 = vmatprep.subr.bf16.mxu0 %v1631
    %1781 = vmatpush1.bf16.msra.mxu0 %v1630
    %1782 = vmatprep.subr.bf16.mxu0 %v1635
    %1783 = vmatpush1.bf16.msra.mxu0 %v1634
    %1784 = vmatprep.subr.bf16.mxu0 %v1639
    %1785 = vmatpush1.bf16.msra.mxu0 %v1638
    %1786 = vmatprep.subr.bf16.mxu0 %v1643
    %1787 = vmatpush1.bf16.msra.mxu0 %v1642
    %1788 = vmatprep.subr.bf16.mxu0 %v1647
    %1789 = vmatpush1.bf16.msra.mxu0 %v1646
    %1790 = vmatprep.subr.bf16.mxu0 %v1651
    %1791 = vmatpush1.bf16.msra.mxu0 %v1650
    %1792 = vmatprep.subr.bf16.mxu0 %v1655
    %1793 = vmatpush1.bf16.msra.mxu0 %v1654
    %1794 = vmatprep.subr.bf16.mxu0 %v1659
    %1795 = vmatpush1.bf16.msra.mxu0 %v1658
    %1796 = vmatprep.subr.bf16.mxu0 %v1663
    %1797 = vmatpush1.bf16.msra.mxu0 %v1662
    %1798 = vmatprep.mubr.bf16.mxu0 %v1759
    %1799 = vmatmul.mubr.bf16.gmra.mrb[0].mxu0 %v1758
    %v1800 = vpop.f32.mrb[0].mxu0
    %v1801 = vadd.f32 %v1735, %v1800
    %v1802 = vpop.f32.mrb[0].mxu0
    %v1803 = vadd.f32 %v1739, %v1802
    %v1804 = vpop.f32.mrb[0].mxu0
    %v1805 = vpop.f32.mrb[0].mxu0
    %1806 = vdwg.mxu0
    %1807 = vmatprep.subr.bf16.mxu0 %v1667
    %1808 = vmatpush1.bf16.msra.mxu0 %v1666
    %1809 = vmatprep.subr.bf16.mxu0 %v1671
    %1810 = vmatpush1.bf16.msra.mxu0 %v1670
    %1811 = vmatprep.subr.bf16.mxu0 %v1675
    %1812 = vmatpush1.bf16.msra.mxu0 %v1674
    %1813 = vmatprep.subr.bf16.mxu0 %v1679
    %1814 = vmatpush1.bf16.msra.mxu0 %v1678
    %1815 = vmatprep.subr.bf16.mxu0 %v1683
    %1816 = vmatpush1.bf16.msra.mxu0 %v1682
    %1817 = vmatprep.subr.bf16.mxu0 %v1687
    %1818 = vmatpush1.bf16.msra.mxu0 %v1686
    %1819 = vmatprep.subr.bf16.mxu0 %v1691
    %1820 = vmatpush1.bf16.msra.mxu0 %v1690
    %1821 = vmatprep.subr.bf16.mxu0 %v1695
    %1822 = vmatpush1.bf16.msra.mxu0 %v1694
    %1823 = vmatprep.subr.bf16.mxu0 %v1699
    %1824 = vmatpush1.bf16.msra.mxu0 %v1698
    %1825 = vmatprep.subr.bf16.mxu0 %v1703
    %1826 = vmatpush1.bf16.msra.mxu0 %v1702
    %1827 = vmatprep.subr.bf16.mxu0 %v1707
    %1828 = vmatpush1.bf16.msra.mxu0 %v1706
    %1829 = vmatprep.subr.bf16.mxu0 %v1711
    %1830 = vmatpush1.bf16.msra.mxu0 %v1710
    %1831 = vmatprep.subr.bf16.mxu0 %v1715
    %1832 = vmatpush1.bf16.msra.mxu0 %v1714
    %1833 = vmatprep.subr.bf16.mxu0 %v1719
    %1834 = vmatpush1.bf16.msra.mxu0 %v1718
    %1835 = vmatprep.subr.bf16.mxu0 %v1723
    %1836 = vmatpush1.bf16.msra.mxu0 %v1722
    %1837 = vmatprep.subr.bf16.mxu0 %v1727
    %1838 = vmatpush1.bf16.msra.mxu0 %v1726
    %1839 = vmatprep.mubr.bf16.mxu0 %v1761
    %1840 = vmatmul.mubr.bf16.gmra.mrb[0].mxu0 %v1760
    %v1841 = vpop.f32.mrb[0].mxu0
    %v1842 = vadd.f32 %v1801, %v1841
    %v1843 = vpop.f32.mrb[0].mxu0
    %v1844 = vadd.f32 %v1803, %v1843
    %v1845 = vpop.f32.mrb[0].mxu0
    %v1846 = vpop.f32.mrb[0].mxu0
    %1847 = vdwg.mxu0
    %1848 = vmatprep.subr.bf16.mxu0 %v1605
    %1849 = vmatpush1.bf16.msra.mxu0 %v1604
    %1850 = vmatprep.subr.bf16.mxu0 %v1609
    %1851 = vmatpush1.bf16.msra.mxu0 %v1608
    %1852 = vmatprep.subr.bf16.mxu0 %v1613
    %1853 = vmatpush1.bf16.msra.mxu0 %v1612
    %1854 = vmatprep.subr.bf16.mxu0 %v1617
    %1855 = vmatpush1.bf16.msra.mxu0 %v1616
    %1856 = vmatprep.subr.bf16.mxu0 %v1621
    %1857 = vmatpush1.bf16.msra.mxu0 %v1620
    %1858 = vmatprep.subr.bf16.mxu0 %v1625
    %1859 = vmatpush1.bf16.msra.mxu0 %v1624
    %1860 = vmatprep.subr.bf16.mxu0 %v1629
    %1861 = vmatpush1.bf16.msra.mxu0 %v1628
    %1862 = vmatprep.subr.bf16.mxu0 %v1633
    %1863 = vmatpush1.bf16.msra.mxu0 %v1632
    %1864 = vmatprep.subr.bf16.mxu0 %v1637
    %1865 = vmatpush1.bf16.msra.mxu0 %v1636
    %1866 = vmatprep.subr.bf16.mxu0 %v1641
    %1867 = vmatpush1.bf16.msra.mxu0 %v1640
    %1868 = vmatprep.subr.bf16.mxu0 %v1645
    %1869 = vmatpush1.bf16.msra.mxu0 %v1644
    %1870 = vmatprep.subr.bf16.mxu0 %v1649
    %1871 = vmatpush1.bf16.msra.mxu0 %v1648
    %1872 = vmatprep.subr.bf16.mxu0 %v1653
    %1873 = vmatpush1.bf16.msra.mxu0 %v1652
    %1874 = vmatprep.subr.bf16.mxu0 %v1657
    %1875 = vmatpush1.bf16.msra.mxu0 %v1656
    %1876 = vmatprep.subr.bf16.mxu0 %v1661
    %1877 = vmatpush1.bf16.msra.mxu0 %v1660
    %1878 = vmatprep.subr.bf16.mxu0 %v1665
    %1879 = vmatpush1.bf16.msra.mxu0 %v1664
    %1880 = vmatprep.mubr.bf16.mxu0 %v1759
    %1881 = vmatmul.mubr.bf16.gmra.mrb[0].mxu0 %v1758
    %v1882 = vpop.f32.mrb[0].mxu0
    %v1883 = vadd.f32 %v1743, %v1882
    %v1884 = vpop.f32.mrb[0].mxu0
    %v1885 = vadd.f32 %v1747, %v1884
    %v1886 = vpop.f32.mrb[0].mxu0
    %v1887 = vpop.f32.mrb[0].mxu0
    %1888 = vdwg.mxu0
    %1889 = vmatprep.subr.bf16.mxu0 %v1669
    %1890 = vmatpush1.bf16.msra.mxu0 %v1668
    %1891 = vmatprep.subr.bf16.mxu0 %v1673
    %1892 = vmatpush1.bf16.msra.mxu0 %v1672
    %1893 = vmatprep.subr.bf16.mxu0 %v1677
    %1894 = vmatpush1.bf16.msra.mxu0 %v1676
    %1895 = vmatprep.subr.bf16.mxu0 %v1681
    %1896 = vmatpush1.bf16.msra.mxu0 %v1680
    %1897 = vmatprep.subr.bf16.mxu0 %v1685
    %1898 = vmatpush1.bf16.msra.mxu0 %v1684
    %1899 = vmatprep.subr.bf16.mxu0 %v1689
    %1900 = vmatpush1.bf16.msra.mxu0 %v1688
    %1901 = vmatprep.subr.bf16.mxu0 %v1693
    %1902 = vmatpush1.bf16.msra.mxu0 %v1692
    %1903 = vmatprep.subr.bf16.mxu0 %v1697
    %1904 = vmatpush1.bf16.msra.mxu0 %v1696
    %1905 = vmatprep.subr.bf16.mxu0 %v1701
    %1906 = vmatpush1.bf16.msra.mxu0 %v1700
    %1907 = vmatprep.subr.bf16.mxu0 %v1705
    %1908 = vmatpush1.bf16.msra.mxu0 %v1704
    %1909 = vmatprep.subr.bf16.mxu0 %v1709
    %1910 = vmatpush1.bf16.msra.mxu0 %v1708
    %1911 = vmatprep.subr.bf16.mxu0 %v1713
    %1912 = vmatpush1.bf16.msra.mxu0 %v1712
    %1913 = vmatprep.subr.bf16.mxu0 %v1717
    %1914 = vmatpush1.bf16.msra.mxu0 %v1716
    %1915 = vmatprep.subr.bf16.mxu0 %v1721
    %1916 = vmatpush1.bf16.msra.mxu0 %v1720
    %1917 = vmatprep.subr.bf16.mxu0 %v1725
    %1918 = vmatpush1.bf16.msra.mxu0 %v1724
    %1919 = vmatprep.subr.bf16.mxu0 %v1729
    %1920 = vmatpush1.bf16.msra.mxu0 %v1728
    %1921 = vmatprep.mubr.bf16.mxu0 %v1761
    %1922 = vmatmul.mubr.bf16.gmra.mrb[0].mxu0 %v1760
    %v1923 = vpop.f32.mrb[0].mxu0
    %v1924 = vadd.f32 %v1883, %v1923
    %v1925 = vpop.f32.mrb[0].mxu0
    %v1926 = vadd.f32 %v1885, %v1925
    %v1927 = vpop.f32.mrb[0].mxu0
    %v1928 = vpop.f32.mrb[0].mxu0
    %1929 = vdwg.mxu0
    %1930 = vst [vmem:[%s39] sm:$0xff] %v825
    %1931 = vst [vmem:[%s39 + $0x8] sm:$0xff] %v827
    %1932 = vst [vmem:[%s41] sm:$0xff] %v948
    %1933 = vst [vmem:[%s41 + $0x8] sm:$0xff] %v950
    %1934 = vst [vmem:[%s43] sm:$0xff] %v1426
    %1935 = vst [vmem:[%s43 + $0x8] sm:$0xff] %v1428
    %1936 = vst [vmem:[%s45] sm:$0xff] %v1590
    %1937 = vst [vmem:[%s45 + $0x8] sm:$0xff] %v1592
    %1938 = vst [vmem:[%s47] sm:$0xff] %v1842
    %1939 = vst [vmem:[%s47 + $0x8] sm:$0xff] %v1844
    %1940 = vst [vmem:[%s49] sm:$0xff] %v1924
    %1941 = vst [vmem:[%s49 + $0x8] sm:$0xff] %v1926
    %s1942 = smul.u32 %s1596, 6
    %s1943 = sshll.u32 %s1942, 4
    %1944 = dma.done %s291, %s1943
    %v1945 = vld [vmem:[#allocation5] sm:$0xff]
    %v1946 = vld [vmem:[#allocation5 + $0x8] sm:$0xff]
    %v1947 = vld [vmem:[#allocation5 + $0x10] sm:$0xff]
    %v1948 = vld [vmem:[#allocation5 + $0x18] sm:$0xff]
    %v1949 = vld [vmem:[#allocation5 + $0x20] sm:$0xff]
    %v1950 = vld [vmem:[#allocation5 + $0x28] sm:$0xff]
    %v1951 = vld [vmem:[#allocation5 + $0x30] sm:$0xff]
    %v1952 = vld [vmem:[#allocation5 + $0x38] sm:$0xff]
    %v1953 = vld [vmem:[#allocation5 + $0x40] sm:$0xff]
    %v1954 = vld [vmem:[#allocation5 + $0x48] sm:$0xff]
    %v1955 = vld [vmem:[#allocation5 + $0x50] sm:$0xff]
    %v1956 = vld [vmem:[#allocation5 + $0x58] sm:$0xff]
    %v1957 = vld [vmem:[#allocation5 + $0x60] sm:$0xff]
    %v1958 = vld [vmem:[#allocation5 + $0x68] sm:$0xff]
    %v1959 = vld [vmem:[#allocation5 + $0x70] sm:$0xff]
    %v1960 = vld [vmem:[#allocation5 + $0x78] sm:$0xff]
    %v1961 = vld [vmem:[#allocation5 + $0x80] sm:$0xff]
    %v1962 = vld [vmem:[#allocation5 + $0x88] sm:$0xff]
    %v1963 = vld [vmem:[#allocation5 + $0x90] sm:$0xff]
    %v1964 = vld [vmem:[#allocation5 + $0x98] sm:$0xff]
    %v1965 = vld [vmem:[#allocation5 + $0xa0] sm:$0xff]
    %v1966 = vld [vmem:[#allocation5 + $0xa8] sm:$0xff]
    %v1967 = vld [vmem:[#allocation5 + $0xb0] sm:$0xff]
    %v1968 = vld [vmem:[#allocation5 + $0xb8] sm:$0xff]
    %v1969 = vld [vmem:[#allocation5 + $0xc0] sm:$0xff]
    %v1970 = vld [vmem:[#allocation5 + $0xc8] sm:$0xff]
    %v1971 = vld [vmem:[#allocation5 + $0xd0] sm:$0xff]
    %v1972 = vld [vmem:[#allocation5 + $0xd8] sm:$0xff]
    %v1973 = vld [vmem:[#allocation5 + $0xe0] sm:$0xff]
    %v1974 = vld [vmem:[#allocation5 + $0xe8] sm:$0xff]
    %v1975 = vld [vmem:[#allocation5 + $0xf0] sm:$0xff]
    %v1976 = vld [vmem:[#allocation5 + $0xf8] sm:$0xff]
    %v1977 = vld [vmem:[#allocation5 + $0x100] sm:$0xff]
    %v1978 = vld [vmem:[#allocation5 + $0x108] sm:$0xff]
    %v1979 = vld [vmem:[#allocation5 + $0x110] sm:$0xff]
    %v1980 = vld [vmem:[#allocation5 + $0x118] sm:$0xff]
    %v1981 = vld [vmem:[#allocation5 + $0x120] sm:$0xff]
    %v1982 = vld [vmem:[#allocation5 + $0x128] sm:$0xff]
    %v1983 = vld [vmem:[#allocation5 + $0x130] sm:$0xff]
    %v1984 = vld [vmem:[#allocation5 + $0x138] sm:$0xff]
    %v1985 = vld [vmem:[#allocation5 + $0x140] sm:$0xff]
    %v1986 = vld [vmem:[#allocation5 + $0x148] sm:$0xff]
    %v1987 = vld [vmem:[#allocation5 + $0x150] sm:$0xff]
    %v1988 = vld [vmem:[#allocation5 + $0x158] sm:$0xff]
    %v1989 = vld [vmem:[#allocation5 + $0x160] sm:$0xff]
    %v1990 = vld [vmem:[#allocation5 + $0x168] sm:$0xff]
    %v1991 = vld [vmem:[#allocation5 + $0x170] sm:$0xff]
    %v1992 = vld [vmem:[#allocation5 + $0x178] sm:$0xff]
    %v1993 = vld [vmem:[#allocation5 + $0x180] sm:$0xff]
    %v1994 = vld [vmem:[#allocation5 + $0x188] sm:$0xff]
    %v1995 = vld [vmem:[#allocation5 + $0x190] sm:$0xff]
    %v1996 = vld [vmem:[#allocation5 + $0x198] sm:$0xff]
    %v1997 = vld [vmem:[#allocation5 + $0x1a0] sm:$0xff]
    %v1998 = vld [vmem:[#allocation5 + $0x1a8] sm:$0xff]
    %v1999 = vld [vmem:[#allocation5 + $0x1b0] sm:$0xff]
    %v2000 = vld [vmem:[#allocation5 + $0x1b8] sm:$0xff]
    %v2001 = vld [vmem:[#allocation5 + $0x1c0] sm:$0xff]
    %v2002 = vld [vmem:[#allocation5 + $0x1c8] sm:$0xff]
    %v2003 = vld [vmem:[#allocation5 + $0x1d0] sm:$0xff]
    %v2004 = vld [vmem:[#allocation5 + $0x1d8] sm:$0xff]
    %v2005 = vld [vmem:[#allocation5 + $0x1e0] sm:$0xff]
    %v2006 = vld [vmem:[#allocation5 + $0x1e8] sm:$0xff]
    %v2007 = vld [vmem:[#allocation5 + $0x1f0] sm:$0xff]
    %v2008 = vld [vmem:[#allocation5 + $0x1f8] sm:$0xff]
    %v2009 = vld [vmem:[#allocation5 + $0x200] sm:$0xff]
    %v2010 = vld [vmem:[#allocation5 + $0x208] sm:$0xff]
    %v2011 = vld [vmem:[#allocation5 + $0x210] sm:$0xff]
    %v2012 = vld [vmem:[#allocation5 + $0x218] sm:$0xff]
    %v2013 = vld [vmem:[#allocation5 + $0x220] sm:$0xff]
    %v2014 = vld [vmem:[#allocation5 + $0x228] sm:$0xff]
    %v2015 = vld [vmem:[#allocation5 + $0x230] sm:$0xff]
    %v2016 = vld [vmem:[#allocation5 + $0x238] sm:$0xff]
    %v2017 = vld [vmem:[#allocation5 + $0x240] sm:$0xff]
    %v2018 = vld [vmem:[#allocation5 + $0x248] sm:$0xff]
    %v2019 = vld [vmem:[#allocation5 + $0x250] sm:$0xff]
    %v2020 = vld [vmem:[#allocation5 + $0x258] sm:$0xff]
    %v2021 = vld [vmem:[#allocation5 + $0x260] sm:$0xff]
    %v2022 = vld [vmem:[#allocation5 + $0x268] sm:$0xff]
    %v2023 = vld [vmem:[#allocation5 + $0x270] sm:$0xff]
    %v2024 = vld [vmem:[#allocation5 + $0x278] sm:$0xff]
    %v2025 = vld [vmem:[#allocation5 + $0x280] sm:$0xff]
    %v2026 = vld [vmem:[#allocation5 + $0x288] sm:$0xff]
    %v2027 = vld [vmem:[#allocation5 + $0x290] sm:$0xff]
    %v2028 = vld [vmem:[#allocation5 + $0x298] sm:$0xff]
    %v2029 = vld [vmem:[#allocation5 + $0x2a0] sm:$0xff]
    %v2030 = vld [vmem:[#allocation5 + $0x2a8] sm:$0xff]
    %v2031 = vld [vmem:[#allocation5 + $0x2b0] sm:$0xff]
    %v2032 = vld [vmem:[#allocation5 + $0x2b8] sm:$0xff]
    %v2033 = vld [vmem:[#allocation5 + $0x2c0] sm:$0xff]
    %v2034 = vld [vmem:[#allocation5 + $0x2c8] sm:$0xff]
    %v2035 = vld [vmem:[#allocation5 + $0x2d0] sm:$0xff]
    %v2036 = vld [vmem:[#allocation5 + $0x2d8] sm:$0xff]
    %v2037 = vld [vmem:[#allocation5 + $0x2e0] sm:$0xff]
    %v2038 = vld [vmem:[#allocation5 + $0x2e8] sm:$0xff]
    %v2039 = vld [vmem:[#allocation5 + $0x2f0] sm:$0xff]
    %v2040 = vld [vmem:[#allocation5 + $0x2f8] sm:$0xff]
    %v2041 = vpack.c.bf16 %v1426, %v1426
    %v2042 = vpack.c.bf16 %v1428, %v1428
    %v2043 = vld [vmem:[#allocation5 + $0x300] sm:$0xff]
    %v2044 = vld [vmem:[#allocation5 + $0x308] sm:$0xff]
    %v2045 = vld [vmem:[#allocation5 + $0x310] sm:$0xff]
    %v2046 = vld [vmem:[#allocation5 + $0x318] sm:$0xff]
    %v2047 = vld [vmem:[#allocation5 + $0x320] sm:$0xff]
    %v2048 = vld [vmem:[#allocation5 + $0x328] sm:$0xff]
    %v2049 = vld [vmem:[#allocation5 + $0x330] sm:$0xff]
    %v2050 = vld [vmem:[#allocation5 + $0x338] sm:$0xff]
    %v2051 = vld [vmem:[#allocation5 + $0x340] sm:$0xff]
    %v2052 = vld [vmem:[#allocation5 + $0x348] sm:$0xff]
    %v2053 = vld [vmem:[#allocation5 + $0x350] sm:$0xff]
    %v2054 = vld [vmem:[#allocation5 + $0x358] sm:$0xff]
    %v2055 = vld [vmem:[#allocation5 + $0x360] sm:$0xff]
    %v2056 = vld [vmem:[#allocation5 + $0x368] sm:$0xff]
    %v2057 = vld [vmem:[#allocation5 + $0x370] sm:$0xff]
    %v2058 = vld [vmem:[#allocation5 + $0x378] sm:$0xff]
    %v2059 = vld [vmem:[#allocation5 + $0x380] sm:$0xff]
    %v2060 = vld [vmem:[#allocation5 + $0x388] sm:$0xff]
    %v2061 = vld [vmem:[#allocation5 + $0x390] sm:$0xff]
    %v2062 = vld [vmem:[#allocation5 + $0x398] sm:$0xff]
    %v2063 = vld [vmem:[#allocation5 + $0x3a0] sm:$0xff]
    %v2064 = vld [vmem:[#allocation5 + $0x3a8] sm:$0xff]
    %v2065 = vld [vmem:[#allocation5 + $0x3b0] sm:$0xff]
    %v2066 = vld [vmem:[#allocation5 + $0x3b8] sm:$0xff]
    %v2067 = vld [vmem:[#allocation5 + $0x3c0] sm:$0xff]
    %v2068 = vld [vmem:[#allocation5 + $0x3c8] sm:$0xff]
    %v2069 = vld [vmem:[#allocation5 + $0x3d0] sm:$0xff]
    %v2070 = vld [vmem:[#allocation5 + $0x3d8] sm:$0xff]
    %v2071 = vld [vmem:[#allocation5 + $0x3e0] sm:$0xff]
    %v2072 = vld [vmem:[#allocation5 + $0x3e8] sm:$0xff]
    %v2073 = vld [vmem:[#allocation5 + $0x3f0] sm:$0xff]
    %v2074 = vld [vmem:[#allocation5 + $0x3f8] sm:$0xff]
    %v2075 = vld [vmem:[#allocation5 + $0x400] sm:$0xff]
    %v2076 = vld [vmem:[#allocation5 + $0x408] sm:$0xff]
    %v2077 = vld [vmem:[#allocation5 + $0x410] sm:$0xff]
    %v2078 = vld [vmem:[#allocation5 + $0x418] sm:$0xff]
    %v2079 = vld [vmem:[#allocation5 + $0x420] sm:$0xff]
    %v2080 = vld [vmem:[#allocation5 + $0x428] sm:$0xff]
    %v2081 = vld [vmem:[#allocation5 + $0x430] sm:$0xff]
    %v2082 = vld [vmem:[#allocation5 + $0x438] sm:$0xff]
    %v2083 = vld [vmem:[#allocation5 + $0x440] sm:$0xff]
    %v2084 = vld [vmem:[#allocation5 + $0x448] sm:$0xff]
    %v2085 = vld [vmem:[#allocation5 + $0x450] sm:$0xff]
    %v2086 = vld [vmem:[#allocation5 + $0x458] sm:$0xff]
    %v2087 = vld [vmem:[#allocation5 + $0x460] sm:$0xff]
    %v2088 = vld [vmem:[#allocation5 + $0x468] sm:$0xff]
    %v2089 = vld [vmem:[#allocation5 + $0x470] sm:$0xff]
    %v2090 = vld [vmem:[#allocation5 + $0x478] sm:$0xff]
    %v2091 = vld [vmem:[#allocation5 + $0x480] sm:$0xff]
    %v2092 = vld [vmem:[#allocation5 + $0x488] sm:$0xff]
    %v2093 = vld [vmem:[#allocation5 + $0x490] sm:$0xff]
    %v2094 = vld [vmem:[#allocation5 + $0x498] sm:$0xff]
    %v2095 = vld [vmem:[#allocation5 + $0x4a0] sm:$0xff]
    %v2096 = vld [vmem:[#allocation5 + $0x4a8] sm:$0xff]
    %v2097 = vld [vmem:[#allocation5 + $0x4b0] sm:$0xff]
    %v2098 = vld [vmem:[#allocation5 + $0x4b8] sm:$0xff]
    %v2099 = vld [vmem:[#allocation5 + $0x4c0] sm:$0xff]
    %v2100 = vld [vmem:[#allocation5 + $0x4c8] sm:$0xff]
    %v2101 = vld [vmem:[#allocation5 + $0x4d0] sm:$0xff]
    %v2102 = vld [vmem:[#allocation5 + $0x4d8] sm:$0xff]
    %v2103 = vld [vmem:[#allocation5 + $0x4e0] sm:$0xff]
    %v2104 = vld [vmem:[#allocation5 + $0x4e8] sm:$0xff]
    %v2105 = vld [vmem:[#allocation5 + $0x4f0] sm:$0xff]
    %v2106 = vld [vmem:[#allocation5 + $0x4f8] sm:$0xff]
    %v2107 = vld [vmem:[#allocation5 + $0x500] sm:$0xff]
    %v2108 = vld [vmem:[#allocation5 + $0x508] sm:$0xff]
    %v2109 = vld [vmem:[#allocation5 + $0x510] sm:$0xff]
    %v2110 = vld [vmem:[#allocation5 + $0x518] sm:$0xff]
    %v2111 = vld [vmem:[#allocation5 + $0x520] sm:$0xff]
    %v2112 = vld [vmem:[#allocation5 + $0x528] sm:$0xff]
    %v2113 = vld [vmem:[#allocation5 + $0x530] sm:$0xff]
    %v2114 = vld [vmem:[#allocation5 + $0x538] sm:$0xff]
    %v2115 = vld [vmem:[#allocation5 + $0x540] sm:$0xff]
    %v2116 = vld [vmem:[#allocation5 + $0x548] sm:$0xff]
    %v2117 = vld [vmem:[#allocation5 + $0x550] sm:$0xff]
    %v2118 = vld [vmem:[#allocation5 + $0x558] sm:$0xff]
    %v2119 = vld [vmem:[#allocation5 + $0x560] sm:$0xff]
    %v2120 = vld [vmem:[#allocation5 + $0x568] sm:$0xff]
    %v2121 = vld [vmem:[#allocation5 + $0x570] sm:$0xff]
    %v2122 = vld [vmem:[#allocation5 + $0x578] sm:$0xff]
    %v2123 = vld [vmem:[#allocation5 + $0x580] sm:$0xff]
    %v2124 = vld [vmem:[#allocation5 + $0x588] sm:$0xff]
    %v2125 = vld [vmem:[#allocation5 + $0x590] sm:$0xff]
    %v2126 = vld [vmem:[#allocation5 + $0x598] sm:$0xff]
    %v2127 = vld [vmem:[#allocation5 + $0x5a0] sm:$0xff]
    %v2128 = vld [vmem:[#allocation5 + $0x5a8] sm:$0xff]
    %v2129 = vld [vmem:[#allocation5 + $0x5b0] sm:$0xff]
    %v2130 = vld [vmem:[#allocation5 + $0x5b8] sm:$0xff]
    %v2131 = vld [vmem:[#allocation5 + $0x5c0] sm:$0xff]
    %v2132 = vld [vmem:[#allocation5 + $0x5c8] sm:$0xff]
    %v2133 = vld [vmem:[#allocation5 + $0x5d0] sm:$0xff]
    %v2134 = vld [vmem:[#allocation5 + $0x5d8] sm:$0xff]
    %v2135 = vld [vmem:[#allocation5 + $0x5e0] sm:$0xff]
    %v2136 = vld [vmem:[#allocation5 + $0x5e8] sm:$0xff]
    %v2137 = vld [vmem:[#allocation5 + $0x5f0] sm:$0xff]
    %v2138 = vld [vmem:[#allocation5 + $0x5f8] sm:$0xff]
    %v2139 = vpack.c.bf16 %v948, %v948
    %v2140 = vpack.c.bf16 %v950, %v950
    %2141 = vmatprep.subr.bf16.mxu0 %v2044
    %2142 = vmatpush1.bf16.msra.mxu0 %v2043
    %2143 = vmatprep.subr.bf16.mxu0 %v2050
    %2144 = vmatpush1.bf16.msra.mxu0 %v2049
    %2145 = vmatprep.subr.bf16.mxu0 %v2056
    %2146 = vmatpush1.bf16.msra.mxu0 %v2055
    %2147 = vmatprep.subr.bf16.mxu0 %v2062
    %2148 = vmatpush1.bf16.msra.mxu0 %v2061
    %2149 = vmatprep.subr.bf16.mxu0 %v2068
    %2150 = vmatpush1.bf16.msra.mxu0 %v2067
    %2151 = vmatprep.subr.bf16.mxu0 %v2074
    %2152 = vmatpush1.bf16.msra.mxu0 %v2073
    %2153 = vmatprep.subr.bf16.mxu0 %v2080
    %2154 = vmatpush1.bf16.msra.mxu0 %v2079
    %2155 = vmatprep.subr.bf16.mxu0 %v2086
    %2156 = vmatpush1.bf16.msra.mxu0 %v2085
    %2157 = vmatprep.subr.bf16.mxu0 %v2092
    %2158 = vmatpush1.bf16.msra.mxu0 %v2091
    %2159 = vmatprep.subr.bf16.mxu0 %v2098
    %2160 = vmatpush1.bf16.msra.mxu0 %v2097
    %2161 = vmatprep.subr.bf16.mxu0 %v2104
    %2162 = vmatpush1.bf16.msra.mxu0 %v2103
    %2163 = vmatprep.subr.bf16.mxu0 %v2110
    %2164 = vmatpush1.bf16.msra.mxu0 %v2109
    %2165 = vmatprep.subr.bf16.mxu0 %v2116
    %2166 = vmatpush1.bf16.msra.mxu0 %v2115
    %2167 = vmatprep.subr.bf16.mxu0 %v2122
    %2168 = vmatpush1.bf16.msra.mxu0 %v2121
    %2169 = vmatprep.subr.bf16.mxu0 %v2128
    %2170 = vmatpush1.bf16.msra.mxu0 %v2127
    %2171 = vmatprep.subr.bf16.mxu0 %v2134
    %2172 = vmatpush1.bf16.msra.mxu0 %v2133
    %2173 = vmatprep.mubr.bf16.mxu0 %v2140
    %2174 = vmatmul.mubr.bf16.gmra.mrb[0].mxu0 %v2139
    %v2175 = vpop.f32.mrb[0].mxu0
    %v2176 = vadd.f32 0.0, %v2175
    %v2177 = vpop.f32.mrb[0].mxu0
    %v2178 = vadd.f32 0.0, %v2177
    %v2179 = vpop.f32.mrb[0].mxu0
    %v2180 = vpop.f32.mrb[0].mxu0
    %2181 = vdwg.mxu0
    %2182 = vmatprep.subr.bf16.mxu0 %v2046
    %2183 = vmatpush1.bf16.msra.mxu0 %v2045
    %2184 = vmatprep.subr.bf16.mxu0 %v2052
    %2185 = vmatpush1.bf16.msra.mxu0 %v2051
    %2186 = vmatprep.subr.bf16.mxu0 %v2058
    %2187 = vmatpush1.bf16.msra.mxu0 %v2057
    %2188 = vmatprep.subr.bf16.mxu0 %v2064
    %2189 = vmatpush1.bf16.msra.mxu0 %v2063
    %2190 = vmatprep.subr.bf16.mxu0 %v2070
    %2191 = vmatpush1.bf16.msra.mxu0 %v2069
    %2192 = vmatprep.subr.bf16.mxu0 %v2076
    %2193 = vmatpush1.bf16.msra.mxu0 %v2075
    %2194 = vmatprep.subr.bf16.mxu0 %v2082
    %2195 = vmatpush1.bf16.msra.mxu0 %v2081
    %2196 = vmatprep.subr.bf16.mxu0 %v2088
    %2197 = vmatpush1.bf16.msra.mxu0 %v2087
    %2198 = vmatprep.subr.bf16.mxu0 %v2094
    %2199 = vmatpush1.bf16.msra.mxu0 %v2093
    %2200 = vmatprep.subr.bf16.mxu0 %v2100
    %2201 = vmatpush1.bf16.msra.mxu0 %v2099
    %2202 = vmatprep.subr.bf16.mxu0 %v2106
    %2203 = vmatpush1.bf16.msra.mxu0 %v2105
    %2204 = vmatprep.subr.bf16.mxu0 %v2112
    %2205 = vmatpush1.bf16.msra.mxu0 %v2111
    %2206 = vmatprep.subr.bf16.mxu0 %v2118
    %2207 = vmatpush1.bf16.msra.mxu0 %v2117
    %2208 = vmatprep.subr.bf16.mxu0 %v2124
    %2209 = vmatpush1.bf16.msra.mxu0 %v2123
    %2210 = vmatprep.subr.bf16.mxu0 %v2130
    %2211 = vmatpush1.bf16.msra.mxu0 %v2129
    %2212 = vmatprep.subr.bf16.mxu0 %v2136
    %2213 = vmatpush1.bf16.msra.mxu0 %v2135
    %2214 = vmatprep.mubr.bf16.mxu0 %v2140
    %2215 = vmatmul.mubr.bf16.gmra.mrb[0].mxu0 %v2139
    %v2216 = vpop.f32.mrb[0].mxu0
    %v2217 = vadd.f32 0.0, %v2216
    %v2218 = vpop.f32.mrb[0].mxu0
    %v2219 = vadd.f32 0.0, %v2218
    %v2220 = vpop.f32.mrb[0].mxu0
    %v2221 = vpop.f32.mrb[0].mxu0
    %2222 = vdwg.mxu0
    %2223 = vmatprep.subr.bf16.mxu0 %v2048
    %2224 = vmatpush1.bf16.msra.mxu0 %v2047
    %2225 = vmatprep.subr.bf16.mxu0 %v2054
    %2226 = vmatpush1.bf16.msra.mxu0 %v2053
    %2227 = vmatprep.subr.bf16.mxu0 %v2060
    %2228 = vmatpush1.bf16.msra.mxu0 %v2059
    %2229 = vmatprep.subr.bf16.mxu0 %v2066
    %2230 = vmatpush1.bf16.msra.mxu0 %v2065
    %2231 = vmatprep.subr.bf16.mxu0 %v2072
    %2232 = vmatpush1.bf16.msra.mxu0 %v2071
    %2233 = vmatprep.subr.bf16.mxu0 %v2078
    %2234 = vmatpush1.bf16.msra.mxu0 %v2077
    %2235 = vmatprep.subr.bf16.mxu0 %v2084
    %2236 = vmatpush1.bf16.msra.mxu0 %v2083
    %2237 = vmatprep.subr.bf16.mxu0 %v2090
    %2238 = vmatpush1.bf16.msra.mxu0 %v2089
    %2239 = vmatprep.subr.bf16.mxu0 %v2096
    %2240 = vmatpush1.bf16.msra.mxu0 %v2095
    %2241 = vmatprep.subr.bf16.mxu0 %v2102
    %2242 = vmatpush1.bf16.msra.mxu0 %v2101
    %2243 = vmatprep.subr.bf16.mxu0 %v2108
    %2244 = vmatpush1.bf16.msra.mxu0 %v2107
    %2245 = vmatprep.subr.bf16.mxu0 %v2114
    %2246 = vmatpush1.bf16.msra.mxu0 %v2113
    %2247 = vmatprep.subr.bf16.mxu0 %v2120
    %2248 = vmatpush1.bf16.msra.mxu0 %v2119
    %2249 = vmatprep.subr.bf16.mxu0 %v2126
    %2250 = vmatpush1.bf16.msra.mxu0 %v2125
    %2251 = vmatprep.subr.bf16.mxu0 %v2132
    %2252 = vmatpush1.bf16.msra.mxu0 %v2131
    %2253 = vmatprep.subr.bf16.mxu0 %v2138
    %2254 = vmatpush1.bf16.msra.mxu0 %v2137
    %2255 = vmatprep.mubr.bf16.mxu0 %v2140
    %2256 = vmatmul.mubr.bf16.gmra.mrb[0].mxu0 %v2139
    %v2257 = vpop.f32.mrb[0].mxu0
    %v2258 = vadd.f32 0.0, %v2257
    %v2259 = vpop.f32.mrb[0].mxu0
    %v2260 = vadd.f32 0.0, %v2259
    %v2261 = vpop.f32.mrb[0].mxu0
    %v2262 = vpop.f32.mrb[0].mxu0
    %2263 = vdwg.mxu0
    %2264 = vmatprep.subr.bf16.mxu0 %v1946
    %2265 = vmatpush1.bf16.msra.mxu0 %v1945
    %2266 = vmatprep.subr.bf16.mxu0 %v1952
    %2267 = vmatpush1.bf16.msra.mxu0 %v1951
    %2268 = vmatprep.subr.bf16.mxu0 %v1958
    %2269 = vmatpush1.bf16.msra.mxu0 %v1957
    %2270 = vmatprep.subr.bf16.mxu0 %v1964
    %2271 = vmatpush1.bf16.msra.mxu0 %v1963
    %2272 = vmatprep.subr.bf16.mxu0 %v1970
    %2273 = vmatpush1.bf16.msra.mxu0 %v1969
    %2274 = vmatprep.subr.bf16.mxu0 %v1976
    %2275 = vmatpush1.bf16.msra.mxu0 %v1975
    %2276 = vmatprep.subr.bf16.mxu0 %v1982
    %2277 = vmatpush1.bf16.msra.mxu0 %v1981
    %2278 = vmatprep.subr.bf16.mxu0 %v1988
    %2279 = vmatpush1.bf16.msra.mxu0 %v1987
    %2280 = vmatprep.subr.bf16.mxu0 %v1994
    %2281 = vmatpush1.bf16.msra.mxu0 %v1993
    %2282 = vmatprep.subr.bf16.mxu0 %v2000
    %2283 = vmatpush1.bf16.msra.mxu0 %v1999
    %2284 = vmatprep.subr.bf16.mxu0 %v2006
    %2285 = vmatpush1.bf16.msra.mxu0 %v2005
    %2286 = vmatprep.subr.bf16.mxu0 %v2012
    %2287 = vmatpush1.bf16.msra.mxu0 %v2011
    %2288 = vmatprep.subr.bf16.mxu0 %v2018
    %2289 = vmatpush1.bf16.msra.mxu0 %v2017
    %2290 = vmatprep.subr.bf16.mxu0 %v2024
    %2291 = vmatpush1.bf16.msra.mxu0 %v2023
    %2292 = vmatprep.subr.bf16.mxu0 %v2030
    %2293 = vmatpush1.bf16.msra.mxu0 %v2029
    %2294 = vmatprep.subr.bf16.mxu0 %v2036
    %2295 = vmatpush1.bf16.msra.mxu0 %v2035
    %2296 = vmatprep.mubr.bf16.mxu0 %v2042
    %2297 = vmatmul.mubr.bf16.gmra.mrb[0].mxu0 %v2041
    %v2298 = vpop.f32.mrb[0].mxu0
    %v2299 = vadd.f32 %v2176, %v2298
    %v2300 = vpop.f32.mrb[0].mxu0
    %v2301 = vadd.f32 %v2178, %v2300
    %v2302 = vpop.f32.mrb[0].mxu0
    %v2303 = vpop.f32.mrb[0].mxu0
    %2304 = vdwg.mxu0
    %2305 = vmatprep.subr.bf16.mxu0 %v1948
    %2306 = vmatpush1.bf16.msra.mxu0 %v1947
    %2307 = vmatprep.subr.bf16.mxu0 %v1954
    %2308 = vmatpush1.bf16.msra.mxu0 %v1953
    %2309 = vmatprep.subr.bf16.mxu0 %v1960
    %2310 = vmatpush1.bf16.msra.mxu0 %v1959
    %2311 = vmatprep.subr.bf16.mxu0 %v1966
    %2312 = vmatpush1.bf16.msra.mxu0 %v1965
    %2313 = vmatprep.subr.bf16.mxu0 %v1972
    %2314 = vmatpush1.bf16.msra.mxu0 %v1971
    %2315 = vmatprep.subr.bf16.mxu0 %v1978
    %2316 = vmatpush1.bf16.msra.mxu0 %v1977
    %2317 = vmatprep.subr.bf16.mxu0 %v1984
    %2318 = vmatpush1.bf16.msra.mxu0 %v1983
    %2319 = vmatprep.subr.bf16.mxu0 %v1990
    %2320 = vmatpush1.bf16.msra.mxu0 %v1989
    %2321 = vmatprep.subr.bf16.mxu0 %v1996
    %2322 = vmatpush1.bf16.msra.mxu0 %v1995
    %2323 = vmatprep.subr.bf16.mxu0 %v2002
    %2324 = vmatpush1.bf16.msra.mxu0 %v2001
    %2325 = vmatprep.subr.bf16.mxu0 %v2008
    %2326 = vmatpush1.bf16.msra.mxu0 %v2007
    %2327 = vmatprep.subr.bf16.mxu0 %v2014
    %2328 = vmatpush1.bf16.msra.mxu0 %v2013
    %2329 = vmatprep.subr.bf16.mxu0 %v2020
    %2330 = vmatpush1.bf16.msra.mxu0 %v2019
    %2331 = vmatprep.subr.bf16.mxu0 %v2026
    %2332 = vmatpush1.bf16.msra.mxu0 %v2025
    %2333 = vmatprep.subr.bf16.mxu0 %v2032
    %2334 = vmatpush1.bf16.msra.mxu0 %v2031
    %2335 = vmatprep.subr.bf16.mxu0 %v2038
    %2336 = vmatpush1.bf16.msra.mxu0 %v2037
    %2337 = vmatprep.mubr.bf16.mxu0 %v2042
    %2338 = vmatmul.mubr.bf16.gmra.mrb[0].mxu0 %v2041
    %v2339 = vpop.f32.mrb[0].mxu0
    %v2340 = vadd.f32 %v2217, %v2339
    %v2341 = vpop.f32.mrb[0].mxu0
    %v2342 = vadd.f32 %v2219, %v2341
    %v2343 = vpop.f32.mrb[0].mxu0
    %v2344 = vpop.f32.mrb[0].mxu0
    %2345 = vdwg.mxu0
    %2346 = vmatprep.subr.bf16.mxu0 %v1950
    %2347 = vmatpush1.bf16.msra.mxu0 %v1949
    %2348 = vmatprep.subr.bf16.mxu0 %v1956
    %2349 = vmatpush1.bf16.msra.mxu0 %v1955
    %2350 = vmatprep.subr.bf16.mxu0 %v1962
    %2351 = vmatpush1.bf16.msra.mxu0 %v1961
    %2352 = vmatprep.subr.bf16.mxu0 %v1968
    %2353 = vmatpush1.bf16.msra.mxu0 %v1967
    %2354 = vmatprep.subr.bf16.mxu0 %v1974
    %2355 = vmatpush1.bf16.msra.mxu0 %v1973
    %2356 = vmatprep.subr.bf16.mxu0 %v1980
    %2357 = vmatpush1.bf16.msra.mxu0 %v1979
    %2358 = vmatprep.subr.bf16.mxu0 %v1986
    %2359 = vmatpush1.bf16.msra.mxu0 %v1985
    %2360 = vmatprep.subr.bf16.mxu0 %v1992
    %2361 = vmatpush1.bf16.msra.mxu0 %v1991
    %2362 = vmatprep.subr.bf16.mxu0 %v1998
    %2363 = vmatpush1.bf16.msra.mxu0 %v1997
    %2364 = vmatprep.subr.bf16.mxu0 %v2004
    %2365 = vmatpush1.bf16.msra.mxu0 %v2003
    %2366 = vmatprep.subr.bf16.mxu0 %v2010
    %2367 = vmatpush1.bf16.msra.mxu0 %v2009
    %2368 = vmatprep.subr.bf16.mxu0 %v2016
    %2369 = vmatpush1.bf16.msra.mxu0 %v2015
    %2370 = vmatprep.subr.bf16.mxu0 %v2022
    %2371 = vmatpush1.bf16.msra.mxu0 %v2021
    %2372 = vmatprep.subr.bf16.mxu0 %v2028
    %2373 = vmatpush1.bf16.msra.mxu0 %v2027
    %2374 = vmatprep.subr.bf16.mxu0 %v2034
    %2375 = vmatpush1.bf16.msra.mxu0 %v2033
    %2376 = vmatprep.subr.bf16.mxu0 %v2040
    %2377 = vmatpush1.bf16.msra.mxu0 %v2039
    %2378 = vmatprep.mubr.bf16.mxu0 %v2042
    %2379 = vmatmul.mubr.bf16.gmra.mrb[0].mxu0 %v2041
    %v2380 = vpop.f32.mrb[0].mxu0
    %v2381 = vadd.f32 %v2258, %v2380
    %v2382 = vpop.f32.mrb[0].mxu0
    %v2383 = vadd.f32 %v2260, %v2382
    %v2384 = vpop.f32.mrb[0].mxu0
    %v2385 = vpop.f32.mrb[0].mxu0
    %2386 = vdwg.mxu0
    %v2387 = vld [vmem:[#allocation16] sm:$0x3f]
    %v2389 = vlaneseq
    %v2390 = vshrl.u32 %v2389, 7
    %v2391 = vsub.s32 0, %v2390
    %v2392 = vrot.slane %v2387, %v2391
    %v2393 = vlaneseq
    %v2394 = vshrl.u32 %v2393, 7
    %v2395 = vsub.s32 1, %v2394
    %v2396 = vrot.slane %v2387, %v2395
    %v2397 = vlaneseq
    %v2398 = vshrl.u32 %v2397, 7
    %v2399 = vsub.s32 2, %v2398
    %v2400 = vrot.slane %v2387, %v2399
    %v2401 = vlaneseq
    %v2402 = vshrl.u32 %v2401, 7
    %v2403 = vsub.s32 3, %v2402
    %v2404 = vrot.slane %v2387, %v2403
    %v2405 = vlaneseq
    %v2406 = vshrl.u32 %v2405, 7
    %v2407 = vsub.s32 4, %v2406
    %v2408 = vrot.slane %v2387, %v2407
    %v2409 = vlaneseq
    %v2410 = vshrl.u32 %v2409, 7
    %v2411 = vsub.s32 5, %v2410
    %v2412 = vrot.slane %v2387, %v2411
    %v2419 = vadd.f32 %v2299, %v2392
    %v2420 = vadd.f32 %v2301, %v2396
    %v2421 = vadd.f32 %v2340, %v2400
    %v2422 = vadd.f32 %v2342, %v2404
    %v2423 = vadd.f32 %v2381, %v2408
    %v2424 = vadd.f32 %v2383, %v2412
    %2425 = vst [vmem:[%s51] sm:$0xff] %v2419
    %2426 = vst [vmem:[%s51 + $0x8] sm:$0xff] %v2420
    %2427 = vst [vmem:[%s51 + $0x10] sm:$0xff] %v2421
    %2428 = vst [vmem:[%s51 + $0x18] sm:$0xff] %v2422
    %2429 = vst [vmem:[%s51 + $0x20] sm:$0xff] %v2423
    %2430 = vst [vmem:[%s51 + $0x28] sm:$0xff] %v2424
    %v2431 = vld [vmem:[#allocation5] sm:$0xff]
    %v2432 = vld [vmem:[#allocation5 + $0x8] sm:$0xff]
    %v2433 = vld [vmem:[#allocation5 + $0x10] sm:$0xff]
    %v2434 = vld [vmem:[#allocation5 + $0x18] sm:$0xff]
    %v2435 = vld [vmem:[#allocation5 + $0x20] sm:$0xff]
    %v2436 = vld [vmem:[#allocation5 + $0x28] sm:$0xff]
    %v2437 = vld [vmem:[#allocation5 + $0x30] sm:$0xff]
    %v2438 = vld [vmem:[#allocation5 + $0x38] sm:$0xff]
    %v2439 = vld [vmem:[#allocation5 + $0x40] sm:$0xff]
    %v2440 = vld [vmem:[#allocation5 + $0x48] sm:$0xff]
    %v2441 = vld [vmem:[#allocation5 + $0x50] sm:$0xff]
    %v2442 = vld [vmem:[#allocation5 + $0x58] sm:$0xff]
    %v2443 = vld [vmem:[#allocation5 + $0x60] sm:$0xff]
    %v2444 = vld [vmem:[#allocation5 + $0x68] sm:$0xff]
    %v2445 = vld [vmem:[#allocation5 + $0x70] sm:$0xff]
    %v2446 = vld [vmem:[#allocation5 + $0x78] sm:$0xff]
    %v2447 = vld [vmem:[#allocation5 + $0x80] sm:$0xff]
    %v2448 = vld [vmem:[#allocation5 + $0x88] sm:$0xff]
    %v2449 = vld [vmem:[#allocation5 + $0x90] sm:$0xff]
    %v2450 = vld [vmem:[#allocation5 + $0x98] sm:$0xff]
    %v2451 = vld [vmem:[#allocation5 + $0xa0] sm:$0xff]
    %v2452 = vld [vmem:[#allocation5 + $0xa8] sm:$0xff]
    %v2453 = vld [vmem:[#allocation5 + $0xb0] sm:$0xff]
    %v2454 = vld [vmem:[#allocation5 + $0xb8] sm:$0xff]
    %v2455 = vld [vmem:[#allocation5 + $0xc0] sm:$0xff]
    %v2456 = vld [vmem:[#allocation5 + $0xc8] sm:$0xff]
    %v2457 = vld [vmem:[#allocation5 + $0xd0] sm:$0xff]
    %v2458 = vld [vmem:[#allocation5 + $0xd8] sm:$0xff]
    %v2459 = vld [vmem:[#allocation5 + $0xe0] sm:$0xff]
    %v2460 = vld [vmem:[#allocation5 + $0xe8] sm:$0xff]
    %v2461 = vld [vmem:[#allocation5 + $0xf0] sm:$0xff]
    %v2462 = vld [vmem:[#allocation5 + $0xf8] sm:$0xff]
    %v2463 = vld [vmem:[#allocation5 + $0x100] sm:$0xff]
    %v2464 = vld [vmem:[#allocation5 + $0x108] sm:$0xff]
    %v2465 = vld [vmem:[#allocation5 + $0x110] sm:$0xff]
    %v2466 = vld [vmem:[#allocation5 + $0x118] sm:$0xff]
    %v2467 = vld [vmem:[#allocation5 + $0x120] sm:$0xff]
    %v2468 = vld [vmem:[#allocation5 + $0x128] sm:$0xff]
    %v2469 = vld [vmem:[#allocation5 + $0x130] sm:$0xff]
    %v2470 = vld [vmem:[#allocation5 + $0x138] sm:$0xff]
    %v2471 = vld [vmem:[#allocation5 + $0x140] sm:$0xff]
    %v2472 = vld [vmem:[#allocation5 + $0x148] sm:$0xff]
    %v2473 = vld [vmem:[#allocation5 + $0x150] sm:$0xff]
    %v2474 = vld [vmem:[#allocation5 + $0x158] sm:$0xff]
    %v2475 = vld [vmem:[#allocation5 + $0x160] sm:$0xff]
    %v2476 = vld [vmem:[#allocation5 + $0x168] sm:$0xff]
    %v2477 = vld [vmem:[#allocation5 + $0x170] sm:$0xff]
    %v2478 = vld [vmem:[#allocation5 + $0x178] sm:$0xff]
    %v2479 = vld [vmem:[#allocation5 + $0x180] sm:$0xff]
    %v2480 = vld [vmem:[#allocation5 + $0x188] sm:$0xff]
    %v2481 = vld [vmem:[#allocation5 + $0x190] sm:$0xff]
    %v2482 = vld [vmem:[#allocation5 + $0x198] sm:$0xff]
    %v2483 = vld [vmem:[#allocation5 + $0x1a0] sm:$0xff]
    %v2484 = vld [vmem:[#allocation5 + $0x1a8] sm:$0xff]
    %v2485 = vld [vmem:[#allocation5 + $0x1b0] sm:$0xff]
    %v2486 = vld [vmem:[#allocation5 + $0x1b8] sm:$0xff]
    %v2487 = vld [vmem:[#allocation5 + $0x1c0] sm:$0xff]
    %v2488 = vld [vmem:[#allocation5 + $0x1c8] sm:$0xff]
    %v2489 = vld [vmem:[#allocation5 + $0x1d0] sm:$0xff]
    %v2490 = vld [vmem:[#allocation5 + $0x1d8] sm:$0xff]
    %v2491 = vld [vmem:[#allocation5 + $0x1e0] sm:$0xff]
    %v2492 = vld [vmem:[#allocation5 + $0x1e8] sm:$0xff]
    %v2493 = vld [vmem:[#allocation5 + $0x1f0] sm:$0xff]
    %v2494 = vld [vmem:[#allocation5 + $0x1f8] sm:$0xff]
    %v2495 = vld [vmem:[#allocation5 + $0x200] sm:$0xff]
    %v2496 = vld [vmem:[#allocation5 + $0x208] sm:$0xff]
    %v2497 = vld [vmem:[#allocation5 + $0x210] sm:$0xff]
    %v2498 = vld [vmem:[#allocation5 + $0x218] sm:$0xff]
    %v2499 = vld [vmem:[#allocation5 + $0x220] sm:$0xff]
    %v2500 = vld [vmem:[#allocation5 + $0x228] sm:$0xff]
    %v2501 = vld [vmem:[#allocation5 + $0x230] sm:$0xff]
    %v2502 = vld [vmem:[#allocation5 + $0x238] sm:$0xff]
    %v2503 = vld [vmem:[#allocation5 + $0x240] sm:$0xff]
    %v2504 = vld [vmem:[#allocation5 + $0x248] sm:$0xff]
    %v2505 = vld [vmem:[#allocation5 + $0x250] sm:$0xff]
    %v2506 = vld [vmem:[#allocation5 + $0x258] sm:$0xff]
    %v2507 = vld [vmem:[#allocation5 + $0x260] sm:$0xff]
    %v2508 = vld [vmem:[#allocation5 + $0x268] sm:$0xff]
    %v2509 = vld [vmem:[#allocation5 + $0x270] sm:$0xff]
    %v2510 = vld [vmem:[#allocation5 + $0x278] sm:$0xff]
    %v2511 = vld [vmem:[#allocation5 + $0x280] sm:$0xff]
    %v2512 = vld [vmem:[#allocation5 + $0x288] sm:$0xff]
    %v2513 = vld [vmem:[#allocation5 + $0x290] sm:$0xff]
    %v2514 = vld [vmem:[#allocation5 + $0x298] sm:$0xff]
    %v2515 = vld [vmem:[#allocation5 + $0x2a0] sm:$0xff]
    %v2516 = vld [vmem:[#allocation5 + $0x2a8] sm:$0xff]
    %v2517 = vld [vmem:[#allocation5 + $0x2b0] sm:$0xff]
    %v2518 = vld [vmem:[#allocation5 + $0x2b8] sm:$0xff]
    %v2519 = vld [vmem:[#allocation5 + $0x2c0] sm:$0xff]
    %v2520 = vld [vmem:[#allocation5 + $0x2c8] sm:$0xff]
    %v2521 = vld [vmem:[#allocation5 + $0x2d0] sm:$0xff]
    %v2522 = vld [vmem:[#allocation5 + $0x2d8] sm:$0xff]
    %v2523 = vld [vmem:[#allocation5 + $0x2e0] sm:$0xff]
    %v2524 = vld [vmem:[#allocation5 + $0x2e8] sm:$0xff]
    %v2525 = vld [vmem:[#allocation5 + $0x2f0] sm:$0xff]
    %v2526 = vld [vmem:[#allocation5 + $0x2f8] sm:$0xff]
    %v2527 = vpack.c.bf16 %v1842, %v1842
    %v2528 = vpack.c.bf16 %v1844, %v1844
    %v2529 = vld [vmem:[#allocation5 + $0x300] sm:$0xff]
    %v2530 = vld [vmem:[#allocation5 + $0x308] sm:$0xff]
    %v2531 = vld [vmem:[#allocation5 + $0x310] sm:$0xff]
    %v2532 = vld [vmem:[#allocation5 + $0x318] sm:$0xff]
    %v2533 = vld [vmem:[#allocation5 + $0x320] sm:$0xff]
    %v2534 = vld [vmem:[#allocation5 + $0x328] sm:$0xff]
    %v2535 = vld [vmem:[#allocation5 + $0x330] sm:$0xff]
    %v2536 = vld [vmem:[#allocation5 + $0x338] sm:$0xff]
    %v2537 = vld [vmem:[#allocation5 + $0x340] sm:$0xff]
    %v2538 = vld [vmem:[#allocation5 + $0x348] sm:$0xff]
    %v2539 = vld [vmem:[#allocation5 + $0x350] sm:$0xff]
    %v2540 = vld [vmem:[#allocation5 + $0x358] sm:$0xff]
    %v2541 = vld [vmem:[#allocation5 + $0x360] sm:$0xff]
    %v2542 = vld [vmem:[#allocation5 + $0x368] sm:$0xff]
    %v2543 = vld [vmem:[#allocation5 + $0x370] sm:$0xff]
    %v2544 = vld [vmem:[#allocation5 + $0x378] sm:$0xff]
    %v2545 = vld [vmem:[#allocation5 + $0x380] sm:$0xff]
    %v2546 = vld [vmem:[#allocation5 + $0x388] sm:$0xff]
    %v2547 = vld [vmem:[#allocation5 + $0x390] sm:$0xff]
    %v2548 = vld [vmem:[#allocation5 + $0x398] sm:$0xff]
    %v2549 = vld [vmem:[#allocation5 + $0x3a0] sm:$0xff]
    %v2550 = vld [vmem:[#allocation5 + $0x3a8] sm:$0xff]
    %v2551 = vld [vmem:[#allocation5 + $0x3b0] sm:$0xff]
    %v2552 = vld [vmem:[#allocation5 + $0x3b8] sm:$0xff]
    %v2553 = vld [vmem:[#allocation5 + $0x3c0] sm:$0xff]
    %v2554 = vld [vmem:[#allocation5 + $0x3c8] sm:$0xff]
    %v2555 = vld [vmem:[#allocation5 + $0x3d0] sm:$0xff]
    %v2556 = vld [vmem:[#allocation5 + $0x3d8] sm:$0xff]
    %v2557 = vld [vmem:[#allocation5 + $0x3e0] sm:$0xff]
    %v2558 = vld [vmem:[#allocation5 + $0x3e8] sm:$0xff]
    %v2559 = vld [vmem:[#allocation5 + $0x3f0] sm:$0xff]
    %v2560 = vld [vmem:[#allocation5 + $0x3f8] sm:$0xff]
    %v2561 = vld [vmem:[#allocation5 + $0x400] sm:$0xff]
    %v2562 = vld [vmem:[#allocation5 + $0x408] sm:$0xff]
    %v2563 = vld [vmem:[#allocation5 + $0x410] sm:$0xff]
    %v2564 = vld [vmem:[#allocation5 + $0x418] sm:$0xff]
    %v2565 = vld [vmem:[#allocation5 + $0x420] sm:$0xff]
    %v2566 = vld [vmem:[#allocation5 + $0x428] sm:$0xff]
    %v2567 = vld [vmem:[#allocation5 + $0x430] sm:$0xff]
    %v2568 = vld [vmem:[#allocation5 + $0x438] sm:$0xff]
    %v2569 = vld [vmem:[#allocation5 + $0x440] sm:$0xff]
    %v2570 = vld [vmem:[#allocation5 + $0x448] sm:$0xff]
    %v2571 = vld [vmem:[#allocation5 + $0x450] sm:$0xff]
    %v2572 = vld [vmem:[#allocation5 + $0x458] sm:$0xff]
    %v2573 = vld [vmem:[#allocation5 + $0x460] sm:$0xff]
    %v2574 = vld [vmem:[#allocation5 + $0x468] sm:$0xff]
    %v2575 = vld [vmem:[#allocation5 + $0x470] sm:$0xff]
    %v2576 = vld [vmem:[#allocation5 + $0x478] sm:$0xff]
    %v2577 = vld [vmem:[#allocation5 + $0x480] sm:$0xff]
    %v2578 = vld [vmem:[#allocation5 + $0x488] sm:$0xff]
    %v2579 = vld [vmem:[#allocation5 + $0x490] sm:$0xff]
    %v2580 = vld [vmem:[#allocation5 + $0x498] sm:$0xff]
    %v2581 = vld [vmem:[#allocation5 + $0x4a0] sm:$0xff]
    %v2582 = vld [vmem:[#allocation5 + $0x4a8] sm:$0xff]
    %v2583 = vld [vmem:[#allocation5 + $0x4b0] sm:$0xff]
    %v2584 = vld [vmem:[#allocation5 + $0x4b8] sm:$0xff]
    %v2585 = vld [vmem:[#allocation5 + $0x4c0] sm:$0xff]
    %v2586 = vld [vmem:[#allocation5 + $0x4c8] sm:$0xff]
    %v2587 = vld [vmem:[#allocation5 + $0x4d0] sm:$0xff]
    %v2588 = vld [vmem:[#allocation5 + $0x4d8] sm:$0xff]
    %v2589 = vld [vmem:[#allocation5 + $0x4e0] sm:$0xff]
    %v2590 = vld [vmem:[#allocation5 + $0x4e8] sm:$0xff]
    %v2591 = vld [vmem:[#allocation5 + $0x4f0] sm:$0xff]
    %v2592 = vld [vmem:[#allocation5 + $0x4f8] sm:$0xff]
    %v2593 = vld [vmem:[#allocation5 + $0x500] sm:$0xff]
    %v2594 = vld [vmem:[#allocation5 + $0x508] sm:$0xff]
    %v2595 = vld [vmem:[#allocation5 + $0x510] sm:$0xff]
    %v2596 = vld [vmem:[#allocation5 + $0x518] sm:$0xff]
    %v2597 = vld [vmem:[#allocation5 + $0x520] sm:$0xff]
    %v2598 = vld [vmem:[#allocation5 + $0x528] sm:$0xff]
    %v2599 = vld [vmem:[#allocation5 + $0x530] sm:$0xff]
    %v2600 = vld [vmem:[#allocation5 + $0x538] sm:$0xff]
    %v2601 = vld [vmem:[#allocation5 + $0x540] sm:$0xff]
    %v2602 = vld [vmem:[#allocation5 + $0x548] sm:$0xff]
    %v2603 = vld [vmem:[#allocation5 + $0x550] sm:$0xff]
    %v2604 = vld [vmem:[#allocation5 + $0x558] sm:$0xff]
    %v2605 = vld [vmem:[#allocation5 + $0x560] sm:$0xff]
    %v2606 = vld [vmem:[#allocation5 + $0x568] sm:$0xff]
    %v2607 = vld [vmem:[#allocation5 + $0x570] sm:$0xff]
    %v2608 = vld [vmem:[#allocation5 + $0x578] sm:$0xff]
    %v2609 = vld [vmem:[#allocation5 + $0x580] sm:$0xff]
    %v2610 = vld [vmem:[#allocation5 + $0x588] sm:$0xff]
    %v2611 = vld [vmem:[#allocation5 + $0x590] sm:$0xff]
    %v2612 = vld [vmem:[#allocation5 + $0x598] sm:$0xff]
    %v2613 = vld [vmem:[#allocation5 + $0x5a0] sm:$0xff]
    %v2614 = vld [vmem:[#allocation5 + $0x5a8] sm:$0xff]
    %v2615 = vld [vmem:[#allocation5 + $0x5b0] sm:$0xff]
    %v2616 = vld [vmem:[#allocation5 + $0x5b8] sm:$0xff]
    %v2617 = vld [vmem:[#allocation5 + $0x5c0] sm:$0xff]
    %v2618 = vld [vmem:[#allocation5 + $0x5c8] sm:$0xff]
    %v2619 = vld [vmem:[#allocation5 + $0x5d0] sm:$0xff]
    %v2620 = vld [vmem:[#allocation5 + $0x5d8] sm:$0xff]
    %v2621 = vld [vmem:[#allocation5 + $0x5e0] sm:$0xff]
    %v2622 = vld [vmem:[#allocation5 + $0x5e8] sm:$0xff]
    %v2623 = vld [vmem:[#allocation5 + $0x5f0] sm:$0xff]
    %v2624 = vld [vmem:[#allocation5 + $0x5f8] sm:$0xff]
    %2625 = vmatprep.subr.bf16.mxu0 %v2530
    %2626 = vmatpush1.bf16.msra.mxu0 %v2529
    %2627 = vmatprep.subr.bf16.mxu0 %v2536
    %2628 = vmatpush1.bf16.msra.mxu0 %v2535
    %2629 = vmatprep.subr.bf16.mxu0 %v2542
    %2630 = vmatpush1.bf16.msra.mxu0 %v2541
    %2631 = vmatprep.subr.bf16.mxu0 %v2548
    %2632 = vmatpush1.bf16.msra.mxu0 %v2547
    %2633 = vmatprep.subr.bf16.mxu0 %v2554
    %2634 = vmatpush1.bf16.msra.mxu0 %v2553
    %2635 = vmatprep.subr.bf16.mxu0 %v2560
    %2636 = vmatpush1.bf16.msra.mxu0 %v2559
    %2637 = vmatprep.subr.bf16.mxu0 %v2566
    %2638 = vmatpush1.bf16.msra.mxu0 %v2565
    %2639 = vmatprep.subr.bf16.mxu0 %v2572
    %2640 = vmatpush1.bf16.msra.mxu0 %v2571
    %2641 = vmatprep.subr.bf16.mxu0 %v2578
    %2642 = vmatpush1.bf16.msra.mxu0 %v2577
    %2643 = vmatprep.subr.bf16.mxu0 %v2584
    %2644 = vmatpush1.bf16.msra.mxu0 %v2583
    %2645 = vmatprep.subr.bf16.mxu0 %v2590
    %2646 = vmatpush1.bf16.msra.mxu0 %v2589
    %2647 = vmatprep.subr.bf16.mxu0 %v2596
    %2648 = vmatpush1.bf16.msra.mxu0 %v2595
    %2649 = vmatprep.subr.bf16.mxu0 %v2602
    %2650 = vmatpush1.bf16.msra.mxu0 %v2601
    %2651 = vmatprep.subr.bf16.mxu0 %v2608
    %2652 = vmatpush1.bf16.msra.mxu0 %v2607
    %2653 = vmatprep.subr.bf16.mxu0 %v2614
    %2654 = vmatpush1.bf16.msra.mxu0 %v2613
    %2655 = vmatprep.subr.bf16.mxu0 %v2620
    %2656 = vmatpush1.bf16.msra.mxu0 %v2619
    %2657 = vmatprep.mubr.bf16.mxu0 %v2140
    %2658 = vmatmul.mubr.bf16.gmra.mrb[0].mxu0 %v2139
    %v2659 = vpop.f32.mrb[0].mxu0
    %v2660 = vadd.f32 0.0, %v2659
    %v2661 = vpop.f32.mrb[0].mxu0
    %v2662 = vadd.f32 0.0, %v2661
    %v2663 = vpop.f32.mrb[0].mxu0
    %v2664 = vpop.f32.mrb[0].mxu0
    %2665 = vdwg.mxu0
    %2666 = vmatprep.subr.bf16.mxu0 %v2532
    %2667 = vmatpush1.bf16.msra.mxu0 %v2531
    %2668 = vmatprep.subr.bf16.mxu0 %v2538
    %2669 = vmatpush1.bf16.msra.mxu0 %v2537
    %2670 = vmatprep.subr.bf16.mxu0 %v2544
    %2671 = vmatpush1.bf16.msra.mxu0 %v2543
    %2672 = vmatprep.subr.bf16.mxu0 %v2550
    %2673 = vmatpush1.bf16.msra.mxu0 %v2549
    %2674 = vmatprep.subr.bf16.mxu0 %v2556
    %2675 = vmatpush1.bf16.msra.mxu0 %v2555
    %2676 = vmatprep.subr.bf16.mxu0 %v2562
    %2677 = vmatpush1.bf16.msra.mxu0 %v2561
    %2678 = vmatprep.subr.bf16.mxu0 %v2568
    %2679 = vmatpush1.bf16.msra.mxu0 %v2567
    %2680 = vmatprep.subr.bf16.mxu0 %v2574
    %2681 = vmatpush1.bf16.msra.mxu0 %v2573
    %2682 = vmatprep.subr.bf16.mxu0 %v2580
    %2683 = vmatpush1.bf16.msra.mxu0 %v2579
    %2684 = vmatprep.subr.bf16.mxu0 %v2586
    %2685 = vmatpush1.bf16.msra.mxu0 %v2585
    %2686 = vmatprep.subr.bf16.mxu0 %v2592
    %2687 = vmatpush1.bf16.msra.mxu0 %v2591
    %2688 = vmatprep.subr.bf16.mxu0 %v2598
    %2689 = vmatpush1.bf16.msra.mxu0 %v2597
    %2690 = vmatprep.subr.bf16.mxu0 %v2604
    %2691 = vmatpush1.bf16.msra.mxu0 %v2603
    %2692 = vmatprep.subr.bf16.mxu0 %v2610
    %2693 = vmatpush1.bf16.msra.mxu0 %v2609
    %2694 = vmatprep.subr.bf16.mxu0 %v2616
    %2695 = vmatpush1.bf16.msra.mxu0 %v2615
    %2696 = vmatprep.subr.bf16.mxu0 %v2622
    %2697 = vmatpush1.bf16.msra.mxu0 %v2621
    %2698 = vmatprep.mubr.bf16.mxu0 %v2140
    %2699 = vmatmul.mubr.bf16.gmra.mrb[0].mxu0 %v2139
    %v2700 = vpop.f32.mrb[0].mxu0
    %v2701 = vadd.f32 0.0, %v2700
    %v2702 = vpop.f32.mrb[0].mxu0
    %v2703 = vadd.f32 0.0, %v2702
    %v2704 = vpop.f32.mrb[0].mxu0
    %v2705 = vpop.f32.mrb[0].mxu0
    %2706 = vdwg.mxu0
    %2707 = vmatprep.subr.bf16.mxu0 %v2534
    %2708 = vmatpush1.bf16.msra.mxu0 %v2533
    %2709 = vmatprep.subr.bf16.mxu0 %v2540
    %2710 = vmatpush1.bf16.msra.mxu0 %v2539
    %2711 = vmatprep.subr.bf16.mxu0 %v2546
    %2712 = vmatpush1.bf16.msra.mxu0 %v2545
    %2713 = vmatprep.subr.bf16.mxu0 %v2552
    %2714 = vmatpush1.bf16.msra.mxu0 %v2551
    %2715 = vmatprep.subr.bf16.mxu0 %v2558
    %2716 = vmatpush1.bf16.msra.mxu0 %v2557
    %2717 = vmatprep.subr.bf16.mxu0 %v2564
    %2718 = vmatpush1.bf16.msra.mxu0 %v2563
    %2719 = vmatprep.subr.bf16.mxu0 %v2570
    %2720 = vmatpush1.bf16.msra.mxu0 %v2569
    %2721 = vmatprep.subr.bf16.mxu0 %v2576
    %2722 = vmatpush1.bf16.msra.mxu0 %v2575
    %2723 = vmatprep.subr.bf16.mxu0 %v2582
    %2724 = vmatpush1.bf16.msra.mxu0 %v2581
    %2725 = vmatprep.subr.bf16.mxu0 %v2588
    %2726 = vmatpush1.bf16.msra.mxu0 %v2587
    %2727 = vmatprep.subr.bf16.mxu0 %v2594
    %2728 = vmatpush1.bf16.msra.mxu0 %v2593
    %2729 = vmatprep.subr.bf16.mxu0 %v2600
    %2730 = vmatpush1.bf16.msra.mxu0 %v2599
    %2731 = vmatprep.subr.bf16.mxu0 %v2606
    %2732 = vmatpush1.bf16.msra.mxu0 %v2605
    %2733 = vmatprep.subr.bf16.mxu0 %v2612
    %2734 = vmatpush1.bf16.msra.mxu0 %v2611
    %2735 = vmatprep.subr.bf16.mxu0 %v2618
    %2736 = vmatpush1.bf16.msra.mxu0 %v2617
    %2737 = vmatprep.subr.bf16.mxu0 %v2624
    %2738 = vmatpush1.bf16.msra.mxu0 %v2623
    %2739 = vmatprep.mubr.bf16.mxu0 %v2140
    %2740 = vmatmul.mubr.bf16.gmra.mrb[0].mxu0 %v2139
    %v2741 = vpop.f32.mrb[0].mxu0
    %v2742 = vadd.f32 0.0, %v2741
    %v2743 = vpop.f32.mrb[0].mxu0
    %v2744 = vadd.f32 0.0, %v2743
    %v2745 = vpop.f32.mrb[0].mxu0
    %v2746 = vpop.f32.mrb[0].mxu0
    %2747 = vdwg.mxu0
    %2748 = vmatprep.subr.bf16.mxu0 %v2432
    %2749 = vmatpush1.bf16.msra.mxu0 %v2431
    %2750 = vmatprep.subr.bf16.mxu0 %v2438
    %2751 = vmatpush1.bf16.msra.mxu0 %v2437
    %2752 = vmatprep.subr.bf16.mxu0 %v2444
    %2753 = vmatpush1.bf16.msra.mxu0 %v2443
    %2754 = vmatprep.subr.bf16.mxu0 %v2450
    %2755 = vmatpush1.bf16.msra.mxu0 %v2449
    %2756 = vmatprep.subr.bf16.mxu0 %v2456
    %2757 = vmatpush1.bf16.msra.mxu0 %v2455
    %2758 = vmatprep.subr.bf16.mxu0 %v2462
    %2759 = vmatpush1.bf16.msra.mxu0 %v2461
    %2760 = vmatprep.subr.bf16.mxu0 %v2468
    %2761 = vmatpush1.bf16.msra.mxu0 %v2467
    %2762 = vmatprep.subr.bf16.mxu0 %v2474
    %2763 = vmatpush1.bf16.msra.mxu0 %v2473
    %2764 = vmatprep.subr.bf16.mxu0 %v2480
    %2765 = vmatpush1.bf16.msra.mxu0 %v2479
    %2766 = vmatprep.subr.bf16.mxu0 %v2486
    %2767 = vmatpush1.bf16.msra.mxu0 %v2485
    %2768 = vmatprep.subr.bf16.mxu0 %v2492
    %2769 = vmatpush1.bf16.msra.mxu0 %v2491
    %2770 = vmatprep.subr.bf16.mxu0 %v2498
    %2771 = vmatpush1.bf16.msra.mxu0 %v2497
    %2772 = vmatprep.subr.bf16.mxu0 %v2504
    %2773 = vmatpush1.bf16.msra.mxu0 %v2503
    %2774 = vmatprep.subr.bf16.mxu0 %v2510
    %2775 = vmatpush1.bf16.msra.mxu0 %v2509
    %2776 = vmatprep.subr.bf16.mxu0 %v2516
    %2777 = vmatpush1.bf16.msra.mxu0 %v2515
    %2778 = vmatprep.subr.bf16.mxu0 %v2522
    %2779 = vmatpush1.bf16.msra.mxu0 %v2521
    %2780 = vmatprep.mubr.bf16.mxu0 %v2528
    %2781 = vmatmul.mubr.bf16.gmra.mrb[0].mxu0 %v2527
    %v2782 = vpop.f32.mrb[0].mxu0
    %v2783 = vadd.f32 %v2660, %v2782
    %v2784 = vpop.f32.mrb[0].mxu0
    %v2785 = vadd.f32 %v2662, %v2784
    %v2786 = vpop.f32.mrb[0].mxu0
    %v2787 = vpop.f32.mrb[0].mxu0
    %2788 = vdwg.mxu0
    %2789 = vmatprep.subr.bf16.mxu0 %v2434
    %2790 = vmatpush1.bf16.msra.mxu0 %v2433
    %2791 = vmatprep.subr.bf16.mxu0 %v2440
    %2792 = vmatpush1.bf16.msra.mxu0 %v2439
    %2793 = vmatprep.subr.bf16.mxu0 %v2446
    %2794 = vmatpush1.bf16.msra.mxu0 %v2445
    %2795 = vmatprep.subr.bf16.mxu0 %v2452
    %2796 = vmatpush1.bf16.msra.mxu0 %v2451
    %2797 = vmatprep.subr.bf16.mxu0 %v2458
    %2798 = vmatpush1.bf16.msra.mxu0 %v2457
    %2799 = vmatprep.subr.bf16.mxu0 %v2464
    %2800 = vmatpush1.bf16.msra.mxu0 %v2463
    %2801 = vmatprep.subr.bf16.mxu0 %v2470
    %2802 = vmatpush1.bf16.msra.mxu0 %v2469
    %2803 = vmatprep.subr.bf16.mxu0 %v2476
    %2804 = vmatpush1.bf16.msra.mxu0 %v2475
    %2805 = vmatprep.subr.bf16.mxu0 %v2482
    %2806 = vmatpush1.bf16.msra.mxu0 %v2481
    %2807 = vmatprep.subr.bf16.mxu0 %v2488
    %2808 = vmatpush1.bf16.msra.mxu0 %v2487
    %2809 = vmatprep.subr.bf16.mxu0 %v2494
    %2810 = vmatpush1.bf16.msra.mxu0 %v2493
    %2811 = vmatprep.subr.bf16.mxu0 %v2500
    %2812 = vmatpush1.bf16.msra.mxu0 %v2499
    %2813 = vmatprep.subr.bf16.mxu0 %v2506
    %2814 = vmatpush1.bf16.msra.mxu0 %v2505
    %2815 = vmatprep.subr.bf16.mxu0 %v2512
    %2816 = vmatpush1.bf16.msra.mxu0 %v2511
    %2817 = vmatprep.subr.bf16.mxu0 %v2518
    %2818 = vmatpush1.bf16.msra.mxu0 %v2517
    %2819 = vmatprep.subr.bf16.mxu0 %v2524
    %2820 = vmatpush1.bf16.msra.mxu0 %v2523
    %2821 = vmatprep.mubr.bf16.mxu0 %v2528
    %2822 = vmatmul.mubr.bf16.gmra.mrb[0].mxu0 %v2527
    %v2823 = vpop.f32.mrb[0].mxu0
    %v2824 = vadd.f32 %v2701, %v2823
    %v2825 = vpop.f32.mrb[0].mxu0
    %v2826 = vadd.f32 %v2703, %v2825
    %v2827 = vpop.f32.mrb[0].mxu0
    %v2828 = vpop.f32.mrb[0].mxu0
    %2829 = vdwg.mxu0
    %2830 = vmatprep.subr.bf16.mxu0 %v2436
    %2831 = vmatpush1.bf16.msra.mxu0 %v2435
    %2832 = vmatprep.subr.bf16.mxu0 %v2442
    %2833 = vmatpush1.bf16.msra.mxu0 %v2441
    %2834 = vmatprep.subr.bf16.mxu0 %v2448
    %2835 = vmatpush1.bf16.msra.mxu0 %v2447
    %2836 = vmatprep.subr.bf16.mxu0 %v2454
    %2837 = vmatpush1.bf16.msra.mxu0 %v2453
    %2838 = vmatprep.subr.bf16.mxu0 %v2460
    %2839 = vmatpush1.bf16.msra.mxu0 %v2459
    %2840 = vmatprep.subr.bf16.mxu0 %v2466
    %2841 = vmatpush1.bf16.msra.mxu0 %v2465
    %2842 = vmatprep.subr.bf16.mxu0 %v2472
    %2843 = vmatpush1.bf16.msra.mxu0 %v2471
    %2844 = vmatprep.subr.bf16.mxu0 %v2478
    %2845 = vmatpush1.bf16.msra.mxu0 %v2477
    %2846 = vmatprep.subr.bf16.mxu0 %v2484
    %2847 = vmatpush1.bf16.msra.mxu0 %v2483
    %2848 = vmatprep.subr.bf16.mxu0 %v2490
    %2849 = vmatpush1.bf16.msra.mxu0 %v2489
    %2850 = vmatprep.subr.bf16.mxu0 %v2496
    %2851 = vmatpush1.bf16.msra.mxu0 %v2495
    %2852 = vmatprep.subr.bf16.mxu0 %v2502
    %2853 = vmatpush1.bf16.msra.mxu0 %v2501
    %2854 = vmatprep.subr.bf16.mxu0 %v2508
    %2855 = vmatpush1.bf16.msra.mxu0 %v2507
    %2856 = vmatprep.subr.bf16.mxu0 %v2514
    %2857 = vmatpush1.bf16.msra.mxu0 %v2513
    %2858 = vmatprep.subr.bf16.mxu0 %v2520
    %2859 = vmatpush1.bf16.msra.mxu0 %v2519
    %2860 = vmatprep.subr.bf16.mxu0 %v2526
    %2861 = vmatpush1.bf16.msra.mxu0 %v2525
    %2862 = vmatprep.mubr.bf16.mxu0 %v2528
    %2863 = vmatmul.mubr.bf16.gmra.mrb[0].mxu0 %v2527
    %v2864 = vpop.f32.mrb[0].mxu0
    %v2865 = vadd.f32 %v2742, %v2864
    %v2866 = vpop.f32.mrb[0].mxu0
    %v2867 = vadd.f32 %v2744, %v2866
    %v2868 = vpop.f32.mrb[0].mxu0
    %v2869 = vpop.f32.mrb[0].mxu0
    %2870 = vdwg.mxu0
    %v2871 = vld [vmem:[#allocation16] sm:$0x3f]
    %v2873 = vlaneseq
    %v2874 = vshrl.u32 %v2873, 7
    %v2875 = vsub.s32 0, %v2874
    %v2876 = vrot.slane %v2871, %v2875
    %v2877 = vlaneseq
    %v2878 = vshrl.u32 %v2877, 7
    %v2879 = vsub.s32 1, %v2878
    %v2880 = vrot.slane %v2871, %v2879
    %v2881 = vlaneseq
    %v2882 = vshrl.u32 %v2881, 7
    %v2883 = vsub.s32 2, %v2882
    %v2884 = vrot.slane %v2871, %v2883
    %v2885 = vlaneseq
    %v2886 = vshrl.u32 %v2885, 7
    %v2887 = vsub.s32 3, %v2886
    %v2888 = vrot.slane %v2871, %v2887
    %v2889 = vlaneseq
    %v2890 = vshrl.u32 %v2889, 7
    %v2891 = vsub.s32 4, %v2890
    %v2892 = vrot.slane %v2871, %v2891
    %v2893 = vlaneseq
    %v2894 = vshrl.u32 %v2893, 7
    %v2895 = vsub.s32 5, %v2894
    %v2896 = vrot.slane %v2871, %v2895
    %v2903 = vadd.f32 %v2783, %v2876
    %v2904 = vadd.f32 %v2785, %v2880
    %v2905 = vadd.f32 %v2824, %v2884
    %v2906 = vadd.f32 %v2826, %v2888
    %v2907 = vadd.f32 %v2865, %v2892
    %v2908 = vadd.f32 %v2867, %v2896
    %2909 = vst [vmem:[%s53] sm:$0xff] %v2903
    %2910 = vst [vmem:[%s53 + $0x8] sm:$0xff] %v2904
    %2911 = vst [vmem:[%s53 + $0x10] sm:$0xff] %v2905
    %2912 = vst [vmem:[%s53 + $0x18] sm:$0xff] %v2906
    %2913 = vst [vmem:[%s53 + $0x20] sm:$0xff] %v2907
    %2914 = vst [vmem:[%s53 + $0x28] sm:$0xff] %v2908
    %s2915 = smul.u32 %s1596, 8
    %s2916 = sshll.u32 %s2915, 4
    %2917 = dma.done %s326, %s2916
    %v2918 = vld [vmem:[#allocation6] sm:$0xff]
    %v2919 = vld [vmem:[#allocation6 + $0x8] sm:$0xff]
    %v2920 = vld [vmem:[#allocation6 + $0x10] sm:$0xff]
    %v2921 = vld [vmem:[#allocation6 + $0x18] sm:$0xff]
    %v2922 = vld [vmem:[#allocation6 + $0x20] sm:$0xff]
    %v2923 = vld [vmem:[#allocation6 + $0x28] sm:$0xff]
    %v2924 = vld [vmem:[#allocation6 + $0x30] sm:$0xff]
    %v2925 = vld [vmem:[#allocation6 + $0x38] sm:$0xff]
    %v2926 = vld [vmem:[#allocation6 + $0x40] sm:$0xff]
    %v2927 = vld [vmem:[#allocation6 + $0x48] sm:$0xff]
    %v2928 = vld [vmem:[#allocation6 + $0x50] sm:$0xff]
    %v2929 = vld [vmem:[#allocation6 + $0x58] sm:$0xff]
    %v2930 = vld [vmem:[#allocation6 + $0x60] sm:$0xff]
    %v2931 = vld [vmem:[#allocation6 + $0x68] sm:$0xff]
    %v2932 = vld [vmem:[#allocation6 + $0x70] sm:$0xff]
    %v2933 = vld [vmem:[#allocation6 + $0x78] sm:$0xff]
    %v2934 = vld [vmem:[#allocation6 + $0x80] sm:$0xff]
    %v2935 = vld [vmem:[#allocation6 + $0x88] sm:$0xff]
    %v2936 = vld [vmem:[#allocation6 + $0x90] sm:$0xff]
    %v2937 = vld [vmem:[#allocation6 + $0x98] sm:$0xff]
    %v2938 = vld [vmem:[#allocation6 + $0xa0] sm:$0xff]
    %v2939 = vld [vmem:[#allocation6 + $0xa8] sm:$0xff]
    %v2940 = vld [vmem:[#allocation6 + $0xb0] sm:$0xff]
    %v2941 = vld [vmem:[#allocation6 + $0xb8] sm:$0xff]
    %v2942 = vld [vmem:[#allocation6 + $0xc0] sm:$0xff]
    %v2943 = vld [vmem:[#allocation6 + $0xc8] sm:$0xff]
    %v2944 = vld [vmem:[#allocation6 + $0xd0] sm:$0xff]
    %v2945 = vld [vmem:[#allocation6 + $0xd8] sm:$0xff]
    %v2946 = vld [vmem:[#allocation6 + $0xe0] sm:$0xff]
    %v2947 = vld [vmem:[#allocation6 + $0xe8] sm:$0xff]
    %v2948 = vld [vmem:[#allocation6 + $0xf0] sm:$0xff]
    %v2949 = vld [vmem:[#allocation6 + $0xf8] sm:$0xff]
    %v2950 = vld [vmem:[#allocation6 + $0x100] sm:$0xff]
    %v2951 = vld [vmem:[#allocation6 + $0x108] sm:$0xff]
    %v2952 = vld [vmem:[#allocation6 + $0x110] sm:$0xff]
    %v2953 = vld [vmem:[#allocation6 + $0x118] sm:$0xff]
    %v2954 = vld [vmem:[#allocation6 + $0x120] sm:$0xff]
    %v2955 = vld [vmem:[#allocation6 + $0x128] sm:$0xff]
    %v2956 = vld [vmem:[#allocation6 + $0x130] sm:$0xff]
    %v2957 = vld [vmem:[#allocation6 + $0x138] sm:$0xff]
    %v2958 = vld [vmem:[#allocation6 + $0x140] sm:$0xff]
    %v2959 = vld [vmem:[#allocation6 + $0x148] sm:$0xff]
    %v2960 = vld [vmem:[#allocation6 + $0x150] sm:$0xff]
    %v2961 = vld [vmem:[#allocation6 + $0x158] sm:$0xff]
    %v2962 = vld [vmem:[#allocation6 + $0x160] sm:$0xff]
    %v2963 = vld [vmem:[#allocation6 + $0x168] sm:$0xff]
    %v2964 = vld [vmem:[#allocation6 + $0x170] sm:$0xff]
    %v2965 = vld [vmem:[#allocation6 + $0x178] sm:$0xff]
    %v2966 = vld [vmem:[#allocation6 + $0x180] sm:$0xff]
    %v2967 = vld [vmem:[#allocation6 + $0x188] sm:$0xff]
    %v2968 = vld [vmem:[#allocation6 + $0x190] sm:$0xff]
    %v2969 = vld [vmem:[#allocation6 + $0x198] sm:$0xff]
    %v2970 = vld [vmem:[#allocation6 + $0x1a0] sm:$0xff]
    %v2971 = vld [vmem:[#allocation6 + $0x1a8] sm:$0xff]
    %v2972 = vld [vmem:[#allocation6 + $0x1b0] sm:$0xff]
    %v2973 = vld [vmem:[#allocation6 + $0x1b8] sm:$0xff]
    %v2974 = vld [vmem:[#allocation6 + $0x1c0] sm:$0xff]
    %v2975 = vld [vmem:[#allocation6 + $0x1c8] sm:$0xff]
    %v2976 = vld [vmem:[#allocation6 + $0x1d0] sm:$0xff]
    %v2977 = vld [vmem:[#allocation6 + $0x1d8] sm:$0xff]
    %v2978 = vld [vmem:[#allocation6 + $0x1e0] sm:$0xff]
    %v2979 = vld [vmem:[#allocation6 + $0x1e8] sm:$0xff]
    %v2980 = vld [vmem:[#allocation6 + $0x1f0] sm:$0xff]
    %v2981 = vld [vmem:[#allocation6 + $0x1f8] sm:$0xff]
    %v2982 = vld [vmem:[#allocation6 + $0x200] sm:$0xff]
    %v2983 = vld [vmem:[#allocation6 + $0x208] sm:$0xff]
    %v2984 = vld [vmem:[#allocation6 + $0x210] sm:$0xff]
    %v2985 = vld [vmem:[#allocation6 + $0x218] sm:$0xff]
    %v2986 = vld [vmem:[#allocation6 + $0x220] sm:$0xff]
    %v2987 = vld [vmem:[#allocation6 + $0x228] sm:$0xff]
    %v2988 = vld [vmem:[#allocation6 + $0x230] sm:$0xff]
    %v2989 = vld [vmem:[#allocation6 + $0x238] sm:$0xff]
    %v2990 = vld [vmem:[#allocation6 + $0x240] sm:$0xff]
    %v2991 = vld [vmem:[#allocation6 + $0x248] sm:$0xff]
    %v2992 = vld [vmem:[#allocation6 + $0x250] sm:$0xff]
    %v2993 = vld [vmem:[#allocation6 + $0x258] sm:$0xff]
    %v2994 = vld [vmem:[#allocation6 + $0x260] sm:$0xff]
    %v2995 = vld [vmem:[#allocation6 + $0x268] sm:$0xff]
    %v2996 = vld [vmem:[#allocation6 + $0x270] sm:$0xff]
    %v2997 = vld [vmem:[#allocation6 + $0x278] sm:$0xff]
    %v2998 = vld [vmem:[#allocation6 + $0x280] sm:$0xff]
    %v2999 = vld [vmem:[#allocation6 + $0x288] sm:$0xff]
    %v3000 = vld [vmem:[#allocation6 + $0x290] sm:$0xff]
    %v3001 = vld [vmem:[#allocation6 + $0x298] sm:$0xff]
    %v3002 = vld [vmem:[#allocation6 + $0x2a0] sm:$0xff]
    %v3003 = vld [vmem:[#allocation6 + $0x2a8] sm:$0xff]
    %v3004 = vld [vmem:[#allocation6 + $0x2b0] sm:$0xff]
    %v3005 = vld [vmem:[#allocation6 + $0x2b8] sm:$0xff]
    %v3006 = vld [vmem:[#allocation6 + $0x2c0] sm:$0xff]
    %v3007 = vld [vmem:[#allocation6 + $0x2c8] sm:$0xff]
    %v3008 = vld [vmem:[#allocation6 + $0x2d0] sm:$0xff]
    %v3009 = vld [vmem:[#allocation6 + $0x2d8] sm:$0xff]
    %v3010 = vld [vmem:[#allocation6 + $0x2e0] sm:$0xff]
    %v3011 = vld [vmem:[#allocation6 + $0x2e8] sm:$0xff]
    %v3012 = vld [vmem:[#allocation6 + $0x2f0] sm:$0xff]
    %v3013 = vld [vmem:[#allocation6 + $0x2f8] sm:$0xff]
    %v3014 = vld [vmem:[#allocation6 + $0x300] sm:$0xff]
    %v3015 = vld [vmem:[#allocation6 + $0x308] sm:$0xff]
    %v3016 = vld [vmem:[#allocation6 + $0x310] sm:$0xff]
    %v3017 = vld [vmem:[#allocation6 + $0x318] sm:$0xff]
    %v3018 = vld [vmem:[#allocation6 + $0x320] sm:$0xff]
    %v3019 = vld [vmem:[#allocation6 + $0x328] sm:$0xff]
    %v3020 = vld [vmem:[#allocation6 + $0x330] sm:$0xff]
    %v3021 = vld [vmem:[#allocation6 + $0x338] sm:$0xff]
    %v3022 = vld [vmem:[#allocation6 + $0x340] sm:$0xff]
    %v3023 = vld [vmem:[#allocation6 + $0x348] sm:$0xff]
    %v3024 = vld [vmem:[#allocation6 + $0x350] sm:$0xff]
    %v3025 = vld [vmem:[#allocation6 + $0x358] sm:$0xff]
    %v3026 = vld [vmem:[#allocation6 + $0x360] sm:$0xff]
    %v3027 = vld [vmem:[#allocation6 + $0x368] sm:$0xff]
    %v3028 = vld [vmem:[#allocation6 + $0x370] sm:$0xff]
    %v3029 = vld [vmem:[#allocation6 + $0x378] sm:$0xff]
    %v3030 = vld [vmem:[#allocation6 + $0x380] sm:$0xff]
    %v3031 = vld [vmem:[#allocation6 + $0x388] sm:$0xff]
    %v3032 = vld [vmem:[#allocation6 + $0x390] sm:$0xff]
    %v3033 = vld [vmem:[#allocation6 + $0x398] sm:$0xff]
    %v3034 = vld [vmem:[#allocation6 + $0x3a0] sm:$0xff]
    %v3035 = vld [vmem:[#allocation6 + $0x3a8] sm:$0xff]
    %v3036 = vld [vmem:[#allocation6 + $0x3b0] sm:$0xff]
    %v3037 = vld [vmem:[#allocation6 + $0x3b8] sm:$0xff]
    %v3038 = vld [vmem:[#allocation6 + $0x3c0] sm:$0xff]
    %v3039 = vld [vmem:[#allocation6 + $0x3c8] sm:$0xff]
    %v3040 = vld [vmem:[#allocation6 + $0x3d0] sm:$0xff]
    %v3041 = vld [vmem:[#allocation6 + $0x3d8] sm:$0xff]
    %v3042 = vld [vmem:[#allocation6 + $0x3e0] sm:$0xff]
    %v3043 = vld [vmem:[#allocation6 + $0x3e8] sm:$0xff]
    %v3044 = vld [vmem:[#allocation6 + $0x3f0] sm:$0xff]
    %v3045 = vld [vmem:[#allocation6 + $0x3f8] sm:$0xff]
    %v3046 = vpack.c.bf16 %v825, %v825
    %v3047 = vpack.c.bf16 %v827, %v827
    %v3048 = vld [vmem:[#allocation6 + $0x400] sm:$0xff]
    %v3049 = vld [vmem:[#allocation6 + $0x408] sm:$0xff]
    %v3050 = vld [vmem:[#allocation6 + $0x410] sm:$0xff]
    %v3051 = vld [vmem:[#allocation6 + $0x418] sm:$0xff]
    %v3052 = vld [vmem:[#allocation6 + $0x420] sm:$0xff]
    %v3053 = vld [vmem:[#allocation6 + $0x428] sm:$0xff]
    %v3054 = vld [vmem:[#allocation6 + $0x430] sm:$0xff]
    %v3055 = vld [vmem:[#allocation6 + $0x438] sm:$0xff]
    %v3056 = vld [vmem:[#allocation6 + $0x440] sm:$0xff]
    %v3057 = vld [vmem:[#allocation6 + $0x448] sm:$0xff]
    %v3058 = vld [vmem:[#allocation6 + $0x450] sm:$0xff]
    %v3059 = vld [vmem:[#allocation6 + $0x458] sm:$0xff]
    %v3060 = vld [vmem:[#allocation6 + $0x460] sm:$0xff]
    %v3061 = vld [vmem:[#allocation6 + $0x468] sm:$0xff]
    %v3062 = vld [vmem:[#allocation6 + $0x470] sm:$0xff]
    %v3063 = vld [vmem:[#allocation6 + $0x478] sm:$0xff]
    %v3064 = vld [vmem:[#allocation6 + $0x480] sm:$0xff]
    %v3065 = vld [vmem:[#allocation6 + $0x488] sm:$0xff]
    %v3066 = vld [vmem:[#allocation6 + $0x490] sm:$0xff]
    %v3067 = vld [vmem:[#allocation6 + $0x498] sm:$0xff]
    %v3068 = vld [vmem:[#allocation6 + $0x4a0] sm:$0xff]
    %v3069 = vld [vmem:[#allocation6 + $0x4a8] sm:$0xff]
    %v3070 = vld [vmem:[#allocation6 + $0x4b0] sm:$0xff]
    %v3071 = vld [vmem:[#allocation6 + $0x4b8] sm:$0xff]
    %v3072 = vld [vmem:[#allocation6 + $0x4c0] sm:$0xff]
    %v3073 = vld [vmem:[#allocation6 + $0x4c8] sm:$0xff]
    %v3074 = vld [vmem:[#allocation6 + $0x4d0] sm:$0xff]
    %v3075 = vld [vmem:[#allocation6 + $0x4d8] sm:$0xff]
    %v3076 = vld [vmem:[#allocation6 + $0x4e0] sm:$0xff]
    %v3077 = vld [vmem:[#allocation6 + $0x4e8] sm:$0xff]
    %v3078 = vld [vmem:[#allocation6 + $0x4f0] sm:$0xff]
    %v3079 = vld [vmem:[#allocation6 + $0x4f8] sm:$0xff]
    %v3080 = vld [vmem:[#allocation6 + $0x500] sm:$0xff]
    %v3081 = vld [vmem:[#allocation6 + $0x508] sm:$0xff]
    %v3082 = vld [vmem:[#allocation6 + $0x510] sm:$0xff]
    %v3083 = vld [vmem:[#allocation6 + $0x518] sm:$0xff]
    %v3084 = vld [vmem:[#allocation6 + $0x520] sm:$0xff]
    %v3085 = vld [vmem:[#allocation6 + $0x528] sm:$0xff]
    %v3086 = vld [vmem:[#allocation6 + $0x530] sm:$0xff]
    %v3087 = vld [vmem:[#allocation6 + $0x538] sm:$0xff]
    %v3088 = vld [vmem:[#allocation6 + $0x540] sm:$0xff]
    %v3089 = vld [vmem:[#allocation6 + $0x548] sm:$0xff]
    %v3090 = vld [vmem:[#allocation6 + $0x550] sm:$0xff]
    %v3091 = vld [vmem:[#allocation6 + $0x558] sm:$0xff]
    %v3092 = vld [vmem:[#allocation6 + $0x560] sm:$0xff]
    %v3093 = vld [vmem:[#allocation6 + $0x568] sm:$0xff]
    %v3094 = vld [vmem:[#allocation6 + $0x570] sm:$0xff]
    %v3095 = vld [vmem:[#allocation6 + $0x578] sm:$0xff]
    %v3096 = vld [vmem:[#allocation6 + $0x580] sm:$0xff]
    %v3097 = vld [vmem:[#allocation6 + $0x588] sm:$0xff]
    %v3098 = vld [vmem:[#allocation6 + $0x590] sm:$0xff]
    %v3099 = vld [vmem:[#allocation6 + $0x598] sm:$0xff]
    %v3100 = vld [vmem:[#allocation6 + $0x5a0] sm:$0xff]
    %v3101 = vld [vmem:[#allocation6 + $0x5a8] sm:$0xff]
    %v3102 = vld [vmem:[#allocation6 + $0x5b0] sm:$0xff]
    %v3103 = vld [vmem:[#allocation6 + $0x5b8] sm:$0xff]
    %v3104 = vld [vmem:[#allocation6 + $0x5c0] sm:$0xff]
    %v3105 = vld [vmem:[#allocation6 + $0x5c8] sm:$0xff]
    %v3106 = vld [vmem:[#allocation6 + $0x5d0] sm:$0xff]
    %v3107 = vld [vmem:[#allocation6 + $0x5d8] sm:$0xff]
    %v3108 = vld [vmem:[#allocation6 + $0x5e0] sm:$0xff]
    %v3109 = vld [vmem:[#allocation6 + $0x5e8] sm:$0xff]
    %v3110 = vld [vmem:[#allocation6 + $0x5f0] sm:$0xff]
    %v3111 = vld [vmem:[#allocation6 + $0x5f8] sm:$0xff]
    %v3112 = vld [vmem:[#allocation6 + $0x600] sm:$0xff]
    %v3113 = vld [vmem:[#allocation6 + $0x608] sm:$0xff]
    %v3114 = vld [vmem:[#allocation6 + $0x610] sm:$0xff]
    %v3115 = vld [vmem:[#allocation6 + $0x618] sm:$0xff]
    %v3116 = vld [vmem:[#allocation6 + $0x620] sm:$0xff]
    %v3117 = vld [vmem:[#allocation6 + $0x628] sm:$0xff]
    %v3118 = vld [vmem:[#allocation6 + $0x630] sm:$0xff]
    %v3119 = vld [vmem:[#allocation6 + $0x638] sm:$0xff]
    %v3120 = vld [vmem:[#allocation6 + $0x640] sm:$0xff]
    %v3121 = vld [vmem:[#allocation6 + $0x648] sm:$0xff]
    %v3122 = vld [vmem:[#allocation6 + $0x650] sm:$0xff]
    %v3123 = vld [vmem:[#allocation6 + $0x658] sm:$0xff]
    %v3124 = vld [vmem:[#allocation6 + $0x660] sm:$0xff]
    %v3125 = vld [vmem:[#allocation6 + $0x668] sm:$0xff]
    %v3126 = vld [vmem:[#allocation6 + $0x670] sm:$0xff]
    %v3127 = vld [vmem:[#allocation6 + $0x678] sm:$0xff]
    %v3128 = vld [vmem:[#allocation6 + $0x680] sm:$0xff]
    %v3129 = vld [vmem:[#allocation6 + $0x688] sm:$0xff]
    %v3130 = vld [vmem:[#allocation6 + $0x690] sm:$0xff]
    %v3131 = vld [vmem:[#allocation6 + $0x698] sm:$0xff]
    %v3132 = vld [vmem:[#allocation6 + $0x6a0] sm:$0xff]
    %v3133 = vld [vmem:[#allocation6 + $0x6a8] sm:$0xff]
    %v3134 = vld [vmem:[#allocation6 + $0x6b0] sm:$0xff]
    %v3135 = vld [vmem:[#allocation6 + $0x6b8] sm:$0xff]
    %v3136 = vld [vmem:[#allocation6 + $0x6c0] sm:$0xff]
    %v3137 = vld [vmem:[#allocation6 + $0x6c8] sm:$0xff]
    %v3138 = vld [vmem:[#allocation6 + $0x6d0] sm:$0xff]
    %v3139 = vld [vmem:[#allocation6 + $0x6d8] sm:$0xff]
    %v3140 = vld [vmem:[#allocation6 + $0x6e0] sm:$0xff]
    %v3141 = vld [vmem:[#allocation6 + $0x6e8] sm:$0xff]
    %v3142 = vld [vmem:[#allocation6 + $0x6f0] sm:$0xff]
    %v3143 = vld [vmem:[#allocation6 + $0x6f8] sm:$0xff]
    %v3144 = vld [vmem:[#allocation6 + $0x700] sm:$0xff]
    %v3145 = vld [vmem:[#allocation6 + $0x708] sm:$0xff]
    %v3146 = vld [vmem:[#allocation6 + $0x710] sm:$0xff]
    %v3147 = vld [vmem:[#allocation6 + $0x718] sm:$0xff]
    %v3148 = vld [vmem:[#allocation6 + $0x720] sm:$0xff]
    %v3149 = vld [vmem:[#allocation6 + $0x728] sm:$0xff]
    %v3150 = vld [vmem:[#allocation6 + $0x730] sm:$0xff]
    %v3151 = vld [vmem:[#allocation6 + $0x738] sm:$0xff]
    %v3152 = vld [vmem:[#allocation6 + $0x740] sm:$0xff]
    %v3153 = vld [vmem:[#allocation6 + $0x748] sm:$0xff]
    %v3154 = vld [vmem:[#allocation6 + $0x750] sm:$0xff]
    %v3155 = vld [vmem:[#allocation6 + $0x758] sm:$0xff]
    %v3156 = vld [vmem:[#allocation6 + $0x760] sm:$0xff]
    %v3157 = vld [vmem:[#allocation6 + $0x768] sm:$0xff]
    %v3158 = vld [vmem:[#allocation6 + $0x770] sm:$0xff]
    %v3159 = vld [vmem:[#allocation6 + $0x778] sm:$0xff]
    %v3160 = vld [vmem:[#allocation6 + $0x780] sm:$0xff]
    %v3161 = vld [vmem:[#allocation6 + $0x788] sm:$0xff]
    %v3162 = vld [vmem:[#allocation6 + $0x790] sm:$0xff]
    %v3163 = vld [vmem:[#allocation6 + $0x798] sm:$0xff]
    %v3164 = vld [vmem:[#allocation6 + $0x7a0] sm:$0xff]
    %v3165 = vld [vmem:[#allocation6 + $0x7a8] sm:$0xff]
    %v3166 = vld [vmem:[#allocation6 + $0x7b0] sm:$0xff]
    %v3167 = vld [vmem:[#allocation6 + $0x7b8] sm:$0xff]
    %v3168 = vld [vmem:[#allocation6 + $0x7c0] sm:$0xff]
    %v3169 = vld [vmem:[#allocation6 + $0x7c8] sm:$0xff]
    %v3170 = vld [vmem:[#allocation6 + $0x7d0] sm:$0xff]
    %v3171 = vld [vmem:[#allocation6 + $0x7d8] sm:$0xff]
    %v3172 = vld [vmem:[#allocation6 + $0x7e0] sm:$0xff]
    %v3173 = vld [vmem:[#allocation6 + $0x7e8] sm:$0xff]
    %v3174 = vld [vmem:[#allocation6 + $0x7f0] sm:$0xff]
    %v3175 = vld [vmem:[#allocation6 + $0x7f8] sm:$0xff]
    %v3176 = vpack.c.bf16 %v1590, %v1590
    %v3177 = vpack.c.bf16 %v1592, %v1592
    %3178 = vmatprep.subr.bf16.mxu0 %v3049
    %3179 = vmatpush1.bf16.msra.mxu0 %v3048
    %3180 = vmatprep.subr.bf16.mxu0 %v3057
    %3181 = vmatpush1.bf16.msra.mxu0 %v3056
    %3182 = vmatprep.subr.bf16.mxu0 %v3065
    %3183 = vmatpush1.bf16.msra.mxu0 %v3064
    %3184 = vmatprep.subr.bf16.mxu0 %v3073
    %3185 = vmatpush1.bf16.msra.mxu0 %v3072
    %3186 = vmatprep.subr.bf16.mxu0 %v3081
    %3187 = vmatpush1.bf16.msra.mxu0 %v3080
    %3188 = vmatprep.subr.bf16.mxu0 %v3089
    %3189 = vmatpush1.bf16.msra.mxu0 %v3088
    %3190 = vmatprep.subr.bf16.mxu0 %v3097
    %3191 = vmatpush1.bf16.msra.mxu0 %v3096
    %3192 = vmatprep.subr.bf16.mxu0 %v3105
    %3193 = vmatpush1.bf16.msra.mxu0 %v3104
    %3194 = vmatprep.subr.bf16.mxu0 %v3113
    %3195 = vmatpush1.bf16.msra.mxu0 %v3112
    %3196 = vmatprep.subr.bf16.mxu0 %v3121
    %3197 = vmatpush1.bf16.msra.mxu0 %v3120
    %3198 = vmatprep.subr.bf16.mxu0 %v3129
    %3199 = vmatpush1.bf16.msra.mxu0 %v3128
    %3200 = vmatprep.subr.bf16.mxu0 %v3137
    %3201 = vmatpush1.bf16.msra.mxu0 %v3136
    %3202 = vmatprep.subr.bf16.mxu0 %v3145
    %3203 = vmatpush1.bf16.msra.mxu0 %v3144
    %3204 = vmatprep.subr.bf16.mxu0 %v3153
    %3205 = vmatpush1.bf16.msra.mxu0 %v3152
    %3206 = vmatprep.subr.bf16.mxu0 %v3161
    %3207 = vmatpush1.bf16.msra.mxu0 %v3160
    %3208 = vmatprep.subr.bf16.mxu0 %v3169
    %3209 = vmatpush1.bf16.msra.mxu0 %v3168
    %3210 = vmatprep.mubr.bf16.mxu0 %v3177
    %3211 = vmatmul.mubr.bf16.gmra.mrb[0].mxu0 %v3176
    %v3212 = vpop.f32.mrb[0].mxu0
    %v3213 = vadd.f32 0.0, %v3212
    %v3214 = vpop.f32.mrb[0].mxu0
    %v3215 = vadd.f32 0.0, %v3214
    %v3216 = vpop.f32.mrb[0].mxu0
    %v3217 = vpop.f32.mrb[0].mxu0
    %3218 = vdwg.mxu0
    %3219 = vmatprep.subr.bf16.mxu0 %v3051
    %3220 = vmatpush1.bf16.msra.mxu0 %v3050
    %3221 = vmatprep.subr.bf16.mxu0 %v3059
    %3222 = vmatpush1.bf16.msra.mxu0 %v3058
    %3223 = vmatprep.subr.bf16.mxu0 %v3067
    %3224 = vmatpush1.bf16.msra.mxu0 %v3066
    %3225 = vmatprep.subr.bf16.mxu0 %v3075
    %3226 = vmatpush1.bf16.msra.mxu0 %v3074
    %3227 = vmatprep.subr.bf16.mxu0 %v3083
    %3228 = vmatpush1.bf16.msra.mxu0 %v3082
    %3229 = vmatprep.subr.bf16.mxu0 %v3091
    %3230 = vmatpush1.bf16.msra.mxu0 %v3090
    %3231 = vmatprep.subr.bf16.mxu0 %v3099
    %3232 = vmatpush1.bf16.msra.mxu0 %v3098
    %3233 = vmatprep.subr.bf16.mxu0 %v3107
    %3234 = vmatpush1.bf16.msra.mxu0 %v3106
    %3235 = vmatprep.subr.bf16.mxu0 %v3115
    %3236 = vmatpush1.bf16.msra.mxu0 %v3114
    %3237 = vmatprep.subr.bf16.mxu0 %v3123
    %3238 = vmatpush1.bf16.msra.mxu0 %v3122
    %3239 = vmatprep.subr.bf16.mxu0 %v3131
    %3240 = vmatpush1.bf16.msra.mxu0 %v3130
    %3241 = vmatprep.subr.bf16.mxu0 %v3139
    %3242 = vmatpush1.bf16.msra.mxu0 %v3138
    %3243 = vmatprep.subr.bf16.mxu0 %v3147
    %3244 = vmatpush1.bf16.msra.mxu0 %v3146
    %3245 = vmatprep.subr.bf16.mxu0 %v3155
    %3246 = vmatpush1.bf16.msra.mxu0 %v3154
    %3247 = vmatprep.subr.bf16.mxu0 %v3163
    %3248 = vmatpush1.bf16.msra.mxu0 %v3162
    %3249 = vmatprep.subr.bf16.mxu0 %v3171
    %3250 = vmatpush1.bf16.msra.mxu0 %v3170
    %3251 = vmatprep.mubr.bf16.mxu0 %v3177
    %3252 = vmatmul.mubr.bf16.gmra.mrb[0].mxu0 %v3176
    %v3253 = vpop.f32.mrb[0].mxu0
    %v3254 = vadd.f32 0.0, %v3253
    %v3255 = vpop.f32.mrb[0].mxu0
    %v3256 = vadd.f32 0.0, %v3255
    %v3257 = vpop.f32.mrb[0].mxu0
    %v3258 = vpop.f32.mrb[0].mxu0
    %3259 = vdwg.mxu0
    %3260 = vmatprep.subr.bf16.mxu0 %v3053
    %3261 = vmatpush1.bf16.msra.mxu0 %v3052
    %3262 = vmatprep.subr.bf16.mxu0 %v3061
    %3263 = vmatpush1.bf16.msra.mxu0 %v3060
    %3264 = vmatprep.subr.bf16.mxu0 %v3069
    %3265 = vmatpush1.bf16.msra.mxu0 %v3068
    %3266 = vmatprep.subr.bf16.mxu0 %v3077
    %3267 = vmatpush1.bf16.msra.mxu0 %v3076
    %3268 = vmatprep.subr.bf16.mxu0 %v3085
    %3269 = vmatpush1.bf16.msra.mxu0 %v3084
    %3270 = vmatprep.subr.bf16.mxu0 %v3093
    %3271 = vmatpush1.bf16.msra.mxu0 %v3092
    %3272 = vmatprep.subr.bf16.mxu0 %v3101
    %3273 = vmatpush1.bf16.msra.mxu0 %v3100
    %3274 = vmatprep.subr.bf16.mxu0 %v3109
    %3275 = vmatpush1.bf16.msra.mxu0 %v3108
    %3276 = vmatprep.subr.bf16.mxu0 %v3117
    %3277 = vmatpush1.bf16.msra.mxu0 %v3116
    %3278 = vmatprep.subr.bf16.mxu0 %v3125
    %3279 = vmatpush1.bf16.msra.mxu0 %v3124
    %3280 = vmatprep.subr.bf16.mxu0 %v3133
    %3281 = vmatpush1.bf16.msra.mxu0 %v3132
    %3282 = vmatprep.subr.bf16.mxu0 %v3141
    %3283 = vmatpush1.bf16.msra.mxu0 %v3140
    %3284 = vmatprep.subr.bf16.mxu0 %v3149
    %3285 = vmatpush1.bf16.msra.mxu0 %v3148
    %3286 = vmatprep.subr.bf16.mxu0 %v3157
    %3287 = vmatpush1.bf16.msra.mxu0 %v3156
    %3288 = vmatprep.subr.bf16.mxu0 %v3165
    %3289 = vmatpush1.bf16.msra.mxu0 %v3164
    %3290 = vmatprep.subr.bf16.mxu0 %v3173
    %3291 = vmatpush1.bf16.msra.mxu0 %v3172
    %3292 = vmatprep.mubr.bf16.mxu0 %v3177
    %3293 = vmatmul.mubr.bf16.gmra.mrb[0].mxu0 %v3176
    %v3294 = vpop.f32.mrb[0].mxu0
    %v3295 = vadd.f32 0.0, %v3294
    %v3296 = vpop.f32.mrb[0].mxu0
    %v3297 = vadd.f32 0.0, %v3296
    %v3298 = vpop.f32.mrb[0].mxu0
    %v3299 = vpop.f32.mrb[0].mxu0
    %3300 = vdwg.mxu0
    %3301 = vmatprep.subr.bf16.mxu0 %v3055
    %3302 = vmatpush1.bf16.msra.mxu0 %v3054
    %3303 = vmatprep.subr.bf16.mxu0 %v3063
    %3304 = vmatpush1.bf16.msra.mxu0 %v3062
    %3305 = vmatprep.subr.bf16.mxu0 %v3071
    %3306 = vmatpush1.bf16.msra.mxu0 %v3070
    %3307 = vmatprep.subr.bf16.mxu0 %v3079
    %3308 = vmatpush1.bf16.msra.mxu0 %v3078
    %3309 = vmatprep.subr.bf16.mxu0 %v3087
    %3310 = vmatpush1.bf16.msra.mxu0 %v3086
    %3311 = vmatprep.subr.bf16.mxu0 %v3095
    %3312 = vmatpush1.bf16.msra.mxu0 %v3094
    %3313 = vmatprep.subr.bf16.mxu0 %v3103
    %3314 = vmatpush1.bf16.msra.mxu0 %v3102
    %3315 = vmatprep.subr.bf16.mxu0 %v3111
    %3316 = vmatpush1.bf16.msra.mxu0 %v3110
    %3317 = vmatprep.subr.bf16.mxu0 %v3119
    %3318 = vmatpush1.bf16.msra.mxu0 %v3118
    %3319 = vmatprep.subr.bf16.mxu0 %v3127
    %3320 = vmatpush1.bf16.msra.mxu0 %v3126
    %3321 = vmatprep.subr.bf16.mxu0 %v3135
    %3322 = vmatpush1.bf16.msra.mxu0 %v3134
    %3323 = vmatprep.subr.bf16.mxu0 %v3143
    %3324 = vmatpush1.bf16.msra.mxu0 %v3142
    %3325 = vmatprep.subr.bf16.mxu0 %v3151
    %3326 = vmatpush1.bf16.msra.mxu0 %v3150
    %3327 = vmatprep.subr.bf16.mxu0 %v3159
    %3328 = vmatpush1.bf16.msra.mxu0 %v3158
    %3329 = vmatprep.subr.bf16.mxu0 %v3167
    %3330 = vmatpush1.bf16.msra.mxu0 %v3166
    %3331 = vmatprep.subr.bf16.mxu0 %v3175
    %3332 = vmatpush1.bf16.msra.mxu0 %v3174
    %3333 = vmatprep.mubr.bf16.mxu0 %v3177
    %3334 = vmatmul.mubr.bf16.gmra.mrb[0].mxu0 %v3176
    %v3335 = vpop.f32.mrb[0].mxu0
    %v3336 = vadd.f32 0.0, %v3335
    %v3337 = vpop.f32.mrb[0].mxu0
    %v3338 = vadd.f32 0.0, %v3337
    %v3339 = vpop.f32.mrb[0].mxu0
    %v3340 = vpop.f32.mrb[0].mxu0
    %3341 = vdwg.mxu0
    %3342 = vmatprep.subr.bf16.mxu0 %v2919
    %3343 = vmatpush1.bf16.msra.mxu0 %v2918
    %3344 = vmatprep.subr.bf16.mxu0 %v2927
    %3345 = vmatpush1.bf16.msra.mxu0 %v2926
    %3346 = vmatprep.subr.bf16.mxu0 %v2935
    %3347 = vmatpush1.bf16.msra.mxu0 %v2934
    %3348 = vmatprep.subr.bf16.mxu0 %v2943
    %3349 = vmatpush1.bf16.msra.mxu0 %v2942
    %3350 = vmatprep.subr.bf16.mxu0 %v2951
    %3351 = vmatpush1.bf16.msra.mxu0 %v2950
    %3352 = vmatprep.subr.bf16.mxu0 %v2959
    %3353 = vmatpush1.bf16.msra.mxu0 %v2958
    %3354 = vmatprep.subr.bf16.mxu0 %v2967
    %3355 = vmatpush1.bf16.msra.mxu0 %v2966
    %3356 = vmatprep.subr.bf16.mxu0 %v2975
    %3357 = vmatpush1.bf16.msra.mxu0 %v2974
    %3358 = vmatprep.subr.bf16.mxu0 %v2983
    %3359 = vmatpush1.bf16.msra.mxu0 %v2982
    %3360 = vmatprep.subr.bf16.mxu0 %v2991
    %3361 = vmatpush1.bf16.msra.mxu0 %v2990
    %3362 = vmatprep.subr.bf16.mxu0 %v2999
    %3363 = vmatpush1.bf16.msra.mxu0 %v2998
    %3364 = vmatprep.subr.bf16.mxu0 %v3007
    %3365 = vmatpush1.bf16.msra.mxu0 %v3006
    %3366 = vmatprep.subr.bf16.mxu0 %v3015
    %3367 = vmatpush1.bf16.msra.mxu0 %v3014
    %3368 = vmatprep.subr.bf16.mxu0 %v3023
    %3369 = vmatpush1.bf16.msra.mxu0 %v3022
    %3370 = vmatprep.subr.bf16.mxu0 %v3031
    %3371 = vmatpush1.bf16.msra.mxu0 %v3030
    %3372 = vmatprep.subr.bf16.mxu0 %v3039
    %3373 = vmatpush1.bf16.msra.mxu0 %v3038
    %3374 = vmatprep.mubr.bf16.mxu0 %v3047
    %3375 = vmatmul.mubr.bf16.gmra.mrb[0].mxu0 %v3046
    %v3376 = vpop.f32.mrb[0].mxu0
    %v3377 = vadd.f32 %v3213, %v3376
    %v3378 = vpop.f32.mrb[0].mxu0
    %v3379 = vadd.f32 %v3215, %v3378
    %v3380 = vpop.f32.mrb[0].mxu0
    %v3381 = vpop.f32.mrb[0].mxu0
    %3382 = vdwg.mxu0
    %3383 = vmatprep.subr.bf16.mxu0 %v2921
    %3384 = vmatpush1.bf16.msra.mxu0 %v2920
    %3385 = vmatprep.subr.bf16.mxu0 %v2929
    %3386 = vmatpush1.bf16.msra.mxu0 %v2928
    %3387 = vmatprep.subr.bf16.mxu0 %v2937
    %3388 = vmatpush1.bf16.msra.mxu0 %v2936
    %3389 = vmatprep.subr.bf16.mxu0 %v2945
    %3390 = vmatpush1.bf16.msra.mxu0 %v2944
    %3391 = vmatprep.subr.bf16.mxu0 %v2953
    %3392 = vmatpush1.bf16.msra.mxu0 %v2952
    %3393 = vmatprep.subr.bf16.mxu0 %v2961
    %3394 = vmatpush1.bf16.msra.mxu0 %v2960
    %3395 = vmatprep.subr.bf16.mxu0 %v2969
    %3396 = vmatpush1.bf16.msra.mxu0 %v2968
    %3397 = vmatprep.subr.bf16.mxu0 %v2977
    %3398 = vmatpush1.bf16.msra.mxu0 %v2976
    %3399 = vmatprep.subr.bf16.mxu0 %v2985
    %3400 = vmatpush1.bf16.msra.mxu0 %v2984
    %3401 = vmatprep.subr.bf16.mxu0 %v2993
    %3402 = vmatpush1.bf16.msra.mxu0 %v2992
    %3403 = vmatprep.subr.bf16.mxu0 %v3001
    %3404 = vmatpush1.bf16.msra.mxu0 %v3000
    %3405 = vmatprep.subr.bf16.mxu0 %v3009
    %3406 = vmatpush1.bf16.msra.mxu0 %v3008
    %3407 = vmatprep.subr.bf16.mxu0 %v3017
    %3408 = vmatpush1.bf16.msra.mxu0 %v3016
    %3409 = vmatprep.subr.bf16.mxu0 %v3025
    %3410 = vmatpush1.bf16.msra.mxu0 %v3024
    %3411 = vmatprep.subr.bf16.mxu0 %v3033
    %3412 = vmatpush1.bf16.msra.mxu0 %v3032
    %3413 = vmatprep.subr.bf16.mxu0 %v3041
    %3414 = vmatpush1.bf16.msra.mxu0 %v3040
    %3415 = vmatprep.mubr.bf16.mxu0 %v3047
    %3416 = vmatmul.mubr.bf16.gmra.mrb[0].mxu0 %v3046
    %v3417 = vpop.f32.mrb[0].mxu0
    %v3418 = vadd.f32 %v3254, %v3417
    %v3419 = vpop.f32.mrb[0].mxu0
    %v3420 = vadd.f32 %v3256, %v3419
    %v3421 = vpop.f32.mrb[0].mxu0
    %v3422 = vpop.f32.mrb[0].mxu0
    %3423 = vdwg.mxu0
    %3424 = vmatprep.subr.bf16.mxu0 %v2923
    %3425 = vmatpush1.bf16.msra.mxu0 %v2922
    %3426 = vmatprep.subr.bf16.mxu0 %v2931
    %3427 = vmatpush1.bf16.msra.mxu0 %v2930
    %3428 = vmatprep.subr.bf16.mxu0 %v2939
    %3429 = vmatpush1.bf16.msra.mxu0 %v2938
    %3430 = vmatprep.subr.bf16.mxu0 %v2947
    %3431 = vmatpush1.bf16.msra.mxu0 %v2946
    %3432 = vmatprep.subr.bf16.mxu0 %v2955
    %3433 = vmatpush1.bf16.msra.mxu0 %v2954
    %3434 = vmatprep.subr.bf16.mxu0 %v2963
    %3435 = vmatpush1.bf16.msra.mxu0 %v2962
    %3436 = vmatprep.subr.bf16.mxu0 %v2971
    %3437 = vmatpush1.bf16.msra.mxu0 %v2970
    %3438 = vmatprep.subr.bf16.mxu0 %v2979
    %3439 = vmatpush1.bf16.msra.mxu0 %v2978
    %3440 = vmatprep.subr.bf16.mxu0 %v2987
    %3441 = vmatpush1.bf16.msra.mxu0 %v2986
    %3442 = vmatprep.subr.bf16.mxu0 %v2995
    %3443 = vmatpush1.bf16.msra.mxu0 %v2994
    %3444 = vmatprep.subr.bf16.mxu0 %v3003
    %3445 = vmatpush1.bf16.msra.mxu0 %v3002
    %3446 = vmatprep.subr.bf16.mxu0 %v3011
    %3447 = vmatpush1.bf16.msra.mxu0 %v3010
    %3448 = vmatprep.subr.bf16.mxu0 %v3019
    %3449 = vmatpush1.bf16.msra.mxu0 %v3018
    %3450 = vmatprep.subr.bf16.mxu0 %v3027
    %3451 = vmatpush1.bf16.msra.mxu0 %v3026
    %3452 = vmatprep.subr.bf16.mxu0 %v3035
    %3453 = vmatpush1.bf16.msra.mxu0 %v3034
    %3454 = vmatprep.subr.bf16.mxu0 %v3043
    %3455 = vmatpush1.bf16.msra.mxu0 %v3042
    %3456 = vmatprep.mubr.bf16.mxu0 %v3047
    %3457 = vmatmul.mubr.bf16.gmra.mrb[0].mxu0 %v3046
    %v3458 = vpop.f32.mrb[0].mxu0
    %v3459 = vadd.f32 %v3295, %v3458
    %v3460 = vpop.f32.mrb[0].mxu0
    %v3461 = vadd.f32 %v3297, %v3460
    %v3462 = vpop.f32.mrb[0].mxu0
    %v3463 = vpop.f32.mrb[0].mxu0
    %3464 = vdwg.mxu0
    %3465 = vmatprep.subr.bf16.mxu0 %v2925
    %3466 = vmatpush1.bf16.msra.mxu0 %v2924
    %3467 = vmatprep.subr.bf16.mxu0 %v2933
    %3468 = vmatpush1.bf16.msra.mxu0 %v2932
    %3469 = vmatprep.subr.bf16.mxu0 %v2941
    %3470 = vmatpush1.bf16.msra.mxu0 %v2940
    %3471 = vmatprep.subr.bf16.mxu0 %v2949
    %3472 = vmatpush1.bf16.msra.mxu0 %v2948
    %3473 = vmatprep.subr.bf16.mxu0 %v2957
    %3474 = vmatpush1.bf16.msra.mxu0 %v2956
    %3475 = vmatprep.subr.bf16.mxu0 %v2965
    %3476 = vmatpush1.bf16.msra.mxu0 %v2964
    %3477 = vmatprep.subr.bf16.mxu0 %v2973
    %3478 = vmatpush1.bf16.msra.mxu0 %v2972
    %3479 = vmatprep.subr.bf16.mxu0 %v2981
    %3480 = vmatpush1.bf16.msra.mxu0 %v2980
    %3481 = vmatprep.subr.bf16.mxu0 %v2989
    %3482 = vmatpush1.bf16.msra.mxu0 %v2988
    %3483 = vmatprep.subr.bf16.mxu0 %v2997
    %3484 = vmatpush1.bf16.msra.mxu0 %v2996
    %3485 = vmatprep.subr.bf16.mxu0 %v3005
    %3486 = vmatpush1.bf16.msra.mxu0 %v3004
    %3487 = vmatprep.subr.bf16.mxu0 %v3013
    %3488 = vmatpush1.bf16.msra.mxu0 %v3012
    %3489 = vmatprep.subr.bf16.mxu0 %v3021
    %3490 = vmatpush1.bf16.msra.mxu0 %v3020
    %3491 = vmatprep.subr.bf16.mxu0 %v3029
    %3492 = vmatpush1.bf16.msra.mxu0 %v3028
    %3493 = vmatprep.subr.bf16.mxu0 %v3037
    %3494 = vmatpush1.bf16.msra.mxu0 %v3036
    %3495 = vmatprep.subr.bf16.mxu0 %v3045
    %3496 = vmatpush1.bf16.msra.mxu0 %v3044
    %3497 = vmatprep.mubr.bf16.mxu0 %v3047
    %3498 = vmatmul.mubr.bf16.gmra.mrb[0].mxu0 %v3046
    %v3499 = vpop.f32.mrb[0].mxu0
    %v3500 = vadd.f32 %v3336, %v3499
    %v3501 = vpop.f32.mrb[0].mxu0
    %v3502 = vadd.f32 %v3338, %v3501
    %v3503 = vpop.f32.mrb[0].mxu0
    %v3504 = vpop.f32.mrb[0].mxu0
    %3505 = vdwg.mxu0
    %v3506 = vld [vmem:[#allocation18] sm:$0xff]
    %v3508 = vlaneseq
    %v3509 = vshrl.u32 %v3508, 7
    %v3510 = vsub.s32 0, %v3509
    %v3511 = vrot.slane %v3506, %v3510
    %v3512 = vlaneseq
    %v3513 = vshrl.u32 %v3512, 7
    %v3514 = vsub.s32 1, %v3513
    %v3515 = vrot.slane %v3506, %v3514
    %v3516 = vlaneseq
    %v3517 = vshrl.u32 %v3516, 7
    %v3518 = vsub.s32 2, %v3517
    %v3519 = vrot.slane %v3506, %v3518
    %v3520 = vlaneseq
    %v3521 = vshrl.u32 %v3520, 7
    %v3522 = vsub.s32 3, %v3521
    %v3523 = vrot.slane %v3506, %v3522
    %v3524 = vlaneseq
    %v3525 = vshrl.u32 %v3524, 7
    %v3526 = vsub.s32 4, %v3525
    %v3527 = vrot.slane %v3506, %v3526
    %v3528 = vlaneseq
    %v3529 = vshrl.u32 %v3528, 7
    %v3530 = vsub.s32 5, %v3529
    %v3531 = vrot.slane %v3506, %v3530
    %v3532 = vlaneseq
    %v3533 = vshrl.u32 %v3532, 7
    %v3534 = vsub.s32 6, %v3533
    %v3535 = vrot.slane %v3506, %v3534
    %v3536 = vlaneseq
    %v3537 = vshrl.u32 %v3536, 7
    %v3538 = vsub.s32 7, %v3537
    %v3539 = vrot.slane %v3506, %v3538
    %v3548 = vadd.f32 %v3377, %v3511
    %v3549 = vadd.f32 %v3379, %v3515
    %v3550 = vadd.f32 %v3418, %v3519
    %v3551 = vadd.f32 %v3420, %v3523
    %v3552 = vadd.f32 %v3459, %v3527
    %v3553 = vadd.f32 %v3461, %v3531
    %v3554 = vadd.f32 %v3500, %v3535
    %v3555 = vadd.f32 %v3502, %v3539
    %3556 = vst [vmem:[%s55] sm:$0xff] %v3548
    %3557 = vst [vmem:[%s55 + $0x8] sm:$0xff] %v3549
    %3558 = vst [vmem:[%s55 + $0x10] sm:$0xff] %v3550
    %3559 = vst [vmem:[%s55 + $0x18] sm:$0xff] %v3551
    %3560 = vst [vmem:[%s55 + $0x20] sm:$0xff] %v3552
    %3561 = vst [vmem:[%s55 + $0x28] sm:$0xff] %v3553
    %3562 = vst [vmem:[%s55 + $0x30] sm:$0xff] %v3554
    %3563 = vst [vmem:[%s55 + $0x38] sm:$0xff] %v3555
    %v3564 = vld [vmem:[#allocation6] sm:$0xff]
    %v3565 = vld [vmem:[#allocation6 + $0x8] sm:$0xff]
    %v3566 = vld [vmem:[#allocation6 + $0x10] sm:$0xff]
    %v3567 = vld [vmem:[#allocation6 + $0x18] sm:$0xff]
    %v3568 = vld [vmem:[#allocation6 + $0x20] sm:$0xff]
    %v3569 = vld [vmem:[#allocation6 + $0x28] sm:$0xff]
    %v3570 = vld [vmem:[#allocation6 + $0x30] sm:$0xff]
    %v3571 = vld [vmem:[#allocation6 + $0x38] sm:$0xff]
    %v3572 = vld [vmem:[#allocation6 + $0x40] sm:$0xff]
    %v3573 = vld [vmem:[#allocation6 + $0x48] sm:$0xff]
    %v3574 = vld [vmem:[#allocation6 + $0x50] sm:$0xff]
    %v3575 = vld [vmem:[#allocation6 + $0x58] sm:$0xff]
    %v3576 = vld [vmem:[#allocation6 + $0x60] sm:$0xff]
    %v3577 = vld [vmem:[#allocation6 + $0x68] sm:$0xff]
    %v3578 = vld [vmem:[#allocation6 + $0x70] sm:$0xff]
    %v3579 = vld [vmem:[#allocation6 + $0x78] sm:$0xff]
    %v3580 = vld [vmem:[#allocation6 + $0x80] sm:$0xff]
    %v3581 = vld [vmem:[#allocation6 + $0x88] sm:$0xff]
    %v3582 = vld [vmem:[#allocation6 + $0x90] sm:$0xff]
    %v3583 = vld [vmem:[#allocation6 + $0x98] sm:$0xff]
    %v3584 = vld [vmem:[#allocation6 + $0xa0] sm:$0xff]
    %v3585 = vld [vmem:[#allocation6 + $0xa8] sm:$0xff]
    %v3586 = vld [vmem:[#allocation6 + $0xb0] sm:$0xff]
    %v3587 = vld [vmem:[#allocation6 + $0xb8] sm:$0xff]
    %v3588 = vld [vmem:[#allocation6 + $0xc0] sm:$0xff]
    %v3589 = vld [vmem:[#allocation6 + $0xc8] sm:$0xff]
    %v3590 = vld [vmem:[#allocation6 + $0xd0] sm:$0xff]
    %v3591 = vld [vmem:[#allocation6 + $0xd8] sm:$0xff]
    %v3592 = vld [vmem:[#allocation6 + $0xe0] sm:$0xff]
    %v3593 = vld [vmem:[#allocation6 + $0xe8] sm:$0xff]
    %v3594 = vld [vmem:[#allocation6 + $0xf0] sm:$0xff]
    %v3595 = vld [vmem:[#allocation6 + $0xf8] sm:$0xff]
    %v3596 = vld [vmem:[#allocation6 + $0x100] sm:$0xff]
    %v3597 = vld [vmem:[#allocation6 + $0x108] sm:$0xff]
    %v3598 = vld [vmem:[#allocation6 + $0x110] sm:$0xff]
    %v3599 = vld [vmem:[#allocation6 + $0x118] sm:$0xff]
    %v3600 = vld [vmem:[#allocation6 + $0x120] sm:$0xff]
    %v3601 = vld [vmem:[#allocation6 + $0x128] sm:$0xff]
    %v3602 = vld [vmem:[#allocation6 + $0x130] sm:$0xff]
    %v3603 = vld [vmem:[#allocation6 + $0x138] sm:$0xff]
    %v3604 = vld [vmem:[#allocation6 + $0x140] sm:$0xff]
    %v3605 = vld [vmem:[#allocation6 + $0x148] sm:$0xff]
    %v3606 = vld [vmem:[#allocation6 + $0x150] sm:$0xff]
    %v3607 = vld [vmem:[#allocation6 + $0x158] sm:$0xff]
    %v3608 = vld [vmem:[#allocation6 + $0x160] sm:$0xff]
    %v3609 = vld [vmem:[#allocation6 + $0x168] sm:$0xff]
    %v3610 = vld [vmem:[#allocation6 + $0x170] sm:$0xff]
    %v3611 = vld [vmem:[#allocation6 + $0x178] sm:$0xff]
    %v3612 = vld [vmem:[#allocation6 + $0x180] sm:$0xff]
    %v3613 = vld [vmem:[#allocation6 + $0x188] sm:$0xff]
    %v3614 = vld [vmem:[#allocation6 + $0x190] sm:$0xff]
    %v3615 = vld [vmem:[#allocation6 + $0x198] sm:$0xff]
    %v3616 = vld [vmem:[#allocation6 + $0x1a0] sm:$0xff]
    %v3617 = vld [vmem:[#allocation6 + $0x1a8] sm:$0xff]
    %v3618 = vld [vmem:[#allocation6 + $0x1b0] sm:$0xff]
    %v3619 = vld [vmem:[#allocation6 + $0x1b8] sm:$0xff]
    %v3620 = vld [vmem:[#allocation6 + $0x1c0] sm:$0xff]
    %v3621 = vld [vmem:[#allocation6 + $0x1c8] sm:$0xff]
    %v3622 = vld [vmem:[#allocation6 + $0x1d0] sm:$0xff]
    %v3623 = vld [vmem:[#allocation6 + $0x1d8] sm:$0xff]
    %v3624 = vld [vmem:[#allocation6 + $0x1e0] sm:$0xff]
    %v3625 = vld [vmem:[#allocation6 + $0x1e8] sm:$0xff]
    %v3626 = vld [vmem:[#allocation6 + $0x1f0] sm:$0xff]
    %v3627 = vld [vmem:[#allocation6 + $0x1f8] sm:$0xff]
    %v3628 = vld [vmem:[#allocation6 + $0x200] sm:$0xff]
    %v3629 = vld [vmem:[#allocation6 + $0x208] sm:$0xff]
    %v3630 = vld [vmem:[#allocation6 + $0x210] sm:$0xff]
    %v3631 = vld [vmem:[#allocation6 + $0x218] sm:$0xff]
    %v3632 = vld [vmem:[#allocation6 + $0x220] sm:$0xff]
    %v3633 = vld [vmem:[#allocation6 + $0x228] sm:$0xff]
    %v3634 = vld [vmem:[#allocation6 + $0x230] sm:$0xff]
    %v3635 = vld [vmem:[#allocation6 + $0x238] sm:$0xff]
    %v3636 = vld [vmem:[#allocation6 + $0x240] sm:$0xff]
    %v3637 = vld [vmem:[#allocation6 + $0x248] sm:$0xff]
    %v3638 = vld [vmem:[#allocation6 + $0x250] sm:$0xff]
    %v3639 = vld [vmem:[#allocation6 + $0x258] sm:$0xff]
    %v3640 = vld [vmem:[#allocation6 + $0x260] sm:$0xff]
    %v3641 = vld [vmem:[#allocation6 + $0x268] sm:$0xff]
    %v3642 = vld [vmem:[#allocation6 + $0x270] sm:$0xff]
    %v3643 = vld [vmem:[#allocation6 + $0x278] sm:$0xff]
    %v3644 = vld [vmem:[#allocation6 + $0x280] sm:$0xff]
    %v3645 = vld [vmem:[#allocation6 + $0x288] sm:$0xff]
    %v3646 = vld [vmem:[#allocation6 + $0x290] sm:$0xff]
    %v3647 = vld [vmem:[#allocation6 + $0x298] sm:$0xff]
    %v3648 = vld [vmem:[#allocation6 + $0x2a0] sm:$0xff]
    %v3649 = vld [vmem:[#allocation6 + $0x2a8] sm:$0xff]
    %v3650 = vld [vmem:[#allocation6 + $0x2b0] sm:$0xff]
    %v3651 = vld [vmem:[#allocation6 + $0x2b8] sm:$0xff]
    %v3652 = vld [vmem:[#allocation6 + $0x2c0] sm:$0xff]
    %v3653 = vld [vmem:[#allocation6 + $0x2c8] sm:$0xff]
    %v3654 = vld [vmem:[#allocation6 + $0x2d0] sm:$0xff]
    %v3655 = vld [vmem:[#allocation6 + $0x2d8] sm:$0xff]
    %v3656 = vld [vmem:[#allocation6 + $0x2e0] sm:$0xff]
    %v3657 = vld [vmem:[#allocation6 + $0x2e8] sm:$0xff]
    %v3658 = vld [vmem:[#allocation6 + $0x2f0] sm:$0xff]
    %v3659 = vld [vmem:[#allocation6 + $0x2f8] sm:$0xff]
    %v3660 = vld [vmem:[#allocation6 + $0x300] sm:$0xff]
    %v3661 = vld [vmem:[#allocation6 + $0x308] sm:$0xff]
    %v3662 = vld [vmem:[#allocation6 + $0x310] sm:$0xff]
    %v3663 = vld [vmem:[#allocation6 + $0x318] sm:$0xff]
    %v3664 = vld [vmem:[#allocation6 + $0x320] sm:$0xff]
    %v3665 = vld [vmem:[#allocation6 + $0x328] sm:$0xff]
    %v3666 = vld [vmem:[#allocation6 + $0x330] sm:$0xff]
    %v3667 = vld [vmem:[#allocation6 + $0x338] sm:$0xff]
    %v3668 = vld [vmem:[#allocation6 + $0x340] sm:$0xff]
    %v3669 = vld [vmem:[#allocation6 + $0x348] sm:$0xff]
    %v3670 = vld [vmem:[#allocation6 + $0x350] sm:$0xff]
    %v3671 = vld [vmem:[#allocation6 + $0x358] sm:$0xff]
    %v3672 = vld [vmem:[#allocation6 + $0x360] sm:$0xff]
    %v3673 = vld [vmem:[#allocation6 + $0x368] sm:$0xff]
    %v3674 = vld [vmem:[#allocation6 + $0x370] sm:$0xff]
    %v3675 = vld [vmem:[#allocation6 + $0x378] sm:$0xff]
    %v3676 = vld [vmem:[#allocation6 + $0x380] sm:$0xff]
    %v3677 = vld [vmem:[#allocation6 + $0x388] sm:$0xff]
    %v3678 = vld [vmem:[#allocation6 + $0x390] sm:$0xff]
    %v3679 = vld [vmem:[#allocation6 + $0x398] sm:$0xff]
    %v3680 = vld [vmem:[#allocation6 + $0x3a0] sm:$0xff]
    %v3681 = vld [vmem:[#allocation6 + $0x3a8] sm:$0xff]
    %v3682 = vld [vmem:[#allocation6 + $0x3b0] sm:$0xff]
    %v3683 = vld [vmem:[#allocation6 + $0x3b8] sm:$0xff]
    %v3684 = vld [vmem:[#allocation6 + $0x3c0] sm:$0xff]
    %v3685 = vld [vmem:[#allocation6 + $0x3c8] sm:$0xff]
    %v3686 = vld [vmem:[#allocation6 + $0x3d0] sm:$0xff]
    %v3687 = vld [vmem:[#allocation6 + $0x3d8] sm:$0xff]
    %v3688 = vld [vmem:[#allocation6 + $0x3e0] sm:$0xff]
    %v3689 = vld [vmem:[#allocation6 + $0x3e8] sm:$0xff]
    %v3690 = vld [vmem:[#allocation6 + $0x3f0] sm:$0xff]
    %v3691 = vld [vmem:[#allocation6 + $0x3f8] sm:$0xff]
    %v3692 = vld [vmem:[#allocation6 + $0x400] sm:$0xff]
    %v3693 = vld [vmem:[#allocation6 + $0x408] sm:$0xff]
    %v3694 = vld [vmem:[#allocation6 + $0x410] sm:$0xff]
    %v3695 = vld [vmem:[#allocation6 + $0x418] sm:$0xff]
    %v3696 = vld [vmem:[#allocation6 + $0x420] sm:$0xff]
    %v3697 = vld [vmem:[#allocation6 + $0x428] sm:$0xff]
    %v3698 = vld [vmem:[#allocation6 + $0x430] sm:$0xff]
    %v3699 = vld [vmem:[#allocation6 + $0x438] sm:$0xff]
    %v3700 = vld [vmem:[#allocation6 + $0x440] sm:$0xff]
    %v3701 = vld [vmem:[#allocation6 + $0x448] sm:$0xff]
    %v3702 = vld [vmem:[#allocation6 + $0x450] sm:$0xff]
    %v3703 = vld [vmem:[#allocation6 + $0x458] sm:$0xff]
    %v3704 = vld [vmem:[#allocation6 + $0x460] sm:$0xff]
    %v3705 = vld [vmem:[#allocation6 + $0x468] sm:$0xff]
    %v3706 = vld [vmem:[#allocation6 + $0x470] sm:$0xff]
    %v3707 = vld [vmem:[#allocation6 + $0x478] sm:$0xff]
    %v3708 = vld [vmem:[#allocation6 + $0x480] sm:$0xff]
    %v3709 = vld [vmem:[#allocation6 + $0x488] sm:$0xff]
    %v3710 = vld [vmem:[#allocation6 + $0x490] sm:$0xff]
    %v3711 = vld [vmem:[#allocation6 + $0x498] sm:$0xff]
    %v3712 = vld [vmem:[#allocation6 + $0x4a0] sm:$0xff]
    %v3713 = vld [vmem:[#allocation6 + $0x4a8] sm:$0xff]
    %v3714 = vld [vmem:[#allocation6 + $0x4b0] sm:$0xff]
    %v3715 = vld [vmem:[#allocation6 + $0x4b8] sm:$0xff]
    %v3716 = vld [vmem:[#allocation6 + $0x4c0] sm:$0xff]
    %v3717 = vld [vmem:[#allocation6 + $0x4c8] sm:$0xff]
    %v3718 = vld [vmem:[#allocation6 + $0x4d0] sm:$0xff]
    %v3719 = vld [vmem:[#allocation6 + $0x4d8] sm:$0xff]
    %v3720 = vld [vmem:[#allocation6 + $0x4e0] sm:$0xff]
    %v3721 = vld [vmem:[#allocation6 + $0x4e8] sm:$0xff]
    %v3722 = vld [vmem:[#allocation6 + $0x4f0] sm:$0xff]
    %v3723 = vld [vmem:[#allocation6 + $0x4f8] sm:$0xff]
    %v3724 = vld [vmem:[#allocation6 + $0x500] sm:$0xff]
    %v3725 = vld [vmem:[#allocation6 + $0x508] sm:$0xff]
    %v3726 = vld [vmem:[#allocation6 + $0x510] sm:$0xff]
    %v3727 = vld [vmem:[#allocation6 + $0x518] sm:$0xff]
    %v3728 = vld [vmem:[#allocation6 + $0x520] sm:$0xff]
    %v3729 = vld [vmem:[#allocation6 + $0x528] sm:$0xff]
    %v3730 = vld [vmem:[#allocation6 + $0x530] sm:$0xff]
    %v3731 = vld [vmem:[#allocation6 + $0x538] sm:$0xff]
    %v3732 = vld [vmem:[#allocation6 + $0x540] sm:$0xff]
    %v3733 = vld [vmem:[#allocation6 + $0x548] sm:$0xff]
    %v3734 = vld [vmem:[#allocation6 + $0x550] sm:$0xff]
    %v3735 = vld [vmem:[#allocation6 + $0x558] sm:$0xff]
    %v3736 = vld [vmem:[#allocation6 + $0x560] sm:$0xff]
    %v3737 = vld [vmem:[#allocation6 + $0x568] sm:$0xff]
    %v3738 = vld [vmem:[#allocation6 + $0x570] sm:$0xff]
    %v3739 = vld [vmem:[#allocation6 + $0x578] sm:$0xff]
    %v3740 = vld [vmem:[#allocation6 + $0x580] sm:$0xff]
    %v3741 = vld [vmem:[#allocation6 + $0x588] sm:$0xff]
    %v3742 = vld [vmem:[#allocation6 + $0x590] sm:$0xff]
    %v3743 = vld [vmem:[#allocation6 + $0x598] sm:$0xff]
    %v3744 = vld [vmem:[#allocation6 + $0x5a0] sm:$0xff]
    %v3745 = vld [vmem:[#allocation6 + $0x5a8] sm:$0xff]
    %v3746 = vld [vmem:[#allocation6 + $0x5b0] sm:$0xff]
    %v3747 = vld [vmem:[#allocation6 + $0x5b8] sm:$0xff]
    %v3748 = vld [vmem:[#allocation6 + $0x5c0] sm:$0xff]
    %v3749 = vld [vmem:[#allocation6 + $0x5c8] sm:$0xff]
    %v3750 = vld [vmem:[#allocation6 + $0x5d0] sm:$0xff]
    %v3751 = vld [vmem:[#allocation6 + $0x5d8] sm:$0xff]
    %v3752 = vld [vmem:[#allocation6 + $0x5e0] sm:$0xff]
    %v3753 = vld [vmem:[#allocation6 + $0x5e8] sm:$0xff]
    %v3754 = vld [vmem:[#allocation6 + $0x5f0] sm:$0xff]
    %v3755 = vld [vmem:[#allocation6 + $0x5f8] sm:$0xff]
    %v3756 = vld [vmem:[#allocation6 + $0x600] sm:$0xff]
    %v3757 = vld [vmem:[#allocation6 + $0x608] sm:$0xff]
    %v3758 = vld [vmem:[#allocation6 + $0x610] sm:$0xff]
    %v3759 = vld [vmem:[#allocation6 + $0x618] sm:$0xff]
    %v3760 = vld [vmem:[#allocation6 + $0x620] sm:$0xff]
    %v3761 = vld [vmem:[#allocation6 + $0x628] sm:$0xff]
    %v3762 = vld [vmem:[#allocation6 + $0x630] sm:$0xff]
    %v3763 = vld [vmem:[#allocation6 + $0x638] sm:$0xff]
    %v3764 = vld [vmem:[#allocation6 + $0x640] sm:$0xff]
    %v3765 = vld [vmem:[#allocation6 + $0x648] sm:$0xff]
    %v3766 = vld [vmem:[#allocation6 + $0x650] sm:$0xff]
    %v3767 = vld [vmem:[#allocation6 + $0x658] sm:$0xff]
    %v3768 = vld [vmem:[#allocation6 + $0x660] sm:$0xff]
    %v3769 = vld [vmem:[#allocation6 + $0x668] sm:$0xff]
    %v3770 = vld [vmem:[#allocation6 + $0x670] sm:$0xff]
    %v3771 = vld [vmem:[#allocation6 + $0x678] sm:$0xff]
    %v3772 = vld [vmem:[#allocation6 + $0x680] sm:$0xff]
    %v3773 = vld [vmem:[#allocation6 + $0x688] sm:$0xff]
    %v3774 = vld [vmem:[#allocation6 + $0x690] sm:$0xff]
    %v3775 = vld [vmem:[#allocation6 + $0x698] sm:$0xff]
    %v3776 = vld [vmem:[#allocation6 + $0x6a0] sm:$0xff]
    %v3777 = vld [vmem:[#allocation6 + $0x6a8] sm:$0xff]
    %v3778 = vld [vmem:[#allocation6 + $0x6b0] sm:$0xff]
    %v3779 = vld [vmem:[#allocation6 + $0x6b8] sm:$0xff]
    %v3780 = vld [vmem:[#allocation6 + $0x6c0] sm:$0xff]
    %v3781 = vld [vmem:[#allocation6 + $0x6c8] sm:$0xff]
    %v3782 = vld [vmem:[#allocation6 + $0x6d0] sm:$0xff]
    %v3783 = vld [vmem:[#allocation6 + $0x6d8] sm:$0xff]
    %v3784 = vld [vmem:[#allocation6 + $0x6e0] sm:$0xff]
    %v3785 = vld [vmem:[#allocation6 + $0x6e8] sm:$0xff]
    %v3786 = vld [vmem:[#allocation6 + $0x6f0] sm:$0xff]
    %v3787 = vld [vmem:[#allocation6 + $0x6f8] sm:$0xff]
    %v3788 = vld [vmem:[#allocation6 + $0x700] sm:$0xff]
    %v3789 = vld [vmem:[#allocation6 + $0x708] sm:$0xff]
    %v3790 = vld [vmem:[#allocation6 + $0x710] sm:$0xff]
    %v3791 = vld [vmem:[#allocation6 + $0x718] sm:$0xff]
    %v3792 = vld [vmem:[#allocation6 + $0x720] sm:$0xff]
    %v3793 = vld [vmem:[#allocation6 + $0x728] sm:$0xff]
    %v3794 = vld [vmem:[#allocation6 + $0x730] sm:$0xff]
    %v3795 = vld [vmem:[#allocation6 + $0x738] sm:$0xff]
    %v3796 = vld [vmem:[#allocation6 + $0x740] sm:$0xff]
    %v3797 = vld [vmem:[#allocation6 + $0x748] sm:$0xff]
    %v3798 = vld [vmem:[#allocation6 + $0x750] sm:$0xff]
    %v3799 = vld [vmem:[#allocation6 + $0x758] sm:$0xff]
    %v3800 = vld [vmem:[#allocation6 + $0x760] sm:$0xff]
    %v3801 = vld [vmem:[#allocation6 + $0x768] sm:$0xff]
    %v3802 = vld [vmem:[#allocation6 + $0x770] sm:$0xff]
    %v3803 = vld [vmem:[#allocation6 + $0x778] sm:$0xff]
    %v3804 = vld [vmem:[#allocation6 + $0x780] sm:$0xff]
    %v3805 = vld [vmem:[#allocation6 + $0x788] sm:$0xff]
    %v3806 = vld [vmem:[#allocation6 + $0x790] sm:$0xff]
    %v3807 = vld [vmem:[#allocation6 + $0x798] sm:$0xff]
    %v3808 = vld [vmem:[#allocation6 + $0x7a0] sm:$0xff]
    %v3809 = vld [vmem:[#allocation6 + $0x7a8] sm:$0xff]
    %v3810 = vld [vmem:[#allocation6 + $0x7b0] sm:$0xff]
    %v3811 = vld [vmem:[#allocation6 + $0x7b8] sm:$0xff]
    %v3812 = vld [vmem:[#allocation6 + $0x7c0] sm:$0xff]
    %v3813 = vld [vmem:[#allocation6 + $0x7c8] sm:$0xff]
    %v3814 = vld [vmem:[#allocation6 + $0x7d0] sm:$0xff]
    %v3815 = vld [vmem:[#allocation6 + $0x7d8] sm:$0xff]
    %v3816 = vld [vmem:[#allocation6 + $0x7e0] sm:$0xff]
    %v3817 = vld [vmem:[#allocation6 + $0x7e8] sm:$0xff]
    %v3818 = vld [vmem:[#allocation6 + $0x7f0] sm:$0xff]
    %v3819 = vld [vmem:[#allocation6 + $0x7f8] sm:$0xff]
    %3820 = vmatprep.subr.bf16.mxu0 %v3693
    %3821 = vmatpush1.bf16.msra.mxu0 %v3692
    %3822 = vmatprep.subr.bf16.mxu0 %v3701
    %3823 = vmatpush1.bf16.msra.mxu0 %v3700
    %3824 = vmatprep.subr.bf16.mxu0 %v3709
    %3825 = vmatpush1.bf16.msra.mxu0 %v3708
    %3826 = vmatprep.subr.bf16.mxu0 %v3717
    %3827 = vmatpush1.bf16.msra.mxu0 %v3716
    %3828 = vmatprep.subr.bf16.mxu0 %v3725
    %3829 = vmatpush1.bf16.msra.mxu0 %v3724
    %3830 = vmatprep.subr.bf16.mxu0 %v3733
    %3831 = vmatpush1.bf16.msra.mxu0 %v3732
    %3832 = vmatprep.subr.bf16.mxu0 %v3741
    %3833 = vmatpush1.bf16.msra.mxu0 %v3740
    %3834 = vmatprep.subr.bf16.mxu0 %v3749
    %3835 = vmatpush1.bf16.msra.mxu0 %v3748
    %3836 = vmatprep.subr.bf16.mxu0 %v3757
    %3837 = vmatpush1.bf16.msra.mxu0 %v3756
    %3838 = vmatprep.subr.bf16.mxu0 %v3765
    %3839 = vmatpush1.bf16.msra.mxu0 %v3764
    %3840 = vmatprep.subr.bf16.mxu0 %v3773
    %3841 = vmatpush1.bf16.msra.mxu0 %v3772
    %3842 = vmatprep.subr.bf16.mxu0 %v3781
    %3843 = vmatpush1.bf16.msra.mxu0 %v3780
    %3844 = vmatprep.subr.bf16.mxu0 %v3789
    %3845 = vmatpush1.bf16.msra.mxu0 %v3788
    %3846 = vmatprep.subr.bf16.mxu0 %v3797
    %3847 = vmatpush1.bf16.msra.mxu0 %v3796
    %3848 = vmatprep.subr.bf16.mxu0 %v3805
    %3849 = vmatpush1.bf16.msra.mxu0 %v3804
    %3850 = vmatprep.subr.bf16.mxu0 %v3813
    %3851 = vmatpush1.bf16.msra.mxu0 %v3812
    %3852 = vmatprep.mubr.bf16.mxu0 %v3177
    %3853 = vmatmul.mubr.bf16.gmra.mrb[0].mxu0 %v3176
    %v3854 = vpop.f32.mrb[0].mxu0
    %v3855 = vadd.f32 0.0, %v3854
    %v3856 = vpop.f32.mrb[0].mxu0
    %v3857 = vadd.f32 0.0, %v3856
    %v3858 = vpop.f32.mrb[0].mxu0
    %v3859 = vpop.f32.mrb[0].mxu0
    %3860 = vdwg.mxu0
    %3861 = vmatprep.subr.bf16.mxu0 %v3695
    %3862 = vmatpush1.bf16.msra.mxu0 %v3694
    %3863 = vmatprep.subr.bf16.mxu0 %v3703
    %3864 = vmatpush1.bf16.msra.mxu0 %v3702
    %3865 = vmatprep.subr.bf16.mxu0 %v3711
    %3866 = vmatpush1.bf16.msra.mxu0 %v3710
    %3867 = vmatprep.subr.bf16.mxu0 %v3719
    %3868 = vmatpush1.bf16.msra.mxu0 %v3718
    %3869 = vmatprep.subr.bf16.mxu0 %v3727
    %3870 = vmatpush1.bf16.msra.mxu0 %v3726
    %3871 = vmatprep.subr.bf16.mxu0 %v3735
    %3872 = vmatpush1.bf16.msra.mxu0 %v3734
    %3873 = vmatprep.subr.bf16.mxu0 %v3743
    %3874 = vmatpush1.bf16.msra.mxu0 %v3742
    %3875 = vmatprep.subr.bf16.mxu0 %v3751
    %3876 = vmatpush1.bf16.msra.mxu0 %v3750
    %3877 = vmatprep.subr.bf16.mxu0 %v3759
    %3878 = vmatpush1.bf16.msra.mxu0 %v3758
    %3879 = vmatprep.subr.bf16.mxu0 %v3767
    %3880 = vmatpush1.bf16.msra.mxu0 %v3766
    %3881 = vmatprep.subr.bf16.mxu0 %v3775
    %3882 = vmatpush1.bf16.msra.mxu0 %v3774
    %3883 = vmatprep.subr.bf16.mxu0 %v3783
    %3884 = vmatpush1.bf16.msra.mxu0 %v3782
    %3885 = vmatprep.subr.bf16.mxu0 %v3791
    %3886 = vmatpush1.bf16.msra.mxu0 %v3790
    %3887 = vmatprep.subr.bf16.mxu0 %v3799
    %3888 = vmatpush1.bf16.msra.mxu0 %v3798
    %3889 = vmatprep.subr.bf16.mxu0 %v3807
    %3890 = vmatpush1.bf16.msra.mxu0 %v3806
    %3891 = vmatprep.subr.bf16.mxu0 %v3815
    %3892 = vmatpush1.bf16.msra.mxu0 %v3814
    %3893 = vmatprep.mubr.bf16.mxu0 %v3177
    %3894 = vmatmul.mubr.bf16.gmra.mrb[0].mxu0 %v3176
    %v3895 = vpop.f32.mrb[0].mxu0
    %v3896 = vadd.f32 0.0, %v3895
    %v3897 = vpop.f32.mrb[0].mxu0
    %v3898 = vadd.f32 0.0, %v3897
    %v3899 = vpop.f32.mrb[0].mxu0
    %v3900 = vpop.f32.mrb[0].mxu0
    %3901 = vdwg.mxu0
    %3902 = vmatprep.subr.bf16.mxu0 %v3697
    %3903 = vmatpush1.bf16.msra.mxu0 %v3696
    %3904 = vmatprep.subr.bf16.mxu0 %v3705
    %3905 = vmatpush1.bf16.msra.mxu0 %v3704
    %3906 = vmatprep.subr.bf16.mxu0 %v3713
    %3907 = vmatpush1.bf16.msra.mxu0 %v3712
    %3908 = vmatprep.subr.bf16.mxu0 %v3721
    %3909 = vmatpush1.bf16.msra.mxu0 %v3720
    %3910 = vmatprep.subr.bf16.mxu0 %v3729
    %3911 = vmatpush1.bf16.msra.mxu0 %v3728
    %3912 = vmatprep.subr.bf16.mxu0 %v3737
    %3913 = vmatpush1.bf16.msra.mxu0 %v3736
    %3914 = vmatprep.subr.bf16.mxu0 %v3745
    %3915 = vmatpush1.bf16.msra.mxu0 %v3744
    %3916 = vmatprep.subr.bf16.mxu0 %v3753
    %3917 = vmatpush1.bf16.msra.mxu0 %v3752
    %3918 = vmatprep.subr.bf16.mxu0 %v3761
    %3919 = vmatpush1.bf16.msra.mxu0 %v3760
    %3920 = vmatprep.subr.bf16.mxu0 %v3769
    %3921 = vmatpush1.bf16.msra.mxu0 %v3768
    %3922 = vmatprep.subr.bf16.mxu0 %v3777
    %3923 = vmatpush1.bf16.msra.mxu0 %v3776
    %3924 = vmatprep.subr.bf16.mxu0 %v3785
    %3925 = vmatpush1.bf16.msra.mxu0 %v3784
    %3926 = vmatprep.subr.bf16.mxu0 %v3793
    %3927 = vmatpush1.bf16.msra.mxu0 %v3792
    %3928 = vmatprep.subr.bf16.mxu0 %v3801
    %3929 = vmatpush1.bf16.msra.mxu0 %v3800
    %3930 = vmatprep.subr.bf16.mxu0 %v3809
    %3931 = vmatpush1.bf16.msra.mxu0 %v3808
    %3932 = vmatprep.subr.bf16.mxu0 %v3817
    %3933 = vmatpush1.bf16.msra.mxu0 %v3816
    %3934 = vmatprep.mubr.bf16.mxu0 %v3177
    %3935 = vmatmul.mubr.bf16.gmra.mrb[0].mxu0 %v3176
    %v3936 = vpop.f32.mrb[0].mxu0
    %v3937 = vadd.f32 0.0, %v3936
    %v3938 = vpop.f32.mrb[0].mxu0
    %v3939 = vadd.f32 0.0, %v3938
    %v3940 = vpop.f32.mrb[0].mxu0
    %v3941 = vpop.f32.mrb[0].mxu0
    %3942 = vdwg.mxu0
    %3943 = vmatprep.subr.bf16.mxu0 %v3699
    %3944 = vmatpush1.bf16.msra.mxu0 %v3698
    %3945 = vmatprep.subr.bf16.mxu0 %v3707
    %3946 = vmatpush1.bf16.msra.mxu0 %v3706
    %3947 = vmatprep.subr.bf16.mxu0 %v3715
    %3948 = vmatpush1.bf16.msra.mxu0 %v3714
    %3949 = vmatprep.subr.bf16.mxu0 %v3723
    %3950 = vmatpush1.bf16.msra.mxu0 %v3722
    %3951 = vmatprep.subr.bf16.mxu0 %v3731
    %3952 = vmatpush1.bf16.msra.mxu0 %v3730
    %3953 = vmatprep.subr.bf16.mxu0 %v3739
    %3954 = vmatpush1.bf16.msra.mxu0 %v3738
    %3955 = vmatprep.subr.bf16.mxu0 %v3747
    %3956 = vmatpush1.bf16.msra.mxu0 %v3746
    %3957 = vmatprep.subr.bf16.mxu0 %v3755
    %3958 = vmatpush1.bf16.msra.mxu0 %v3754
    %3959 = vmatprep.subr.bf16.mxu0 %v3763
    %3960 = vmatpush1.bf16.msra.mxu0 %v3762
    %3961 = vmatprep.subr.bf16.mxu0 %v3771
    %3962 = vmatpush1.bf16.msra.mxu0 %v3770
    %3963 = vmatprep.subr.bf16.mxu0 %v3779
    %3964 = vmatpush1.bf16.msra.mxu0 %v3778
    %3965 = vmatprep.subr.bf16.mxu0 %v3787
    %3966 = vmatpush1.bf16.msra.mxu0 %v3786
    %3967 = vmatprep.subr.bf16.mxu0 %v3795
    %3968 = vmatpush1.bf16.msra.mxu0 %v3794
    %3969 = vmatprep.subr.bf16.mxu0 %v3803
    %3970 = vmatpush1.bf16.msra.mxu0 %v3802
    %3971 = vmatprep.subr.bf16.mxu0 %v3811
    %3972 = vmatpush1.bf16.msra.mxu0 %v3810
    %3973 = vmatprep.subr.bf16.mxu0 %v3819
    %3974 = vmatpush1.bf16.msra.mxu0 %v3818
    %3975 = vmatprep.mubr.bf16.mxu0 %v3177
    %3976 = vmatmul.mubr.bf16.gmra.mrb[0].mxu0 %v3176
    %v3977 = vpop.f32.mrb[0].mxu0
    %v3978 = vadd.f32 0.0, %v3977
    %v3979 = vpop.f32.mrb[0].mxu0
    %v3980 = vadd.f32 0.0, %v3979
    %v3981 = vpop.f32.mrb[0].mxu0
    %v3982 = vpop.f32.mrb[0].mxu0
    %3983 = vdwg.mxu0
    %3984 = vmatprep.subr.bf16.mxu0 %v3565
    %3985 = vmatpush1.bf16.msra.mxu0 %v3564
    %3986 = vmatprep.subr.bf16.mxu0 %v3573
    %3987 = vmatpush1.bf16.msra.mxu0 %v3572
    %3988 = vmatprep.subr.bf16.mxu0 %v3581
    %3989 = vmatpush1.bf16.msra.mxu0 %v3580
    %3990 = vmatprep.subr.bf16.mxu0 %v3589
    %3991 = vmatpush1.bf16.msra.mxu0 %v3588
    %3992 = vmatprep.subr.bf16.mxu0 %v3597
    %3993 = vmatpush1.bf16.msra.mxu0 %v3596
    %3994 = vmatprep.subr.bf16.mxu0 %v3605
    %3995 = vmatpush1.bf16.msra.mxu0 %v3604
    %3996 = vmatprep.subr.bf16.mxu0 %v3613
    %3997 = vmatpush1.bf16.msra.mxu0 %v3612
    %3998 = vmatprep.subr.bf16.mxu0 %v3621
    %3999 = vmatpush1.bf16.msra.mxu0 %v3620
    %4000 = vmatprep.subr.bf16.mxu0 %v3629
    %4001 = vmatpush1.bf16.msra.mxu0 %v3628
    %4002 = vmatprep.subr.bf16.mxu0 %v3637
    %4003 = vmatpush1.bf16.msra.mxu0 %v3636
    %4004 = vmatprep.subr.bf16.mxu0 %v3645
    %4005 = vmatpush1.bf16.msra.mxu0 %v3644
    %4006 = vmatprep.subr.bf16.mxu0 %v3653
    %4007 = vmatpush1.bf16.msra.mxu0 %v3652
    %4008 = vmatprep.subr.bf16.mxu0 %v3661
    %4009 = vmatpush1.bf16.msra.mxu0 %v3660
    %4010 = vmatprep.subr.bf16.mxu0 %v3669
    %4011 = vmatpush1.bf16.msra.mxu0 %v3668
    %4012 = vmatprep.subr.bf16.mxu0 %v3677
    %4013 = vmatpush1.bf16.msra.mxu0 %v3676
    %4014 = vmatprep.subr.bf16.mxu0 %v3685
    %4015 = vmatpush1.bf16.msra.mxu0 %v3684
    %4016 = vmatprep.mubr.bf16.mxu0 %v2528
    %4017 = vmatmul.mubr.bf16.gmra.mrb[0].mxu0 %v2527
    %v4018 = vpop.f32.mrb[0].mxu0
    %v4019 = vadd.f32 %v3855, %v4018
    %v4020 = vpop.f32.mrb[0].mxu0
    %v4021 = vadd.f32 %v3857, %v4020
    %v4022 = vpop.f32.mrb[0].mxu0
    %v4023 = vpop.f32.mrb[0].mxu0
    %4024 = vdwg.mxu0
    %4025 = vmatprep.subr.bf16.mxu0 %v3567
    %4026 = vmatpush1.bf16.msra.mxu0 %v3566
    %4027 = vmatprep.subr.bf16.mxu0 %v3575
    %4028 = vmatpush1.bf16.msra.mxu0 %v3574
    %4029 = vmatprep.subr.bf16.mxu0 %v3583
    %4030 = vmatpush1.bf16.msra.mxu0 %v3582
    %4031 = vmatprep.subr.bf16.mxu0 %v3591
    %4032 = vmatpush1.bf16.msra.mxu0 %v3590
    %4033 = vmatprep.subr.bf16.mxu0 %v3599
    %4034 = vmatpush1.bf16.msra.mxu0 %v3598
    %4035 = vmatprep.subr.bf16.mxu0 %v3607
    %4036 = vmatpush1.bf16.msra.mxu0 %v3606
    %4037 = vmatprep.subr.bf16.mxu0 %v3615
    %4038 = vmatpush1.bf16.msra.mxu0 %v3614
    %4039 = vmatprep.subr.bf16.mxu0 %v3623
    %4040 = vmatpush1.bf16.msra.mxu0 %v3622
    %4041 = vmatprep.subr.bf16.mxu0 %v3631
    %4042 = vmatpush1.bf16.msra.mxu0 %v3630
    %4043 = vmatprep.subr.bf16.mxu0 %v3639
    %4044 = vmatpush1.bf16.msra.mxu0 %v3638
    %4045 = vmatprep.subr.bf16.mxu0 %v3647
    %4046 = vmatpush1.bf16.msra.mxu0 %v3646
    %4047 = vmatprep.subr.bf16.mxu0 %v3655
    %4048 = vmatpush1.bf16.msra.mxu0 %v3654
    %4049 = vmatprep.subr.bf16.mxu0 %v3663
    %4050 = vmatpush1.bf16.msra.mxu0 %v3662
    %4051 = vmatprep.subr.bf16.mxu0 %v3671
    %4052 = vmatpush1.bf16.msra.mxu0 %v3670
    %4053 = vmatprep.subr.bf16.mxu0 %v3679
    %4054 = vmatpush1.bf16.msra.mxu0 %v3678
    %4055 = vmatprep.subr.bf16.mxu0 %v3687
    %4056 = vmatpush1.bf16.msra.mxu0 %v3686
    %4057 = vmatprep.mubr.bf16.mxu0 %v2528
    %4058 = vmatmul.mubr.bf16.gmra.mrb[0].mxu0 %v2527
    %v4059 = vpop.f32.mrb[0].mxu0
    %v4060 = vadd.f32 %v3896, %v4059
    %v4061 = vpop.f32.mrb[0].mxu0
    %v4062 = vadd.f32 %v3898, %v4061
    %v4063 = vpop.f32.mrb[0].mxu0
    %v4064 = vpop.f32.mrb[0].mxu0
    %4065 = vdwg.mxu0
    %4066 = vmatprep.subr.bf16.mxu0 %v3569
    %4067 = vmatpush1.bf16.msra.mxu0 %v3568
    %4068 = vmatprep.subr.bf16.mxu0 %v3577
    %4069 = vmatpush1.bf16.msra.mxu0 %v3576
    %4070 = vmatprep.subr.bf16.mxu0 %v3585
    %4071 = vmatpush1.bf16.msra.mxu0 %v3584
    %4072 = vmatprep.subr.bf16.mxu0 %v3593
    %4073 = vmatpush1.bf16.msra.mxu0 %v3592
    %4074 = vmatprep.subr.bf16.mxu0 %v3601
    %4075 = vmatpush1.bf16.msra.mxu0 %v3600
    %4076 = vmatprep.subr.bf16.mxu0 %v3609
    %4077 = vmatpush1.bf16.msra.mxu0 %v3608
    %4078 = vmatprep.subr.bf16.mxu0 %v3617
    %4079 = vmatpush1.bf16.msra.mxu0 %v3616
    %4080 = vmatprep.subr.bf16.mxu0 %v3625
    %4081 = vmatpush1.bf16.msra.mxu0 %v3624
    %4082 = vmatprep.subr.bf16.mxu0 %v3633
    %4083 = vmatpush1.bf16.msra.mxu0 %v3632
    %4084 = vmatprep.subr.bf16.mxu0 %v3641
    %4085 = vmatpush1.bf16.msra.mxu0 %v3640
    %4086 = vmatprep.subr.bf16.mxu0 %v3649
    %4087 = vmatpush1.bf16.msra.mxu0 %v3648
    %4088 = vmatprep.subr.bf16.mxu0 %v3657
    %4089 = vmatpush1.bf16.msra.mxu0 %v3656
    %4090 = vmatprep.subr.bf16.mxu0 %v3665
    %4091 = vmatpush1.bf16.msra.mxu0 %v3664
    %4092 = vmatprep.subr.bf16.mxu0 %v3673
    %4093 = vmatpush1.bf16.msra.mxu0 %v3672
    %4094 = vmatprep.subr.bf16.mxu0 %v3681
    %4095 = vmatpush1.bf16.msra.mxu0 %v3680
    %4096 = vmatprep.subr.bf16.mxu0 %v3689
    %4097 = vmatpush1.bf16.msra.mxu0 %v3688
    %4098 = vmatprep.mubr.bf16.mxu0 %v2528
    %4099 = vmatmul.mubr.bf16.gmra.mrb[0].mxu0 %v2527
    %v4100 = vpop.f32.mrb[0].mxu0
    %v4101 = vadd.f32 %v3937, %v4100
    %v4102 = vpop.f32.mrb[0].mxu0
    %v4103 = vadd.f32 %v3939, %v4102
    %v4104 = vpop.f32.mrb[0].mxu0
    %v4105 = vpop.f32.mrb[0].mxu0
    %4106 = vdwg.mxu0
    %4107 = vmatprep.subr.bf16.mxu0 %v3571
    %4108 = vmatpush1.bf16.msra.mxu0 %v3570
    %4109 = vmatprep.subr.bf16.mxu0 %v3579
    %4110 = vmatpush1.bf16.msra.mxu0 %v3578
    %4111 = vmatprep.subr.bf16.mxu0 %v3587
    %4112 = vmatpush1.bf16.msra.mxu0 %v3586
    %4113 = vmatprep.subr.bf16.mxu0 %v3595
    %4114 = vmatpush1.bf16.msra.mxu0 %v3594
    %4115 = vmatprep.subr.bf16.mxu0 %v3603
    %4116 = vmatpush1.bf16.msra.mxu0 %v3602
    %4117 = vmatprep.subr.bf16.mxu0 %v3611
    %4118 = vmatpush1.bf16.msra.mxu0 %v3610
    %4119 = vmatprep.subr.bf16.mxu0 %v3619
    %4120 = vmatpush1.bf16.msra.mxu0 %v3618
    %4121 = vmatprep.subr.bf16.mxu0 %v3627
    %4122 = vmatpush1.bf16.msra.mxu0 %v3626
    %4123 = vmatprep.subr.bf16.mxu0 %v3635
    %4124 = vmatpush1.bf16.msra.mxu0 %v3634
    %4125 = vmatprep.subr.bf16.mxu0 %v3643
    %4126 = vmatpush1.bf16.msra.mxu0 %v3642
    %4127 = vmatprep.subr.bf16.mxu0 %v3651
    %4128 = vmatpush1.bf16.msra.mxu0 %v3650
    %4129 = vmatprep.subr.bf16.mxu0 %v3659
    %4130 = vmatpush1.bf16.msra.mxu0 %v3658
    %4131 = vmatprep.subr.bf16.mxu0 %v3667
    %4132 = vmatpush1.bf16.msra.mxu0 %v3666
    %4133 = vmatprep.subr.bf16.mxu0 %v3675
    %4134 = vmatpush1.bf16.msra.mxu0 %v3674
    %4135 = vmatprep.subr.bf16.mxu0 %v3683
    %4136 = vmatpush1.bf16.msra.mxu0 %v3682
    %4137 = vmatprep.subr.bf16.mxu0 %v3691
    %4138 = vmatpush1.bf16.msra.mxu0 %v3690
    %4139 = vmatprep.mubr.bf16.mxu0 %v2528
    %4140 = vmatmul.mubr.bf16.gmra.mrb[0].mxu0 %v2527
    %v4141 = vpop.f32.mrb[0].mxu0
    %v4142 = vadd.f32 %v3978, %v4141
    %v4143 = vpop.f32.mrb[0].mxu0
    %v4144 = vadd.f32 %v3980, %v4143
    %v4145 = vpop.f32.mrb[0].mxu0
    %v4146 = vpop.f32.mrb[0].mxu0
    %4147 = vdwg.mxu0
    %v4148 = vld [vmem:[#allocation18] sm:$0xff]
    %v4150 = vlaneseq
    %v4151 = vshrl.u32 %v4150, 7
    %v4152 = vsub.s32 0, %v4151
    %v4153 = vrot.slane %v4148, %v4152
    %v4154 = vlaneseq
    %v4155 = vshrl.u32 %v4154, 7
    %v4156 = vsub.s32 1, %v4155
    %v4157 = vrot.slane %v4148, %v4156
    %v4158 = vlaneseq
    %v4159 = vshrl.u32 %v4158, 7
    %v4160 = vsub.s32 2, %v4159
    %v4161 = vrot.slane %v4148, %v4160
    %v4162 = vlaneseq
    %v4163 = vshrl.u32 %v4162, 7
    %v4164 = vsub.s32 3, %v4163
    %v4165 = vrot.slane %v4148, %v4164
    %v4166 = vlaneseq
    %v4167 = vshrl.u32 %v4166, 7
    %v4168 = vsub.s32 4, %v4167
    %v4169 = vrot.slane %v4148, %v4168
    %v4170 = vlaneseq
    %v4171 = vshrl.u32 %v4170, 7
    %v4172 = vsub.s32 5, %v4171
    %v4173 = vrot.slane %v4148, %v4172
    %v4174 = vlaneseq
    %v4175 = vshrl.u32 %v4174, 7
    %v4176 = vsub.s32 6, %v4175
    %v4177 = vrot.slane %v4148, %v4176
    %v4178 = vlaneseq
    %v4179 = vshrl.u32 %v4178, 7
    %v4180 = vsub.s32 7, %v4179
    %v4181 = vrot.slane %v4148, %v4180
    %v4190 = vadd.f32 %v4019, %v4153
    %v4191 = vadd.f32 %v4021, %v4157
    %v4192 = vadd.f32 %v4060, %v4161
    %v4193 = vadd.f32 %v4062, %v4165
    %v4194 = vadd.f32 %v4101, %v4169
    %v4195 = vadd.f32 %v4103, %v4173
    %v4196 = vadd.f32 %v4142, %v4177
    %v4197 = vadd.f32 %v4144, %v4181
    %4198 = vst [vmem:[%s57] sm:$0xff] %v4190
    %4199 = vst [vmem:[%s57 + $0x8] sm:$0xff] %v4191
    %4200 = vst [vmem:[%s57 + $0x10] sm:$0xff] %v4192
    %4201 = vst [vmem:[%s57 + $0x18] sm:$0xff] %v4193
    %4202 = vst [vmem:[%s57 + $0x20] sm:$0xff] %v4194
    %4203 = vst [vmem:[%s57 + $0x28] sm:$0xff] %v4195
    %4204 = vst [vmem:[%s57 + $0x30] sm:$0xff] %v4196
    %4205 = vst [vmem:[%s57 + $0x38] sm:$0xff] %v4197
    %s4206 = sshll.u32 %s1597, 4
    %4207 = dma.done %s361, %s4206
    %v4208 = vld [vmem:[#allocation7] sm:$0xff]
    %v4209 = vld [vmem:[#allocation7 + $0x8] sm:$0xff]
    %v4210 = vld [vmem:[#allocation7 + $0x10] sm:$0xff]
    %v4211 = vld [vmem:[#allocation7 + $0x18] sm:$0xff]
    %v4212 = vld [vmem:[#allocation7 + $0x20] sm:$0xff]
    %v4213 = vld [vmem:[#allocation7 + $0x28] sm:$0xff]
    %v4214 = vld [vmem:[#allocation7 + $0x30] sm:$0xff]
    %v4215 = vld [vmem:[#allocation7 + $0x38] sm:$0xff]
    %v4216 = vld [vmem:[#allocation7 + $0x40] sm:$0xff]
    %v4217 = vld [vmem:[#allocation7 + $0x48] sm:$0xff]
    %v4218 = vld [vmem:[#allocation7 + $0x50] sm:$0xff]
    %v4219 = vld [vmem:[#allocation7 + $0x58] sm:$0xff]
    %v4220 = vld [vmem:[#allocation7 + $0x60] sm:$0xff]
    %v4221 = vld [vmem:[#allocation7 + $0x68] sm:$0xff]
    %v4222 = vld [vmem:[#allocation7 + $0x70] sm:$0xff]
    %v4223 = vld [vmem:[#allocation7 + $0x78] sm:$0xff]
    %v4224 = vld [vmem:[#allocation7 + $0x80] sm:$0xff]
    %v4225 = vld [vmem:[#allocation7 + $0x88] sm:$0xff]
    %v4226 = vld [vmem:[#allocation7 + $0x90] sm:$0xff]
    %v4227 = vld [vmem:[#allocation7 + $0x98] sm:$0xff]
    %v4228 = vld [vmem:[#allocation7 + $0xa0] sm:$0xff]
    %v4229 = vld [vmem:[#allocation7 + $0xa8] sm:$0xff]
    %v4230 = vld [vmem:[#allocation7 + $0xb0] sm:$0xff]
    %v4231 = vld [vmem:[#allocation7 + $0xb8] sm:$0xff]
    %v4232 = vld [vmem:[#allocation7 + $0xc0] sm:$0xff]
    %v4233 = vld [vmem:[#allocation7 + $0xc8] sm:$0xff]
    %v4234 = vld [vmem:[#allocation7 + $0xd0] sm:$0xff]
    %v4235 = vld [vmem:[#allocation7 + $0xd8] sm:$0xff]
    %v4236 = vld [vmem:[#allocation7 + $0xe0] sm:$0xff]
    %v4237 = vld [vmem:[#allocation7 + $0xe8] sm:$0xff]
    %v4238 = vld [vmem:[#allocation7 + $0xf0] sm:$0xff]
    %v4239 = vld [vmem:[#allocation7 + $0xf8] sm:$0xff]
    %v4240 = vld [vmem:[#allocation7 + $0x100] sm:$0xff]
    %v4241 = vld [vmem:[#allocation7 + $0x108] sm:$0xff]
    %v4242 = vld [vmem:[#allocation7 + $0x110] sm:$0xff]
    %v4243 = vld [vmem:[#allocation7 + $0x118] sm:$0xff]
    %v4244 = vld [vmem:[#allocation7 + $0x120] sm:$0xff]
    %v4245 = vld [vmem:[#allocation7 + $0x128] sm:$0xff]
    %v4246 = vld [vmem:[#allocation7 + $0x130] sm:$0xff]
    %v4247 = vld [vmem:[#allocation7 + $0x138] sm:$0xff]
    %v4248 = vld [vmem:[#allocation7 + $0x140] sm:$0xff]
    %v4249 = vld [vmem:[#allocation7 + $0x148] sm:$0xff]
    %v4250 = vld [vmem:[#allocation7 + $0x150] sm:$0xff]
    %v4251 = vld [vmem:[#allocation7 + $0x158] sm:$0xff]
    %v4252 = vld [vmem:[#allocation7 + $0x160] sm:$0xff]
    %v4253 = vld [vmem:[#allocation7 + $0x168] sm:$0xff]
    %v4254 = vld [vmem:[#allocation7 + $0x170] sm:$0xff]
    %v4255 = vld [vmem:[#allocation7 + $0x178] sm:$0xff]
    %v4256 = vld [vmem:[#allocation7 + $0x180] sm:$0xff]
    %v4257 = vld [vmem:[#allocation7 + $0x188] sm:$0xff]
    %v4258 = vld [vmem:[#allocation7 + $0x190] sm:$0xff]
    %v4259 = vld [vmem:[#allocation7 + $0x198] sm:$0xff]
    %v4260 = vld [vmem:[#allocation7 + $0x1a0] sm:$0xff]
    %v4261 = vld [vmem:[#allocation7 + $0x1a8] sm:$0xff]
    %v4262 = vld [vmem:[#allocation7 + $0x1b0] sm:$0xff]
    %v4263 = vld [vmem:[#allocation7 + $0x1b8] sm:$0xff]
    %v4264 = vld [vmem:[#allocation7 + $0x1c0] sm:$0xff]
    %v4265 = vld [vmem:[#allocation7 + $0x1c8] sm:$0xff]
    %v4266 = vld [vmem:[#allocation7 + $0x1d0] sm:$0xff]
    %v4267 = vld [vmem:[#allocation7 + $0x1d8] sm:$0xff]
    %v4268 = vld [vmem:[#allocation7 + $0x1e0] sm:$0xff]
    %v4269 = vld [vmem:[#allocation7 + $0x1e8] sm:$0xff]
    %v4270 = vld [vmem:[#allocation7 + $0x1f0] sm:$0xff]
    %v4271 = vld [vmem:[#allocation7 + $0x1f8] sm:$0xff]
    %v4272 = vld [vmem:[#allocation7 + $0x200] sm:$0xff]
    %v4273 = vld [vmem:[#allocation7 + $0x208] sm:$0xff]
    %v4274 = vld [vmem:[#allocation7 + $0x210] sm:$0xff]
    %v4275 = vld [vmem:[#allocation7 + $0x218] sm:$0xff]
    %v4276 = vld [vmem:[#allocation7 + $0x220] sm:$0xff]
    %v4277 = vld [vmem:[#allocation7 + $0x228] sm:$0xff]
    %v4278 = vld [vmem:[#allocation7 + $0x230] sm:$0xff]
    %v4279 = vld [vmem:[#allocation7 + $0x238] sm:$0xff]
    %v4280 = vld [vmem:[#allocation7 + $0x240] sm:$0xff]
    %v4281 = vld [vmem:[#allocation7 + $0x248] sm:$0xff]
    %v4282 = vld [vmem:[#allocation7 + $0x250] sm:$0xff]
    %v4283 = vld [vmem:[#allocation7 + $0x258] sm:$0xff]
    %v4284 = vld [vmem:[#allocation7 + $0x260] sm:$0xff]
    %v4285 = vld [vmem:[#allocation7 + $0x268] sm:$0xff]
    %v4286 = vld [vmem:[#allocation7 + $0x270] sm:$0xff]
    %v4287 = vld [vmem:[#allocation7 + $0x278] sm:$0xff]
    %v4288 = vld [vmem:[#allocation7 + $0x280] sm:$0xff]
    %v4289 = vld [vmem:[#allocation7 + $0x288] sm:$0xff]
    %v4290 = vld [vmem:[#allocation7 + $0x290] sm:$0xff]
    %v4291 = vld [vmem:[#allocation7 + $0x298] sm:$0xff]
    %v4292 = vld [vmem:[#allocation7 + $0x2a0] sm:$0xff]
    %v4293 = vld [vmem:[#allocation7 + $0x2a8] sm:$0xff]
    %v4294 = vld [vmem:[#allocation7 + $0x2b0] sm:$0xff]
    %v4295 = vld [vmem:[#allocation7 + $0x2b8] sm:$0xff]
    %v4296 = vld [vmem:[#allocation7 + $0x2c0] sm:$0xff]
    %v4297 = vld [vmem:[#allocation7 + $0x2c8] sm:$0xff]
    %v4298 = vld [vmem:[#allocation7 + $0x2d0] sm:$0xff]
    %v4299 = vld [vmem:[#allocation7 + $0x2d8] sm:$0xff]
    %v4300 = vld [vmem:[#allocation7 + $0x2e0] sm:$0xff]
    %v4301 = vld [vmem:[#allocation7 + $0x2e8] sm:$0xff]
    %v4302 = vld [vmem:[#allocation7 + $0x2f0] sm:$0xff]
    %v4303 = vld [vmem:[#allocation7 + $0x2f8] sm:$0xff]
    %v4304 = vld [vmem:[#allocation7 + $0x300] sm:$0xff]
    %v4305 = vld [vmem:[#allocation7 + $0x308] sm:$0xff]
    %v4306 = vld [vmem:[#allocation7 + $0x310] sm:$0xff]
    %v4307 = vld [vmem:[#allocation7 + $0x318] sm:$0xff]
    %v4308 = vld [vmem:[#allocation7 + $0x320] sm:$0xff]
    %v4309 = vld [vmem:[#allocation7 + $0x328] sm:$0xff]
    %v4310 = vld [vmem:[#allocation7 + $0x330] sm:$0xff]
    %v4311 = vld [vmem:[#allocation7 + $0x338] sm:$0xff]
    %v4312 = vld [vmem:[#allocation7 + $0x340] sm:$0xff]
    %v4313 = vld [vmem:[#allocation7 + $0x348] sm:$0xff]
    %v4314 = vld [vmem:[#allocation7 + $0x350] sm:$0xff]
    %v4315 = vld [vmem:[#allocation7 + $0x358] sm:$0xff]
    %v4316 = vld [vmem:[#allocation7 + $0x360] sm:$0xff]
    %v4317 = vld [vmem:[#allocation7 + $0x368] sm:$0xff]
    %v4318 = vld [vmem:[#allocation7 + $0x370] sm:$0xff]
    %v4319 = vld [vmem:[#allocation7 + $0x378] sm:$0xff]
    %v4320 = vld [vmem:[#allocation7 + $0x380] sm:$0xff]
    %v4321 = vld [vmem:[#allocation7 + $0x388] sm:$0xff]
    %v4322 = vld [vmem:[#allocation7 + $0x390] sm:$0xff]
    %v4323 = vld [vmem:[#allocation7 + $0x398] sm:$0xff]
    %v4324 = vld [vmem:[#allocation7 + $0x3a0] sm:$0xff]
    %v4325 = vld [vmem:[#allocation7 + $0x3a8] sm:$0xff]
    %v4326 = vld [vmem:[#allocation7 + $0x3b0] sm:$0xff]
    %v4327 = vld [vmem:[#allocation7 + $0x3b8] sm:$0xff]
    %v4328 = vld [vmem:[#allocation7 + $0x3c0] sm:$0xff]
    %v4329 = vld [vmem:[#allocation7 + $0x3c8] sm:$0xff]
    %v4330 = vld [vmem:[#allocation7 + $0x3d0] sm:$0xff]
    %v4331 = vld [vmem:[#allocation7 + $0x3d8] sm:$0xff]
    %v4332 = vld [vmem:[#allocation7 + $0x3e0] sm:$0xff]
    %v4333 = vld [vmem:[#allocation7 + $0x3e8] sm:$0xff]
    %v4334 = vld [vmem:[#allocation7 + $0x3f0] sm:$0xff]
    %v4335 = vld [vmem:[#allocation7 + $0x3f8] sm:$0xff]
    %v4336 = vpack.c.bf16 %v1924, %v1924
    %v4337 = vpack.c.bf16 %v1926, %v1926
    %4338 = vmatprep.subr.bf16.mxu0 %v4273
    %4339 = vmatpush1.bf16.msra.mxu0 %v4272
    %4340 = vmatprep.subr.bf16.mxu0 %v4277
    %4341 = vmatpush1.bf16.msra.mxu0 %v4276
    %4342 = vmatprep.subr.bf16.mxu0 %v4281
    %4343 = vmatpush1.bf16.msra.mxu0 %v4280
    %4344 = vmatprep.subr.bf16.mxu0 %v4285
    %4345 = vmatpush1.bf16.msra.mxu0 %v4284
    %4346 = vmatprep.subr.bf16.mxu0 %v4289
    %4347 = vmatpush1.bf16.msra.mxu0 %v4288
    %4348 = vmatprep.subr.bf16.mxu0 %v4293
    %4349 = vmatpush1.bf16.msra.mxu0 %v4292
    %4350 = vmatprep.subr.bf16.mxu0 %v4297
    %4351 = vmatpush1.bf16.msra.mxu0 %v4296
    %4352 = vmatprep.subr.bf16.mxu0 %v4301
    %4353 = vmatpush1.bf16.msra.mxu0 %v4300
    %4354 = vmatprep.subr.bf16.mxu0 %v4305
    %4355 = vmatpush1.bf16.msra.mxu0 %v4304
    %4356 = vmatprep.subr.bf16.mxu0 %v4309
    %4357 = vmatpush1.bf16.msra.mxu0 %v4308
    %4358 = vmatprep.subr.bf16.mxu0 %v4313
    %4359 = vmatpush1.bf16.msra.mxu0 %v4312
    %4360 = vmatprep.subr.bf16.mxu0 %v4317
    %4361 = vmatpush1.bf16.msra.mxu0 %v4316
    %4362 = vmatprep.subr.bf16.mxu0 %v4321
    %4363 = vmatpush1.bf16.msra.mxu0 %v4320
    %4364 = vmatprep.subr.bf16.mxu0 %v4325
    %4365 = vmatpush1.bf16.msra.mxu0 %v4324
    %4366 = vmatprep.subr.bf16.mxu0 %v4329
    %4367 = vmatpush1.bf16.msra.mxu0 %v4328
    %4368 = vmatprep.subr.bf16.mxu0 %v4333
    %4369 = vmatpush1.bf16.msra.mxu0 %v4332
    %4370 = vmatprep.mubr.bf16.mxu0 %v4337
    %4371 = vmatmul.mubr.bf16.gmra.mrb[0].mxu0 %v4336
    %v4372 = vpop.f32.mrb[0].mxu0
    %v4373 = vadd.f32 0.0, %v4372
    %v4374 = vpop.f32.mrb[0].mxu0
    %v4375 = vadd.f32 0.0, %v4374
    %v4376 = vpop.f32.mrb[0].mxu0
    %v4377 = vpop.f32.mrb[0].mxu0
    %4378 = vdwg.mxu0
    %4379 = vmatprep.subr.bf16.mxu0 %v4275
    %4380 = vmatpush1.bf16.msra.mxu0 %v4274
    %4381 = vmatprep.subr.bf16.mxu0 %v4279
    %4382 = vmatpush1.bf16.msra.mxu0 %v4278
    %4383 = vmatprep.subr.bf16.mxu0 %v4283
    %4384 = vmatpush1.bf16.msra.mxu0 %v4282
    %4385 = vmatprep.subr.bf16.mxu0 %v4287
    %4386 = vmatpush1.bf16.msra.mxu0 %v4286
    %4387 = vmatprep.subr.bf16.mxu0 %v4291
    %4388 = vmatpush1.bf16.msra.mxu0 %v4290
    %4389 = vmatprep.subr.bf16.mxu0 %v4295
    %4390 = vmatpush1.bf16.msra.mxu0 %v4294
    %4391 = vmatprep.subr.bf16.mxu0 %v4299
    %4392 = vmatpush1.bf16.msra.mxu0 %v4298
    %4393 = vmatprep.subr.bf16.mxu0 %v4303
    %4394 = vmatpush1.bf16.msra.mxu0 %v4302
    %4395 = vmatprep.subr.bf16.mxu0 %v4307
    %4396 = vmatpush1.bf16.msra.mxu0 %v4306
    %4397 = vmatprep.subr.bf16.mxu0 %v4311
    %4398 = vmatpush1.bf16.msra.mxu0 %v4310
    %4399 = vmatprep.subr.bf16.mxu0 %v4315
    %4400 = vmatpush1.bf16.msra.mxu0 %v4314
    %4401 = vmatprep.subr.bf16.mxu0 %v4319
    %4402 = vmatpush1.bf16.msra.mxu0 %v4318
    %4403 = vmatprep.subr.bf16.mxu0 %v4323
    %4404 = vmatpush1.bf16.msra.mxu0 %v4322
    %4405 = vmatprep.subr.bf16.mxu0 %v4327
    %4406 = vmatpush1.bf16.msra.mxu0 %v4326
    %4407 = vmatprep.subr.bf16.mxu0 %v4331
    %4408 = vmatpush1.bf16.msra.mxu0 %v4330
    %4409 = vmatprep.subr.bf16.mxu0 %v4335
    %4410 = vmatpush1.bf16.msra.mxu0 %v4334
    %4411 = vmatprep.mubr.bf16.mxu0 %v4337
    %4412 = vmatmul.mubr.bf16.gmra.mrb[0].mxu0 %v4336
    %v4413 = vpop.f32.mrb[0].mxu0
    %v4414 = vadd.f32 0.0, %v4413
    %v4415 = vpop.f32.mrb[0].mxu0
    %v4416 = vadd.f32 0.0, %v4415
    %v4417 = vpop.f32.mrb[0].mxu0
    %v4418 = vpop.f32.mrb[0].mxu0
    %4419 = vdwg.mxu0
    %4420 = vmatprep.subr.bf16.mxu0 %v4209
    %4421 = vmatpush1.bf16.msra.mxu0 %v4208
    %4422 = vmatprep.subr.bf16.mxu0 %v4213
    %4423 = vmatpush1.bf16.msra.mxu0 %v4212
    %4424 = vmatprep.subr.bf16.mxu0 %v4217
    %4425 = vmatpush1.bf16.msra.mxu0 %v4216
    %4426 = vmatprep.subr.bf16.mxu0 %v4221
    %4427 = vmatpush1.bf16.msra.mxu0 %v4220
    %4428 = vmatprep.subr.bf16.mxu0 %v4225
    %4429 = vmatpush1.bf16.msra.mxu0 %v4224
    %4430 = vmatprep.subr.bf16.mxu0 %v4229
    %4431 = vmatpush1.bf16.msra.mxu0 %v4228
    %4432 = vmatprep.subr.bf16.mxu0 %v4233
    %4433 = vmatpush1.bf16.msra.mxu0 %v4232
    %4434 = vmatprep.subr.bf16.mxu0 %v4237
    %4435 = vmatpush1.bf16.msra.mxu0 %v4236
    %4436 = vmatprep.subr.bf16.mxu0 %v4241
    %4437 = vmatpush1.bf16.msra.mxu0 %v4240
    %4438 = vmatprep.subr.bf16.mxu0 %v4245
    %4439 = vmatpush1.bf16.msra.mxu0 %v4244
    %4440 = vmatprep.subr.bf16.mxu0 %v4249
    %4441 = vmatpush1.bf16.msra.mxu0 %v4248
    %4442 = vmatprep.subr.bf16.mxu0 %v4253
    %4443 = vmatpush1.bf16.msra.mxu0 %v4252
    %4444 = vmatprep.subr.bf16.mxu0 %v4257
    %4445 = vmatpush1.bf16.msra.mxu0 %v4256
    %4446 = vmatprep.subr.bf16.mxu0 %v4261
    %4447 = vmatpush1.bf16.msra.mxu0 %v4260
    %4448 = vmatprep.subr.bf16.mxu0 %v4265
    %4449 = vmatpush1.bf16.msra.mxu0 %v4264
    %4450 = vmatprep.subr.bf16.mxu0 %v4269
    %4451 = vmatpush1.bf16.msra.mxu0 %v4268
    %4452 = vmatprep.mubr.bf16.mxu0 %v3047
    %4453 = vmatmul.mubr.bf16.gmra.mrb[0].mxu0 %v3046
    %v4454 = vpop.f32.mrb[0].mxu0
    %v4455 = vadd.f32 %v4373, %v4454
    %v4456 = vpop.f32.mrb[0].mxu0
    %v4457 = vadd.f32 %v4375, %v4456
    %v4458 = vpop.f32.mrb[0].mxu0
    %v4459 = vpop.f32.mrb[0].mxu0
    %4460 = vdwg.mxu0
    %4461 = vmatprep.subr.bf16.mxu0 %v4211
    %4462 = vmatpush1.bf16.msra.mxu0 %v4210
    %4463 = vmatprep.subr.bf16.mxu0 %v4215
    %4464 = vmatpush1.bf16.msra.mxu0 %v4214
    %4465 = vmatprep.subr.bf16.mxu0 %v4219
    %4466 = vmatpush1.bf16.msra.mxu0 %v4218
    %4467 = vmatprep.subr.bf16.mxu0 %v4223
    %4468 = vmatpush1.bf16.msra.mxu0 %v4222
    %4469 = vmatprep.subr.bf16.mxu0 %v4227
    %4470 = vmatpush1.bf16.msra.mxu0 %v4226
    %4471 = vmatprep.subr.bf16.mxu0 %v4231
    %4472 = vmatpush1.bf16.msra.mxu0 %v4230
    %4473 = vmatprep.subr.bf16.mxu0 %v4235
    %4474 = vmatpush1.bf16.msra.mxu0 %v4234
    %4475 = vmatprep.subr.bf16.mxu0 %v4239
    %4476 = vmatpush1.bf16.msra.mxu0 %v4238
    %4477 = vmatprep.subr.bf16.mxu0 %v4243
    %4478 = vmatpush1.bf16.msra.mxu0 %v4242
    %4479 = vmatprep.subr.bf16.mxu0 %v4247
    %4480 = vmatpush1.bf16.msra.mxu0 %v4246
    %4481 = vmatprep.subr.bf16.mxu0 %v4251
    %4482 = vmatpush1.bf16.msra.mxu0 %v4250
    %4483 = vmatprep.subr.bf16.mxu0 %v4255
    %4484 = vmatpush1.bf16.msra.mxu0 %v4254
    %4485 = vmatprep.subr.bf16.mxu0 %v4259
    %4486 = vmatpush1.bf16.msra.mxu0 %v4258
    %4487 = vmatprep.subr.bf16.mxu0 %v4263
    %4488 = vmatpush1.bf16.msra.mxu0 %v4262
    %4489 = vmatprep.subr.bf16.mxu0 %v4267
    %4490 = vmatpush1.bf16.msra.mxu0 %v4266
    %4491 = vmatprep.subr.bf16.mxu0 %v4271
    %4492 = vmatpush1.bf16.msra.mxu0 %v4270
    %4493 = vmatprep.mubr.bf16.mxu0 %v3047
    %4494 = vmatmul.mubr.bf16.gmra.mrb[0].mxu0 %v3046
    %v4495 = vpop.f32.mrb[0].mxu0
    %v4496 = vadd.f32 %v4414, %v4495
    %v4497 = vpop.f32.mrb[0].mxu0
    %v4498 = vadd.f32 %v4416, %v4497
    %v4499 = vpop.f32.mrb[0].mxu0
    %v4500 = vpop.f32.mrb[0].mxu0
    %4501 = vdwg.mxu0
    %v4502 = vld [vmem:[#allocation19] sm:$0xf]
    %v4504 = vlaneseq
    %v4505 = vshrl.u32 %v4504, 7
    %v4506 = vsub.s32 0, %v4505
    %v4507 = vrot.slane %v4502, %v4506
    %v4508 = vlaneseq
    %v4509 = vshrl.u32 %v4508, 7
    %v4510 = vsub.s32 1, %v4509
    %v4511 = vrot.slane %v4502, %v4510
    %v4512 = vlaneseq
    %v4513 = vshrl.u32 %v4512, 7
    %v4514 = vsub.s32 2, %v4513
    %v4515 = vrot.slane %v4502, %v4514
    %v4516 = vlaneseq
    %v4517 = vshrl.u32 %v4516, 7
    %v4518 = vsub.s32 3, %v4517
    %v4519 = vrot.slane %v4502, %v4518
    %v4524 = vadd.f32 %v4455, %v4507
    %v4525 = vadd.f32 %v4457, %v4511
    %v4526 = vadd.f32 %v4496, %v4515
    %v4527 = vadd.f32 %v4498, %v4519
    %4528 = vst [vmem:[%s59] sm:$0xff] %v4524
    %4529 = vst [vmem:[%s59 + $0x8] sm:$0xff] %v4525
    %4530 = vst [vmem:[%s59 + $0x10] sm:$0xff] %v4526
    %4531 = vst [vmem:[%s59 + $0x18] sm:$0xff] %v4527
    %v4532 = vld [vmem:[#allocation7] sm:$0xff]
    %v4533 = vld [vmem:[#allocation7 + $0x8] sm:$0xff]
    %v4534 = vld [vmem:[#allocation7 + $0x10] sm:$0xff]
    %v4535 = vld [vmem:[#allocation7 + $0x18] sm:$0xff]
    %v4536 = vld [vmem:[#allocation7 + $0x20] sm:$0xff]
    %v4537 = vld [vmem:[#allocation7 + $0x28] sm:$0xff]
    %v4538 = vld [vmem:[#allocation7 + $0x30] sm:$0xff]
    %v4539 = vld [vmem:[#allocation7 + $0x38] sm:$0xff]
    %v4540 = vld [vmem:[#allocation7 + $0x40] sm:$0xff]
    %v4541 = vld [vmem:[#allocation7 + $0x48] sm:$0xff]
    %v4542 = vld [vmem:[#allocation7 + $0x50] sm:$0xff]
    %v4543 = vld [vmem:[#allocation7 + $0x58] sm:$0xff]
    %v4544 = vld [vmem:[#allocation7 + $0x60] sm:$0xff]
    %v4545 = vld [vmem:[#allocation7 + $0x68] sm:$0xff]
    %v4546 = vld [vmem:[#allocation7 + $0x70] sm:$0xff]
    %v4547 = vld [vmem:[#allocation7 + $0x78] sm:$0xff]
    %v4548 = vld [vmem:[#allocation7 + $0x80] sm:$0xff]
    %v4549 = vld [vmem:[#allocation7 + $0x88] sm:$0xff]
    %v4550 = vld [vmem:[#allocation7 + $0x90] sm:$0xff]
    %v4551 = vld [vmem:[#allocation7 + $0x98] sm:$0xff]
    %v4552 = vld [vmem:[#allocation7 + $0xa0] sm:$0xff]
    %v4553 = vld [vmem:[#allocation7 + $0xa8] sm:$0xff]
    %v4554 = vld [vmem:[#allocation7 + $0xb0] sm:$0xff]
    %v4555 = vld [vmem:[#allocation7 + $0xb8] sm:$0xff]
    %v4556 = vld [vmem:[#allocation7 + $0xc0] sm:$0xff]
    %v4557 = vld [vmem:[#allocation7 + $0xc8] sm:$0xff]
    %v4558 = vld [vmem:[#allocation7 + $0xd0] sm:$0xff]
    %v4559 = vld [vmem:[#allocation7 + $0xd8] sm:$0xff]
    %v4560 = vld [vmem:[#allocation7 + $0xe0] sm:$0xff]
    %v4561 = vld [vmem:[#allocation7 + $0xe8] sm:$0xff]
    %v4562 = vld [vmem:[#allocation7 + $0xf0] sm:$0xff]
    %v4563 = vld [vmem:[#allocation7 + $0xf8] sm:$0xff]
    %v4564 = vld [vmem:[#allocation7 + $0x100] sm:$0xff]
    %v4565 = vld [vmem:[#allocation7 + $0x108] sm:$0xff]
    %v4566 = vld [vmem:[#allocation7 + $0x110] sm:$0xff]
    %v4567 = vld [vmem:[#allocation7 + $0x118] sm:$0xff]
    %v4568 = vld [vmem:[#allocation7 + $0x120] sm:$0xff]
    %v4569 = vld [vmem:[#allocation7 + $0x128] sm:$0xff]
    %v4570 = vld [vmem:[#allocation7 + $0x130] sm:$0xff]
    %v4571 = vld [vmem:[#allocation7 + $0x138] sm:$0xff]
    %v4572 = vld [vmem:[#allocation7 + $0x140] sm:$0xff]
    %v4573 = vld [vmem:[#allocation7 + $0x148] sm:$0xff]
    %v4574 = vld [vmem:[#allocation7 + $0x150] sm:$0xff]
    %v4575 = vld [vmem:[#allocation7 + $0x158] sm:$0xff]
    %v4576 = vld [vmem:[#allocation7 + $0x160] sm:$0xff]
    %v4577 = vld [vmem:[#allocation7 + $0x168] sm:$0xff]
    %v4578 = vld [vmem:[#allocation7 + $0x170] sm:$0xff]
    %v4579 = vld [vmem:[#allocation7 + $0x178] sm:$0xff]
    %v4580 = vld [vmem:[#allocation7 + $0x180] sm:$0xff]
    %v4581 = vld [vmem:[#allocation7 + $0x188] sm:$0xff]
    %v4582 = vld [vmem:[#allocation7 + $0x190] sm:$0xff]
    %v4583 = vld [vmem:[#allocation7 + $0x198] sm:$0xff]
    %v4584 = vld [vmem:[#allocation7 + $0x1a0] sm:$0xff]
    %v4585 = vld [vmem:[#allocation7 + $0x1a8] sm:$0xff]
    %v4586 = vld [vmem:[#allocation7 + $0x1b0] sm:$0xff]
    %v4587 = vld [vmem:[#allocation7 + $0x1b8] sm:$0xff]
    %v4588 = vld [vmem:[#allocation7 + $0x1c0] sm:$0xff]
    %v4589 = vld [vmem:[#allocation7 + $0x1c8] sm:$0xff]
    %v4590 = vld [vmem:[#allocation7 + $0x1d0] sm:$0xff]
    %v4591 = vld [vmem:[#allocation7 + $0x1d8] sm:$0xff]
    %v4592 = vld [vmem:[#allocation7 + $0x1e0] sm:$0xff]
    %v4593 = vld [vmem:[#allocation7 + $0x1e8] sm:$0xff]
    %v4594 = vld [vmem:[#allocation7 + $0x1f0] sm:$0xff]
    %v4595 = vld [vmem:[#allocation7 + $0x1f8] sm:$0xff]
    %v4596 = vld [vmem:[#allocation7 + $0x200] sm:$0xff]
    %v4597 = vld [vmem:[#allocation7 + $0x208] sm:$0xff]
    %v4598 = vld [vmem:[#allocation7 + $0x210] sm:$0xff]
    %v4599 = vld [vmem:[#allocation7 + $0x218] sm:$0xff]
    %v4600 = vld [vmem:[#allocation7 + $0x220] sm:$0xff]
    %v4601 = vld [vmem:[#allocation7 + $0x228] sm:$0xff]
    %v4602 = vld [vmem:[#allocation7 + $0x230] sm:$0xff]
    %v4603 = vld [vmem:[#allocation7 + $0x238] sm:$0xff]
    %v4604 = vld [vmem:[#allocation7 + $0x240] sm:$0xff]
    %v4605 = vld [vmem:[#allocation7 + $0x248] sm:$0xff]
    %v4606 = vld [vmem:[#allocation7 + $0x250] sm:$0xff]
    %v4607 = vld [vmem:[#allocation7 + $0x258] sm:$0xff]
    %v4608 = vld [vmem:[#allocation7 + $0x260] sm:$0xff]
    %v4609 = vld [vmem:[#allocation7 + $0x268] sm:$0xff]
    %v4610 = vld [vmem:[#allocation7 + $0x270] sm:$0xff]
    %v4611 = vld [vmem:[#allocation7 + $0x278] sm:$0xff]
    %v4612 = vld [vmem:[#allocation7 + $0x280] sm:$0xff]
    %v4613 = vld [vmem:[#allocation7 + $0x288] sm:$0xff]
    %v4614 = vld [vmem:[#allocation7 + $0x290] sm:$0xff]
    %v4615 = vld [vmem:[#allocation7 + $0x298] sm:$0xff]
    %v4616 = vld [vmem:[#allocation7 + $0x2a0] sm:$0xff]
    %v4617 = vld [vmem:[#allocation7 + $0x2a8] sm:$0xff]
    %v4618 = vld [vmem:[#allocation7 + $0x2b0] sm:$0xff]
    %v4619 = vld [vmem:[#allocation7 + $0x2b8] sm:$0xff]
    %v4620 = vld [vmem:[#allocation7 + $0x2c0] sm:$0xff]
    %v4621 = vld [vmem:[#allocation7 + $0x2c8] sm:$0xff]
    %v4622 = vld [vmem:[#allocation7 + $0x2d0] sm:$0xff]
    %v4623 = vld [vmem:[#allocation7 + $0x2d8] sm:$0xff]
    %v4624 = vld [vmem:[#allocation7 + $0x2e0] sm:$0xff]
    %v4625 = vld [vmem:[#allocation7 + $0x2e8] sm:$0xff]
    %v4626 = vld [vmem:[#allocation7 + $0x2f0] sm:$0xff]
    %v4627 = vld [vmem:[#allocation7 + $0x2f8] sm:$0xff]
    %v4628 = vld [vmem:[#allocation7 + $0x300] sm:$0xff]
    %v4629 = vld [vmem:[#allocation7 + $0x308] sm:$0xff]
    %v4630 = vld [vmem:[#allocation7 + $0x310] sm:$0xff]
    %v4631 = vld [vmem:[#allocation7 + $0x318] sm:$0xff]
    %v4632 = vld [vmem:[#allocation7 + $0x320] sm:$0xff]
    %v4633 = vld [vmem:[#allocation7 + $0x328] sm:$0xff]
    %v4634 = vld [vmem:[#allocation7 + $0x330] sm:$0xff]
    %v4635 = vld [vmem:[#allocation7 + $0x338] sm:$0xff]
    %v4636 = vld [vmem:[#allocation7 + $0x340] sm:$0xff]
    %v4637 = vld [vmem:[#allocation7 + $0x348] sm:$0xff]
    %v4638 = vld [vmem:[#allocation7 + $0x350] sm:$0xff]
    %v4639 = vld [vmem:[#allocation7 + $0x358] sm:$0xff]
    %v4640 = vld [vmem:[#allocation7 + $0x360] sm:$0xff]
    %v4641 = vld [vmem:[#allocation7 + $0x368] sm:$0xff]
    %v4642 = vld [vmem:[#allocation7 + $0x370] sm:$0xff]
    %v4643 = vld [vmem:[#allocation7 + $0x378] sm:$0xff]
    %v4644 = vld [vmem:[#allocation7 + $0x380] sm:$0xff]
    %v4645 = vld [vmem:[#allocation7 + $0x388] sm:$0xff]
    %v4646 = vld [vmem:[#allocation7 + $0x390] sm:$0xff]
    %v4647 = vld [vmem:[#allocation7 + $0x398] sm:$0xff]
    %v4648 = vld [vmem:[#allocation7 + $0x3a0] sm:$0xff]
    %v4649 = vld [vmem:[#allocation7 + $0x3a8] sm:$0xff]
    %v4650 = vld [vmem:[#allocation7 + $0x3b0] sm:$0xff]
    %v4651 = vld [vmem:[#allocation7 + $0x3b8] sm:$0xff]
    %v4652 = vld [vmem:[#allocation7 + $0x3c0] sm:$0xff]
    %v4653 = vld [vmem:[#allocation7 + $0x3c8] sm:$0xff]
    %v4654 = vld [vmem:[#allocation7 + $0x3d0] sm:$0xff]
    %v4655 = vld [vmem:[#allocation7 + $0x3d8] sm:$0xff]
    %v4656 = vld [vmem:[#allocation7 + $0x3e0] sm:$0xff]
    %v4657 = vld [vmem:[#allocation7 + $0x3e8] sm:$0xff]
    %v4658 = vld [vmem:[#allocation7 + $0x3f0] sm:$0xff]
    %v4659 = vld [vmem:[#allocation7 + $0x3f8] sm:$0xff]
    %4660 = vmatprep.subr.bf16.mxu0 %v4597
    %4661 = vmatpush1.bf16.msra.mxu0 %v4596
    %4662 = vmatprep.subr.bf16.mxu0 %v4601
    %4663 = vmatpush1.bf16.msra.mxu0 %v4600
    %4664 = vmatprep.subr.bf16.mxu0 %v4605
    %4665 = vmatpush1.bf16.msra.mxu0 %v4604
    %4666 = vmatprep.subr.bf16.mxu0 %v4609
    %4667 = vmatpush1.bf16.msra.mxu0 %v4608
    %4668 = vmatprep.subr.bf16.mxu0 %v4613
    %4669 = vmatpush1.bf16.msra.mxu0 %v4612
    %4670 = vmatprep.subr.bf16.mxu0 %v4617
    %4671 = vmatpush1.bf16.msra.mxu0 %v4616
    %4672 = vmatprep.subr.bf16.mxu0 %v4621
    %4673 = vmatpush1.bf16.msra.mxu0 %v4620
    %4674 = vmatprep.subr.bf16.mxu0 %v4625
    %4675 = vmatpush1.bf16.msra.mxu0 %v4624
    %4676 = vmatprep.subr.bf16.mxu0 %v4629
    %4677 = vmatpush1.bf16.msra.mxu0 %v4628
    %4678 = vmatprep.subr.bf16.mxu0 %v4633
    %4679 = vmatpush1.bf16.msra.mxu0 %v4632
    %4680 = vmatprep.subr.bf16.mxu0 %v4637
    %4681 = vmatpush1.bf16.msra.mxu0 %v4636
    %4682 = vmatprep.subr.bf16.mxu0 %v4641
    %4683 = vmatpush1.bf16.msra.mxu0 %v4640
    %4684 = vmatprep.subr.bf16.mxu0 %v4645
    %4685 = vmatpush1.bf16.msra.mxu0 %v4644
    %4686 = vmatprep.subr.bf16.mxu0 %v4649
    %4687 = vmatpush1.bf16.msra.mxu0 %v4648
    %4688 = vmatprep.subr.bf16.mxu0 %v4653
    %4689 = vmatpush1.bf16.msra.mxu0 %v4652
    %4690 = vmatprep.subr.bf16.mxu0 %v4657
    %4691 = vmatpush1.bf16.msra.mxu0 %v4656
    %4692 = vmatprep.mubr.bf16.mxu0 %v4337
    %4693 = vmatmul.mubr.bf16.gmra.mrb[0].mxu0 %v4336
    %v4694 = vpop.f32.mrb[0].mxu0
    %v4695 = vadd.f32 0.0, %v4694
    %v4696 = vpop.f32.mrb[0].mxu0
    %v4697 = vadd.f32 0.0, %v4696
    %v4698 = vpop.f32.mrb[0].mxu0
    %v4699 = vpop.f32.mrb[0].mxu0
    %4700 = vdwg.mxu0
    %4701 = vmatprep.subr.bf16.mxu0 %v4599
    %4702 = vmatpush1.bf16.msra.mxu0 %v4598
    %4703 = vmatprep.subr.bf16.mxu0 %v4603
    %4704 = vmatpush1.bf16.msra.mxu0 %v4602
    %4705 = vmatprep.subr.bf16.mxu0 %v4607
    %4706 = vmatpush1.bf16.msra.mxu0 %v4606
    %4707 = vmatprep.subr.bf16.mxu0 %v4611
    %4708 = vmatpush1.bf16.msra.mxu0 %v4610
    %4709 = vmatprep.subr.bf16.mxu0 %v4615
    %4710 = vmatpush1.bf16.msra.mxu0 %v4614
    %4711 = vmatprep.subr.bf16.mxu0 %v4619
    %4712 = vmatpush1.bf16.msra.mxu0 %v4618
    %4713 = vmatprep.subr.bf16.mxu0 %v4623
    %4714 = vmatpush1.bf16.msra.mxu0 %v4622
    %4715 = vmatprep.subr.bf16.mxu0 %v4627
    %4716 = vmatpush1.bf16.msra.mxu0 %v4626
    %4717 = vmatprep.subr.bf16.mxu0 %v4631
    %4718 = vmatpush1.bf16.msra.mxu0 %v4630
    %4719 = vmatprep.subr.bf16.mxu0 %v4635
    %4720 = vmatpush1.bf16.msra.mxu0 %v4634
    %4721 = vmatprep.subr.bf16.mxu0 %v4639
    %4722 = vmatpush1.bf16.msra.mxu0 %v4638
    %4723 = vmatprep.subr.bf16.mxu0 %v4643
    %4724 = vmatpush1.bf16.msra.mxu0 %v4642
    %4725 = vmatprep.subr.bf16.mxu0 %v4647
    %4726 = vmatpush1.bf16.msra.mxu0 %v4646
    %4727 = vmatprep.subr.bf16.mxu0 %v4651
    %4728 = vmatpush1.bf16.msra.mxu0 %v4650
    %4729 = vmatprep.subr.bf16.mxu0 %v4655
    %4730 = vmatpush1.bf16.msra.mxu0 %v4654
    %4731 = vmatprep.subr.bf16.mxu0 %v4659
    %4732 = vmatpush1.bf16.msra.mxu0 %v4658
    %4733 = vmatprep.mubr.bf16.mxu0 %v4337
    %4734 = vmatmul.mubr.bf16.gmra.mrb[0].mxu0 %v4336
    %v4735 = vpop.f32.mrb[0].mxu0
    %v4736 = vadd.f32 0.0, %v4735
    %v4737 = vpop.f32.mrb[0].mxu0
    %v4738 = vadd.f32 0.0, %v4737
    %v4739 = vpop.f32.mrb[0].mxu0
    %v4740 = vpop.f32.mrb[0].mxu0
    %4741 = vdwg.mxu0
    %4742 = vmatprep.subr.bf16.mxu0 %v4533
    %4743 = vmatpush1.bf16.msra.mxu0 %v4532
    %4744 = vmatprep.subr.bf16.mxu0 %v4537
    %4745 = vmatpush1.bf16.msra.mxu0 %v4536
    %4746 = vmatprep.subr.bf16.mxu0 %v4541
    %4747 = vmatpush1.bf16.msra.mxu0 %v4540
    %4748 = vmatprep.subr.bf16.mxu0 %v4545
    %4749 = vmatpush1.bf16.msra.mxu0 %v4544
    %4750 = vmatprep.subr.bf16.mxu0 %v4549
    %4751 = vmatpush1.bf16.msra.mxu0 %v4548
    %4752 = vmatprep.subr.bf16.mxu0 %v4553
    %4753 = vmatpush1.bf16.msra.mxu0 %v4552
    %4754 = vmatprep.subr.bf16.mxu0 %v4557
    %4755 = vmatpush1.bf16.msra.mxu0 %v4556
    %4756 = vmatprep.subr.bf16.mxu0 %v4561
    %4757 = vmatpush1.bf16.msra.mxu0 %v4560
    %4758 = vmatprep.subr.bf16.mxu0 %v4565
    %4759 = vmatpush1.bf16.msra.mxu0 %v4564
    %4760 = vmatprep.subr.bf16.mxu0 %v4569
    %4761 = vmatpush1.bf16.msra.mxu0 %v4568
    %4762 = vmatprep.subr.bf16.mxu0 %v4573
    %4763 = vmatpush1.bf16.msra.mxu0 %v4572
    %4764 = vmatprep.subr.bf16.mxu0 %v4577
    %4765 = vmatpush1.bf16.msra.mxu0 %v4576
    %4766 = vmatprep.subr.bf16.mxu0 %v4581
    %4767 = vmatpush1.bf16.msra.mxu0 %v4580
    %4768 = vmatprep.subr.bf16.mxu0 %v4585
    %4769 = vmatpush1.bf16.msra.mxu0 %v4584
    %4770 = vmatprep.subr.bf16.mxu0 %v4589
    %4771 = vmatpush1.bf16.msra.mxu0 %v4588
    %4772 = vmatprep.subr.bf16.mxu0 %v4593
    %4773 = vmatpush1.bf16.msra.mxu0 %v4592
    %4774 = vmatprep.mubr.bf16.mxu0 %v2042
    %4775 = vmatmul.mubr.bf16.gmra.mrb[0].mxu0 %v2041
    %v4776 = vpop.f32.mrb[0].mxu0
    %v4777 = vadd.f32 %v4695, %v4776
    %v4778 = vpop.f32.mrb[0].mxu0
    %v4779 = vadd.f32 %v4697, %v4778
    %v4780 = vpop.f32.mrb[0].mxu0
    %v4781 = vpop.f32.mrb[0].mxu0
    %4782 = vdwg.mxu0
    %4783 = vmatprep.subr.bf16.mxu0 %v4535
    %4784 = vmatpush1.bf16.msra.mxu0 %v4534
    %4785 = vmatprep.subr.bf16.mxu0 %v4539
    %4786 = vmatpush1.bf16.msra.mxu0 %v4538
    %4787 = vmatprep.subr.bf16.mxu0 %v4543
    %4788 = vmatpush1.bf16.msra.mxu0 %v4542
    %4789 = vmatprep.subr.bf16.mxu0 %v4547
    %4790 = vmatpush1.bf16.msra.mxu0 %v4546
    %4791 = vmatprep.subr.bf16.mxu0 %v4551
    %4792 = vmatpush1.bf16.msra.mxu0 %v4550
    %4793 = vmatprep.subr.bf16.mxu0 %v4555
    %4794 = vmatpush1.bf16.msra.mxu0 %v4554
    %4795 = vmatprep.subr.bf16.mxu0 %v4559
    %4796 = vmatpush1.bf16.msra.mxu0 %v4558
    %4797 = vmatprep.subr.bf16.mxu0 %v4563
    %4798 = vmatpush1.bf16.msra.mxu0 %v4562
    %4799 = vmatprep.subr.bf16.mxu0 %v4567
    %4800 = vmatpush1.bf16.msra.mxu0 %v4566
    %4801 = vmatprep.subr.bf16.mxu0 %v4571
    %4802 = vmatpush1.bf16.msra.mxu0 %v4570
    %4803 = vmatprep.subr.bf16.mxu0 %v4575
    %4804 = vmatpush1.bf16.msra.mxu0 %v4574
    %4805 = vmatprep.subr.bf16.mxu0 %v4579
    %4806 = vmatpush1.bf16.msra.mxu0 %v4578
    %4807 = vmatprep.subr.bf16.mxu0 %v4583
    %4808 = vmatpush1.bf16.msra.mxu0 %v4582
    %4809 = vmatprep.subr.bf16.mxu0 %v4587
    %4810 = vmatpush1.bf16.msra.mxu0 %v4586
    %4811 = vmatprep.subr.bf16.mxu0 %v4591
    %4812 = vmatpush1.bf16.msra.mxu0 %v4590
    %4813 = vmatprep.subr.bf16.mxu0 %v4595
    %4814 = vmatpush1.bf16.msra.mxu0 %v4594
    %4815 = vmatprep.mubr.bf16.mxu0 %v2042
    %4816 = vmatmul.mubr.bf16.gmra.mrb[0].mxu0 %v2041
    %v4817 = vpop.f32.mrb[0].mxu0
    %v4818 = vadd.f32 %v4736, %v4817
    %v4819 = vpop.f32.mrb[0].mxu0
    %v4820 = vadd.f32 %v4738, %v4819
    %v4821 = vpop.f32.mrb[0].mxu0
    %v4822 = vpop.f32.mrb[0].mxu0
    %4823 = vdwg.mxu0
    %v4824 = vld [vmem:[#allocation19] sm:$0xf]
    %v4826 = vlaneseq
    %v4827 = vshrl.u32 %v4826, 7
    %v4828 = vsub.s32 0, %v4827
    %v4829 = vrot.slane %v4824, %v4828
    %v4830 = vlaneseq
    %v4831 = vshrl.u32 %v4830, 7
    %v4832 = vsub.s32 1, %v4831
    %v4833 = vrot.slane %v4824, %v4832
    %v4834 = vlaneseq
    %v4835 = vshrl.u32 %v4834, 7
    %v4836 = vsub.s32 2, %v4835
    %v4837 = vrot.slane %v4824, %v4836
    %v4838 = vlaneseq
    %v4839 = vshrl.u32 %v4838, 7
    %v4840 = vsub.s32 3, %v4839
    %v4841 = vrot.slane %v4824, %v4840
    %v4846 = vadd.f32 %v4777, %v4829
    %v4847 = vadd.f32 %v4779, %v4833
    %v4848 = vadd.f32 %v4818, %v4837
    %v4849 = vadd.f32 %v4820, %v4841
    %4850 = vst [vmem:[%s61] sm:$0xff] %v4846
    %4851 = vst [vmem:[%s61 + $0x8] sm:$0xff] %v4847
    %4852 = vst [vmem:[%s61 + $0x10] sm:$0xff] %v4848
    %4853 = vst [vmem:[%s61 + $0x18] sm:$0xff] %v4849
    %s4854 = smul.u32 4, 192
    %s4855 = smul.u32 %s4854, 8
    %s4856 = sshll.u32 %s4855, 4
    %4857 = dma.done %s396, %s4856
    %v4858 = vld [vmem:[#allocation8] sm:$0xff]
    %v4859 = vld [vmem:[#allocation8 + $0x8] sm:$0xff]
    %v4860 = vld [vmem:[#allocation8 + $0x10] sm:$0xff]
    %v4861 = vld [vmem:[#allocation8 + $0x18] sm:$0xff]
    %v4862 = vld [vmem:[#allocation8 + $0x20] sm:$0xff]
    %v4863 = vld [vmem:[#allocation8 + $0x28] sm:$0xff]
    %v4864 = vld [vmem:[#allocation8 + $0x30] sm:$0xff]
    %v4865 = vld [vmem:[#allocation8 + $0x38] sm:$0xff]
    %v4866 = vld [vmem:[#allocation8 + $0x40] sm:$0xff]
    %v4867 = vld [vmem:[#allocation8 + $0x48] sm:$0xff]
    %v4868 = vld [vmem:[#allocation8 + $0x50] sm:$0xff]
    %v4869 = vld [vmem:[#allocation8 + $0x58] sm:$0xff]
    %v4870 = vld [vmem:[#allocation8 + $0x60] sm:$0xff]
    %v4871 = vld [vmem:[#allocation8 + $0x68] sm:$0xff]
    %v4872 = vld [vmem:[#allocation8 + $0x70] sm:$0xff]
    %v4873 = vld [vmem:[#allocation8 + $0x78] sm:$0xff]
    %v4874 = vld [vmem:[#allocation8 + $0x80] sm:$0xff]
    %v4875 = vld [vmem:[#allocation8 + $0x88] sm:$0xff]
    %v4876 = vld [vmem:[#allocation8 + $0x90] sm:$0xff]
    %v4877 = vld [vmem:[#allocation8 + $0x98] sm:$0xff]
    %v4878 = vld [vmem:[#allocation8 + $0xa0] sm:$0xff]
    %v4879 = vld [vmem:[#allocation8 + $0xa8] sm:$0xff]
    %v4880 = vld [vmem:[#allocation8 + $0xb0] sm:$0xff]
    %v4881 = vld [vmem:[#allocation8 + $0xb8] sm:$0xff]
    %v4882 = vld [vmem:[#allocation8 + $0xc0] sm:$0xff]
    %v4883 = vld [vmem:[#allocation8 + $0xc8] sm:$0xff]
    %v4884 = vld [vmem:[#allocation8 + $0xd0] sm:$0xff]
    %v4885 = vld [vmem:[#allocation8 + $0xd8] sm:$0xff]
    %v4886 = vld [vmem:[#allocation8 + $0xe0] sm:$0xff]
    %v4887 = vld [vmem:[#allocation8 + $0xe8] sm:$0xff]
    %v4888 = vld [vmem:[#allocation8 + $0xf0] sm:$0xff]
    %v4889 = vld [vmem:[#allocation8 + $0xf8] sm:$0xff]
    %v4890 = vld [vmem:[#allocation8 + $0x100] sm:$0xff]
    %v4891 = vld [vmem:[#allocation8 + $0x108] sm:$0xff]
    %v4892 = vld [vmem:[#allocation8 + $0x110] sm:$0xff]
    %v4893 = vld [vmem:[#allocation8 + $0x118] sm:$0xff]
    %v4894 = vld [vmem:[#allocation8 + $0x120] sm:$0xff]
    %v4895 = vld [vmem:[#allocation8 + $0x128] sm:$0xff]
    %v4896 = vld [vmem:[#allocation8 + $0x130] sm:$0xff]
    %v4897 = vld [vmem:[#allocation8 + $0x138] sm:$0xff]
    %v4898 = vld [vmem:[#allocation8 + $0x140] sm:$0xff]
    %v4899 = vld [vmem:[#allocation8 + $0x148] sm:$0xff]
    %v4900 = vld [vmem:[#allocation8 + $0x150] sm:$0xff]
    %v4901 = vld [vmem:[#allocation8 + $0x158] sm:$0xff]
    %v4902 = vld [vmem:[#allocation8 + $0x160] sm:$0xff]
    %v4903 = vld [vmem:[#allocation8 + $0x168] sm:$0xff]
    %v4904 = vld [vmem:[#allocation8 + $0x170] sm:$0xff]
    %v4905 = vld [vmem:[#allocation8 + $0x178] sm:$0xff]
    %v4906 = vld [vmem:[#allocation8 + $0x180] sm:$0xff]
    %v4907 = vld [vmem:[#allocation8 + $0x188] sm:$0xff]
    %v4908 = vld [vmem:[#allocation8 + $0x190] sm:$0xff]
    %v4909 = vld [vmem:[#allocation8 + $0x198] sm:$0xff]
    %v4910 = vld [vmem:[#allocation8 + $0x1a0] sm:$0xff]
    %v4911 = vld [vmem:[#allocation8 + $0x1a8] sm:$0xff]
    %v4912 = vld [vmem:[#allocation8 + $0x1b0] sm:$0xff]
    %v4913 = vld [vmem:[#allocation8 + $0x1b8] sm:$0xff]
    %v4914 = vld [vmem:[#allocation8 + $0x1c0] sm:$0xff]
    %v4915 = vld [vmem:[#allocation8 + $0x1c8] sm:$0xff]
    %v4916 = vld [vmem:[#allocation8 + $0x1d0] sm:$0xff]
    %v4917 = vld [vmem:[#allocation8 + $0x1d8] sm:$0xff]
    %v4918 = vld [vmem:[#allocation8 + $0x1e0] sm:$0xff]
    %v4919 = vld [vmem:[#allocation8 + $0x1e8] sm:$0xff]
    %v4920 = vld [vmem:[#allocation8 + $0x1f0] sm:$0xff]
    %v4921 = vld [vmem:[#allocation8 + $0x1f8] sm:$0xff]
    %v4922 = vld [vmem:[#allocation8 + $0x200] sm:$0xff]
    %v4923 = vld [vmem:[#allocation8 + $0x208] sm:$0xff]
    %v4924 = vld [vmem:[#allocation8 + $0x210] sm:$0xff]
    %v4925 = vld [vmem:[#allocation8 + $0x218] sm:$0xff]
    %v4926 = vld [vmem:[#allocation8 + $0x220] sm:$0xff]
    %v4927 = vld [vmem:[#allocation8 + $0x228] sm:$0xff]
    %v4928 = vld [vmem:[#allocation8 + $0x230] sm:$0xff]
    %v4929 = vld [vmem:[#allocation8 + $0x238] sm:$0xff]
    %v4930 = vld [vmem:[#allocation8 + $0x240] sm:$0xff]
    %v4931 = vld [vmem:[#allocation8 + $0x248] sm:$0xff]
    %v4932 = vld [vmem:[#allocation8 + $0x250] sm:$0xff]
    %v4933 = vld [vmem:[#allocation8 + $0x258] sm:$0xff]
    %v4934 = vld [vmem:[#allocation8 + $0x260] sm:$0xff]
    %v4935 = vld [vmem:[#allocation8 + $0x268] sm:$0xff]
    %v4936 = vld [vmem:[#allocation8 + $0x270] sm:$0xff]
    %v4937 = vld [vmem:[#allocation8 + $0x278] sm:$0xff]
    %v4938 = vld [vmem:[#allocation8 + $0x280] sm:$0xff]
    %v4939 = vld [vmem:[#allocation8 + $0x288] sm:$0xff]
    %v4940 = vld [vmem:[#allocation8 + $0x290] sm:$0xff]
    %v4941 = vld [vmem:[#allocation8 + $0x298] sm:$0xff]
    %v4942 = vld [vmem:[#allocation8 + $0x2a0] sm:$0xff]
    %v4943 = vld [vmem:[#allocation8 + $0x2a8] sm:$0xff]
    %v4944 = vld [vmem:[#allocation8 + $0x2b0] sm:$0xff]
    %v4945 = vld [vmem:[#allocation8 + $0x2b8] sm:$0xff]
    %v4946 = vld [vmem:[#allocation8 + $0x2c0] sm:$0xff]
    %v4947 = vld [vmem:[#allocation8 + $0x2c8] sm:$0xff]
    %v4948 = vld [vmem:[#allocation8 + $0x2d0] sm:$0xff]
    %v4949 = vld [vmem:[#allocation8 + $0x2d8] sm:$0xff]
    %v4950 = vld [vmem:[#allocation8 + $0x2e0] sm:$0xff]
    %v4951 = vld [vmem:[#allocation8 + $0x2e8] sm:$0xff]
    %v4952 = vld [vmem:[#allocation8 + $0x2f0] sm:$0xff]
    %v4953 = vld [vmem:[#allocation8 + $0x2f8] sm:$0xff]
    %v4954 = vld [vmem:[#allocation8 + $0x300] sm:$0xff]
    %v4955 = vld [vmem:[#allocation8 + $0x308] sm:$0xff]
    %v4956 = vld [vmem:[#allocation8 + $0x310] sm:$0xff]
    %v4957 = vld [vmem:[#allocation8 + $0x318] sm:$0xff]
    %v4958 = vld [vmem:[#allocation8 + $0x320] sm:$0xff]
    %v4959 = vld [vmem:[#allocation8 + $0x328] sm:$0xff]
    %v4960 = vld [vmem:[#allocation8 + $0x330] sm:$0xff]
    %v4961 = vld [vmem:[#allocation8 + $0x338] sm:$0xff]
    %v4962 = vld [vmem:[#allocation8 + $0x340] sm:$0xff]
    %v4963 = vld [vmem:[#allocation8 + $0x348] sm:$0xff]
    %v4964 = vld [vmem:[#allocation8 + $0x350] sm:$0xff]
    %v4965 = vld [vmem:[#allocation8 + $0x358] sm:$0xff]
    %v4966 = vld [vmem:[#allocation8 + $0x360] sm:$0xff]
    %v4967 = vld [vmem:[#allocation8 + $0x368] sm:$0xff]
    %v4968 = vld [vmem:[#allocation8 + $0x370] sm:$0xff]
    %v4969 = vld [vmem:[#allocation8 + $0x378] sm:$0xff]
    %v4970 = vld [vmem:[#allocation8 + $0x380] sm:$0xff]
    %v4971 = vld [vmem:[#allocation8 + $0x388] sm:$0xff]
    %v4972 = vld [vmem:[#allocation8 + $0x390] sm:$0xff]
    %v4973 = vld [vmem:[#allocation8 + $0x398] sm:$0xff]
    %v4974 = vld [vmem:[#allocation8 + $0x3a0] sm:$0xff]
    %v4975 = vld [vmem:[#allocation8 + $0x3a8] sm:$0xff]
    %v4976 = vld [vmem:[#allocation8 + $0x3b0] sm:$0xff]
    %v4977 = vld [vmem:[#allocation8 + $0x3b8] sm:$0xff]
    %v4978 = vld [vmem:[#allocation8 + $0x3c0] sm:$0xff]
    %v4979 = vld [vmem:[#allocation8 + $0x3c8] sm:$0xff]
    %v4980 = vld [vmem:[#allocation8 + $0x3d0] sm:$0xff]
    %v4981 = vld [vmem:[#allocation8 + $0x3d8] sm:$0xff]
    %v4982 = vld [vmem:[#allocation8 + $0x3e0] sm:$0xff]
    %v4983 = vld [vmem:[#allocation8 + $0x3e8] sm:$0xff]
    %v4984 = vld [vmem:[#allocation8 + $0x3f0] sm:$0xff]
    %v4985 = vld [vmem:[#allocation8 + $0x3f8] sm:$0xff]
    %v4986 = vld [vmem:[#allocation8 + $0x400] sm:$0xff]
    %v4987 = vld [vmem:[#allocation8 + $0x408] sm:$0xff]
    %v4988 = vld [vmem:[#allocation8 + $0x410] sm:$0xff]
    %v4989 = vld [vmem:[#allocation8 + $0x418] sm:$0xff]
    %v4990 = vld [vmem:[#allocation8 + $0x420] sm:$0xff]
    %v4991 = vld [vmem:[#allocation8 + $0x428] sm:$0xff]
    %v4992 = vld [vmem:[#allocation8 + $0x430] sm:$0xff]
    %v4993 = vld [vmem:[#allocation8 + $0x438] sm:$0xff]
    %v4994 = vld [vmem:[#allocation8 + $0x440] sm:$0xff]
    %v4995 = vld [vmem:[#allocation8 + $0x448] sm:$0xff]
    %v4996 = vld [vmem:[#allocation8 + $0x450] sm:$0xff]
    %v4997 = vld [vmem:[#allocation8 + $0x458] sm:$0xff]
    %v4998 = vld [vmem:[#allocation8 + $0x460] sm:$0xff]
    %v4999 = vld [vmem:[#allocation8 + $0x468] sm:$0xff]
    %v5000 = vld [vmem:[#allocation8 + $0x470] sm:$0xff]
    %v5001 = vld [vmem:[#allocation8 + $0x478] sm:$0xff]
    %v5002 = vld [vmem:[#allocation8 + $0x480] sm:$0xff]
    %v5003 = vld [vmem:[#allocation8 + $0x488] sm:$0xff]
    %v5004 = vld [vmem:[#allocation8 + $0x490] sm:$0xff]
    %v5005 = vld [vmem:[#allocation8 + $0x498] sm:$0xff]
    %v5006 = vld [vmem:[#allocation8 + $0x4a0] sm:$0xff]
    %v5007 = vld [vmem:[#allocation8 + $0x4a8] sm:$0xff]
    %v5008 = vld [vmem:[#allocation8 + $0x4b0] sm:$0xff]
    %v5009 = vld [vmem:[#allocation8 + $0x4b8] sm:$0xff]
    %v5010 = vld [vmem:[#allocation8 + $0x4c0] sm:$0xff]
    %v5011 = vld [vmem:[#allocation8 + $0x4c8] sm:$0xff]
    %v5012 = vld [vmem:[#allocation8 + $0x4d0] sm:$0xff]
    %v5013 = vld [vmem:[#allocation8 + $0x4d8] sm:$0xff]
    %v5014 = vld [vmem:[#allocation8 + $0x4e0] sm:$0xff]
    %v5015 = vld [vmem:[#allocation8 + $0x4e8] sm:$0xff]
    %v5016 = vld [vmem:[#allocation8 + $0x4f0] sm:$0xff]
    %v5017 = vld [vmem:[#allocation8 + $0x4f8] sm:$0xff]
    %v5018 = vld [vmem:[#allocation8 + $0x500] sm:$0xff]
    %v5019 = vld [vmem:[#allocation8 + $0x508] sm:$0xff]
    %v5020 = vld [vmem:[#allocation8 + $0x510] sm:$0xff]
    %v5021 = vld [vmem:[#allocation8 + $0x518] sm:$0xff]
    %v5022 = vld [vmem:[#allocation8 + $0x520] sm:$0xff]
    %v5023 = vld [vmem:[#allocation8 + $0x528] sm:$0xff]
    %v5024 = vld [vmem:[#allocation8 + $0x530] sm:$0xff]
    %v5025 = vld [vmem:[#allocation8 + $0x538] sm:$0xff]
    %v5026 = vld [vmem:[#allocation8 + $0x540] sm:$0xff]
    %v5027 = vld [vmem:[#allocation8 + $0x548] sm:$0xff]
    %v5028 = vld [vmem:[#allocation8 + $0x550] sm:$0xff]
    %v5029 = vld [vmem:[#allocation8 + $0x558] sm:$0xff]
    %v5030 = vld [vmem:[#allocation8 + $0x560] sm:$0xff]
    %v5031 = vld [vmem:[#allocation8 + $0x568] sm:$0xff]
    %v5032 = vld [vmem:[#allocation8 + $0x570] sm:$0xff]
    %v5033 = vld [vmem:[#allocation8 + $0x578] sm:$0xff]
    %v5034 = vld [vmem:[#allocation8 + $0x580] sm:$0xff]
    %v5035 = vld [vmem:[#allocation8 + $0x588] sm:$0xff]
    %v5036 = vld [vmem:[#allocation8 + $0x590] sm:$0xff]
    %v5037 = vld [vmem:[#allocation8 + $0x598] sm:$0xff]
    %v5038 = vld [vmem:[#allocation8 + $0x5a0] sm:$0xff]
    %v5039 = vld [vmem:[#allocation8 + $0x5a8] sm:$0xff]
    %v5040 = vld [vmem:[#allocation8 + $0x5b0] sm:$0xff]
    %v5041 = vld [vmem:[#allocation8 + $0x5b8] sm:$0xff]
    %v5042 = vld [vmem:[#allocation8 + $0x5c0] sm:$0xff]
    %v5043 = vld [vmem:[#allocation8 + $0x5c8] sm:$0xff]
    %v5044 = vld [vmem:[#allocation8 + $0x5d0] sm:$0xff]
    %v5045 = vld [vmem:[#allocation8 + $0x5d8] sm:$0xff]
    %v5046 = vld [vmem:[#allocation8 + $0x5e0] sm:$0xff]
    %v5047 = vld [vmem:[#allocation8 + $0x5e8] sm:$0xff]
    %v5048 = vld [vmem:[#allocation8 + $0x5f0] sm:$0xff]
    %v5049 = vld [vmem:[#allocation8 + $0x5f8] sm:$0xff]
    %v5050 = vld [vmem:[#allocation8 + $0x600] sm:$0xff]
    %v5051 = vld [vmem:[#allocation8 + $0x608] sm:$0xff]
    %v5052 = vld [vmem:[#allocation8 + $0x610] sm:$0xff]
    %v5053 = vld [vmem:[#allocation8 + $0x618] sm:$0xff]
    %v5054 = vld [vmem:[#allocation8 + $0x620] sm:$0xff]
    %v5055 = vld [vmem:[#allocation8 + $0x628] sm:$0xff]
    %v5056 = vld [vmem:[#allocation8 + $0x630] sm:$0xff]
    %v5057 = vld [vmem:[#allocation8 + $0x638] sm:$0xff]
    %v5058 = vld [vmem:[#allocation8 + $0x640] sm:$0xff]
    %v5059 = vld [vmem:[#allocation8 + $0x648] sm:$0xff]
    %v5060 = vld [vmem:[#allocation8 + $0x650] sm:$0xff]
    %v5061 = vld [vmem:[#allocation8 + $0x658] sm:$0xff]
    %v5062 = vld [vmem:[#allocation8 + $0x660] sm:$0xff]
    %v5063 = vld [vmem:[#allocation8 + $0x668] sm:$0xff]
    %v5064 = vld [vmem:[#allocation8 + $0x670] sm:$0xff]
    %v5065 = vld [vmem:[#allocation8 + $0x678] sm:$0xff]
    %v5066 = vld [vmem:[#allocation8 + $0x680] sm:$0xff]
    %v5067 = vld [vmem:[#allocation8 + $0x688] sm:$0xff]
    %v5068 = vld [vmem:[#allocation8 + $0x690] sm:$0xff]
    %v5069 = vld [vmem:[#allocation8 + $0x698] sm:$0xff]
    %v5070 = vld [vmem:[#allocation8 + $0x6a0] sm:$0xff]
    %v5071 = vld [vmem:[#allocation8 + $0x6a8] sm:$0xff]
    %v5072 = vld [vmem:[#allocation8 + $0x6b0] sm:$0xff]
    %v5073 = vld [vmem:[#allocation8 + $0x6b8] sm:$0xff]
    %v5074 = vld [vmem:[#allocation8 + $0x6c0] sm:$0xff]
    %v5075 = vld [vmem:[#allocation8 + $0x6c8] sm:$0xff]
    %v5076 = vld [vmem:[#allocation8 + $0x6d0] sm:$0xff]
    %v5077 = vld [vmem:[#allocation8 + $0x6d8] sm:$0xff]
    %v5078 = vld [vmem:[#allocation8 + $0x6e0] sm:$0xff]
    %v5079 = vld [vmem:[#allocation8 + $0x6e8] sm:$0xff]
    %v5080 = vld [vmem:[#allocation8 + $0x6f0] sm:$0xff]
    %v5081 = vld [vmem:[#allocation8 + $0x6f8] sm:$0xff]
    %v5082 = vld [vmem:[#allocation8 + $0x700] sm:$0xff]
    %v5083 = vld [vmem:[#allocation8 + $0x708] sm:$0xff]
    %v5084 = vld [vmem:[#allocation8 + $0x710] sm:$0xff]
    %v5085 = vld [vmem:[#allocation8 + $0x718] sm:$0xff]
    %v5086 = vld [vmem:[#allocation8 + $0x720] sm:$0xff]
    %v5087 = vld [vmem:[#allocation8 + $0x728] sm:$0xff]
    %v5088 = vld [vmem:[#allocation8 + $0x730] sm:$0xff]
    %v5089 = vld [vmem:[#allocation8 + $0x738] sm:$0xff]
    %v5090 = vld [vmem:[#allocation8 + $0x740] sm:$0xff]
    %v5091 = vld [vmem:[#allocation8 + $0x748] sm:$0xff]
    %v5092 = vld [vmem:[#allocation8 + $0x750] sm:$0xff]
    %v5093 = vld [vmem:[#allocation8 + $0x758] sm:$0xff]
    %v5094 = vld [vmem:[#allocation8 + $0x760] sm:$0xff]
    %v5095 = vld [vmem:[#allocation8 + $0x768] sm:$0xff]
    %v5096 = vld [vmem:[#allocation8 + $0x770] sm:$0xff]
    %v5097 = vld [vmem:[#allocation8 + $0x778] sm:$0xff]
    %v5098 = vld [vmem:[#allocation8 + $0x780] sm:$0xff]
    %v5099 = vld [vmem:[#allocation8 + $0x788] sm:$0xff]
    %v5100 = vld [vmem:[#allocation8 + $0x790] sm:$0xff]
    %v5101 = vld [vmem:[#allocation8 + $0x798] sm:$0xff]
    %v5102 = vld [vmem:[#allocation8 + $0x7a0] sm:$0xff]
    %v5103 = vld [vmem:[#allocation8 + $0x7a8] sm:$0xff]
    %v5104 = vld [vmem:[#allocation8 + $0x7b0] sm:$0xff]
    %v5105 = vld [vmem:[#allocation8 + $0x7b8] sm:$0xff]
    %v5106 = vld [vmem:[#allocation8 + $0x7c0] sm:$0xff]
    %v5107 = vld [vmem:[#allocation8 + $0x7c8] sm:$0xff]
    %v5108 = vld [vmem:[#allocation8 + $0x7d0] sm:$0xff]
    %v5109 = vld [vmem:[#allocation8 + $0x7d8] sm:$0xff]
    %v5110 = vld [vmem:[#allocation8 + $0x7e0] sm:$0xff]
    %v5111 = vld [vmem:[#allocation8 + $0x7e8] sm:$0xff]
    %v5112 = vld [vmem:[#allocation8 + $0x7f0] sm:$0xff]
    %v5113 = vld [vmem:[#allocation8 + $0x7f8] sm:$0xff]
    %v5114 = vld [vmem:[#allocation8 + $0x800] sm:$0xff]
    %v5115 = vld [vmem:[#allocation8 + $0x808] sm:$0xff]
    %v5116 = vld [vmem:[#allocation8 + $0x810] sm:$0xff]
    %v5117 = vld [vmem:[#allocation8 + $0x818] sm:$0xff]
    %v5118 = vld [vmem:[#allocation8 + $0x820] sm:$0xff]
    %v5119 = vld [vmem:[#allocation8 + $0x828] sm:$0xff]
    %v5120 = vld [vmem:[#allocation8 + $0x830] sm:$0xff]
    %v5121 = vld [vmem:[#allocation8 + $0x838] sm:$0xff]
    %v5122 = vld [vmem:[#allocation8 + $0x840] sm:$0xff]
    %v5123 = vld [vmem:[#allocation8 + $0x848] sm:$0xff]
    %v5124 = vld [vmem:[#allocation8 + $0x850] sm:$0xff]
    %v5125 = vld [vmem:[#allocation8 + $0x858] sm:$0xff]
    %v5126 = vld [vmem:[#allocation8 + $0x860] sm:$0xff]
    %v5127 = vld [vmem:[#allocation8 + $0x868] sm:$0xff]
    %v5128 = vld [vmem:[#allocation8 + $0x870] sm:$0xff]
    %v5129 = vld [vmem:[#allocation8 + $0x878] sm:$0xff]
    %v5130 = vld [vmem:[#allocation8 + $0x880] sm:$0xff]
    %v5131 = vld [vmem:[#allocation8 + $0x888] sm:$0xff]
    %v5132 = vld [vmem:[#allocation8 + $0x890] sm:$0xff]
    %v5133 = vld [vmem:[#allocation8 + $0x898] sm:$0xff]
    %v5134 = vld [vmem:[#allocation8 + $0x8a0] sm:$0xff]
    %v5135 = vld [vmem:[#allocation8 + $0x8a8] sm:$0xff]
    %v5136 = vld [vmem:[#allocation8 + $0x8b0] sm:$0xff]
    %v5137 = vld [vmem:[#allocation8 + $0x8b8] sm:$0xff]
    %v5138 = vld [vmem:[#allocation8 + $0x8c0] sm:$0xff]
    %v5139 = vld [vmem:[#allocation8 + $0x8c8] sm:$0xff]
    %v5140 = vld [vmem:[#allocation8 + $0x8d0] sm:$0xff]
    %v5141 = vld [vmem:[#allocation8 + $0x8d8] sm:$0xff]
    %v5142 = vld [vmem:[#allocation8 + $0x8e0] sm:$0xff]
    %v5143 = vld [vmem:[#allocation8 + $0x8e8] sm:$0xff]
    %v5144 = vld [vmem:[#allocation8 + $0x8f0] sm:$0xff]
    %v5145 = vld [vmem:[#allocation8 + $0x8f8] sm:$0xff]
    %v5146 = vld [vmem:[#allocation8 + $0x900] sm:$0xff]
    %v5147 = vld [vmem:[#allocation8 + $0x908] sm:$0xff]
    %v5148 = vld [vmem:[#allocation8 + $0x910] sm:$0xff]
    %v5149 = vld [vmem:[#allocation8 + $0x918] sm:$0xff]
    %v5150 = vld [vmem:[#allocation8 + $0x920] sm:$0xff]
    %v5151 = vld [vmem:[#allocation8 + $0x928] sm:$0xff]
    %v5152 = vld [vmem:[#allocation8 + $0x930] sm:$0xff]
    %v5153 = vld [vmem:[#allocation8 + $0x938] sm:$0xff]
    %v5154 = vld [vmem:[#allocation8 + $0x940] sm:$0xff]
    %v5155 = vld [vmem:[#allocation8 + $0x948] sm:$0xff]
    %v5156 = vld [vmem:[#allocation8 + $0x950] sm:$0xff]
    %v5157 = vld [vmem:[#allocation8 + $0x958] sm:$0xff]
    %v5158 = vld [vmem:[#allocation8 + $0x960] sm:$0xff]
    %v5159 = vld [vmem:[#allocation8 + $0x968] sm:$0xff]
    %v5160 = vld [vmem:[#allocation8 + $0x970] sm:$0xff]
    %v5161 = vld [vmem:[#allocation8 + $0x978] sm:$0xff]
    %v5162 = vld [vmem:[#allocation8 + $0x980] sm:$0xff]
    %v5163 = vld [vmem:[#allocation8 + $0x988] sm:$0xff]
    %v5164 = vld [vmem:[#allocation8 + $0x990] sm:$0xff]
    %v5165 = vld [vmem:[#allocation8 + $0x998] sm:$0xff]
    %v5166 = vld [vmem:[#allocation8 + $0x9a0] sm:$0xff]
    %v5167 = vld [vmem:[#allocation8 + $0x9a8] sm:$0xff]
    %v5168 = vld [vmem:[#allocation8 + $0x9b0] sm:$0xff]
    %v5169 = vld [vmem:[#allocation8 + $0x9b8] sm:$0xff]
    %v5170 = vld [vmem:[#allocation8 + $0x9c0] sm:$0xff]
    %v5171 = vld [vmem:[#allocation8 + $0x9c8] sm:$0xff]
    %v5172 = vld [vmem:[#allocation8 + $0x9d0] sm:$0xff]
    %v5173 = vld [vmem:[#allocation8 + $0x9d8] sm:$0xff]
    %v5174 = vld [vmem:[#allocation8 + $0x9e0] sm:$0xff]
    %v5175 = vld [vmem:[#allocation8 + $0x9e8] sm:$0xff]
    %v5176 = vld [vmem:[#allocation8 + $0x9f0] sm:$0xff]
    %v5177 = vld [vmem:[#allocation8 + $0x9f8] sm:$0xff]
    %v5178 = vld [vmem:[#allocation8 + $0xa00] sm:$0xff]
    %v5179 = vld [vmem:[#allocation8 + $0xa08] sm:$0xff]
    %v5180 = vld [vmem:[#allocation8 + $0xa10] sm:$0xff]
    %v5181 = vld [vmem:[#allocation8 + $0xa18] sm:$0xff]
    %v5182 = vld [vmem:[#allocation8 + $0xa20] sm:$0xff]
    %v5183 = vld [vmem:[#allocation8 + $0xa28] sm:$0xff]
    %v5184 = vld [vmem:[#allocation8 + $0xa30] sm:$0xff]
    %v5185 = vld [vmem:[#allocation8 + $0xa38] sm:$0xff]
    %v5186 = vld [vmem:[#allocation8 + $0xa40] sm:$0xff]
    %v5187 = vld [vmem:[#allocation8 + $0xa48] sm:$0xff]
    %v5188 = vld [vmem:[#allocation8 + $0xa50] sm:$0xff]
    %v5189 = vld [vmem:[#allocation8 + $0xa58] sm:$0xff]
    %v5190 = vld [vmem:[#allocation8 + $0xa60] sm:$0xff]
    %v5191 = vld [vmem:[#allocation8 + $0xa68] sm:$0xff]
    %v5192 = vld [vmem:[#allocation8 + $0xa70] sm:$0xff]
    %v5193 = vld [vmem:[#allocation8 + $0xa78] sm:$0xff]
    %v5194 = vld [vmem:[#allocation8 + $0xa80] sm:$0xff]
    %v5195 = vld [vmem:[#allocation8 + $0xa88] sm:$0xff]
    %v5196 = vld [vmem:[#allocation8 + $0xa90] sm:$0xff]
    %v5197 = vld [vmem:[#allocation8 + $0xa98] sm:$0xff]
    %v5198 = vld [vmem:[#allocation8 + $0xaa0] sm:$0xff]
    %v5199 = vld [vmem:[#allocation8 + $0xaa8] sm:$0xff]
    %v5200 = vld [vmem:[#allocation8 + $0xab0] sm:$0xff]
    %v5201 = vld [vmem:[#allocation8 + $0xab8] sm:$0xff]
    %v5202 = vld [vmem:[#allocation8 + $0xac0] sm:$0xff]
    %v5203 = vld [vmem:[#allocation8 + $0xac8] sm:$0xff]
    %v5204 = vld [vmem:[#allocation8 + $0xad0] sm:$0xff]
    %v5205 = vld [vmem:[#allocation8 + $0xad8] sm:$0xff]
    %v5206 = vld [vmem:[#allocation8 + $0xae0] sm:$0xff]
    %v5207 = vld [vmem:[#allocation8 + $0xae8] sm:$0xff]
    %v5208 = vld [vmem:[#allocation8 + $0xaf0] sm:$0xff]
    %v5209 = vld [vmem:[#allocation8 + $0xaf8] sm:$0xff]
    %v5210 = vld [vmem:[#allocation8 + $0xb00] sm:$0xff]
    %v5211 = vld [vmem:[#allocation8 + $0xb08] sm:$0xff]
    %v5212 = vld [vmem:[#allocation8 + $0xb10] sm:$0xff]
    %v5213 = vld [vmem:[#allocation8 + $0xb18] sm:$0xff]
    %v5214 = vld [vmem:[#allocation8 + $0xb20] sm:$0xff]
    %v5215 = vld [vmem:[#allocation8 + $0xb28] sm:$0xff]
    %v5216 = vld [vmem:[#allocation8 + $0xb30] sm:$0xff]
    %v5217 = vld [vmem:[#allocation8 + $0xb38] sm:$0xff]
    %v5218 = vld [vmem:[#allocation8 + $0xb40] sm:$0xff]
    %v5219 = vld [vmem:[#allocation8 + $0xb48] sm:$0xff]
    %v5220 = vld [vmem:[#allocation8 + $0xb50] sm:$0xff]
    %v5221 = vld [vmem:[#allocation8 + $0xb58] sm:$0xff]
    %v5222 = vld [vmem:[#allocation8 + $0xb60] sm:$0xff]
    %v5223 = vld [vmem:[#allocation8 + $0xb68] sm:$0xff]
    %v5224 = vld [vmem:[#allocation8 + $0xb70] sm:$0xff]
    %v5225 = vld [vmem:[#allocation8 + $0xb78] sm:$0xff]
    %v5226 = vld [vmem:[#allocation8 + $0xb80] sm:$0xff]
    %v5227 = vld [vmem:[#allocation8 + $0xb88] sm:$0xff]
    %v5228 = vld [vmem:[#allocation8 + $0xb90] sm:$0xff]
    %v5229 = vld [vmem:[#allocation8 + $0xb98] sm:$0xff]
    %v5230 = vld [vmem:[#allocation8 + $0xba0] sm:$0xff]
    %v5231 = vld [vmem:[#allocation8 + $0xba8] sm:$0xff]
    %v5232 = vld [vmem:[#allocation8 + $0xbb0] sm:$0xff]
    %v5233 = vld [vmem:[#allocation8 + $0xbb8] sm:$0xff]
    %v5234 = vld [vmem:[#allocation8 + $0xbc0] sm:$0xff]
    %v5235 = vld [vmem:[#allocation8 + $0xbc8] sm:$0xff]
    %v5236 = vld [vmem:[#allocation8 + $0xbd0] sm:$0xff]
    %v5237 = vld [vmem:[#allocation8 + $0xbd8] sm:$0xff]
    %v5238 = vld [vmem:[#allocation8 + $0xbe0] sm:$0xff]
    %v5239 = vld [vmem:[#allocation8 + $0xbe8] sm:$0xff]
    %v5240 = vld [vmem:[#allocation8 + $0xbf0] sm:$0xff]
    %v5241 = vld [vmem:[#allocation8 + $0xbf8] sm:$0xff]
    %v5242 = vld [vmem:[#allocation8 + $0xc00] sm:$0xff]
    %v5243 = vld [vmem:[#allocation8 + $0xc08] sm:$0xff]
    %v5244 = vld [vmem:[#allocation8 + $0xc10] sm:$0xff]
    %v5245 = vld [vmem:[#allocation8 + $0xc18] sm:$0xff]
    %v5246 = vld [vmem:[#allocation8 + $0xc20] sm:$0xff]
    %v5247 = vld [vmem:[#allocation8 + $0xc28] sm:$0xff]
    %v5248 = vld [vmem:[#allocation8 + $0xc30] sm:$0xff]
    %v5249 = vld [vmem:[#allocation8 + $0xc38] sm:$0xff]
    %v5250 = vld [vmem:[#allocation8 + $0xc40] sm:$0xff]
    %v5251 = vld [vmem:[#allocation8 + $0xc48] sm:$0xff]
    %v5252 = vld [vmem:[#allocation8 + $0xc50] sm:$0xff]
    %v5253 = vld [vmem:[#allocation8 + $0xc58] sm:$0xff]
    %v5254 = vld [vmem:[#allocation8 + $0xc60] sm:$0xff]
    %v5255 = vld [vmem:[#allocation8 + $0xc68] sm:$0xff]
    %v5256 = vld [vmem:[#allocation8 + $0xc70] sm:$0xff]
    %v5257 = vld [vmem:[#allocation8 + $0xc78] sm:$0xff]
    %v5258 = vld [vmem:[#allocation8 + $0xc80] sm:$0xff]
    %v5259 = vld [vmem:[#allocation8 + $0xc88] sm:$0xff]
    %v5260 = vld [vmem:[#allocation8 + $0xc90] sm:$0xff]
    %v5261 = vld [vmem:[#allocation8 + $0xc98] sm:$0xff]
    %v5262 = vld [vmem:[#allocation8 + $0xca0] sm:$0xff]
    %v5263 = vld [vmem:[#allocation8 + $0xca8] sm:$0xff]
    %v5264 = vld [vmem:[#allocation8 + $0xcb0] sm:$0xff]
    %v5265 = vld [vmem:[#allocation8 + $0xcb8] sm:$0xff]
    %v5266 = vld [vmem:[#allocation8 + $0xcc0] sm:$0xff]
    %v5267 = vld [vmem:[#allocation8 + $0xcc8] sm:$0xff]
    %v5268 = vld [vmem:[#allocation8 + $0xcd0] sm:$0xff]
    %v5269 = vld [vmem:[#allocation8 + $0xcd8] sm:$0xff]
    %v5270 = vld [vmem:[#allocation8 + $0xce0] sm:$0xff]
    %v5271 = vld [vmem:[#allocation8 + $0xce8] sm:$0xff]
    %v5272 = vld [vmem:[#allocation8 + $0xcf0] sm:$0xff]
    %v5273 = vld [vmem:[#allocation8 + $0xcf8] sm:$0xff]
    %v5274 = vld [vmem:[#allocation8 + $0xd00] sm:$0xff]
    %v5275 = vld [vmem:[#allocation8 + $0xd08] sm:$0xff]
    %v5276 = vld [vmem:[#allocation8 + $0xd10] sm:$0xff]
    %v5277 = vld [vmem:[#allocation8 + $0xd18] sm:$0xff]
    %v5278 = vld [vmem:[#allocation8 + $0xd20] sm:$0xff]
    %v5279 = vld [vmem:[#allocation8 + $0xd28] sm:$0xff]
    %v5280 = vld [vmem:[#allocation8 + $0xd30] sm:$0xff]
    %v5281 = vld [vmem:[#allocation8 + $0xd38] sm:$0xff]
    %v5282 = vld [vmem:[#allocation8 + $0xd40] sm:$0xff]
    %v5283 = vld [vmem:[#allocation8 + $0xd48] sm:$0xff]
    %v5284 = vld [vmem:[#allocation8 + $0xd50] sm:$0xff]
    %v5285 = vld [vmem:[#allocation8 + $0xd58] sm:$0xff]
    %v5286 = vld [vmem:[#allocation8 + $0xd60] sm:$0xff]
    %v5287 = vld [vmem:[#allocation8 + $0xd68] sm:$0xff]
    %v5288 = vld [vmem:[#allocation8 + $0xd70] sm:$0xff]
    %v5289 = vld [vmem:[#allocation8 + $0xd78] sm:$0xff]
    %v5290 = vld [vmem:[#allocation8 + $0xd80] sm:$0xff]
    %v5291 = vld [vmem:[#allocation8 + $0xd88] sm:$0xff]
    %v5292 = vld [vmem:[#allocation8 + $0xd90] sm:$0xff]
    %v5293 = vld [vmem:[#allocation8 + $0xd98] sm:$0xff]
    %v5294 = vld [vmem:[#allocation8 + $0xda0] sm:$0xff]
    %v5295 = vld [vmem:[#allocation8 + $0xda8] sm:$0xff]
    %v5296 = vld [vmem:[#allocation8 + $0xdb0] sm:$0xff]
    %v5297 = vld [vmem:[#allocation8 + $0xdb8] sm:$0xff]
    %v5298 = vld [vmem:[#allocation8 + $0xdc0] sm:$0xff]
    %v5299 = vld [vmem:[#allocation8 + $0xdc8] sm:$0xff]
    %v5300 = vld [vmem:[#allocation8 + $0xdd0] sm:$0xff]
    %v5301 = vld [vmem:[#allocation8 + $0xdd8] sm:$0xff]
    %v5302 = vld [vmem:[#allocation8 + $0xde0] sm:$0xff]
    %v5303 = vld [vmem:[#allocation8 + $0xde8] sm:$0xff]
    %v5304 = vld [vmem:[#allocation8 + $0xdf0] sm:$0xff]
    %v5305 = vld [vmem:[#allocation8 + $0xdf8] sm:$0xff]
    %v5306 = vld [vmem:[#allocation8 + $0xe00] sm:$0xff]
    %v5307 = vld [vmem:[#allocation8 + $0xe08] sm:$0xff]
    %v5308 = vld [vmem:[#allocation8 + $0xe10] sm:$0xff]
    %v5309 = vld [vmem:[#allocation8 + $0xe18] sm:$0xff]
    %v5310 = vld [vmem:[#allocation8 + $0xe20] sm:$0xff]
    %v5311 = vld [vmem:[#allocation8 + $0xe28] sm:$0xff]
    %v5312 = vld [vmem:[#allocation8 + $0xe30] sm:$0xff]
    %v5313 = vld [vmem:[#allocation8 + $0xe38] sm:$0xff]
    %v5314 = vld [vmem:[#allocation8 + $0xe40] sm:$0xff]
    %v5315 = vld [vmem:[#allocation8 + $0xe48] sm:$0xff]
    %v5316 = vld [vmem:[#allocation8 + $0xe50] sm:$0xff]
    %v5317 = vld [vmem:[#allocation8 + $0xe58] sm:$0xff]
    %v5318 = vld [vmem:[#allocation8 + $0xe60] sm:$0xff]
    %v5319 = vld [vmem:[#allocation8 + $0xe68] sm:$0xff]
    %v5320 = vld [vmem:[#allocation8 + $0xe70] sm:$0xff]
    %v5321 = vld [vmem:[#allocation8 + $0xe78] sm:$0xff]
    %v5322 = vld [vmem:[#allocation8 + $0xe80] sm:$0xff]
    %v5323 = vld [vmem:[#allocation8 + $0xe88] sm:$0xff]
    %v5324 = vld [vmem:[#allocation8 + $0xe90] sm:$0xff]
    %v5325 = vld [vmem:[#allocation8 + $0xe98] sm:$0xff]
    %v5326 = vld [vmem:[#allocation8 + $0xea0] sm:$0xff]
    %v5327 = vld [vmem:[#allocation8 + $0xea8] sm:$0xff]
    %v5328 = vld [vmem:[#allocation8 + $0xeb0] sm:$0xff]
    %v5329 = vld [vmem:[#allocation8 + $0xeb8] sm:$0xff]
    %v5330 = vld [vmem:[#allocation8 + $0xec0] sm:$0xff]
    %v5331 = vld [vmem:[#allocation8 + $0xec8] sm:$0xff]
    %v5332 = vld [vmem:[#allocation8 + $0xed0] sm:$0xff]
    %v5333 = vld [vmem:[#allocation8 + $0xed8] sm:$0xff]
    %v5334 = vld [vmem:[#allocation8 + $0xee0] sm:$0xff]
    %v5335 = vld [vmem:[#allocation8 + $0xee8] sm:$0xff]
    %v5336 = vld [vmem:[#allocation8 + $0xef0] sm:$0xff]
    %v5337 = vld [vmem:[#allocation8 + $0xef8] sm:$0xff]
    %v5338 = vld [vmem:[#allocation8 + $0xf00] sm:$0xff]
    %v5339 = vld [vmem:[#allocation8 + $0xf08] sm:$0xff]
    %v5340 = vld [vmem:[#allocation8 + $0xf10] sm:$0xff]
    %v5341 = vld [vmem:[#allocation8 + $0xf18] sm:$0xff]
    %v5342 = vld [vmem:[#allocation8 + $0xf20] sm:$0xff]
    %v5343 = vld [vmem:[#allocation8 + $0xf28] sm:$0xff]
    %v5344 = vld [vmem:[#allocation8 + $0xf30] sm:$0xff]
    %v5345 = vld [vmem:[#allocation8 + $0xf38] sm:$0xff]
    %v5346 = vld [vmem:[#allocation8 + $0xf40] sm:$0xff]
    %v5347 = vld [vmem:[#allocation8 + $0xf48] sm:$0xff]
    %v5348 = vld [vmem:[#allocation8 + $0xf50] sm:$0xff]
    %v5349 = vld [vmem:[#allocation8 + $0xf58] sm:$0xff]
    %v5350 = vld [vmem:[#allocation8 + $0xf60] sm:$0xff]
    %v5351 = vld [vmem:[#allocation8 + $0xf68] sm:$0xff]
    %v5352 = vld [vmem:[#allocation8 + $0xf70] sm:$0xff]
    %v5353 = vld [vmem:[#allocation8 + $0xf78] sm:$0xff]
    %v5354 = vld [vmem:[#allocation8 + $0xf80] sm:$0xff]
    %v5355 = vld [vmem:[#allocation8 + $0xf88] sm:$0xff]
    %v5356 = vld [vmem:[#allocation8 + $0xf90] sm:$0xff]
    %v5357 = vld [vmem:[#allocation8 + $0xf98] sm:$0xff]
    %v5358 = vld [vmem:[#allocation8 + $0xfa0] sm:$0xff]
    %v5359 = vld [vmem:[#allocation8 + $0xfa8] sm:$0xff]
    %v5360 = vld [vmem:[#allocation8 + $0xfb0] sm:$0xff]
    %v5361 = vld [vmem:[#allocation8 + $0xfb8] sm:$0xff]
    %v5362 = vld [vmem:[#allocation8 + $0xfc0] sm:$0xff]
    %v5363 = vld [vmem:[#allocation8 + $0xfc8] sm:$0xff]
    %v5364 = vld [vmem:[#allocation8 + $0xfd0] sm:$0xff]
    %v5365 = vld [vmem:[#allocation8 + $0xfd8] sm:$0xff]
    %v5366 = vld [vmem:[#allocation8 + $0xfe0] sm:$0xff]
    %v5367 = vld [vmem:[#allocation8 + $0xfe8] sm:$0xff]
    %v5368 = vld [vmem:[#allocation8 + $0xff0] sm:$0xff]
    %v5369 = vld [vmem:[#allocation8 + $0xff8] sm:$0xff]
    %5370 = vmatprep.subr.bf16.mxu0 %v5115
    %5371 = vmatpush1.bf16.msra.mxu0 %v5114
    %5372 = vmatprep.subr.bf16.mxu0 %v5123
    %5373 = vmatpush1.bf16.msra.mxu0 %v5122
    %5374 = vmatprep.subr.bf16.mxu0 %v5131
    %5375 = vmatpush1.bf16.msra.mxu0 %v5130
    %5376 = vmatprep.subr.bf16.mxu0 %v5139
    %5377 = vmatpush1.bf16.msra.mxu0 %v5138
    %5378 = vmatprep.subr.bf16.mxu0 %v5147
    %5379 = vmatpush1.bf16.msra.mxu0 %v5146
    %5380 = vmatprep.subr.bf16.mxu0 %v5155
    %5381 = vmatpush1.bf16.msra.mxu0 %v5154
    %5382 = vmatprep.subr.bf16.mxu0 %v5163
    %5383 = vmatpush1.bf16.msra.mxu0 %v5162
    %5384 = vmatprep.subr.bf16.mxu0 %v5171
    %5385 = vmatpush1.bf16.msra.mxu0 %v5170
    %5386 = vmatprep.subr.bf16.mxu0 %v5179
    %5387 = vmatpush1.bf16.msra.mxu0 %v5178
    %5388 = vmatprep.subr.bf16.mxu0 %v5187
    %5389 = vmatpush1.bf16.msra.mxu0 %v5186
    %5390 = vmatprep.subr.bf16.mxu0 %v5195
    %5391 = vmatpush1.bf16.msra.mxu0 %v5194
    %5392 = vmatprep.subr.bf16.mxu0 %v5203
    %5393 = vmatpush1.bf16.msra.mxu0 %v5202
    %5394 = vmatprep.subr.bf16.mxu0 %v5211
    %5395 = vmatpush1.bf16.msra.mxu0 %v5210
    %5396 = vmatprep.subr.bf16.mxu0 %v5219
    %5397 = vmatpush1.bf16.msra.mxu0 %v5218
    %5398 = vmatprep.subr.bf16.mxu0 %v5227
    %5399 = vmatpush1.bf16.msra.mxu0 %v5226
    %5400 = vmatprep.subr.bf16.mxu0 %v5235
    %5401 = vmatpush1.bf16.msra.mxu0 %v5234
    %5402 = vmatprep.mubr.bf16.mxu0 %v2042
    %5403 = vmatmul.mubr.bf16.gmra.mrb[0].mxu0 %v2041
    %v5404 = vpop.f32.mrb[0].mxu0
    %v5405 = vadd.f32 0.0, %v5404
    %v5406 = vpop.f32.mrb[0].mxu0
    %v5407 = vadd.f32 0.0, %v5406
    %v5408 = vpop.f32.mrb[0].mxu0
    %v5409 = vpop.f32.mrb[0].mxu0
    %5410 = vdwg.mxu0
    %5411 = vmatprep.subr.bf16.mxu0 %v5243
    %5412 = vmatpush1.bf16.msra.mxu0 %v5242
    %5413 = vmatprep.subr.bf16.mxu0 %v5251
    %5414 = vmatpush1.bf16.msra.mxu0 %v5250
    %5415 = vmatprep.subr.bf16.mxu0 %v5259
    %5416 = vmatpush1.bf16.msra.mxu0 %v5258
    %5417 = vmatprep.subr.bf16.mxu0 %v5267
    %5418 = vmatpush1.bf16.msra.mxu0 %v5266
    %5419 = vmatprep.subr.bf16.mxu0 %v5275
    %5420 = vmatpush1.bf16.msra.mxu0 %v5274
    %5421 = vmatprep.subr.bf16.mxu0 %v5283
    %5422 = vmatpush1.bf16.msra.mxu0 %v5282
    %5423 = vmatprep.subr.bf16.mxu0 %v5291
    %5424 = vmatpush1.bf16.msra.mxu0 %v5290
    %5425 = vmatprep.subr.bf16.mxu0 %v5299
    %5426 = vmatpush1.bf16.msra.mxu0 %v5298
    %5427 = vmatprep.subr.bf16.mxu0 %v5307
    %5428 = vmatpush1.bf16.msra.mxu0 %v5306
    %5429 = vmatprep.subr.bf16.mxu0 %v5315
    %5430 = vmatpush1.bf16.msra.mxu0 %v5314
    %5431 = vmatprep.subr.bf16.mxu0 %v5323
    %5432 = vmatpush1.bf16.msra.mxu0 %v5322
    %5433 = vmatprep.subr.bf16.mxu0 %v5331
    %5434 = vmatpush1.bf16.msra.mxu0 %v5330
    %5435 = vmatprep.subr.bf16.mxu0 %v5339
    %5436 = vmatpush1.bf16.msra.mxu0 %v5338
    %5437 = vmatprep.subr.bf16.mxu0 %v5347
    %5438 = vmatpush1.bf16.msra.mxu0 %v5346
    %5439 = vmatprep.subr.bf16.mxu0 %v5355
    %5440 = vmatpush1.bf16.msra.mxu0 %v5354
    %5441 = vmatprep.subr.bf16.mxu0 %v5363
    %5442 = vmatpush1.bf16.msra.mxu0 %v5362
    %5443 = vmatprep.mubr.bf16.mxu0 %v3177
    %5444 = vmatmul.mubr.bf16.gmra.mrb[0].mxu0 %v3176
    %v5445 = vpop.f32.mrb[0].mxu0
    %v5446 = vadd.f32 %v5405, %v5445
    %v5447 = vpop.f32.mrb[0].mxu0
    %v5448 = vadd.f32 %v5407, %v5447
    %v5449 = vpop.f32.mrb[0].mxu0
    %v5450 = vpop.f32.mrb[0].mxu0
    %5451 = vdwg.mxu0
    %5452 = vmatprep.subr.bf16.mxu0 %v5117
    %5453 = vmatpush1.bf16.msra.mxu0 %v5116
    %5454 = vmatprep.subr.bf16.mxu0 %v5125
    %5455 = vmatpush1.bf16.msra.mxu0 %v5124
    %5456 = vmatprep.subr.bf16.mxu0 %v5133
    %5457 = vmatpush1.bf16.msra.mxu0 %v5132
    %5458 = vmatprep.subr.bf16.mxu0 %v5141
    %5459 = vmatpush1.bf16.msra.mxu0 %v5140
    %5460 = vmatprep.subr.bf16.mxu0 %v5149
    %5461 = vmatpush1.bf16.msra.mxu0 %v5148
    %5462 = vmatprep.subr.bf16.mxu0 %v5157
    %5463 = vmatpush1.bf16.msra.mxu0 %v5156
    %5464 = vmatprep.subr.bf16.mxu0 %v5165
    %5465 = vmatpush1.bf16.msra.mxu0 %v5164
    %5466 = vmatprep.subr.bf16.mxu0 %v5173
    %5467 = vmatpush1.bf16.msra.mxu0 %v5172
    %5468 = vmatprep.subr.bf16.mxu0 %v5181
    %5469 = vmatpush1.bf16.msra.mxu0 %v5180
    %5470 = vmatprep.subr.bf16.mxu0 %v5189
    %5471 = vmatpush1.bf16.msra.mxu0 %v5188
    %5472 = vmatprep.subr.bf16.mxu0 %v5197
    %5473 = vmatpush1.bf16.msra.mxu0 %v5196
    %5474 = vmatprep.subr.bf16.mxu0 %v5205
    %5475 = vmatpush1.bf16.msra.mxu0 %v5204
    %5476 = vmatprep.subr.bf16.mxu0 %v5213
    %5477 = vmatpush1.bf16.msra.mxu0 %v5212
    %5478 = vmatprep.subr.bf16.mxu0 %v5221
    %5479 = vmatpush1.bf16.msra.mxu0 %v5220
    %5480 = vmatprep.subr.bf16.mxu0 %v5229
    %5481 = vmatpush1.bf16.msra.mxu0 %v5228
    %5482 = vmatprep.subr.bf16.mxu0 %v5237
    %5483 = vmatpush1.bf16.msra.mxu0 %v5236
    %5484 = vmatprep.mubr.bf16.mxu0 %v2042
    %5485 = vmatmul.mubr.bf16.gmra.mrb[0].mxu0 %v2041
    %v5486 = vpop.f32.mrb[0].mxu0
    %v5487 = vadd.f32 0.0, %v5486
    %v5488 = vpop.f32.mrb[0].mxu0
    %v5489 = vadd.f32 0.0, %v5488
    %v5490 = vpop.f32.mrb[0].mxu0
    %v5491 = vpop.f32.mrb[0].mxu0
    %5492 = vdwg.mxu0
    %5493 = vmatprep.subr.bf16.mxu0 %v5245
    %5494 = vmatpush1.bf16.msra.mxu0 %v5244
    %5495 = vmatprep.subr.bf16.mxu0 %v5253
    %5496 = vmatpush1.bf16.msra.mxu0 %v5252
    %5497 = vmatprep.subr.bf16.mxu0 %v5261
    %5498 = vmatpush1.bf16.msra.mxu0 %v5260
    %5499 = vmatprep.subr.bf16.mxu0 %v5269
    %5500 = vmatpush1.bf16.msra.mxu0 %v5268
    %5501 = vmatprep.subr.bf16.mxu0 %v5277
    %5502 = vmatpush1.bf16.msra.mxu0 %v5276
    %5503 = vmatprep.subr.bf16.mxu0 %v5285
    %5504 = vmatpush1.bf16.msra.mxu0 %v5284
    %5505 = vmatprep.subr.bf16.mxu0 %v5293
    %5506 = vmatpush1.bf16.msra.mxu0 %v5292
    %5507 = vmatprep.subr.bf16.mxu0 %v5301
    %5508 = vmatpush1.bf16.msra.mxu0 %v5300
    %5509 = vmatprep.subr.bf16.mxu0 %v5309
    %5510 = vmatpush1.bf16.msra.mxu0 %v5308
    %5511 = vmatprep.subr.bf16.mxu0 %v5317
    %5512 = vmatpush1.bf16.msra.mxu0 %v5316
    %5513 = vmatprep.subr.bf16.mxu0 %v5325
    %5514 = vmatpush1.bf16.msra.mxu0 %v5324
    %5515 = vmatprep.subr.bf16.mxu0 %v5333
    %5516 = vmatpush1.bf16.msra.mxu0 %v5332
    %5517 = vmatprep.subr.bf16.mxu0 %v5341
    %5518 = vmatpush1.bf16.msra.mxu0 %v5340
    %5519 = vmatprep.subr.bf16.mxu0 %v5349
    %5520 = vmatpush1.bf16.msra.mxu0 %v5348
    %5521 = vmatprep.subr.bf16.mxu0 %v5357
    %5522 = vmatpush1.bf16.msra.mxu0 %v5356
    %5523 = vmatprep.subr.bf16.mxu0 %v5365
    %5524 = vmatpush1.bf16.msra.mxu0 %v5364
    %5525 = vmatprep.mubr.bf16.mxu0 %v3177
    %5526 = vmatmul.mubr.bf16.gmra.mrb[0].mxu0 %v3176
    %v5527 = vpop.f32.mrb[0].mxu0
    %v5528 = vadd.f32 %v5487, %v5527
    %v5529 = vpop.f32.mrb[0].mxu0
    %v5530 = vadd.f32 %v5489, %v5529
    %v5531 = vpop.f32.mrb[0].mxu0
    %v5532 = vpop.f32.mrb[0].mxu0
    %5533 = vdwg.mxu0
    %5534 = vmatprep.subr.bf16.mxu0 %v5119
    %5535 = vmatpush1.bf16.msra.mxu0 %v5118
    %5536 = vmatprep.subr.bf16.mxu0 %v5127
    %5537 = vmatpush1.bf16.msra.mxu0 %v5126
    %5538 = vmatprep.subr.bf16.mxu0 %v5135
    %5539 = vmatpush1.bf16.msra.mxu0 %v5134
    %5540 = vmatprep.subr.bf16.mxu0 %v5143
    %5541 = vmatpush1.bf16.msra.mxu0 %v5142
    %5542 = vmatprep.subr.bf16.mxu0 %v5151
    %5543 = vmatpush1.bf16.msra.mxu0 %v5150
    %5544 = vmatprep.subr.bf16.mxu0 %v5159
    %5545 = vmatpush1.bf16.msra.mxu0 %v5158
    %5546 = vmatprep.subr.bf16.mxu0 %v5167
    %5547 = vmatpush1.bf16.msra.mxu0 %v5166
    %5548 = vmatprep.subr.bf16.mxu0 %v5175
    %5549 = vmatpush1.bf16.msra.mxu0 %v5174
    %5550 = vmatprep.subr.bf16.mxu0 %v5183
    %5551 = vmatpush1.bf16.msra.mxu0 %v5182
    %5552 = vmatprep.subr.bf16.mxu0 %v5191
    %5553 = vmatpush1.bf16.msra.mxu0 %v5190
    %5554 = vmatprep.subr.bf16.mxu0 %v5199
    %5555 = vmatpush1.bf16.msra.mxu0 %v5198
    %5556 = vmatprep.subr.bf16.mxu0 %v5207
    %5557 = vmatpush1.bf16.msra.mxu0 %v5206
    %5558 = vmatprep.subr.bf16.mxu0 %v5215
    %5559 = vmatpush1.bf16.msra.mxu0 %v5214
    %5560 = vmatprep.subr.bf16.mxu0 %v5223
    %5561 = vmatpush1.bf16.msra.mxu0 %v5222
    %5562 = vmatprep.subr.bf16.mxu0 %v5231
    %5563 = vmatpush1.bf16.msra.mxu0 %v5230
    %5564 = vmatprep.subr.bf16.mxu0 %v5239
    %5565 = vmatpush1.bf16.msra.mxu0 %v5238
    %5566 = vmatprep.mubr.bf16.mxu0 %v2042
    %5567 = vmatmul.mubr.bf16.gmra.mrb[0].mxu0 %v2041
    %v5568 = vpop.f32.mrb[0].mxu0
    %v5569 = vadd.f32 0.0, %v5568
    %v5570 = vpop.f32.mrb[0].mxu0
    %v5571 = vadd.f32 0.0, %v5570
    %v5572 = vpop.f32.mrb[0].mxu0
    %v5573 = vpop.f32.mrb[0].mxu0
    %5574 = vdwg.mxu0
    %5575 = vmatprep.subr.bf16.mxu0 %v5247
    %5576 = vmatpush1.bf16.msra.mxu0 %v5246
    %5577 = vmatprep.subr.bf16.mxu0 %v5255
    %5578 = vmatpush1.bf16.msra.mxu0 %v5254
    %5579 = vmatprep.subr.bf16.mxu0 %v5263
    %5580 = vmatpush1.bf16.msra.mxu0 %v5262
    %5581 = vmatprep.subr.bf16.mxu0 %v5271
    %5582 = vmatpush1.bf16.msra.mxu0 %v5270
    %5583 = vmatprep.subr.bf16.mxu0 %v5279
    %5584 = vmatpush1.bf16.msra.mxu0 %v5278
    %5585 = vmatprep.subr.bf16.mxu0 %v5287
    %5586 = vmatpush1.bf16.msra.mxu0 %v5286
    %5587 = vmatprep.subr.bf16.mxu0 %v5295
    %5588 = vmatpush1.bf16.msra.mxu0 %v5294
    %5589 = vmatprep.subr.bf16.mxu0 %v5303
    %5590 = vmatpush1.bf16.msra.mxu0 %v5302
    %5591 = vmatprep.subr.bf16.mxu0 %v5311
    %5592 = vmatpush1.bf16.msra.mxu0 %v5310
    %5593 = vmatprep.subr.bf16.mxu0 %v5319
    %5594 = vmatpush1.bf16.msra.mxu0 %v5318
    %5595 = vmatprep.subr.bf16.mxu0 %v5327
    %5596 = vmatpush1.bf16.msra.mxu0 %v5326
    %5597 = vmatprep.subr.bf16.mxu0 %v5335
    %5598 = vmatpush1.bf16.msra.mxu0 %v5334
    %5599 = vmatprep.subr.bf16.mxu0 %v5343
    %5600 = vmatpush1.bf16.msra.mxu0 %v5342
    %5601 = vmatprep.subr.bf16.mxu0 %v5351
    %5602 = vmatpush1.bf16.msra.mxu0 %v5350
    %5603 = vmatprep.subr.bf16.mxu0 %v5359
    %5604 = vmatpush1.bf16.msra.mxu0 %v5358
    %5605 = vmatprep.subr.bf16.mxu0 %v5367
    %5606 = vmatpush1.bf16.msra.mxu0 %v5366
    %5607 = vmatprep.mubr.bf16.mxu0 %v3177
    %5608 = vmatmul.mubr.bf16.gmra.mrb[0].mxu0 %v3176
    %v5609 = vpop.f32.mrb[0].mxu0
    %v5610 = vadd.f32 %v5569, %v5609
    %v5611 = vpop.f32.mrb[0].mxu0
    %v5612 = vadd.f32 %v5571, %v5611
    %v5613 = vpop.f32.mrb[0].mxu0
    %v5614 = vpop.f32.mrb[0].mxu0
    %5615 = vdwg.mxu0
    %5616 = vmatprep.subr.bf16.mxu0 %v5121
    %5617 = vmatpush1.bf16.msra.mxu0 %v5120
    %5618 = vmatprep.subr.bf16.mxu0 %v5129
    %5619 = vmatpush1.bf16.msra.mxu0 %v5128
    %5620 = vmatprep.subr.bf16.mxu0 %v5137
    %5621 = vmatpush1.bf16.msra.mxu0 %v5136
    %5622 = vmatprep.subr.bf16.mxu0 %v5145
    %5623 = vmatpush1.bf16.msra.mxu0 %v5144
    %5624 = vmatprep.subr.bf16.mxu0 %v5153
    %5625 = vmatpush1.bf16.msra.mxu0 %v5152
    %5626 = vmatprep.subr.bf16.mxu0 %v5161
    %5627 = vmatpush1.bf16.msra.mxu0 %v5160
    %5628 = vmatprep.subr.bf16.mxu0 %v5169
    %5629 = vmatpush1.bf16.msra.mxu0 %v5168
    %5630 = vmatprep.subr.bf16.mxu0 %v5177
    %5631 = vmatpush1.bf16.msra.mxu0 %v5176
    %5632 = vmatprep.subr.bf16.mxu0 %v5185
    %5633 = vmatpush1.bf16.msra.mxu0 %v5184
    %5634 = vmatprep.subr.bf16.mxu0 %v5193
    %5635 = vmatpush1.bf16.msra.mxu0 %v5192
    %5636 = vmatprep.subr.bf16.mxu0 %v5201
    %5637 = vmatpush1.bf16.msra.mxu0 %v5200
    %5638 = vmatprep.subr.bf16.mxu0 %v5209
    %5639 = vmatpush1.bf16.msra.mxu0 %v5208
    %5640 = vmatprep.subr.bf16.mxu0 %v5217
    %5641 = vmatpush1.bf16.msra.mxu0 %v5216
    %5642 = vmatprep.subr.bf16.mxu0 %v5225
    %5643 = vmatpush1.bf16.msra.mxu0 %v5224
    %5644 = vmatprep.subr.bf16.mxu0 %v5233
    %5645 = vmatpush1.bf16.msra.mxu0 %v5232
    %5646 = vmatprep.subr.bf16.mxu0 %v5241
    %5647 = vmatpush1.bf16.msra.mxu0 %v5240
    %5648 = vmatprep.mubr.bf16.mxu0 %v2042
    %5649 = vmatmul.mubr.bf16.gmra.mrb[0].mxu0 %v2041
    %v5650 = vpop.f32.mrb[0].mxu0
    %v5651 = vadd.f32 0.0, %v5650
    %v5652 = vpop.f32.mrb[0].mxu0
    %v5653 = vadd.f32 0.0, %v5652
    %v5654 = vpop.f32.mrb[0].mxu0
    %v5655 = vpop.f32.mrb[0].mxu0
    %5656 = vdwg.mxu0
    %5657 = vmatprep.subr.bf16.mxu0 %v5249
    %5658 = vmatpush1.bf16.msra.mxu0 %v5248
    %5659 = vmatprep.subr.bf16.mxu0 %v5257
    %5660 = vmatpush1.bf16.msra.mxu0 %v5256
    %5661 = vmatprep.subr.bf16.mxu0 %v5265
    %5662 = vmatpush1.bf16.msra.mxu0 %v5264
    %5663 = vmatprep.subr.bf16.mxu0 %v5273
    %5664 = vmatpush1.bf16.msra.mxu0 %v5272
    %5665 = vmatprep.subr.bf16.mxu0 %v5281
    %5666 = vmatpush1.bf16.msra.mxu0 %v5280
    %5667 = vmatprep.subr.bf16.mxu0 %v5289
    %5668 = vmatpush1.bf16.msra.mxu0 %v5288
    %5669 = vmatprep.subr.bf16.mxu0 %v5297
    %5670 = vmatpush1.bf16.msra.mxu0 %v5296
    %5671 = vmatprep.subr.bf16.mxu0 %v5305
    %5672 = vmatpush1.bf16.msra.mxu0 %v5304
    %5673 = vmatprep.subr.bf16.mxu0 %v5313
    %5674 = vmatpush1.bf16.msra.mxu0 %v5312
    %5675 = vmatprep.subr.bf16.mxu0 %v5321
    %5676 = vmatpush1.bf16.msra.mxu0 %v5320
    %5677 = vmatprep.subr.bf16.mxu0 %v5329
    %5678 = vmatpush1.bf16.msra.mxu0 %v5328
    %5679 = vmatprep.subr.bf16.mxu0 %v5337
    %5680 = vmatpush1.bf16.msra.mxu0 %v5336
    %5681 = vmatprep.subr.bf16.mxu0 %v5345
    %5682 = vmatpush1.bf16.msra.mxu0 %v5344
    %5683 = vmatprep.subr.bf16.mxu0 %v5353
    %5684 = vmatpush1.bf16.msra.mxu0 %v5352
    %5685 = vmatprep.subr.bf16.mxu0 %v5361
    %5686 = vmatpush1.bf16.msra.mxu0 %v5360
    %5687 = vmatprep.subr.bf16.mxu0 %v5369
    %5688 = vmatpush1.bf16.msra.mxu0 %v5368
    %5689 = vmatprep.mubr.bf16.mxu0 %v3177
    %5690 = vmatmul.mubr.bf16.gmra.mrb[0].mxu0 %v3176
    %v5691 = vpop.f32.mrb[0].mxu0
    %v5692 = vadd.f32 %v5651, %v5691
    %v5693 = vpop.f32.mrb[0].mxu0
    %v5694 = vadd.f32 %v5653, %v5693
    %v5695 = vpop.f32.mrb[0].mxu0
    %v5696 = vpop.f32.mrb[0].mxu0
    %5697 = vdwg.mxu0
    %5698 = vmatprep.subr.bf16.mxu0 %v4859
    %5699 = vmatpush1.bf16.msra.mxu0 %v4858
    %5700 = vmatprep.subr.bf16.mxu0 %v4867
    %5701 = vmatpush1.bf16.msra.mxu0 %v4866
    %5702 = vmatprep.subr.bf16.mxu0 %v4875
    %5703 = vmatpush1.bf16.msra.mxu0 %v4874
    %5704 = vmatprep.subr.bf16.mxu0 %v4883
    %5705 = vmatpush1.bf16.msra.mxu0 %v4882
    %5706 = vmatprep.subr.bf16.mxu0 %v4891
    %5707 = vmatpush1.bf16.msra.mxu0 %v4890
    %5708 = vmatprep.subr.bf16.mxu0 %v4899
    %5709 = vmatpush1.bf16.msra.mxu0 %v4898
    %5710 = vmatprep.subr.bf16.mxu0 %v4907
    %5711 = vmatpush1.bf16.msra.mxu0 %v4906
    %5712 = vmatprep.subr.bf16.mxu0 %v4915
    %5713 = vmatpush1.bf16.msra.mxu0 %v4914
    %5714 = vmatprep.subr.bf16.mxu0 %v4923
    %5715 = vmatpush1.bf16.msra.mxu0 %v4922
    %5716 = vmatprep.subr.bf16.mxu0 %v4931
    %5717 = vmatpush1.bf16.msra.mxu0 %v4930
    %5718 = vmatprep.subr.bf16.mxu0 %v4939
    %5719 = vmatpush1.bf16.msra.mxu0 %v4938
    %5720 = vmatprep.subr.bf16.mxu0 %v4947
    %5721 = vmatpush1.bf16.msra.mxu0 %v4946
    %5722 = vmatprep.subr.bf16.mxu0 %v4955
    %5723 = vmatpush1.bf16.msra.mxu0 %v4954
    %5724 = vmatprep.subr.bf16.mxu0 %v4963
    %5725 = vmatpush1.bf16.msra.mxu0 %v4962
    %5726 = vmatprep.subr.bf16.mxu0 %v4971
    %5727 = vmatpush1.bf16.msra.mxu0 %v4970
    %5728 = vmatprep.subr.bf16.mxu0 %v4979
    %5729 = vmatpush1.bf16.msra.mxu0 %v4978
    %5730 = vmatprep.mubr.bf16.mxu0 %v3047
    %5731 = vmatmul.mubr.bf16.gmra.mrb[0].mxu0 %v3046
    %v5732 = vpop.f32.mrb[0].mxu0
    %v5733 = vadd.f32 %v5446, %v5732
    %v5734 = vpop.f32.mrb[0].mxu0
    %v5735 = vadd.f32 %v5448, %v5734
    %v5736 = vpop.f32.mrb[0].mxu0
    %v5737 = vpop.f32.mrb[0].mxu0
    %5738 = vdwg.mxu0
    %5739 = vmatprep.subr.bf16.mxu0 %v4987
    %5740 = vmatpush1.bf16.msra.mxu0 %v4986
    %5741 = vmatprep.subr.bf16.mxu0 %v4995
    %5742 = vmatpush1.bf16.msra.mxu0 %v4994
    %5743 = vmatprep.subr.bf16.mxu0 %v5003
    %5744 = vmatpush1.bf16.msra.mxu0 %v5002
    %5745 = vmatprep.subr.bf16.mxu0 %v5011
    %5746 = vmatpush1.bf16.msra.mxu0 %v5010
    %5747 = vmatprep.subr.bf16.mxu0 %v5019
    %5748 = vmatpush1.bf16.msra.mxu0 %v5018
    %5749 = vmatprep.subr.bf16.mxu0 %v5027
    %5750 = vmatpush1.bf16.msra.mxu0 %v5026
    %5751 = vmatprep.subr.bf16.mxu0 %v5035
    %5752 = vmatpush1.bf16.msra.mxu0 %v5034
    %5753 = vmatprep.subr.bf16.mxu0 %v5043
    %5754 = vmatpush1.bf16.msra.mxu0 %v5042
    %5755 = vmatprep.subr.bf16.mxu0 %v5051
    %5756 = vmatpush1.bf16.msra.mxu0 %v5050
    %5757 = vmatprep.subr.bf16.mxu0 %v5059
    %5758 = vmatpush1.bf16.msra.mxu0 %v5058
    %5759 = vmatprep.subr.bf16.mxu0 %v5067
    %5760 = vmatpush1.bf16.msra.mxu0 %v5066
    %5761 = vmatprep.subr.bf16.mxu0 %v5075
    %5762 = vmatpush1.bf16.msra.mxu0 %v5074
    %5763 = vmatprep.subr.bf16.mxu0 %v5083
    %5764 = vmatpush1.bf16.msra.mxu0 %v5082
    %5765 = vmatprep.subr.bf16.mxu0 %v5091
    %5766 = vmatpush1.bf16.msra.mxu0 %v5090
    %5767 = vmatprep.subr.bf16.mxu0 %v5099
    %5768 = vmatpush1.bf16.msra.mxu0 %v5098
    %5769 = vmatprep.subr.bf16.mxu0 %v5107
    %5770 = vmatpush1.bf16.msra.mxu0 %v5106
    %5771 = vmatprep.mubr.bf16.mxu0 %v2140
    %5772 = vmatmul.mubr.bf16.gmra.mrb[0].mxu0 %v2139
    %v5773 = vpop.f32.mrb[0].mxu0
    %v5774 = vadd.f32 %v5733, %v5773
    %v5775 = vpop.f32.mrb[0].mxu0
    %v5776 = vadd.f32 %v5735, %v5775
    %v5777 = vpop.f32.mrb[0].mxu0
    %v5778 = vpop.f32.mrb[0].mxu0
    %5779 = vdwg.mxu0
    %5780 = vmatprep.subr.bf16.mxu0 %v4861
    %5781 = vmatpush1.bf16.msra.mxu0 %v4860
    %5782 = vmatprep.subr.bf16.mxu0 %v4869
    %5783 = vmatpush1.bf16.msra.mxu0 %v4868
    %5784 = vmatprep.subr.bf16.mxu0 %v4877
    %5785 = vmatpush1.bf16.msra.mxu0 %v4876
    %5786 = vmatprep.subr.bf16.mxu0 %v4885
    %5787 = vmatpush1.bf16.msra.mxu0 %v4884
    %5788 = vmatprep.subr.bf16.mxu0 %v4893
    %5789 = vmatpush1.bf16.msra.mxu0 %v4892
    %5790 = vmatprep.subr.bf16.mxu0 %v4901
    %5791 = vmatpush1.bf16.msra.mxu0 %v4900
    %5792 = vmatprep.subr.bf16.mxu0 %v4909
    %5793 = vmatpush1.bf16.msra.mxu0 %v4908
    %5794 = vmatprep.subr.bf16.mxu0 %v4917
    %5795 = vmatpush1.bf16.msra.mxu0 %v4916
    %5796 = vmatprep.subr.bf16.mxu0 %v4925
    %5797 = vmatpush1.bf16.msra.mxu0 %v4924
    %5798 = vmatprep.subr.bf16.mxu0 %v4933
    %5799 = vmatpush1.bf16.msra.mxu0 %v4932
    %5800 = vmatprep.subr.bf16.mxu0 %v4941
    %5801 = vmatpush1.bf16.msra.mxu0 %v4940
    %5802 = vmatprep.subr.bf16.mxu0 %v4949
    %5803 = vmatpush1.bf16.msra.mxu0 %v4948
    %5804 = vmatprep.subr.bf16.mxu0 %v4957
    %5805 = vmatpush1.bf16.msra.mxu0 %v4956
    %5806 = vmatprep.subr.bf16.mxu0 %v4965
    %5807 = vmatpush1.bf16.msra.mxu0 %v4964
    %5808 = vmatprep.subr.bf16.mxu0 %v4973
    %5809 = vmatpush1.bf16.msra.mxu0 %v4972
    %5810 = vmatprep.subr.bf16.mxu0 %v4981
    %5811 = vmatpush1.bf16.msra.mxu0 %v4980
    %5812 = vmatprep.mubr.bf16.mxu0 %v3047
    %5813 = vmatmul.mubr.bf16.gmra.mrb[0].mxu0 %v3046
    %v5814 = vpop.f32.mrb[0].mxu0
    %v5815 = vadd.f32 %v5528, %v5814
    %v5816 = vpop.f32.mrb[0].mxu0
    %v5817 = vadd.f32 %v5530, %v5816
    %v5818 = vpop.f32.mrb[0].mxu0
    %v5819 = vpop.f32.mrb[0].mxu0
    %5820 = vdwg.mxu0
    %5821 = vmatprep.subr.bf16.mxu0 %v4989
    %5822 = vmatpush1.bf16.msra.mxu0 %v4988
    %5823 = vmatprep.subr.bf16.mxu0 %v4997
    %5824 = vmatpush1.bf16.msra.mxu0 %v4996
    %5825 = vmatprep.subr.bf16.mxu0 %v5005
    %5826 = vmatpush1.bf16.msra.mxu0 %v5004
    %5827 = vmatprep.subr.bf16.mxu0 %v5013
    %5828 = vmatpush1.bf16.msra.mxu0 %v5012
    %5829 = vmatprep.subr.bf16.mxu0 %v5021
    %5830 = vmatpush1.bf16.msra.mxu0 %v5020
    %5831 = vmatprep.subr.bf16.mxu0 %v5029
    %5832 = vmatpush1.bf16.msra.mxu0 %v5028
    %5833 = vmatprep.subr.bf16.mxu0 %v5037
    %5834 = vmatpush1.bf16.msra.mxu0 %v5036
    %5835 = vmatprep.subr.bf16.mxu0 %v5045
    %5836 = vmatpush1.bf16.msra.mxu0 %v5044
    %5837 = vmatprep.subr.bf16.mxu0 %v5053
    %5838 = vmatpush1.bf16.msra.mxu0 %v5052
    %5839 = vmatprep.subr.bf16.mxu0 %v5061
    %5840 = vmatpush1.bf16.msra.mxu0 %v5060
    %5841 = vmatprep.subr.bf16.mxu0 %v5069
    %5842 = vmatpush1.bf16.msra.mxu0 %v5068
    %5843 = vmatprep.subr.bf16.mxu0 %v5077
    %5844 = vmatpush1.bf16.msra.mxu0 %v5076
    %5845 = vmatprep.subr.bf16.mxu0 %v5085
    %5846 = vmatpush1.bf16.msra.mxu0 %v5084
    %5847 = vmatprep.subr.bf16.mxu0 %v5093
    %5848 = vmatpush1.bf16.msra.mxu0 %v5092
    %5849 = vmatprep.subr.bf16.mxu0 %v5101
    %5850 = vmatpush1.bf16.msra.mxu0 %v5100
    %5851 = vmatprep.subr.bf16.mxu0 %v5109
    %5852 = vmatpush1.bf16.msra.mxu0 %v5108
    %5853 = vmatprep.mubr.bf16.mxu0 %v2140
    %5854 = vmatmul.mubr.bf16.gmra.mrb[0].mxu0 %v2139
    %v5855 = vpop.f32.mrb[0].mxu0
    %v5856 = vadd.f32 %v5815, %v5855
    %v5857 = vpop.f32.mrb[0].mxu0
    %v5858 = vadd.f32 %v5817, %v5857
    %v5859 = vpop.f32.mrb[0].mxu0
    %v5860 = vpop.f32.mrb[0].mxu0
    %5861 = vdwg.mxu0
    %5862 = vmatprep.subr.bf16.mxu0 %v4863
    %5863 = vmatpush1.bf16.msra.mxu0 %v4862
    %5864 = vmatprep.subr.bf16.mxu0 %v4871
    %5865 = vmatpush1.bf16.msra.mxu0 %v4870
    %5866 = vmatprep.subr.bf16.mxu0 %v4879
    %5867 = vmatpush1.bf16.msra.mxu0 %v4878
    %5868 = vmatprep.subr.bf16.mxu0 %v4887
    %5869 = vmatpush1.bf16.msra.mxu0 %v4886
    %5870 = vmatprep.subr.bf16.mxu0 %v4895
    %5871 = vmatpush1.bf16.msra.mxu0 %v4894
    %5872 = vmatprep.subr.bf16.mxu0 %v4903
    %5873 = vmatpush1.bf16.msra.mxu0 %v4902
    %5874 = vmatprep.subr.bf16.mxu0 %v4911
    %5875 = vmatpush1.bf16.msra.mxu0 %v4910
    %5876 = vmatprep.subr.bf16.mxu0 %v4919
    %5877 = vmatpush1.bf16.msra.mxu0 %v4918
    %5878 = vmatprep.subr.bf16.mxu0 %v4927
    %5879 = vmatpush1.bf16.msra.mxu0 %v4926
    %5880 = vmatprep.subr.bf16.mxu0 %v4935
    %5881 = vmatpush1.bf16.msra.mxu0 %v4934
    %5882 = vmatprep.subr.bf16.mxu0 %v4943
    %5883 = vmatpush1.bf16.msra.mxu0 %v4942
    %5884 = vmatprep.subr.bf16.mxu0 %v4951
    %5885 = vmatpush1.bf16.msra.mxu0 %v4950
    %5886 = vmatprep.subr.bf16.mxu0 %v4959
    %5887 = vmatpush1.bf16.msra.mxu0 %v4958
    %5888 = vmatprep.subr.bf16.mxu0 %v4967
    %5889 = vmatpush1.bf16.msra.mxu0 %v4966
    %5890 = vmatprep.subr.bf16.mxu0 %v4975
    %5891 = vmatpush1.bf16.msra.mxu0 %v4974
    %5892 = vmatprep.subr.bf16.mxu0 %v4983
    %5893 = vmatpush1.bf16.msra.mxu0 %v4982
    %5894 = vmatprep.mubr.bf16.mxu0 %v3047
    %5895 = vmatmul.mubr.bf16.gmra.mrb[0].mxu0 %v3046
    %v5896 = vpop.f32.mrb[0].mxu0
    %v5897 = vadd.f32 %v5610, %v5896
    %v5898 = vpop.f32.mrb[0].mxu0
    %v5899 = vadd.f32 %v5612, %v5898
    %v5900 = vpop.f32.mrb[0].mxu0
    %v5901 = vpop.f32.mrb[0].mxu0
    %5902 = vdwg.mxu0
    %5903 = vmatprep.subr.bf16.mxu0 %v4991
    %5904 = vmatpush1.bf16.msra.mxu0 %v4990
    %5905 = vmatprep.subr.bf16.mxu0 %v4999
    %5906 = vmatpush1.bf16.msra.mxu0 %v4998
    %5907 = vmatprep.subr.bf16.mxu0 %v5007
    %5908 = vmatpush1.bf16.msra.mxu0 %v5006
    %5909 = vmatprep.subr.bf16.mxu0 %v5015
    %5910 = vmatpush1.bf16.msra.mxu0 %v5014
    %5911 = vmatprep.subr.bf16.mxu0 %v5023
    %5912 = vmatpush1.bf16.msra.mxu0 %v5022
    %5913 = vmatprep.subr.bf16.mxu0 %v5031
    %5914 = vmatpush1.bf16.msra.mxu0 %v5030
    %5915 = vmatprep.subr.bf16.mxu0 %v5039
    %5916 = vmatpush1.bf16.msra.mxu0 %v5038
    %5917 = vmatprep.subr.bf16.mxu0 %v5047
    %5918 = vmatpush1.bf16.msra.mxu0 %v5046
    %5919 = vmatprep.subr.bf16.mxu0 %v5055
    %5920 = vmatpush1.bf16.msra.mxu0 %v5054
    %5921 = vmatprep.subr.bf16.mxu0 %v5063
    %5922 = vmatpush1.bf16.msra.mxu0 %v5062
    %5923 = vmatprep.subr.bf16.mxu0 %v5071
    %5924 = vmatpush1.bf16.msra.mxu0 %v5070
    %5925 = vmatprep.subr.bf16.mxu0 %v5079
    %5926 = vmatpush1.bf16.msra.mxu0 %v5078
    %5927 = vmatprep.subr.bf16.mxu0 %v5087
    %5928 = vmatpush1.bf16.msra.mxu0 %v5086
    %5929 = vmatprep.subr.bf16.mxu0 %v5095
    %5930 = vmatpush1.bf16.msra.mxu0 %v5094
    %5931 = vmatprep.subr.bf16.mxu0 %v5103
    %5932 = vmatpush1.bf16.msra.mxu0 %v5102
    %5933 = vmatprep.subr.bf16.mxu0 %v5111
    %5934 = vmatpush1.bf16.msra.mxu0 %v5110
    %5935 = vmatprep.mubr.bf16.mxu0 %v2140
    %5936 = vmatmul.mubr.bf16.gmra.mrb[0].mxu0 %v2139
    %v5937 = vpop.f32.mrb[0].mxu0
    %v5938 = vadd.f32 %v5897, %v5937
    %v5939 = vpop.f32.mrb[0].mxu0
    %v5940 = vadd.f32 %v5899, %v5939
    %v5941 = vpop.f32.mrb[0].mxu0
    %v5942 = vpop.f32.mrb[0].mxu0
    %5943 = vdwg.mxu0
    %5944 = vmatprep.subr.bf16.mxu0 %v4865
    %5945 = vmatpush1.bf16.msra.mxu0 %v4864
    %5946 = vmatprep.subr.bf16.mxu0 %v4873
    %5947 = vmatpush1.bf16.msra.mxu0 %v4872
    %5948 = vmatprep.subr.bf16.mxu0 %v4881
    %5949 = vmatpush1.bf16.msra.mxu0 %v4880
    %5950 = vmatprep.subr.bf16.mxu0 %v4889
    %5951 = vmatpush1.bf16.msra.mxu0 %v4888
    %5952 = vmatprep.subr.bf16.mxu0 %v4897
    %5953 = vmatpush1.bf16.msra.mxu0 %v4896
    %5954 = vmatprep.subr.bf16.mxu0 %v4905
    %5955 = vmatpush1.bf16.msra.mxu0 %v4904
    %5956 = vmatprep.subr.bf16.mxu0 %v4913
    %5957 = vmatpush1.bf16.msra.mxu0 %v4912
    %5958 = vmatprep.subr.bf16.mxu0 %v4921
    %5959 = vmatpush1.bf16.msra.mxu0 %v4920
    %5960 = vmatprep.subr.bf16.mxu0 %v4929
    %5961 = vmatpush1.bf16.msra.mxu0 %v4928
    %5962 = vmatprep.subr.bf16.mxu0 %v4937
    %5963 = vmatpush1.bf16.msra.mxu0 %v4936
    %5964 = vmatprep.subr.bf16.mxu0 %v4945
    %5965 = vmatpush1.bf16.msra.mxu0 %v4944
    %5966 = vmatprep.subr.bf16.mxu0 %v4953
    %5967 = vmatpush1.bf16.msra.mxu0 %v4952
    %5968 = vmatprep.subr.bf16.mxu0 %v4961
    %5969 = vmatpush1.bf16.msra.mxu0 %v4960
    %5970 = vmatprep.subr.bf16.mxu0 %v4969
    %5971 = vmatpush1.bf16.msra.mxu0 %v4968
    %5972 = vmatprep.subr.bf16.mxu0 %v4977
    %5973 = vmatpush1.bf16.msra.mxu0 %v4976
    %5974 = vmatprep.subr.bf16.mxu0 %v4985
    %5975 = vmatpush1.bf16.msra.mxu0 %v4984
    %5976 = vmatprep.mubr.bf16.mxu0 %v3047
    %5977 = vmatmul.mubr.bf16.gmra.mrb[0].mxu0 %v3046
    %v5978 = vpop.f32.mrb[0].mxu0
    %v5979 = vadd.f32 %v5692, %v5978
    %v5980 = vpop.f32.mrb[0].mxu0
    %v5981 = vadd.f32 %v5694, %v5980
    %v5982 = vpop.f32.mrb[0].mxu0
    %v5983 = vpop.f32.mrb[0].mxu0
    %5984 = vdwg.mxu0
    %5985 = vmatprep.subr.bf16.mxu0 %v4993
    %5986 = vmatpush1.bf16.msra.mxu0 %v4992
    %5987 = vmatprep.subr.bf16.mxu0 %v5001
    %5988 = vmatpush1.bf16.msra.mxu0 %v5000
    %5989 = vmatprep.subr.bf16.mxu0 %v5009
    %5990 = vmatpush1.bf16.msra.mxu0 %v5008
    %5991 = vmatprep.subr.bf16.mxu0 %v5017
    %5992 = vmatpush1.bf16.msra.mxu0 %v5016
    %5993 = vmatprep.subr.bf16.mxu0 %v5025
    %5994 = vmatpush1.bf16.msra.mxu0 %v5024
    %5995 = vmatprep.subr.bf16.mxu0 %v5033
    %5996 = vmatpush1.bf16.msra.mxu0 %v5032
    %5997 = vmatprep.subr.bf16.mxu0 %v5041
    %5998 = vmatpush1.bf16.msra.mxu0 %v5040
    %5999 = vmatprep.subr.bf16.mxu0 %v5049
    %6000 = vmatpush1.bf16.msra.mxu0 %v5048
    %6001 = vmatprep.subr.bf16.mxu0 %v5057
    %6002 = vmatpush1.bf16.msra.mxu0 %v5056
    %6003 = vmatprep.subr.bf16.mxu0 %v5065
    %6004 = vmatpush1.bf16.msra.mxu0 %v5064
    %6005 = vmatprep.subr.bf16.mxu0 %v5073
    %6006 = vmatpush1.bf16.msra.mxu0 %v5072
    %6007 = vmatprep.subr.bf16.mxu0 %v5081
    %6008 = vmatpush1.bf16.msra.mxu0 %v5080
    %6009 = vmatprep.subr.bf16.mxu0 %v5089
    %6010 = vmatpush1.bf16.msra.mxu0 %v5088
    %6011 = vmatprep.subr.bf16.mxu0 %v5097
    %6012 = vmatpush1.bf16.msra.mxu0 %v5096
    %6013 = vmatprep.subr.bf16.mxu0 %v5105
    %6014 = vmatpush1.bf16.msra.mxu0 %v5104
    %6015 = vmatprep.subr.bf16.mxu0 %v5113
    %6016 = vmatpush1.bf16.msra.mxu0 %v5112
    %6017 = vmatprep.mubr.bf16.mxu0 %v2140
    %6018 = vmatmul.mubr.bf16.gmra.mrb[0].mxu0 %v2139
    %v6019 = vpop.f32.mrb[0].mxu0
    %v6020 = vadd.f32 %v5979, %v6019
    %v6021 = vpop.f32.mrb[0].mxu0
    %v6022 = vadd.f32 %v5981, %v6021
    %v6023 = vpop.f32.mrb[0].mxu0
    %v6024 = vpop.f32.mrb[0].mxu0
    %6025 = vdwg.mxu0
    %v6026 = vld [vmem:[#allocation8 + $0x1000] sm:$0xff]
    %v6027 = vld [vmem:[#allocation8 + $0x1008] sm:$0xff]
    %v6028 = vld [vmem:[#allocation8 + $0x1010] sm:$0xff]
    %v6029 = vld [vmem:[#allocation8 + $0x1018] sm:$0xff]
    %v6030 = vld [vmem:[#allocation8 + $0x1020] sm:$0xff]
    %v6031 = vld [vmem:[#allocation8 + $0x1028] sm:$0xff]
    %v6032 = vld [vmem:[#allocation8 + $0x1030] sm:$0xff]
    %v6033 = vld [vmem:[#allocation8 + $0x1038] sm:$0xff]
    %v6034 = vld [vmem:[#allocation8 + $0x1040] sm:$0xff]
    %v6035 = vld [vmem:[#allocation8 + $0x1048] sm:$0xff]
    %v6036 = vld [vmem:[#allocation8 + $0x1050] sm:$0xff]
    %v6037 = vld [vmem:[#allocation8 + $0x1058] sm:$0xff]
    %v6038 = vld [vmem:[#allocation8 + $0x1060] sm:$0xff]
    %v6039 = vld [vmem:[#allocation8 + $0x1068] sm:$0xff]
    %v6040 = vld [vmem:[#allocation8 + $0x1070] sm:$0xff]
    %v6041 = vld [vmem:[#allocation8 + $0x1078] sm:$0xff]
    %v6042 = vld [vmem:[#allocation8 + $0x1080] sm:$0xff]
    %v6043 = vld [vmem:[#allocation8 + $0x1088] sm:$0xff]
    %v6044 = vld [vmem:[#allocation8 + $0x1090] sm:$0xff]
    %v6045 = vld [vmem:[#allocation8 + $0x1098] sm:$0xff]
    %v6046 = vld [vmem:[#allocation8 + $0x10a0] sm:$0xff]
    %v6047 = vld [vmem:[#allocation8 + $0x10a8] sm:$0xff]
    %v6048 = vld [vmem:[#allocation8 + $0x10b0] sm:$0xff]
    %v6049 = vld [vmem:[#allocation8 + $0x10b8] sm:$0xff]
    %v6050 = vld [vmem:[#allocation8 + $0x10c0] sm:$0xff]
    %v6051 = vld [vmem:[#allocation8 + $0x10c8] sm:$0xff]
    %v6052 = vld [vmem:[#allocation8 + $0x10d0] sm:$0xff]
    %v6053 = vld [vmem:[#allocation8 + $0x10d8] sm:$0xff]
    %v6054 = vld [vmem:[#allocation8 + $0x10e0] sm:$0xff]
    %v6055 = vld [vmem:[#allocation8 + $0x10e8] sm:$0xff]
    %v6056 = vld [vmem:[#allocation8 + $0x10f0] sm:$0xff]
    %v6057 = vld [vmem:[#allocation8 + $0x10f8] sm:$0xff]
    %v6058 = vld [vmem:[#allocation8 + $0x1100] sm:$0xff]
    %v6059 = vld [vmem:[#allocation8 + $0x1108] sm:$0xff]
    %v6060 = vld [vmem:[#allocation8 + $0x1110] sm:$0xff]
    %v6061 = vld [vmem:[#allocation8 + $0x1118] sm:$0xff]
    %v6062 = vld [vmem:[#allocation8 + $0x1120] sm:$0xff]
    %v6063 = vld [vmem:[#allocation8 + $0x1128] sm:$0xff]
    %v6064 = vld [vmem:[#allocation8 + $0x1130] sm:$0xff]
    %v6065 = vld [vmem:[#allocation8 + $0x1138] sm:$0xff]
    %v6066 = vld [vmem:[#allocation8 + $0x1140] sm:$0xff]
    %v6067 = vld [vmem:[#allocation8 + $0x1148] sm:$0xff]
    %v6068 = vld [vmem:[#allocation8 + $0x1150] sm:$0xff]
    %v6069 = vld [vmem:[#allocation8 + $0x1158] sm:$0xff]
    %v6070 = vld [vmem:[#allocation8 + $0x1160] sm:$0xff]
    %v6071 = vld [vmem:[#allocation8 + $0x1168] sm:$0xff]
    %v6072 = vld [vmem:[#allocation8 + $0x1170] sm:$0xff]
    %v6073 = vld [vmem:[#allocation8 + $0x1178] sm:$0xff]
    %v6074 = vld [vmem:[#allocation8 + $0x1180] sm:$0xff]
    %v6075 = vld [vmem:[#allocation8 + $0x1188] sm:$0xff]
    %v6076 = vld [vmem:[#allocation8 + $0x1190] sm:$0xff]
    %v6077 = vld [vmem:[#allocation8 + $0x1198] sm:$0xff]
    %v6078 = vld [vmem:[#allocation8 + $0x11a0] sm:$0xff]
    %v6079 = vld [vmem:[#allocation8 + $0x11a8] sm:$0xff]
    %v6080 = vld [vmem:[#allocation8 + $0x11b0] sm:$0xff]
    %v6081 = vld [vmem:[#allocation8 + $0x11b8] sm:$0xff]
    %v6082 = vld [vmem:[#allocation8 + $0x11c0] sm:$0xff]
    %v6083 = vld [vmem:[#allocation8 + $0x11c8] sm:$0xff]
    %v6084 = vld [vmem:[#allocation8 + $0x11d0] sm:$0xff]
    %v6085 = vld [vmem:[#allocation8 + $0x11d8] sm:$0xff]
    %v6086 = vld [vmem:[#allocation8 + $0x11e0] sm:$0xff]
    %v6087 = vld [vmem:[#allocation8 + $0x11e8] sm:$0xff]
    %v6088 = vld [vmem:[#allocation8 + $0x11f0] sm:$0xff]
    %v6089 = vld [vmem:[#allocation8 + $0x11f8] sm:$0xff]
    %v6090 = vld [vmem:[#allocation8 + $0x1200] sm:$0xff]
    %v6091 = vld [vmem:[#allocation8 + $0x1208] sm:$0xff]
    %v6092 = vld [vmem:[#allocation8 + $0x1210] sm:$0xff]
    %v6093 = vld [vmem:[#allocation8 + $0x1218] sm:$0xff]
    %v6094 = vld [vmem:[#allocation8 + $0x1220] sm:$0xff]
    %v6095 = vld [vmem:[#allocation8 + $0x1228] sm:$0xff]
    %v6096 = vld [vmem:[#allocation8 + $0x1230] sm:$0xff]
    %v6097 = vld [vmem:[#allocation8 + $0x1238] sm:$0xff]
    %v6098 = vld [vmem:[#allocation8 + $0x1240] sm:$0xff]
    %v6099 = vld [vmem:[#allocation8 + $0x1248] sm:$0xff]
    %v6100 = vld [vmem:[#allocation8 + $0x1250] sm:$0xff]
    %v6101 = vld [vmem:[#allocation8 + $0x1258] sm:$0xff]
    %v6102 = vld [vmem:[#allocation8 + $0x1260] sm:$0xff]
    %v6103 = vld [vmem:[#allocation8 + $0x1268] sm:$0xff]
    %v6104 = vld [vmem:[#allocation8 + $0x1270] sm:$0xff]
    %v6105 = vld [vmem:[#allocation8 + $0x1278] sm:$0xff]
    %v6106 = vld [vmem:[#allocation8 + $0x1280] sm:$0xff]
    %v6107 = vld [vmem:[#allocation8 + $0x1288] sm:$0xff]
    %v6108 = vld [vmem:[#allocation8 + $0x1290] sm:$0xff]
    %v6109 = vld [vmem:[#allocation8 + $0x1298] sm:$0xff]
    %v6110 = vld [vmem:[#allocation8 + $0x12a0] sm:$0xff]
    %v6111 = vld [vmem:[#allocation8 + $0x12a8] sm:$0xff]
    %v6112 = vld [vmem:[#allocation8 + $0x12b0] sm:$0xff]
    %v6113 = vld [vmem:[#allocation8 + $0x12b8] sm:$0xff]
    %v6114 = vld [vmem:[#allocation8 + $0x12c0] sm:$0xff]
    %v6115 = vld [vmem:[#allocation8 + $0x12c8] sm:$0xff]
    %v6116 = vld [vmem:[#allocation8 + $0x12d0] sm:$0xff]
    %v6117 = vld [vmem:[#allocation8 + $0x12d8] sm:$0xff]
    %v6118 = vld [vmem:[#allocation8 + $0x12e0] sm:$0xff]
    %v6119 = vld [vmem:[#allocation8 + $0x12e8] sm:$0xff]
    %v6120 = vld [vmem:[#allocation8 + $0x12f0] sm:$0xff]
    %v6121 = vld [vmem:[#allocation8 + $0x12f8] sm:$0xff]
    %v6122 = vld [vmem:[#allocation8 + $0x1300] sm:$0xff]
    %v6123 = vld [vmem:[#allocation8 + $0x1308] sm:$0xff]
    %v6124 = vld [vmem:[#allocation8 + $0x1310] sm:$0xff]
    %v6125 = vld [vmem:[#allocation8 + $0x1318] sm:$0xff]
    %v6126 = vld [vmem:[#allocation8 + $0x1320] sm:$0xff]
    %v6127 = vld [vmem:[#allocation8 + $0x1328] sm:$0xff]
    %v6128 = vld [vmem:[#allocation8 + $0x1330] sm:$0xff]
    %v6129 = vld [vmem:[#allocation8 + $0x1338] sm:$0xff]
    %v6130 = vld [vmem:[#allocation8 + $0x1340] sm:$0xff]
    %v6131 = vld [vmem:[#allocation8 + $0x1348] sm:$0xff]
    %v6132 = vld [vmem:[#allocation8 + $0x1350] sm:$0xff]
    %v6133 = vld [vmem:[#allocation8 + $0x1358] sm:$0xff]
    %v6134 = vld [vmem:[#allocation8 + $0x1360] sm:$0xff]
    %v6135 = vld [vmem:[#allocation8 + $0x1368] sm:$0xff]
    %v6136 = vld [vmem:[#allocation8 + $0x1370] sm:$0xff]
    %v6137 = vld [vmem:[#allocation8 + $0x1378] sm:$0xff]
    %v6138 = vld [vmem:[#allocation8 + $0x1380] sm:$0xff]
    %v6139 = vld [vmem:[#allocation8 + $0x1388] sm:$0xff]
    %v6140 = vld [vmem:[#allocation8 + $0x1390] sm:$0xff]
    %v6141 = vld [vmem:[#allocation8 + $0x1398] sm:$0xff]
    %v6142 = vld [vmem:[#allocation8 + $0x13a0] sm:$0xff]
    %v6143 = vld [vmem:[#allocation8 + $0x13a8] sm:$0xff]
    %v6144 = vld [vmem:[#allocation8 + $0x13b0] sm:$0xff]
    %v6145 = vld [vmem:[#allocation8 + $0x13b8] sm:$0xff]
    %v6146 = vld [vmem:[#allocation8 + $0x13c0] sm:$0xff]
    %v6147 = vld [vmem:[#allocation8 + $0x13c8] sm:$0xff]
    %v6148 = vld [vmem:[#allocation8 + $0x13d0] sm:$0xff]
    %v6149 = vld [vmem:[#allocation8 + $0x13d8] sm:$0xff]
    %v6150 = vld [vmem:[#allocation8 + $0x13e0] sm:$0xff]
    %v6151 = vld [vmem:[#allocation8 + $0x13e8] sm:$0xff]
    %v6152 = vld [vmem:[#allocation8 + $0x13f0] sm:$0xff]
    %v6153 = vld [vmem:[#allocation8 + $0x13f8] sm:$0xff]
    %v6154 = vld [vmem:[#allocation8 + $0x1400] sm:$0xff]
    %v6155 = vld [vmem:[#allocation8 + $0x1408] sm:$0xff]
    %v6156 = vld [vmem:[#allocation8 + $0x1410] sm:$0xff]
    %v6157 = vld [vmem:[#allocation8 + $0x1418] sm:$0xff]
    %v6158 = vld [vmem:[#allocation8 + $0x1420] sm:$0xff]
    %v6159 = vld [vmem:[#allocation8 + $0x1428] sm:$0xff]
    %v6160 = vld [vmem:[#allocation8 + $0x1430] sm:$0xff]
    %v6161 = vld [vmem:[#allocation8 + $0x1438] sm:$0xff]
    %v6162 = vld [vmem:[#allocation8 + $0x1440] sm:$0xff]
    %v6163 = vld [vmem:[#allocation8 + $0x1448] sm:$0xff]
    %v6164 = vld [vmem:[#allocation8 + $0x1450] sm:$0xff]
    %v6165 = vld [vmem:[#allocation8 + $0x1458] sm:$0xff]
    %v6166 = vld [vmem:[#allocation8 + $0x1460] sm:$0xff]
    %v6167 = vld [vmem:[#allocation8 + $0x1468] sm:$0xff]
    %v6168 = vld [vmem:[#allocation8 + $0x1470] sm:$0xff]
    %v6169 = vld [vmem:[#allocation8 + $0x1478] sm:$0xff]
    %v6170 = vld [vmem:[#allocation8 + $0x1480] sm:$0xff]
    %v6171 = vld [vmem:[#allocation8 + $0x1488] sm:$0xff]
    %v6172 = vld [vmem:[#allocation8 + $0x1490] sm:$0xff]
    %v6173 = vld [vmem:[#allocation8 + $0x1498] sm:$0xff]
    %v6174 = vld [vmem:[#allocation8 + $0x14a0] sm:$0xff]
    %v6175 = vld [vmem:[#allocation8 + $0x14a8] sm:$0xff]
    %v6176 = vld [vmem:[#allocation8 + $0x14b0] sm:$0xff]
    %v6177 = vld [vmem:[#allocation8 + $0x14b8] sm:$0xff]
    %v6178 = vld [vmem:[#allocation8 + $0x14c0] sm:$0xff]
    %v6179 = vld [vmem:[#allocation8 + $0x14c8] sm:$0xff]
    %v6180 = vld [vmem:[#allocation8 + $0x14d0] sm:$0xff]
    %v6181 = vld [vmem:[#allocation8 + $0x14d8] sm:$0xff]
    %v6182 = vld [vmem:[#allocation8 + $0x14e0] sm:$0xff]
    %v6183 = vld [vmem:[#allocation8 + $0x14e8] sm:$0xff]
    %v6184 = vld [vmem:[#allocation8 + $0x14f0] sm:$0xff]
    %v6185 = vld [vmem:[#allocation8 + $0x14f8] sm:$0xff]
    %v6186 = vld [vmem:[#allocation8 + $0x1500] sm:$0xff]
    %v6187 = vld [vmem:[#allocation8 + $0x1508] sm:$0xff]
    %v6188 = vld [vmem:[#allocation8 + $0x1510] sm:$0xff]
    %v6189 = vld [vmem:[#allocation8 + $0x1518] sm:$0xff]
    %v6190 = vld [vmem:[#allocation8 + $0x1520] sm:$0xff]
    %v6191 = vld [vmem:[#allocation8 + $0x1528] sm:$0xff]
    %v6192 = vld [vmem:[#allocation8 + $0x1530] sm:$0xff]
    %v6193 = vld [vmem:[#allocation8 + $0x1538] sm:$0xff]
    %v6194 = vld [vmem:[#allocation8 + $0x1540] sm:$0xff]
    %v6195 = vld [vmem:[#allocation8 + $0x1548] sm:$0xff]
    %v6196 = vld [vmem:[#allocation8 + $0x1550] sm:$0xff]
    %v6197 = vld [vmem:[#allocation8 + $0x1558] sm:$0xff]
    %v6198 = vld [vmem:[#allocation8 + $0x1560] sm:$0xff]
    %v6199 = vld [vmem:[#allocation8 + $0x1568] sm:$0xff]
    %v6200 = vld [vmem:[#allocation8 + $0x1570] sm:$0xff]
    %v6201 = vld [vmem:[#allocation8 + $0x1578] sm:$0xff]
    %v6202 = vld [vmem:[#allocation8 + $0x1580] sm:$0xff]
    %v6203 = vld [vmem:[#allocation8 + $0x1588] sm:$0xff]
    %v6204 = vld [vmem:[#allocation8 + $0x1590] sm:$0xff]
    %v6205 = vld [vmem:[#allocation8 + $0x1598] sm:$0xff]
    %v6206 = vld [vmem:[#allocation8 + $0x15a0] sm:$0xff]
    %v6207 = vld [vmem:[#allocation8 + $0x15a8] sm:$0xff]
    %v6208 = vld [vmem:[#allocation8 + $0x15b0] sm:$0xff]
    %v6209 = vld [vmem:[#allocation8 + $0x15b8] sm:$0xff]
    %v6210 = vld [vmem:[#allocation8 + $0x15c0] sm:$0xff]
    %v6211 = vld [vmem:[#allocation8 + $0x15c8] sm:$0xff]
    %v6212 = vld [vmem:[#allocation8 + $0x15d0] sm:$0xff]
    %v6213 = vld [vmem:[#allocation8 + $0x15d8] sm:$0xff]
    %v6214 = vld [vmem:[#allocation8 + $0x15e0] sm:$0xff]
    %v6215 = vld [vmem:[#allocation8 + $0x15e8] sm:$0xff]
    %v6216 = vld [vmem:[#allocation8 + $0x15f0] sm:$0xff]
    %v6217 = vld [vmem:[#allocation8 + $0x15f8] sm:$0xff]
    %v6218 = vld [vmem:[#allocation8 + $0x1600] sm:$0xff]
    %v6219 = vld [vmem:[#allocation8 + $0x1608] sm:$0xff]
    %v6220 = vld [vmem:[#allocation8 + $0x1610] sm:$0xff]
    %v6221 = vld [vmem:[#allocation8 + $0x1618] sm:$0xff]
    %v6222 = vld [vmem:[#allocation8 + $0x1620] sm:$0xff]
    %v6223 = vld [vmem:[#allocation8 + $0x1628] sm:$0xff]
    %v6224 = vld [vmem:[#allocation8 + $0x1630] sm:$0xff]
    %v6225 = vld [vmem:[#allocation8 + $0x1638] sm:$0xff]
    %v6226 = vld [vmem:[#allocation8 + $0x1640] sm:$0xff]
    %v6227 = vld [vmem:[#allocation8 + $0x1648] sm:$0xff]
    %v6228 = vld [vmem:[#allocation8 + $0x1650] sm:$0xff]
    %v6229 = vld [vmem:[#allocation8 + $0x1658] sm:$0xff]
    %v6230 = vld [vmem:[#allocation8 + $0x1660] sm:$0xff]
    %v6231 = vld [vmem:[#allocation8 + $0x1668] sm:$0xff]
    %v6232 = vld [vmem:[#allocation8 + $0x1670] sm:$0xff]
    %v6233 = vld [vmem:[#allocation8 + $0x1678] sm:$0xff]
    %v6234 = vld [vmem:[#allocation8 + $0x1680] sm:$0xff]
    %v6235 = vld [vmem:[#allocation8 + $0x1688] sm:$0xff]
    %v6236 = vld [vmem:[#allocation8 + $0x1690] sm:$0xff]
    %v6237 = vld [vmem:[#allocation8 + $0x1698] sm:$0xff]
    %v6238 = vld [vmem:[#allocation8 + $0x16a0] sm:$0xff]
    %v6239 = vld [vmem:[#allocation8 + $0x16a8] sm:$0xff]
    %v6240 = vld [vmem:[#allocation8 + $0x16b0] sm:$0xff]
    %v6241 = vld [vmem:[#allocation8 + $0x16b8] sm:$0xff]
    %v6242 = vld [vmem:[#allocation8 + $0x16c0] sm:$0xff]
    %v6243 = vld [vmem:[#allocation8 + $0x16c8] sm:$0xff]
    %v6244 = vld [vmem:[#allocation8 + $0x16d0] sm:$0xff]
    %v6245 = vld [vmem:[#allocation8 + $0x16d8] sm:$0xff]
    %v6246 = vld [vmem:[#allocation8 + $0x16e0] sm:$0xff]
    %v6247 = vld [vmem:[#allocation8 + $0x16e8] sm:$0xff]
    %v6248 = vld [vmem:[#allocation8 + $0x16f0] sm:$0xff]
    %v6249 = vld [vmem:[#allocation8 + $0x16f8] sm:$0xff]
    %v6250 = vld [vmem:[#allocation8 + $0x1700] sm:$0xff]
    %v6251 = vld [vmem:[#allocation8 + $0x1708] sm:$0xff]
    %v6252 = vld [vmem:[#allocation8 + $0x1710] sm:$0xff]
    %v6253 = vld [vmem:[#allocation8 + $0x1718] sm:$0xff]
    %v6254 = vld [vmem:[#allocation8 + $0x1720] sm:$0xff]
    %v6255 = vld [vmem:[#allocation8 + $0x1728] sm:$0xff]
    %v6256 = vld [vmem:[#allocation8 + $0x1730] sm:$0xff]
    %v6257 = vld [vmem:[#allocation8 + $0x1738] sm:$0xff]
    %v6258 = vld [vmem:[#allocation8 + $0x1740] sm:$0xff]
    %v6259 = vld [vmem:[#allocation8 + $0x1748] sm:$0xff]
    %v6260 = vld [vmem:[#allocation8 + $0x1750] sm:$0xff]
    %v6261 = vld [vmem:[#allocation8 + $0x1758] sm:$0xff]
    %v6262 = vld [vmem:[#allocation8 + $0x1760] sm:$0xff]
    %v6263 = vld [vmem:[#allocation8 + $0x1768] sm:$0xff]
    %v6264 = vld [vmem:[#allocation8 + $0x1770] sm:$0xff]
    %v6265 = vld [vmem:[#allocation8 + $0x1778] sm:$0xff]
    %v6266 = vld [vmem:[#allocation8 + $0x1780] sm:$0xff]
    %v6267 = vld [vmem:[#allocation8 + $0x1788] sm:$0xff]
    %v6268 = vld [vmem:[#allocation8 + $0x1790] sm:$0xff]
    %v6269 = vld [vmem:[#allocation8 + $0x1798] sm:$0xff]
    %v6270 = vld [vmem:[#allocation8 + $0x17a0] sm:$0xff]
    %v6271 = vld [vmem:[#allocation8 + $0x17a8] sm:$0xff]
    %v6272 = vld [vmem:[#allocation8 + $0x17b0] sm:$0xff]
    %v6273 = vld [vmem:[#allocation8 + $0x17b8] sm:$0xff]
    %v6274 = vld [vmem:[#allocation8 + $0x17c0] sm:$0xff]
    %v6275 = vld [vmem:[#allocation8 + $0x17c8] sm:$0xff]
    %v6276 = vld [vmem:[#allocation8 + $0x17d0] sm:$0xff]
    %v6277 = vld [vmem:[#allocation8 + $0x17d8] sm:$0xff]
    %v6278 = vld [vmem:[#allocation8 + $0x17e0] sm:$0xff]
    %v6279 = vld [vmem:[#allocation8 + $0x17e8] sm:$0xff]
    %v6280 = vld [vmem:[#allocation8 + $0x17f0] sm:$0xff]
    %v6281 = vld [vmem:[#allocation8 + $0x17f8] sm:$0xff]
    %6282 = vmatprep.subr.bf16.mxu0 %v6027
    %6283 = vmatpush1.bf16.msra.mxu0 %v6026
    %6284 = vmatprep.subr.bf16.mxu0 %v6035
    %6285 = vmatpush1.bf16.msra.mxu0 %v6034
    %6286 = vmatprep.subr.bf16.mxu0 %v6043
    %6287 = vmatpush1.bf16.msra.mxu0 %v6042
    %6288 = vmatprep.subr.bf16.mxu0 %v6051
    %6289 = vmatpush1.bf16.msra.mxu0 %v6050
    %6290 = vmatprep.subr.bf16.mxu0 %v6059
    %6291 = vmatpush1.bf16.msra.mxu0 %v6058
    %6292 = vmatprep.subr.bf16.mxu0 %v6067
    %6293 = vmatpush1.bf16.msra.mxu0 %v6066
    %6294 = vmatprep.subr.bf16.mxu0 %v6075
    %6295 = vmatpush1.bf16.msra.mxu0 %v6074
    %6296 = vmatprep.subr.bf16.mxu0 %v6083
    %6297 = vmatpush1.bf16.msra.mxu0 %v6082
    %6298 = vmatprep.subr.bf16.mxu0 %v6091
    %6299 = vmatpush1.bf16.msra.mxu0 %v6090
    %6300 = vmatprep.subr.bf16.mxu0 %v6099
    %6301 = vmatpush1.bf16.msra.mxu0 %v6098
    %6302 = vmatprep.subr.bf16.mxu0 %v6107
    %6303 = vmatpush1.bf16.msra.mxu0 %v6106
    %6304 = vmatprep.subr.bf16.mxu0 %v6115
    %6305 = vmatpush1.bf16.msra.mxu0 %v6114
    %6306 = vmatprep.subr.bf16.mxu0 %v6123
    %6307 = vmatpush1.bf16.msra.mxu0 %v6122
    %6308 = vmatprep.subr.bf16.mxu0 %v6131
    %6309 = vmatpush1.bf16.msra.mxu0 %v6130
    %6310 = vmatprep.subr.bf16.mxu0 %v6139
    %6311 = vmatpush1.bf16.msra.mxu0 %v6138
    %6312 = vmatprep.subr.bf16.mxu0 %v6147
    %6313 = vmatpush1.bf16.msra.mxu0 %v6146
    %6314 = vmatprep.mubr.bf16.mxu0 %v2528
    %6315 = vmatmul.mubr.bf16.gmra.mrb[0].mxu0 %v2527
    %v6316 = vpop.f32.mrb[0].mxu0
    %v6317 = vadd.f32 0.0, %v6316
    %v6318 = vpop.f32.mrb[0].mxu0
    %v6319 = vadd.f32 0.0, %v6318
    %v6320 = vpop.f32.mrb[0].mxu0
    %v6321 = vpop.f32.mrb[0].mxu0
    %6322 = vdwg.mxu0
    %6323 = vmatprep.subr.bf16.mxu0 %v6155
    %6324 = vmatpush1.bf16.msra.mxu0 %v6154
    %6325 = vmatprep.subr.bf16.mxu0 %v6163
    %6326 = vmatpush1.bf16.msra.mxu0 %v6162
    %6327 = vmatprep.subr.bf16.mxu0 %v6171
    %6328 = vmatpush1.bf16.msra.mxu0 %v6170
    %6329 = vmatprep.subr.bf16.mxu0 %v6179
    %6330 = vmatpush1.bf16.msra.mxu0 %v6178
    %6331 = vmatprep.subr.bf16.mxu0 %v6187
    %6332 = vmatpush1.bf16.msra.mxu0 %v6186
    %6333 = vmatprep.subr.bf16.mxu0 %v6195
    %6334 = vmatpush1.bf16.msra.mxu0 %v6194
    %6335 = vmatprep.subr.bf16.mxu0 %v6203
    %6336 = vmatpush1.bf16.msra.mxu0 %v6202
    %6337 = vmatprep.subr.bf16.mxu0 %v6211
    %6338 = vmatpush1.bf16.msra.mxu0 %v6210
    %6339 = vmatprep.subr.bf16.mxu0 %v6219
    %6340 = vmatpush1.bf16.msra.mxu0 %v6218
    %6341 = vmatprep.subr.bf16.mxu0 %v6227
    %6342 = vmatpush1.bf16.msra.mxu0 %v6226
    %6343 = vmatprep.subr.bf16.mxu0 %v6235
    %6344 = vmatpush1.bf16.msra.mxu0 %v6234
    %6345 = vmatprep.subr.bf16.mxu0 %v6243
    %6346 = vmatpush1.bf16.msra.mxu0 %v6242
    %6347 = vmatprep.subr.bf16.mxu0 %v6251
    %6348 = vmatpush1.bf16.msra.mxu0 %v6250
    %6349 = vmatprep.subr.bf16.mxu0 %v6259
    %6350 = vmatpush1.bf16.msra.mxu0 %v6258
    %6351 = vmatprep.subr.bf16.mxu0 %v6267
    %6352 = vmatpush1.bf16.msra.mxu0 %v6266
    %6353 = vmatprep.subr.bf16.mxu0 %v6275
    %6354 = vmatpush1.bf16.msra.mxu0 %v6274
    %6355 = vmatprep.mubr.bf16.mxu0 %v4337
    %6356 = vmatmul.mubr.bf16.gmra.mrb[0].mxu0 %v4336
    %v6357 = vpop.f32.mrb[0].mxu0
    %v6358 = vadd.f32 %v6317, %v6357
    %v6359 = vpop.f32.mrb[0].mxu0
    %v6360 = vadd.f32 %v6319, %v6359
    %v6361 = vpop.f32.mrb[0].mxu0
    %v6362 = vpop.f32.mrb[0].mxu0
    %6363 = vdwg.mxu0
    %6364 = vmatprep.subr.bf16.mxu0 %v6029
    %6365 = vmatpush1.bf16.msra.mxu0 %v6028
    %6366 = vmatprep.subr.bf16.mxu0 %v6037
    %6367 = vmatpush1.bf16.msra.mxu0 %v6036
    %6368 = vmatprep.subr.bf16.mxu0 %v6045
    %6369 = vmatpush1.bf16.msra.mxu0 %v6044
    %6370 = vmatprep.subr.bf16.mxu0 %v6053
    %6371 = vmatpush1.bf16.msra.mxu0 %v6052
    %6372 = vmatprep.subr.bf16.mxu0 %v6061
    %6373 = vmatpush1.bf16.msra.mxu0 %v6060
    %6374 = vmatprep.subr.bf16.mxu0 %v6069
    %6375 = vmatpush1.bf16.msra.mxu0 %v6068
    %6376 = vmatprep.subr.bf16.mxu0 %v6077
    %6377 = vmatpush1.bf16.msra.mxu0 %v6076
    %6378 = vmatprep.subr.bf16.mxu0 %v6085
    %6379 = vmatpush1.bf16.msra.mxu0 %v6084
    %6380 = vmatprep.subr.bf16.mxu0 %v6093
    %6381 = vmatpush1.bf16.msra.mxu0 %v6092
    %6382 = vmatprep.subr.bf16.mxu0 %v6101
    %6383 = vmatpush1.bf16.msra.mxu0 %v6100
    %6384 = vmatprep.subr.bf16.mxu0 %v6109
    %6385 = vmatpush1.bf16.msra.mxu0 %v6108
    %6386 = vmatprep.subr.bf16.mxu0 %v6117
    %6387 = vmatpush1.bf16.msra.mxu0 %v6116
    %6388 = vmatprep.subr.bf16.mxu0 %v6125
    %6389 = vmatpush1.bf16.msra.mxu0 %v6124
    %6390 = vmatprep.subr.bf16.mxu0 %v6133
    %6391 = vmatpush1.bf16.msra.mxu0 %v6132
    %6392 = vmatprep.subr.bf16.mxu0 %v6141
    %6393 = vmatpush1.bf16.msra.mxu0 %v6140
    %6394 = vmatprep.subr.bf16.mxu0 %v6149
    %6395 = vmatpush1.bf16.msra.mxu0 %v6148
    %6396 = vmatprep.mubr.bf16.mxu0 %v2528
    %6397 = vmatmul.mubr.bf16.gmra.mrb[0].mxu0 %v2527
    %v6398 = vpop.f32.mrb[0].mxu0
    %v6399 = vadd.f32 0.0, %v6398
    %v6400 = vpop.f32.mrb[0].mxu0
    %v6401 = vadd.f32 0.0, %v6400
    %v6402 = vpop.f32.mrb[0].mxu0
    %v6403 = vpop.f32.mrb[0].mxu0
    %6404 = vdwg.mxu0
    %6405 = vmatprep.subr.bf16.mxu0 %v6157
    %6406 = vmatpush1.bf16.msra.mxu0 %v6156
    %6407 = vmatprep.subr.bf16.mxu0 %v6165
    %6408 = vmatpush1.bf16.msra.mxu0 %v6164
    %6409 = vmatprep.subr.bf16.mxu0 %v6173
    %6410 = vmatpush1.bf16.msra.mxu0 %v6172
    %6411 = vmatprep.subr.bf16.mxu0 %v6181
    %6412 = vmatpush1.bf16.msra.mxu0 %v6180
    %6413 = vmatprep.subr.bf16.mxu0 %v6189
    %6414 = vmatpush1.bf16.msra.mxu0 %v6188
    %6415 = vmatprep.subr.bf16.mxu0 %v6197
    %6416 = vmatpush1.bf16.msra.mxu0 %v6196
    %6417 = vmatprep.subr.bf16.mxu0 %v6205
    %6418 = vmatpush1.bf16.msra.mxu0 %v6204
    %6419 = vmatprep.subr.bf16.mxu0 %v6213
    %6420 = vmatpush1.bf16.msra.mxu0 %v6212
    %6421 = vmatprep.subr.bf16.mxu0 %v6221
    %6422 = vmatpush1.bf16.msra.mxu0 %v6220
    %6423 = vmatprep.subr.bf16.mxu0 %v6229
    %6424 = vmatpush1.bf16.msra.mxu0 %v6228
    %6425 = vmatprep.subr.bf16.mxu0 %v6237
    %6426 = vmatpush1.bf16.msra.mxu0 %v6236
    %6427 = vmatprep.subr.bf16.mxu0 %v6245
    %6428 = vmatpush1.bf16.msra.mxu0 %v6244
    %6429 = vmatprep.subr.bf16.mxu0 %v6253
    %6430 = vmatpush1.bf16.msra.mxu0 %v6252
    %6431 = vmatprep.subr.bf16.mxu0 %v6261
    %6432 = vmatpush1.bf16.msra.mxu0 %v6260
    %6433 = vmatprep.subr.bf16.mxu0 %v6269
    %6434 = vmatpush1.bf16.msra.mxu0 %v6268
    %6435 = vmatprep.subr.bf16.mxu0 %v6277
    %6436 = vmatpush1.bf16.msra.mxu0 %v6276
    %6437 = vmatprep.mubr.bf16.mxu0 %v4337
    %6438 = vmatmul.mubr.bf16.gmra.mrb[0].mxu0 %v4336
    %v6439 = vpop.f32.mrb[0].mxu0
    %v6440 = vadd.f32 %v6399, %v6439
    %v6441 = vpop.f32.mrb[0].mxu0
    %v6442 = vadd.f32 %v6401, %v6441
    %v6443 = vpop.f32.mrb[0].mxu0
    %v6444 = vpop.f32.mrb[0].mxu0
    %6445 = vdwg.mxu0
    %6446 = vmatprep.subr.bf16.mxu0 %v6031
    %6447 = vmatpush1.bf16.msra.mxu0 %v6030
    %6448 = vmatprep.subr.bf16.mxu0 %v6039
    %6449 = vmatpush1.bf16.msra.mxu0 %v6038
    %6450 = vmatprep.subr.bf16.mxu0 %v6047
    %6451 = vmatpush1.bf16.msra.mxu0 %v6046
    %6452 = vmatprep.subr.bf16.mxu0 %v6055
    %6453 = vmatpush1.bf16.msra.mxu0 %v6054
    %6454 = vmatprep.subr.bf16.mxu0 %v6063
    %6455 = vmatpush1.bf16.msra.mxu0 %v6062
    %6456 = vmatprep.subr.bf16.mxu0 %v6071
    %6457 = vmatpush1.bf16.msra.mxu0 %v6070
    %6458 = vmatprep.subr.bf16.mxu0 %v6079
    %6459 = vmatpush1.bf16.msra.mxu0 %v6078
    %6460 = vmatprep.subr.bf16.mxu0 %v6087
    %6461 = vmatpush1.bf16.msra.mxu0 %v6086
    %6462 = vmatprep.subr.bf16.mxu0 %v6095
    %6463 = vmatpush1.bf16.msra.mxu0 %v6094
    %6464 = vmatprep.subr.bf16.mxu0 %v6103
    %6465 = vmatpush1.bf16.msra.mxu0 %v6102
    %6466 = vmatprep.subr.bf16.mxu0 %v6111
    %6467 = vmatpush1.bf16.msra.mxu0 %v6110
    %6468 = vmatprep.subr.bf16.mxu0 %v6119
    %6469 = vmatpush1.bf16.msra.mxu0 %v6118
    %6470 = vmatprep.subr.bf16.mxu0 %v6127
    %6471 = vmatpush1.bf16.msra.mxu0 %v6126
    %6472 = vmatprep.subr.bf16.mxu0 %v6135
    %6473 = vmatpush1.bf16.msra.mxu0 %v6134
    %6474 = vmatprep.subr.bf16.mxu0 %v6143
    %6475 = vmatpush1.bf16.msra.mxu0 %v6142
    %6476 = vmatprep.subr.bf16.mxu0 %v6151
    %6477 = vmatpush1.bf16.msra.mxu0 %v6150
    %6478 = vmatprep.mubr.bf16.mxu0 %v2528
    %6479 = vmatmul.mubr.bf16.gmra.mrb[0].mxu0 %v2527
    %v6480 = vpop.f32.mrb[0].mxu0
    %v6481 = vadd.f32 0.0, %v6480
    %v6482 = vpop.f32.mrb[0].mxu0
    %v6483 = vadd.f32 0.0, %v6482
    %v6484 = vpop.f32.mrb[0].mxu0
    %v6485 = vpop.f32.mrb[0].mxu0
    %6486 = vdwg.mxu0
    %6487 = vmatprep.subr.bf16.mxu0 %v6159
    %6488 = vmatpush1.bf16.msra.mxu0 %v6158
    %6489 = vmatprep.subr.bf16.mxu0 %v6167
    %6490 = vmatpush1.bf16.msra.mxu0 %v6166
    %6491 = vmatprep.subr.bf16.mxu0 %v6175
    %6492 = vmatpush1.bf16.msra.mxu0 %v6174
    %6493 = vmatprep.subr.bf16.mxu0 %v6183
    %6494 = vmatpush1.bf16.msra.mxu0 %v6182
    %6495 = vmatprep.subr.bf16.mxu0 %v6191
    %6496 = vmatpush1.bf16.msra.mxu0 %v6190
    %6497 = vmatprep.subr.bf16.mxu0 %v6199
    %6498 = vmatpush1.bf16.msra.mxu0 %v6198
    %6499 = vmatprep.subr.bf16.mxu0 %v6207
    %6500 = vmatpush1.bf16.msra.mxu0 %v6206
    %6501 = vmatprep.subr.bf16.mxu0 %v6215
    %6502 = vmatpush1.bf16.msra.mxu0 %v6214
    %6503 = vmatprep.subr.bf16.mxu0 %v6223
    %6504 = vmatpush1.bf16.msra.mxu0 %v6222
    %6505 = vmatprep.subr.bf16.mxu0 %v6231
    %6506 = vmatpush1.bf16.msra.mxu0 %v6230
    %6507 = vmatprep.subr.bf16.mxu0 %v6239
    %6508 = vmatpush1.bf16.msra.mxu0 %v6238
    %6509 = vmatprep.subr.bf16.mxu0 %v6247
    %6510 = vmatpush1.bf16.msra.mxu0 %v6246
    %6511 = vmatprep.subr.bf16.mxu0 %v6255
    %6512 = vmatpush1.bf16.msra.mxu0 %v6254
    %6513 = vmatprep.subr.bf16.mxu0 %v6263
    %6514 = vmatpush1.bf16.msra.mxu0 %v6262
    %6515 = vmatprep.subr.bf16.mxu0 %v6271
    %6516 = vmatpush1.bf16.msra.mxu0 %v6270
    %6517 = vmatprep.subr.bf16.mxu0 %v6279
    %6518 = vmatpush1.bf16.msra.mxu0 %v6278
    %6519 = vmatprep.mubr.bf16.mxu0 %v4337
    %6520 = vmatmul.mubr.bf16.gmra.mrb[0].mxu0 %v4336
    %v6521 = vpop.f32.mrb[0].mxu0
    %v6522 = vadd.f32 %v6481, %v6521
    %v6523 = vpop.f32.mrb[0].mxu0
    %v6524 = vadd.f32 %v6483, %v6523
    %v6525 = vpop.f32.mrb[0].mxu0
    %v6526 = vpop.f32.mrb[0].mxu0
    %6527 = vdwg.mxu0
    %6528 = vmatprep.subr.bf16.mxu0 %v6033
    %6529 = vmatpush1.bf16.msra.mxu0 %v6032
    %6530 = vmatprep.subr.bf16.mxu0 %v6041
    %6531 = vmatpush1.bf16.msra.mxu0 %v6040
    %6532 = vmatprep.subr.bf16.mxu0 %v6049
    %6533 = vmatpush1.bf16.msra.mxu0 %v6048
    %6534 = vmatprep.subr.bf16.mxu0 %v6057
    %6535 = vmatpush1.bf16.msra.mxu0 %v6056
    %6536 = vmatprep.subr.bf16.mxu0 %v6065
    %6537 = vmatpush1.bf16.msra.mxu0 %v6064
    %6538 = vmatprep.subr.bf16.mxu0 %v6073
    %6539 = vmatpush1.bf16.msra.mxu0 %v6072
    %6540 = vmatprep.subr.bf16.mxu0 %v6081
    %6541 = vmatpush1.bf16.msra.mxu0 %v6080
    %6542 = vmatprep.subr.bf16.mxu0 %v6089
    %6543 = vmatpush1.bf16.msra.mxu0 %v6088
    %6544 = vmatprep.subr.bf16.mxu0 %v6097
    %6545 = vmatpush1.bf16.msra.mxu0 %v6096
    %6546 = vmatprep.subr.bf16.mxu0 %v6105
    %6547 = vmatpush1.bf16.msra.mxu0 %v6104
    %6548 = vmatprep.subr.bf16.mxu0 %v6113
    %6549 = vmatpush1.bf16.msra.mxu0 %v6112
    %6550 = vmatprep.subr.bf16.mxu0 %v6121
    %6551 = vmatpush1.bf16.msra.mxu0 %v6120
    %6552 = vmatprep.subr.bf16.mxu0 %v6129
    %6553 = vmatpush1.bf16.msra.mxu0 %v6128
    %6554 = vmatprep.subr.bf16.mxu0 %v6137
    %6555 = vmatpush1.bf16.msra.mxu0 %v6136
    %6556 = vmatprep.subr.bf16.mxu0 %v6145
    %6557 = vmatpush1.bf16.msra.mxu0 %v6144
    %6558 = vmatprep.subr.bf16.mxu0 %v6153
    %6559 = vmatpush1.bf16.msra.mxu0 %v6152
    %6560 = vmatprep.mubr.bf16.mxu0 %v2528
    %6561 = vmatmul.mubr.bf16.gmra.mrb[0].mxu0 %v2527
    %v6562 = vpop.f32.mrb[0].mxu0
    %v6563 = vadd.f32 0.0, %v6562
    %v6564 = vpop.f32.mrb[0].mxu0
    %v6565 = vadd.f32 0.0, %v6564
    %v6566 = vpop.f32.mrb[0].mxu0
    %v6567 = vpop.f32.mrb[0].mxu0
    %6568 = vdwg.mxu0
    %6569 = vmatprep.subr.bf16.mxu0 %v6161
    %6570 = vmatpush1.bf16.msra.mxu0 %v6160
    %6571 = vmatprep.subr.bf16.mxu0 %v6169
    %6572 = vmatpush1.bf16.msra.mxu0 %v6168
    %6573 = vmatprep.subr.bf16.mxu0 %v6177
    %6574 = vmatpush1.bf16.msra.mxu0 %v6176
    %6575 = vmatprep.subr.bf16.mxu0 %v6185
    %6576 = vmatpush1.bf16.msra.mxu0 %v6184
    %6577 = vmatprep.subr.bf16.mxu0 %v6193
    %6578 = vmatpush1.bf16.msra.mxu0 %v6192
    %6579 = vmatprep.subr.bf16.mxu0 %v6201
    %6580 = vmatpush1.bf16.msra.mxu0 %v6200
    %6581 = vmatprep.subr.bf16.mxu0 %v6209
    %6582 = vmatpush1.bf16.msra.mxu0 %v6208
    %6583 = vmatprep.subr.bf16.mxu0 %v6217
    %6584 = vmatpush1.bf16.msra.mxu0 %v6216
    %6585 = vmatprep.subr.bf16.mxu0 %v6225
    %6586 = vmatpush1.bf16.msra.mxu0 %v6224
    %6587 = vmatprep.subr.bf16.mxu0 %v6233
    %6588 = vmatpush1.bf16.msra.mxu0 %v6232
    %6589 = vmatprep.subr.bf16.mxu0 %v6241
    %6590 = vmatpush1.bf16.msra.mxu0 %v6240
    %6591 = vmatprep.subr.bf16.mxu0 %v6249
    %6592 = vmatpush1.bf16.msra.mxu0 %v6248
    %6593 = vmatprep.subr.bf16.mxu0 %v6257
    %6594 = vmatpush1.bf16.msra.mxu0 %v6256
    %6595 = vmatprep.subr.bf16.mxu0 %v6265
    %6596 = vmatpush1.bf16.msra.mxu0 %v6264
    %6597 = vmatprep.subr.bf16.mxu0 %v6273
    %6598 = vmatpush1.bf16.msra.mxu0 %v6272
    %6599 = vmatprep.subr.bf16.mxu0 %v6281
    %6600 = vmatpush1.bf16.msra.mxu0 %v6280
    %6601 = vmatprep.mubr.bf16.mxu0 %v4337
    %6602 = vmatmul.mubr.bf16.gmra.mrb[0].mxu0 %v4336
    %v6603 = vpop.f32.mrb[0].mxu0
    %v6604 = vadd.f32 %v6563, %v6603
    %v6605 = vpop.f32.mrb[0].mxu0
    %v6606 = vadd.f32 %v6565, %v6605
    %v6607 = vpop.f32.mrb[0].mxu0
    %v6608 = vpop.f32.mrb[0].mxu0
    %6609 = vdwg.mxu0
    %v6610 = vadd.f32 %v5774, %v6358
    %v6611 = vadd.f32 %v5776, %v6360
    %v6612 = vadd.f32 %v5856, %v6440
    %v6613 = vadd.f32 %v5858, %v6442
    %v6614 = vadd.f32 %v5938, %v6522
    %v6615 = vadd.f32 %v5940, %v6524
    %v6616 = vadd.f32 %v6020, %v6604
    %v6617 = vadd.f32 %v6022, %v6606
    %v6618 = vld [vmem:[#allocation21] sm:$0xff]
    %v6620 = vlaneseq
    %v6621 = vshrl.u32 %v6620, 7
    %v6622 = vsub.s32 0, %v6621
    %v6623 = vrot.slane %v6618, %v6622
    %v6624 = vlaneseq
    %v6625 = vshrl.u32 %v6624, 7
    %v6626 = vsub.s32 1, %v6625
    %v6627 = vrot.slane %v6618, %v6626
    %v6628 = vlaneseq
    %v6629 = vshrl.u32 %v6628, 7
    %v6630 = vsub.s32 2, %v6629
    %v6631 = vrot.slane %v6618, %v6630
    %v6632 = vlaneseq
    %v6633 = vshrl.u32 %v6632, 7
    %v6634 = vsub.s32 3, %v6633
    %v6635 = vrot.slane %v6618, %v6634
    %v6636 = vlaneseq
    %v6637 = vshrl.u32 %v6636, 7
    %v6638 = vsub.s32 4, %v6637
    %v6639 = vrot.slane %v6618, %v6638
    %v6640 = vlaneseq
    %v6641 = vshrl.u32 %v6640, 7
    %v6642 = vsub.s32 5, %v6641
    %v6643 = vrot.slane %v6618, %v6642
    %v6644 = vlaneseq
    %v6645 = vshrl.u32 %v6644, 7
    %v6646 = vsub.s32 6, %v6645
    %v6647 = vrot.slane %v6618, %v6646
    %v6648 = vlaneseq
    %v6649 = vshrl.u32 %v6648, 7
    %v6650 = vsub.s32 7, %v6649
    %v6651 = vrot.slane %v6618, %v6650
    %v6660 = vadd.f32 %v6610, %v6623
    %v6661 = vadd.f32 %v6611, %v6627
    %v6662 = vadd.f32 %v6612, %v6631
    %v6663 = vadd.f32 %v6613, %v6635
    %v6664 = vadd.f32 %v6614, %v6639
    %v6665 = vadd.f32 %v6615, %v6643
    %v6666 = vadd.f32 %v6616, %v6647
    %v6667 = vadd.f32 %v6617, %v6651
    %v6668 = vmax.f32 %v6660, 0.0
    %v6669 = vmax.f32 %v6661, 0.0
    %v6670 = vmax.f32 %v6662, 0.0
    %v6671 = vmax.f32 %v6663, 0.0
    %v6672 = vmax.f32 %v6664, 0.0
    %v6673 = vmax.f32 %v6665, 0.0
    %v6674 = vmax.f32 %v6666, 0.0
    %v6675 = vmax.f32 %v6667, 0.0
    %s6676 = smul.u32 %s954, 14
    %s6677 = sshll.u32 %s6676, 4
    %6678 = dma.done %s431, %s6677
    %v6679 = vld [vmem:[#allocation9] sm:$0xff]
    %v6680 = vld [vmem:[#allocation9 + $0x8] sm:$0xff]
    %v6681 = vld [vmem:[#allocation9 + $0x10] sm:$0xff]
    %v6682 = vld [vmem:[#allocation9 + $0x18] sm:$0xff]
    %v6683 = vld [vmem:[#allocation9 + $0x20] sm:$0xff]
    %v6684 = vld [vmem:[#allocation9 + $0x28] sm:$0xff]
    %v6685 = vld [vmem:[#allocation9 + $0x30] sm:$0xff]
    %v6686 = vld [vmem:[#allocation9 + $0x38] sm:$0xff]
    %v6687 = vld [vmem:[#allocation9 + $0x40] sm:$0xff]
    %v6688 = vld [vmem:[#allocation9 + $0x48] sm:$0xff]
    %v6689 = vld [vmem:[#allocation9 + $0x50] sm:$0xff]
    %v6690 = vld [vmem:[#allocation9 + $0x58] sm:$0xff]
    %v6691 = vld [vmem:[#allocation9 + $0x60] sm:$0xff]
    %v6692 = vld [vmem:[#allocation9 + $0x68] sm:$0xff]
    %v6693 = vld [vmem:[#allocation9 + $0x70] sm:$0xff]
    %v6694 = vld [vmem:[#allocation9 + $0x78] sm:$0xff]
    %v6695 = vld [vmem:[#allocation9 + $0x80] sm:$0xff]
    %v6696 = vld [vmem:[#allocation9 + $0x88] sm:$0xff]
    %v6697 = vld [vmem:[#allocation9 + $0x90] sm:$0xff]
    %v6698 = vld [vmem:[#allocation9 + $0x98] sm:$0xff]
    %v6699 = vld [vmem:[#allocation9 + $0xa0] sm:$0xff]
    %v6700 = vld [vmem:[#allocation9 + $0xa8] sm:$0xff]
    %v6701 = vld [vmem:[#allocation9 + $0xb0] sm:$0xff]
    %v6702 = vld [vmem:[#allocation9 + $0xb8] sm:$0xff]
    %v6703 = vld [vmem:[#allocation9 + $0xc0] sm:$0xff]
    %v6704 = vld [vmem:[#allocation9 + $0xc8] sm:$0xff]
    %v6705 = vld [vmem:[#allocation9 + $0xd0] sm:$0xff]
    %v6706 = vld [vmem:[#allocation9 + $0xd8] sm:$0xff]
    %v6707 = vld [vmem:[#allocation9 + $0xe0] sm:$0xff]
    %v6708 = vld [vmem:[#allocation9 + $0xe8] sm:$0xff]
    %v6709 = vld [vmem:[#allocation9 + $0xf0] sm:$0xff]
    %v6710 = vld [vmem:[#allocation9 + $0xf8] sm:$0xff]
    %v6711 = vld [vmem:[#allocation9 + $0x100] sm:$0xff]
    %v6712 = vld [vmem:[#allocation9 + $0x108] sm:$0xff]
    %v6713 = vld [vmem:[#allocation9 + $0x110] sm:$0xff]
    %v6714 = vld [vmem:[#allocation9 + $0x118] sm:$0xff]
    %v6715 = vld [vmem:[#allocation9 + $0x120] sm:$0xff]
    %v6716 = vld [vmem:[#allocation9 + $0x128] sm:$0xff]
    %v6717 = vld [vmem:[#allocation9 + $0x130] sm:$0xff]
    %v6718 = vld [vmem:[#allocation9 + $0x138] sm:$0xff]
    %v6719 = vld [vmem:[#allocation9 + $0x140] sm:$0xff]
    %v6720 = vld [vmem:[#allocation9 + $0x148] sm:$0xff]
    %v6721 = vld [vmem:[#allocation9 + $0x150] sm:$0xff]
    %v6722 = vld [vmem:[#allocation9 + $0x158] sm:$0xff]
    %v6723 = vld [vmem:[#allocation9 + $0x160] sm:$0xff]
    %v6724 = vld [vmem:[#allocation9 + $0x168] sm:$0xff]
    %v6725 = vld [vmem:[#allocation9 + $0x170] sm:$0xff]
    %v6726 = vld [vmem:[#allocation9 + $0x178] sm:$0xff]
    %v6727 = vld [vmem:[#allocation9 + $0x180] sm:$0xff]
    %v6728 = vld [vmem:[#allocation9 + $0x188] sm:$0xff]
    %v6729 = vld [vmem:[#allocation9 + $0x190] sm:$0xff]
    %v6730 = vld [vmem:[#allocation9 + $0x198] sm:$0xff]
    %v6731 = vld [vmem:[#allocation9 + $0x1a0] sm:$0xff]
    %v6732 = vld [vmem:[#allocation9 + $0x1a8] sm:$0xff]
    %v6733 = vld [vmem:[#allocation9 + $0x1b0] sm:$0xff]
    %v6734 = vld [vmem:[#allocation9 + $0x1b8] sm:$0xff]
    %v6735 = vld [vmem:[#allocation9 + $0x1c0] sm:$0xff]
    %v6736 = vld [vmem:[#allocation9 + $0x1c8] sm:$0xff]
    %v6737 = vld [vmem:[#allocation9 + $0x1d0] sm:$0xff]
    %v6738 = vld [vmem:[#allocation9 + $0x1d8] sm:$0xff]
    %v6739 = vld [vmem:[#allocation9 + $0x1e0] sm:$0xff]
    %v6740 = vld [vmem:[#allocation9 + $0x1e8] sm:$0xff]
    %v6741 = vld [vmem:[#allocation9 + $0x1f0] sm:$0xff]
    %v6742 = vld [vmem:[#allocation9 + $0x1f8] sm:$0xff]
    %v6743 = vld [vmem:[#allocation9 + $0x200] sm:$0xff]
    %v6744 = vld [vmem:[#allocation9 + $0x208] sm:$0xff]
    %v6745 = vld [vmem:[#allocation9 + $0x210] sm:$0xff]
    %v6746 = vld [vmem:[#allocation9 + $0x218] sm:$0xff]
    %v6747 = vld [vmem:[#allocation9 + $0x220] sm:$0xff]
    %v6748 = vld [vmem:[#allocation9 + $0x228] sm:$0xff]
    %v6749 = vld [vmem:[#allocation9 + $0x230] sm:$0xff]
    %v6750 = vld [vmem:[#allocation9 + $0x238] sm:$0xff]
    %v6751 = vld [vmem:[#allocation9 + $0x240] sm:$0xff]
    %v6752 = vld [vmem:[#allocation9 + $0x248] sm:$0xff]
    %v6753 = vld [vmem:[#allocation9 + $0x250] sm:$0xff]
    %v6754 = vld [vmem:[#allocation9 + $0x258] sm:$0xff]
    %v6755 = vld [vmem:[#allocation9 + $0x260] sm:$0xff]
    %v6756 = vld [vmem:[#allocation9 + $0x268] sm:$0xff]
    %v6757 = vld [vmem:[#allocation9 + $0x270] sm:$0xff]
    %v6758 = vld [vmem:[#allocation9 + $0x278] sm:$0xff]
    %v6759 = vld [vmem:[#allocation9 + $0x280] sm:$0xff]
    %v6760 = vld [vmem:[#allocation9 + $0x288] sm:$0xff]
    %v6761 = vld [vmem:[#allocation9 + $0x290] sm:$0xff]
    %v6762 = vld [vmem:[#allocation9 + $0x298] sm:$0xff]
    %v6763 = vld [vmem:[#allocation9 + $0x2a0] sm:$0xff]
    %v6764 = vld [vmem:[#allocation9 + $0x2a8] sm:$0xff]
    %v6765 = vld [vmem:[#allocation9 + $0x2b0] sm:$0xff]
    %v6766 = vld [vmem:[#allocation9 + $0x2b8] sm:$0xff]
    %v6767 = vld [vmem:[#allocation9 + $0x2c0] sm:$0xff]
    %v6768 = vld [vmem:[#allocation9 + $0x2c8] sm:$0xff]
    %v6769 = vld [vmem:[#allocation9 + $0x2d0] sm:$0xff]
    %v6770 = vld [vmem:[#allocation9 + $0x2d8] sm:$0xff]
    %v6771 = vld [vmem:[#allocation9 + $0x2e0] sm:$0xff]
    %v6772 = vld [vmem:[#allocation9 + $0x2e8] sm:$0xff]
    %v6773 = vld [vmem:[#allocation9 + $0x2f0] sm:$0xff]
    %v6774 = vld [vmem:[#allocation9 + $0x2f8] sm:$0xff]
    %v6775 = vld [vmem:[#allocation9 + $0x300] sm:$0xff]
    %v6776 = vld [vmem:[#allocation9 + $0x308] sm:$0xff]
    %v6777 = vld [vmem:[#allocation9 + $0x310] sm:$0xff]
    %v6778 = vld [vmem:[#allocation9 + $0x318] sm:$0xff]
    %v6779 = vld [vmem:[#allocation9 + $0x320] sm:$0xff]
    %v6780 = vld [vmem:[#allocation9 + $0x328] sm:$0xff]
    %v6781 = vld [vmem:[#allocation9 + $0x330] sm:$0xff]
    %v6782 = vld [vmem:[#allocation9 + $0x338] sm:$0xff]
    %v6783 = vld [vmem:[#allocation9 + $0x340] sm:$0xff]
    %v6784 = vld [vmem:[#allocation9 + $0x348] sm:$0xff]
    %v6785 = vld [vmem:[#allocation9 + $0x350] sm:$0xff]
    %v6786 = vld [vmem:[#allocation9 + $0x358] sm:$0xff]
    %v6787 = vld [vmem:[#allocation9 + $0x360] sm:$0xff]
    %v6788 = vld [vmem:[#allocation9 + $0x368] sm:$0xff]
    %v6789 = vld [vmem:[#allocation9 + $0x370] sm:$0xff]
    %v6790 = vld [vmem:[#allocation9 + $0x378] sm:$0xff]
    %v6791 = vld [vmem:[#allocation9 + $0x380] sm:$0xff]
    %v6792 = vld [vmem:[#allocation9 + $0x388] sm:$0xff]
    %v6793 = vld [vmem:[#allocation9 + $0x390] sm:$0xff]
    %v6794 = vld [vmem:[#allocation9 + $0x398] sm:$0xff]
    %v6795 = vld [vmem:[#allocation9 + $0x3a0] sm:$0xff]
    %v6796 = vld [vmem:[#allocation9 + $0x3a8] sm:$0xff]
    %v6797 = vld [vmem:[#allocation9 + $0x3b0] sm:$0xff]
    %v6798 = vld [vmem:[#allocation9 + $0x3b8] sm:$0xff]
    %v6799 = vld [vmem:[#allocation9 + $0x3c0] sm:$0xff]
    %v6800 = vld [vmem:[#allocation9 + $0x3c8] sm:$0xff]
    %v6801 = vld [vmem:[#allocation9 + $0x3d0] sm:$0xff]
    %v6802 = vld [vmem:[#allocation9 + $0x3d8] sm:$0xff]
    %v6803 = vld [vmem:[#allocation9 + $0x3e0] sm:$0xff]
    %v6804 = vld [vmem:[#allocation9 + $0x3e8] sm:$0xff]
    %v6805 = vld [vmem:[#allocation9 + $0x3f0] sm:$0xff]
    %v6806 = vld [vmem:[#allocation9 + $0x3f8] sm:$0xff]
    %v6807 = vld [vmem:[#allocation9 + $0x400] sm:$0xff]
    %v6808 = vld [vmem:[#allocation9 + $0x408] sm:$0xff]
    %v6809 = vld [vmem:[#allocation9 + $0x410] sm:$0xff]
    %v6810 = vld [vmem:[#allocation9 + $0x418] sm:$0xff]
    %v6811 = vld [vmem:[#allocation9 + $0x420] sm:$0xff]
    %v6812 = vld [vmem:[#allocation9 + $0x428] sm:$0xff]
    %v6813 = vld [vmem:[#allocation9 + $0x430] sm:$0xff]
    %v6814 = vld [vmem:[#allocation9 + $0x438] sm:$0xff]
    %v6815 = vld [vmem:[#allocation9 + $0x440] sm:$0xff]
    %v6816 = vld [vmem:[#allocation9 + $0x448] sm:$0xff]
    %v6817 = vld [vmem:[#allocation9 + $0x450] sm:$0xff]
    %v6818 = vld [vmem:[#allocation9 + $0x458] sm:$0xff]
    %v6819 = vld [vmem:[#allocation9 + $0x460] sm:$0xff]
    %v6820 = vld [vmem:[#allocation9 + $0x468] sm:$0xff]
    %v6821 = vld [vmem:[#allocation9 + $0x470] sm:$0xff]
    %v6822 = vld [vmem:[#allocation9 + $0x478] sm:$0xff]
    %v6823 = vld [vmem:[#allocation9 + $0x480] sm:$0xff]
    %v6824 = vld [vmem:[#allocation9 + $0x488] sm:$0xff]
    %v6825 = vld [vmem:[#allocation9 + $0x490] sm:$0xff]
    %v6826 = vld [vmem:[#allocation9 + $0x498] sm:$0xff]
    %v6827 = vld [vmem:[#allocation9 + $0x4a0] sm:$0xff]
    %v6828 = vld [vmem:[#allocation9 + $0x4a8] sm:$0xff]
    %v6829 = vld [vmem:[#allocation9 + $0x4b0] sm:$0xff]
    %v6830 = vld [vmem:[#allocation9 + $0x4b8] sm:$0xff]
    %v6831 = vld [vmem:[#allocation9 + $0x4c0] sm:$0xff]
    %v6832 = vld [vmem:[#allocation9 + $0x4c8] sm:$0xff]
    %v6833 = vld [vmem:[#allocation9 + $0x4d0] sm:$0xff]
    %v6834 = vld [vmem:[#allocation9 + $0x4d8] sm:$0xff]
    %v6835 = vld [vmem:[#allocation9 + $0x4e0] sm:$0xff]
    %v6836 = vld [vmem:[#allocation9 + $0x4e8] sm:$0xff]
    %v6837 = vld [vmem:[#allocation9 + $0x4f0] sm:$0xff]
    %v6838 = vld [vmem:[#allocation9 + $0x4f8] sm:$0xff]
    %v6839 = vld [vmem:[#allocation9 + $0x500] sm:$0xff]
    %v6840 = vld [vmem:[#allocation9 + $0x508] sm:$0xff]
    %v6841 = vld [vmem:[#allocation9 + $0x510] sm:$0xff]
    %v6842 = vld [vmem:[#allocation9 + $0x518] sm:$0xff]
    %v6843 = vld [vmem:[#allocation9 + $0x520] sm:$0xff]
    %v6844 = vld [vmem:[#allocation9 + $0x528] sm:$0xff]
    %v6845 = vld [vmem:[#allocation9 + $0x530] sm:$0xff]
    %v6846 = vld [vmem:[#allocation9 + $0x538] sm:$0xff]
    %v6847 = vld [vmem:[#allocation9 + $0x540] sm:$0xff]
    %v6848 = vld [vmem:[#allocation9 + $0x548] sm:$0xff]
    %v6849 = vld [vmem:[#allocation9 + $0x550] sm:$0xff]
    %v6850 = vld [vmem:[#allocation9 + $0x558] sm:$0xff]
    %v6851 = vld [vmem:[#allocation9 + $0x560] sm:$0xff]
    %v6852 = vld [vmem:[#allocation9 + $0x568] sm:$0xff]
    %v6853 = vld [vmem:[#allocation9 + $0x570] sm:$0xff]
    %v6854 = vld [vmem:[#allocation9 + $0x578] sm:$0xff]
    %v6855 = vld [vmem:[#allocation9 + $0x580] sm:$0xff]
    %v6856 = vld [vmem:[#allocation9 + $0x588] sm:$0xff]
    %v6857 = vld [vmem:[#allocation9 + $0x590] sm:$0xff]
    %v6858 = vld [vmem:[#allocation9 + $0x598] sm:$0xff]
    %v6859 = vld [vmem:[#allocation9 + $0x5a0] sm:$0xff]
    %v6860 = vld [vmem:[#allocation9 + $0x5a8] sm:$0xff]
    %v6861 = vld [vmem:[#allocation9 + $0x5b0] sm:$0xff]
    %v6862 = vld [vmem:[#allocation9 + $0x5b8] sm:$0xff]
    %v6863 = vld [vmem:[#allocation9 + $0x5c0] sm:$0xff]
    %v6864 = vld [vmem:[#allocation9 + $0x5c8] sm:$0xff]
    %v6865 = vld [vmem:[#allocation9 + $0x5d0] sm:$0xff]
    %v6866 = vld [vmem:[#allocation9 + $0x5d8] sm:$0xff]
    %v6867 = vld [vmem:[#allocation9 + $0x5e0] sm:$0xff]
    %v6868 = vld [vmem:[#allocation9 + $0x5e8] sm:$0xff]
    %v6869 = vld [vmem:[#allocation9 + $0x5f0] sm:$0xff]
    %v6870 = vld [vmem:[#allocation9 + $0x5f8] sm:$0xff]
    %v6871 = vld [vmem:[#allocation9 + $0x600] sm:$0xff]
    %v6872 = vld [vmem:[#allocation9 + $0x608] sm:$0xff]
    %v6873 = vld [vmem:[#allocation9 + $0x610] sm:$0xff]
    %v6874 = vld [vmem:[#allocation9 + $0x618] sm:$0xff]
    %v6875 = vld [vmem:[#allocation9 + $0x620] sm:$0xff]
    %v6876 = vld [vmem:[#allocation9 + $0x628] sm:$0xff]
    %v6877 = vld [vmem:[#allocation9 + $0x630] sm:$0xff]
    %v6878 = vld [vmem:[#allocation9 + $0x638] sm:$0xff]
    %v6879 = vld [vmem:[#allocation9 + $0x640] sm:$0xff]
    %v6880 = vld [vmem:[#allocation9 + $0x648] sm:$0xff]
    %v6881 = vld [vmem:[#allocation9 + $0x650] sm:$0xff]
    %v6882 = vld [vmem:[#allocation9 + $0x658] sm:$0xff]
    %v6883 = vld [vmem:[#allocation9 + $0x660] sm:$0xff]
    %v6884 = vld [vmem:[#allocation9 + $0x668] sm:$0xff]
    %v6885 = vld [vmem:[#allocation9 + $0x670] sm:$0xff]
    %v6886 = vld [vmem:[#allocation9 + $0x678] sm:$0xff]
    %v6887 = vld [vmem:[#allocation9 + $0x680] sm:$0xff]
    %v6888 = vld [vmem:[#allocation9 + $0x688] sm:$0xff]
    %v6889 = vld [vmem:[#allocation9 + $0x690] sm:$0xff]
    %v6890 = vld [vmem:[#allocation9 + $0x698] sm:$0xff]
    %v6891 = vld [vmem:[#allocation9 + $0x6a0] sm:$0xff]
    %v6892 = vld [vmem:[#allocation9 + $0x6a8] sm:$0xff]
    %v6893 = vld [vmem:[#allocation9 + $0x6b0] sm:$0xff]
    %v6894 = vld [vmem:[#allocation9 + $0x6b8] sm:$0xff]
    %v6895 = vld [vmem:[#allocation9 + $0x6c0] sm:$0xff]
    %v6896 = vld [vmem:[#allocation9 + $0x6c8] sm:$0xff]
    %v6897 = vld [vmem:[#allocation9 + $0x6d0] sm:$0xff]
    %v6898 = vld [vmem:[#allocation9 + $0x6d8] sm:$0xff]
    %v6899 = vld [vmem:[#allocation9 + $0x6e0] sm:$0xff]
    %v6900 = vld [vmem:[#allocation9 + $0x6e8] sm:$0xff]
    %v6901 = vld [vmem:[#allocation9 + $0x6f0] sm:$0xff]
    %v6902 = vld [vmem:[#allocation9 + $0x6f8] sm:$0xff]
    %v6903 = vld [vmem:[#allocation9 + $0x700] sm:$0xff]
    %v6904 = vld [vmem:[#allocation9 + $0x708] sm:$0xff]
    %v6905 = vld [vmem:[#allocation9 + $0x710] sm:$0xff]
    %v6906 = vld [vmem:[#allocation9 + $0x718] sm:$0xff]
    %v6907 = vld [vmem:[#allocation9 + $0x720] sm:$0xff]
    %v6908 = vld [vmem:[#allocation9 + $0x728] sm:$0xff]
    %v6909 = vld [vmem:[#allocation9 + $0x730] sm:$0xff]
    %v6910 = vld [vmem:[#allocation9 + $0x738] sm:$0xff]
    %v6911 = vld [vmem:[#allocation9 + $0x740] sm:$0xff]
    %v6912 = vld [vmem:[#allocation9 + $0x748] sm:$0xff]
    %v6913 = vld [vmem:[#allocation9 + $0x750] sm:$0xff]
    %v6914 = vld [vmem:[#allocation9 + $0x758] sm:$0xff]
    %v6915 = vld [vmem:[#allocation9 + $0x760] sm:$0xff]
    %v6916 = vld [vmem:[#allocation9 + $0x768] sm:$0xff]
    %v6917 = vld [vmem:[#allocation9 + $0x770] sm:$0xff]
    %v6918 = vld [vmem:[#allocation9 + $0x778] sm:$0xff]
    %v6919 = vld [vmem:[#allocation9 + $0x780] sm:$0xff]
    %v6920 = vld [vmem:[#allocation9 + $0x788] sm:$0xff]
    %v6921 = vld [vmem:[#allocation9 + $0x790] sm:$0xff]
    %v6922 = vld [vmem:[#allocation9 + $0x798] sm:$0xff]
    %v6923 = vld [vmem:[#allocation9 + $0x7a0] sm:$0xff]
    %v6924 = vld [vmem:[#allocation9 + $0x7a8] sm:$0xff]
    %v6925 = vld [vmem:[#allocation9 + $0x7b0] sm:$0xff]
    %v6926 = vld [vmem:[#allocation9 + $0x7b8] sm:$0xff]
    %v6927 = vld [vmem:[#allocation9 + $0x7c0] sm:$0xff]
    %v6928 = vld [vmem:[#allocation9 + $0x7c8] sm:$0xff]
    %v6929 = vld [vmem:[#allocation9 + $0x7d0] sm:$0xff]
    %v6930 = vld [vmem:[#allocation9 + $0x7d8] sm:$0xff]
    %v6931 = vld [vmem:[#allocation9 + $0x7e0] sm:$0xff]
    %v6932 = vld [vmem:[#allocation9 + $0x7e8] sm:$0xff]
    %v6933 = vld [vmem:[#allocation9 + $0x7f0] sm:$0xff]
    %v6934 = vld [vmem:[#allocation9 + $0x7f8] sm:$0xff]
    %v6935 = vld [vmem:[#allocation9 + $0x800] sm:$0xff]
    %v6936 = vld [vmem:[#allocation9 + $0x808] sm:$0xff]
    %v6937 = vld [vmem:[#allocation9 + $0x810] sm:$0xff]
    %v6938 = vld [vmem:[#allocation9 + $0x818] sm:$0xff]
    %v6939 = vld [vmem:[#allocation9 + $0x820] sm:$0xff]
    %v6940 = vld [vmem:[#allocation9 + $0x828] sm:$0xff]
    %v6941 = vld [vmem:[#allocation9 + $0x830] sm:$0xff]
    %v6942 = vld [vmem:[#allocation9 + $0x838] sm:$0xff]
    %v6943 = vld [vmem:[#allocation9 + $0x840] sm:$0xff]
    %v6944 = vld [vmem:[#allocation9 + $0x848] sm:$0xff]
    %v6945 = vld [vmem:[#allocation9 + $0x850] sm:$0xff]
    %v6946 = vld [vmem:[#allocation9 + $0x858] sm:$0xff]
    %v6947 = vld [vmem:[#allocation9 + $0x860] sm:$0xff]
    %v6948 = vld [vmem:[#allocation9 + $0x868] sm:$0xff]
    %v6949 = vld [vmem:[#allocation9 + $0x870] sm:$0xff]
    %v6950 = vld [vmem:[#allocation9 + $0x878] sm:$0xff]
    %v6951 = vld [vmem:[#allocation9 + $0x880] sm:$0xff]
    %v6952 = vld [vmem:[#allocation9 + $0x888] sm:$0xff]
    %v6953 = vld [vmem:[#allocation9 + $0x890] sm:$0xff]
    %v6954 = vld [vmem:[#allocation9 + $0x898] sm:$0xff]
    %v6955 = vld [vmem:[#allocation9 + $0x8a0] sm:$0xff]
    %v6956 = vld [vmem:[#allocation9 + $0x8a8] sm:$0xff]
    %v6957 = vld [vmem:[#allocation9 + $0x8b0] sm:$0xff]
    %v6958 = vld [vmem:[#allocation9 + $0x8b8] sm:$0xff]
    %v6959 = vld [vmem:[#allocation9 + $0x8c0] sm:$0xff]
    %v6960 = vld [vmem:[#allocation9 + $0x8c8] sm:$0xff]
    %v6961 = vld [vmem:[#allocation9 + $0x8d0] sm:$0xff]
    %v6962 = vld [vmem:[#allocation9 + $0x8d8] sm:$0xff]
    %v6963 = vld [vmem:[#allocation9 + $0x8e0] sm:$0xff]
    %v6964 = vld [vmem:[#allocation9 + $0x8e8] sm:$0xff]
    %v6965 = vld [vmem:[#allocation9 + $0x8f0] sm:$0xff]
    %v6966 = vld [vmem:[#allocation9 + $0x8f8] sm:$0xff]
    %v6967 = vld [vmem:[#allocation9 + $0x900] sm:$0xff]
    %v6968 = vld [vmem:[#allocation9 + $0x908] sm:$0xff]
    %v6969 = vld [vmem:[#allocation9 + $0x910] sm:$0xff]
    %v6970 = vld [vmem:[#allocation9 + $0x918] sm:$0xff]
    %v6971 = vld [vmem:[#allocation9 + $0x920] sm:$0xff]
    %v6972 = vld [vmem:[#allocation9 + $0x928] sm:$0xff]
    %v6973 = vld [vmem:[#allocation9 + $0x930] sm:$0xff]
    %v6974 = vld [vmem:[#allocation9 + $0x938] sm:$0xff]
    %v6975 = vld [vmem:[#allocation9 + $0x940] sm:$0xff]
    %v6976 = vld [vmem:[#allocation9 + $0x948] sm:$0xff]
    %v6977 = vld [vmem:[#allocation9 + $0x950] sm:$0xff]
    %v6978 = vld [vmem:[#allocation9 + $0x958] sm:$0xff]
    %v6979 = vld [vmem:[#allocation9 + $0x960] sm:$0xff]
    %v6980 = vld [vmem:[#allocation9 + $0x968] sm:$0xff]
    %v6981 = vld [vmem:[#allocation9 + $0x970] sm:$0xff]
    %v6982 = vld [vmem:[#allocation9 + $0x978] sm:$0xff]
    %v6983 = vld [vmem:[#allocation9 + $0x980] sm:$0xff]
    %v6984 = vld [vmem:[#allocation9 + $0x988] sm:$0xff]
    %v6985 = vld [vmem:[#allocation9 + $0x990] sm:$0xff]
    %v6986 = vld [vmem:[#allocation9 + $0x998] sm:$0xff]
    %v6987 = vld [vmem:[#allocation9 + $0x9a0] sm:$0xff]
    %v6988 = vld [vmem:[#allocation9 + $0x9a8] sm:$0xff]
    %v6989 = vld [vmem:[#allocation9 + $0x9b0] sm:$0xff]
    %v6990 = vld [vmem:[#allocation9 + $0x9b8] sm:$0xff]
    %v6991 = vld [vmem:[#allocation9 + $0x9c0] sm:$0xff]
    %v6992 = vld [vmem:[#allocation9 + $0x9c8] sm:$0xff]
    %v6993 = vld [vmem:[#allocation9 + $0x9d0] sm:$0xff]
    %v6994 = vld [vmem:[#allocation9 + $0x9d8] sm:$0xff]
    %v6995 = vld [vmem:[#allocation9 + $0x9e0] sm:$0xff]
    %v6996 = vld [vmem:[#allocation9 + $0x9e8] sm:$0xff]
    %v6997 = vld [vmem:[#allocation9 + $0x9f0] sm:$0xff]
    %v6998 = vld [vmem:[#allocation9 + $0x9f8] sm:$0xff]
    %v6999 = vld [vmem:[#allocation9 + $0xa00] sm:$0xff]
    %v7000 = vld [vmem:[#allocation9 + $0xa08] sm:$0xff]
    %v7001 = vld [vmem:[#allocation9 + $0xa10] sm:$0xff]
    %v7002 = vld [vmem:[#allocation9 + $0xa18] sm:$0xff]
    %v7003 = vld [vmem:[#allocation9 + $0xa20] sm:$0xff]
    %v7004 = vld [vmem:[#allocation9 + $0xa28] sm:$0xff]
    %v7005 = vld [vmem:[#allocation9 + $0xa30] sm:$0xff]
    %v7006 = vld [vmem:[#allocation9 + $0xa38] sm:$0xff]
    %v7007 = vld [vmem:[#allocation9 + $0xa40] sm:$0xff]
    %v7008 = vld [vmem:[#allocation9 + $0xa48] sm:$0xff]
    %v7009 = vld [vmem:[#allocation9 + $0xa50] sm:$0xff]
    %v7010 = vld [vmem:[#allocation9 + $0xa58] sm:$0xff]
    %v7011 = vld [vmem:[#allocation9 + $0xa60] sm:$0xff]
    %v7012 = vld [vmem:[#allocation9 + $0xa68] sm:$0xff]
    %v7013 = vld [vmem:[#allocation9 + $0xa70] sm:$0xff]
    %v7014 = vld [vmem:[#allocation9 + $0xa78] sm:$0xff]
    %v7015 = vld [vmem:[#allocation9 + $0xa80] sm:$0xff]
    %v7016 = vld [vmem:[#allocation9 + $0xa88] sm:$0xff]
    %v7017 = vld [vmem:[#allocation9 + $0xa90] sm:$0xff]
    %v7018 = vld [vmem:[#allocation9 + $0xa98] sm:$0xff]
    %v7019 = vld [vmem:[#allocation9 + $0xaa0] sm:$0xff]
    %v7020 = vld [vmem:[#allocation9 + $0xaa8] sm:$0xff]
    %v7021 = vld [vmem:[#allocation9 + $0xab0] sm:$0xff]
    %v7022 = vld [vmem:[#allocation9 + $0xab8] sm:$0xff]
    %v7023 = vld [vmem:[#allocation9 + $0xac0] sm:$0xff]
    %v7024 = vld [vmem:[#allocation9 + $0xac8] sm:$0xff]
    %v7025 = vld [vmem:[#allocation9 + $0xad0] sm:$0xff]
    %v7026 = vld [vmem:[#allocation9 + $0xad8] sm:$0xff]
    %v7027 = vld [vmem:[#allocation9 + $0xae0] sm:$0xff]
    %v7028 = vld [vmem:[#allocation9 + $0xae8] sm:$0xff]
    %v7029 = vld [vmem:[#allocation9 + $0xaf0] sm:$0xff]
    %v7030 = vld [vmem:[#allocation9 + $0xaf8] sm:$0xff]
    %v7031 = vld [vmem:[#allocation9 + $0xb00] sm:$0xff]
    %v7032 = vld [vmem:[#allocation9 + $0xb08] sm:$0xff]
    %v7033 = vld [vmem:[#allocation9 + $0xb10] sm:$0xff]
    %v7034 = vld [vmem:[#allocation9 + $0xb18] sm:$0xff]
    %v7035 = vld [vmem:[#allocation9 + $0xb20] sm:$0xff]
    %v7036 = vld [vmem:[#allocation9 + $0xb28] sm:$0xff]
    %v7037 = vld [vmem:[#allocation9 + $0xb30] sm:$0xff]
    %v7038 = vld [vmem:[#allocation9 + $0xb38] sm:$0xff]
    %v7039 = vld [vmem:[#allocation9 + $0xb40] sm:$0xff]
    %v7040 = vld [vmem:[#allocation9 + $0xb48] sm:$0xff]
    %v7041 = vld [vmem:[#allocation9 + $0xb50] sm:$0xff]
    %v7042 = vld [vmem:[#allocation9 + $0xb58] sm:$0xff]
    %v7043 = vld [vmem:[#allocation9 + $0xb60] sm:$0xff]
    %v7044 = vld [vmem:[#allocation9 + $0xb68] sm:$0xff]
    %v7045 = vld [vmem:[#allocation9 + $0xb70] sm:$0xff]
    %v7046 = vld [vmem:[#allocation9 + $0xb78] sm:$0xff]
    %v7047 = vld [vmem:[#allocation9 + $0xb80] sm:$0xff]
    %v7048 = vld [vmem:[#allocation9 + $0xb88] sm:$0xff]
    %v7049 = vld [vmem:[#allocation9 + $0xb90] sm:$0xff]
    %v7050 = vld [vmem:[#allocation9 + $0xb98] sm:$0xff]
    %v7051 = vld [vmem:[#allocation9 + $0xba0] sm:$0xff]
    %v7052 = vld [vmem:[#allocation9 + $0xba8] sm:$0xff]
    %v7053 = vld [vmem:[#allocation9 + $0xbb0] sm:$0xff]
    %v7054 = vld [vmem:[#allocation9 + $0xbb8] sm:$0xff]
    %v7055 = vld [vmem:[#allocation9 + $0xbc0] sm:$0xff]
    %v7056 = vld [vmem:[#allocation9 + $0xbc8] sm:$0xff]
    %v7057 = vld [vmem:[#allocation9 + $0xbd0] sm:$0xff]
    %v7058 = vld [vmem:[#allocation9 + $0xbd8] sm:$0xff]
    %v7059 = vld [vmem:[#allocation9 + $0xbe0] sm:$0xff]
    %v7060 = vld [vmem:[#allocation9 + $0xbe8] sm:$0xff]
    %v7061 = vld [vmem:[#allocation9 + $0xbf0] sm:$0xff]
    %v7062 = vld [vmem:[#allocation9 + $0xbf8] sm:$0xff]
    %v7063 = vld [vmem:[#allocation9 + $0xc00] sm:$0xff]
    %v7064 = vld [vmem:[#allocation9 + $0xc08] sm:$0xff]
    %v7065 = vld [vmem:[#allocation9 + $0xc10] sm:$0xff]
    %v7066 = vld [vmem:[#allocation9 + $0xc18] sm:$0xff]
    %v7067 = vld [vmem:[#allocation9 + $0xc20] sm:$0xff]
    %v7068 = vld [vmem:[#allocation9 + $0xc28] sm:$0xff]
    %v7069 = vld [vmem:[#allocation9 + $0xc30] sm:$0xff]
    %v7070 = vld [vmem:[#allocation9 + $0xc38] sm:$0xff]
    %v7071 = vld [vmem:[#allocation9 + $0xc40] sm:$0xff]
    %v7072 = vld [vmem:[#allocation9 + $0xc48] sm:$0xff]
    %v7073 = vld [vmem:[#allocation9 + $0xc50] sm:$0xff]
    %v7074 = vld [vmem:[#allocation9 + $0xc58] sm:$0xff]
    %v7075 = vld [vmem:[#allocation9 + $0xc60] sm:$0xff]
    %v7076 = vld [vmem:[#allocation9 + $0xc68] sm:$0xff]
    %v7077 = vld [vmem:[#allocation9 + $0xc70] sm:$0xff]
    %v7078 = vld [vmem:[#allocation9 + $0xc78] sm:$0xff]
    %v7079 = vld [vmem:[#allocation9 + $0xc80] sm:$0xff]
    %v7080 = vld [vmem:[#allocation9 + $0xc88] sm:$0xff]
    %v7081 = vld [vmem:[#allocation9 + $0xc90] sm:$0xff]
    %v7082 = vld [vmem:[#allocation9 + $0xc98] sm:$0xff]
    %v7083 = vld [vmem:[#allocation9 + $0xca0] sm:$0xff]
    %v7084 = vld [vmem:[#allocation9 + $0xca8] sm:$0xff]
    %v7085 = vld [vmem:[#allocation9 + $0xcb0] sm:$0xff]
    %v7086 = vld [vmem:[#allocation9 + $0xcb8] sm:$0xff]
    %v7087 = vld [vmem:[#allocation9 + $0xcc0] sm:$0xff]
    %v7088 = vld [vmem:[#allocation9 + $0xcc8] sm:$0xff]
    %v7089 = vld [vmem:[#allocation9 + $0xcd0] sm:$0xff]
    %v7090 = vld [vmem:[#allocation9 + $0xcd8] sm:$0xff]
    %v7091 = vld [vmem:[#allocation9 + $0xce0] sm:$0xff]
    %v7092 = vld [vmem:[#allocation9 + $0xce8] sm:$0xff]
    %v7093 = vld [vmem:[#allocation9 + $0xcf0] sm:$0xff]
    %v7094 = vld [vmem:[#allocation9 + $0xcf8] sm:$0xff]
    %v7095 = vld [vmem:[#allocation9 + $0xd00] sm:$0xff]
    %v7096 = vld [vmem:[#allocation9 + $0xd08] sm:$0xff]
    %v7097 = vld [vmem:[#allocation9 + $0xd10] sm:$0xff]
    %v7098 = vld [vmem:[#allocation9 + $0xd18] sm:$0xff]
    %v7099 = vld [vmem:[#allocation9 + $0xd20] sm:$0xff]
    %v7100 = vld [vmem:[#allocation9 + $0xd28] sm:$0xff]
    %v7101 = vld [vmem:[#allocation9 + $0xd30] sm:$0xff]
    %v7102 = vld [vmem:[#allocation9 + $0xd38] sm:$0xff]
    %v7103 = vld [vmem:[#allocation9 + $0xd40] sm:$0xff]
    %v7104 = vld [vmem:[#allocation9 + $0xd48] sm:$0xff]
    %v7105 = vld [vmem:[#allocation9 + $0xd50] sm:$0xff]
    %v7106 = vld [vmem:[#allocation9 + $0xd58] sm:$0xff]
    %v7107 = vld [vmem:[#allocation9 + $0xd60] sm:$0xff]
    %v7108 = vld [vmem:[#allocation9 + $0xd68] sm:$0xff]
    %v7109 = vld [vmem:[#allocation9 + $0xd70] sm:$0xff]
    %v7110 = vld [vmem:[#allocation9 + $0xd78] sm:$0xff]
    %v7111 = vld [vmem:[#allocation9 + $0xd80] sm:$0xff]
    %v7112 = vld [vmem:[#allocation9 + $0xd88] sm:$0xff]
    %v7113 = vld [vmem:[#allocation9 + $0xd90] sm:$0xff]
    %v7114 = vld [vmem:[#allocation9 + $0xd98] sm:$0xff]
    %v7115 = vld [vmem:[#allocation9 + $0xda0] sm:$0xff]
    %v7116 = vld [vmem:[#allocation9 + $0xda8] sm:$0xff]
    %v7117 = vld [vmem:[#allocation9 + $0xdb0] sm:$0xff]
    %v7118 = vld [vmem:[#allocation9 + $0xdb8] sm:$0xff]
    %v7119 = vld [vmem:[#allocation9 + $0xdc0] sm:$0xff]
    %v7120 = vld [vmem:[#allocation9 + $0xdc8] sm:$0xff]
    %v7121 = vld [vmem:[#allocation9 + $0xdd0] sm:$0xff]
    %v7122 = vld [vmem:[#allocation9 + $0xdd8] sm:$0xff]
    %v7123 = vld [vmem:[#allocation9 + $0xde0] sm:$0xff]
    %v7124 = vld [vmem:[#allocation9 + $0xde8] sm:$0xff]
    %v7125 = vld [vmem:[#allocation9 + $0xdf0] sm:$0xff]
    %v7126 = vld [vmem:[#allocation9 + $0xdf8] sm:$0xff]
    %v7127 = vld [vmem:[#allocation9 + $0xe00] sm:$0xff]
    %v7128 = vld [vmem:[#allocation9 + $0xe08] sm:$0xff]
    %v7129 = vld [vmem:[#allocation9 + $0xe10] sm:$0xff]
    %v7130 = vld [vmem:[#allocation9 + $0xe18] sm:$0xff]
    %v7131 = vld [vmem:[#allocation9 + $0xe20] sm:$0xff]
    %v7132 = vld [vmem:[#allocation9 + $0xe28] sm:$0xff]
    %v7133 = vld [vmem:[#allocation9 + $0xe30] sm:$0xff]
    %v7134 = vld [vmem:[#allocation9 + $0xe38] sm:$0xff]
    %v7135 = vld [vmem:[#allocation9 + $0xe40] sm:$0xff]
    %v7136 = vld [vmem:[#allocation9 + $0xe48] sm:$0xff]
    %v7137 = vld [vmem:[#allocation9 + $0xe50] sm:$0xff]
    %v7138 = vld [vmem:[#allocation9 + $0xe58] sm:$0xff]
    %v7139 = vld [vmem:[#allocation9 + $0xe60] sm:$0xff]
    %v7140 = vld [vmem:[#allocation9 + $0xe68] sm:$0xff]
    %v7141 = vld [vmem:[#allocation9 + $0xe70] sm:$0xff]
    %v7142 = vld [vmem:[#allocation9 + $0xe78] sm:$0xff]
    %v7143 = vld [vmem:[#allocation9 + $0xe80] sm:$0xff]
    %v7144 = vld [vmem:[#allocation9 + $0xe88] sm:$0xff]
    %v7145 = vld [vmem:[#allocation9 + $0xe90] sm:$0xff]
    %v7146 = vld [vmem:[#allocation9 + $0xe98] sm:$0xff]
    %v7147 = vld [vmem:[#allocation9 + $0xea0] sm:$0xff]
    %v7148 = vld [vmem:[#allocation9 + $0xea8] sm:$0xff]
    %v7149 = vld [vmem:[#allocation9 + $0xeb0] sm:$0xff]
    %v7150 = vld [vmem:[#allocation9 + $0xeb8] sm:$0xff]
    %v7151 = vld [vmem:[#allocation9 + $0xec0] sm:$0xff]
    %v7152 = vld [vmem:[#allocation9 + $0xec8] sm:$0xff]
    %v7153 = vld [vmem:[#allocation9 + $0xed0] sm:$0xff]
    %v7154 = vld [vmem:[#allocation9 + $0xed8] sm:$0xff]
    %v7155 = vld [vmem:[#allocation9 + $0xee0] sm:$0xff]
    %v7156 = vld [vmem:[#allocation9 + $0xee8] sm:$0xff]
    %v7157 = vld [vmem:[#allocation9 + $0xef0] sm:$0xff]
    %v7158 = vld [vmem:[#allocation9 + $0xef8] sm:$0xff]
    %v7159 = vld [vmem:[#allocation9 + $0xf00] sm:$0xff]
    %v7160 = vld [vmem:[#allocation9 + $0xf08] sm:$0xff]
    %v7161 = vld [vmem:[#allocation9 + $0xf10] sm:$0xff]
    %v7162 = vld [vmem:[#allocation9 + $0xf18] sm:$0xff]
    %v7163 = vld [vmem:[#allocation9 + $0xf20] sm:$0xff]
    %v7164 = vld [vmem:[#allocation9 + $0xf28] sm:$0xff]
    %v7165 = vld [vmem:[#allocation9 + $0xf30] sm:$0xff]
    %v7166 = vld [vmem:[#allocation9 + $0xf38] sm:$0xff]
    %v7167 = vld [vmem:[#allocation9 + $0xf40] sm:$0xff]
    %v7168 = vld [vmem:[#allocation9 + $0xf48] sm:$0xff]
    %v7169 = vld [vmem:[#allocation9 + $0xf50] sm:$0xff]
    %v7170 = vld [vmem:[#allocation9 + $0xf58] sm:$0xff]
    %v7171 = vld [vmem:[#allocation9 + $0xf60] sm:$0xff]
    %v7172 = vld [vmem:[#allocation9 + $0xf68] sm:$0xff]
    %v7173 = vld [vmem:[#allocation9 + $0xf70] sm:$0xff]
    %v7174 = vld [vmem:[#allocation9 + $0xf78] sm:$0xff]
    %v7175 = vld [vmem:[#allocation9 + $0xf80] sm:$0xff]
    %v7176 = vld [vmem:[#allocation9 + $0xf88] sm:$0xff]
    %v7177 = vld [vmem:[#allocation9 + $0xf90] sm:$0xff]
    %v7178 = vld [vmem:[#allocation9 + $0xf98] sm:$0xff]
    %v7179 = vld [vmem:[#allocation9 + $0xfa0] sm:$0xff]
    %v7180 = vld [vmem:[#allocation9 + $0xfa8] sm:$0xff]
    %v7181 = vld [vmem:[#allocation9 + $0xfb0] sm:$0xff]
    %v7182 = vld [vmem:[#allocation9 + $0xfb8] sm:$0xff]
    %v7183 = vld [vmem:[#allocation9 + $0xfc0] sm:$0xff]
    %v7184 = vld [vmem:[#allocation9 + $0xfc8] sm:$0xff]
    %v7185 = vld [vmem:[#allocation9 + $0xfd0] sm:$0xff]
    %v7186 = vld [vmem:[#allocation9 + $0xfd8] sm:$0xff]
    %v7187 = vld [vmem:[#allocation9 + $0xfe0] sm:$0xff]
    %v7188 = vld [vmem:[#allocation9 + $0xfe8] sm:$0xff]
    %v7189 = vld [vmem:[#allocation9 + $0xff0] sm:$0xff]
    %v7190 = vld [vmem:[#allocation9 + $0xff8] sm:$0xff]
    %v7191 = vld [vmem:[#allocation9 + $0x1000] sm:$0xff]
    %v7192 = vld [vmem:[#allocation9 + $0x1008] sm:$0xff]
    %v7193 = vld [vmem:[#allocation9 + $0x1010] sm:$0xff]
    %v7194 = vld [vmem:[#allocation9 + $0x1018] sm:$0xff]
    %v7195 = vld [vmem:[#allocation9 + $0x1020] sm:$0xff]
    %v7196 = vld [vmem:[#allocation9 + $0x1028] sm:$0xff]
    %v7197 = vld [vmem:[#allocation9 + $0x1030] sm:$0xff]
    %v7198 = vld [vmem:[#allocation9 + $0x1038] sm:$0xff]
    %v7199 = vld [vmem:[#allocation9 + $0x1040] sm:$0xff]
    %v7200 = vld [vmem:[#allocation9 + $0x1048] sm:$0xff]
    %v7201 = vld [vmem:[#allocation9 + $0x1050] sm:$0xff]
    %v7202 = vld [vmem:[#allocation9 + $0x1058] sm:$0xff]
    %v7203 = vld [vmem:[#allocation9 + $0x1060] sm:$0xff]
    %v7204 = vld [vmem:[#allocation9 + $0x1068] sm:$0xff]
    %v7205 = vld [vmem:[#allocation9 + $0x1070] sm:$0xff]
    %v7206 = vld [vmem:[#allocation9 + $0x1078] sm:$0xff]
    %v7207 = vld [vmem:[#allocation9 + $0x1080] sm:$0xff]
    %v7208 = vld [vmem:[#allocation9 + $0x1088] sm:$0xff]
    %v7209 = vld [vmem:[#allocation9 + $0x1090] sm:$0xff]
    %v7210 = vld [vmem:[#allocation9 + $0x1098] sm:$0xff]
    %v7211 = vld [vmem:[#allocation9 + $0x10a0] sm:$0xff]
    %v7212 = vld [vmem:[#allocation9 + $0x10a8] sm:$0xff]
    %v7213 = vld [vmem:[#allocation9 + $0x10b0] sm:$0xff]
    %v7214 = vld [vmem:[#allocation9 + $0x10b8] sm:$0xff]
    %v7215 = vld [vmem:[#allocation9 + $0x10c0] sm:$0xff]
    %v7216 = vld [vmem:[#allocation9 + $0x10c8] sm:$0xff]
    %v7217 = vld [vmem:[#allocation9 + $0x10d0] sm:$0xff]
    %v7218 = vld [vmem:[#allocation9 + $0x10d8] sm:$0xff]
    %v7219 = vld [vmem:[#allocation9 + $0x10e0] sm:$0xff]
    %v7220 = vld [vmem:[#allocation9 + $0x10e8] sm:$0xff]
    %v7221 = vld [vmem:[#allocation9 + $0x10f0] sm:$0xff]
    %v7222 = vld [vmem:[#allocation9 + $0x10f8] sm:$0xff]
    %v7223 = vld [vmem:[#allocation9 + $0x1100] sm:$0xff]
    %v7224 = vld [vmem:[#allocation9 + $0x1108] sm:$0xff]
    %v7225 = vld [vmem:[#allocation9 + $0x1110] sm:$0xff]
    %v7226 = vld [vmem:[#allocation9 + $0x1118] sm:$0xff]
    %v7227 = vld [vmem:[#allocation9 + $0x1120] sm:$0xff]
    %v7228 = vld [vmem:[#allocation9 + $0x1128] sm:$0xff]
    %v7229 = vld [vmem:[#allocation9 + $0x1130] sm:$0xff]
    %v7230 = vld [vmem:[#allocation9 + $0x1138] sm:$0xff]
    %v7231 = vld [vmem:[#allocation9 + $0x1140] sm:$0xff]
    %v7232 = vld [vmem:[#allocation9 + $0x1148] sm:$0xff]
    %v7233 = vld [vmem:[#allocation9 + $0x1150] sm:$0xff]
    %v7234 = vld [vmem:[#allocation9 + $0x1158] sm:$0xff]
    %v7235 = vld [vmem:[#allocation9 + $0x1160] sm:$0xff]
    %v7236 = vld [vmem:[#allocation9 + $0x1168] sm:$0xff]
    %v7237 = vld [vmem:[#allocation9 + $0x1170] sm:$0xff]
    %v7238 = vld [vmem:[#allocation9 + $0x1178] sm:$0xff]
    %v7239 = vld [vmem:[#allocation9 + $0x1180] sm:$0xff]
    %v7240 = vld [vmem:[#allocation9 + $0x1188] sm:$0xff]
    %v7241 = vld [vmem:[#allocation9 + $0x1190] sm:$0xff]
    %v7242 = vld [vmem:[#allocation9 + $0x1198] sm:$0xff]
    %v7243 = vld [vmem:[#allocation9 + $0x11a0] sm:$0xff]
    %v7244 = vld [vmem:[#allocation9 + $0x11a8] sm:$0xff]
    %v7245 = vld [vmem:[#allocation9 + $0x11b0] sm:$0xff]
    %v7246 = vld [vmem:[#allocation9 + $0x11b8] sm:$0xff]
    %v7247 = vld [vmem:[#allocation9 + $0x11c0] sm:$0xff]
    %v7248 = vld [vmem:[#allocation9 + $0x11c8] sm:$0xff]
    %v7249 = vld [vmem:[#allocation9 + $0x11d0] sm:$0xff]
    %v7250 = vld [vmem:[#allocation9 + $0x11d8] sm:$0xff]
    %v7251 = vld [vmem:[#allocation9 + $0x11e0] sm:$0xff]
    %v7252 = vld [vmem:[#allocation9 + $0x11e8] sm:$0xff]
    %v7253 = vld [vmem:[#allocation9 + $0x11f0] sm:$0xff]
    %v7254 = vld [vmem:[#allocation9 + $0x11f8] sm:$0xff]
    %v7255 = vld [vmem:[#allocation9 + $0x1200] sm:$0xff]
    %v7256 = vld [vmem:[#allocation9 + $0x1208] sm:$0xff]
    %v7257 = vld [vmem:[#allocation9 + $0x1210] sm:$0xff]
    %v7258 = vld [vmem:[#allocation9 + $0x1218] sm:$0xff]
    %v7259 = vld [vmem:[#allocation9 + $0x1220] sm:$0xff]
    %v7260 = vld [vmem:[#allocation9 + $0x1228] sm:$0xff]
    %v7261 = vld [vmem:[#allocation9 + $0x1230] sm:$0xff]
    %v7262 = vld [vmem:[#allocation9 + $0x1238] sm:$0xff]
    %v7263 = vld [vmem:[#allocation9 + $0x1240] sm:$0xff]
    %v7264 = vld [vmem:[#allocation9 + $0x1248] sm:$0xff]
    %v7265 = vld [vmem:[#allocation9 + $0x1250] sm:$0xff]
    %v7266 = vld [vmem:[#allocation9 + $0x1258] sm:$0xff]
    %v7267 = vld [vmem:[#allocation9 + $0x1260] sm:$0xff]
    %v7268 = vld [vmem:[#allocation9 + $0x1268] sm:$0xff]
    %v7269 = vld [vmem:[#allocation9 + $0x1270] sm:$0xff]
    %v7270 = vld [vmem:[#allocation9 + $0x1278] sm:$0xff]
    %v7271 = vld [vmem:[#allocation9 + $0x1280] sm:$0xff]
    %v7272 = vld [vmem:[#allocation9 + $0x1288] sm:$0xff]
    %v7273 = vld [vmem:[#allocation9 + $0x1290] sm:$0xff]
    %v7274 = vld [vmem:[#allocation9 + $0x1298] sm:$0xff]
    %v7275 = vld [vmem:[#allocation9 + $0x12a0] sm:$0xff]
    %v7276 = vld [vmem:[#allocation9 + $0x12a8] sm:$0xff]
    %v7277 = vld [vmem:[#allocation9 + $0x12b0] sm:$0xff]
    %v7278 = vld [vmem:[#allocation9 + $0x12b8] sm:$0xff]
    %v7279 = vld [vmem:[#allocation9 + $0x12c0] sm:$0xff]
    %v7280 = vld [vmem:[#allocation9 + $0x12c8] sm:$0xff]
    %v7281 = vld [vmem:[#allocation9 + $0x12d0] sm:$0xff]
    %v7282 = vld [vmem:[#allocation9 + $0x12d8] sm:$0xff]
    %v7283 = vld [vmem:[#allocation9 + $0x12e0] sm:$0xff]
    %v7284 = vld [vmem:[#allocation9 + $0x12e8] sm:$0xff]
    %v7285 = vld [vmem:[#allocation9 + $0x12f0] sm:$0xff]
    %v7286 = vld [vmem:[#allocation9 + $0x12f8] sm:$0xff]
    %v7287 = vld [vmem:[#allocation9 + $0x1300] sm:$0xff]
    %v7288 = vld [vmem:[#allocation9 + $0x1308] sm:$0xff]
    %v7289 = vld [vmem:[#allocation9 + $0x1310] sm:$0xff]
    %v7290 = vld [vmem:[#allocation9 + $0x1318] sm:$0xff]
    %v7291 = vld [vmem:[#allocation9 + $0x1320] sm:$0xff]
    %v7292 = vld [vmem:[#allocation9 + $0x1328] sm:$0xff]
    %v7293 = vld [vmem:[#allocation9 + $0x1330] sm:$0xff]
    %v7294 = vld [vmem:[#allocation9 + $0x1338] sm:$0xff]
    %v7295 = vld [vmem:[#allocation9 + $0x1340] sm:$0xff]
    %v7296 = vld [vmem:[#allocation9 + $0x1348] sm:$0xff]
    %v7297 = vld [vmem:[#allocation9 + $0x1350] sm:$0xff]
    %v7298 = vld [vmem:[#allocation9 + $0x1358] sm:$0xff]
    %v7299 = vld [vmem:[#allocation9 + $0x1360] sm:$0xff]
    %v7300 = vld [vmem:[#allocation9 + $0x1368] sm:$0xff]
    %v7301 = vld [vmem:[#allocation9 + $0x1370] sm:$0xff]
    %v7302 = vld [vmem:[#allocation9 + $0x1378] sm:$0xff]
    %v7303 = vld [vmem:[#allocation9 + $0x1380] sm:$0xff]
    %v7304 = vld [vmem:[#allocation9 + $0x1388] sm:$0xff]
    %v7305 = vld [vmem:[#allocation9 + $0x1390] sm:$0xff]
    %v7306 = vld [vmem:[#allocation9 + $0x1398] sm:$0xff]
    %v7307 = vld [vmem:[#allocation9 + $0x13a0] sm:$0xff]
    %v7308 = vld [vmem:[#allocation9 + $0x13a8] sm:$0xff]
    %v7309 = vld [vmem:[#allocation9 + $0x13b0] sm:$0xff]
    %v7310 = vld [vmem:[#allocation9 + $0x13b8] sm:$0xff]
    %v7311 = vld [vmem:[#allocation9 + $0x13c0] sm:$0xff]
    %v7312 = vld [vmem:[#allocation9 + $0x13c8] sm:$0xff]
    %v7313 = vld [vmem:[#allocation9 + $0x13d0] sm:$0xff]
    %v7314 = vld [vmem:[#allocation9 + $0x13d8] sm:$0xff]
    %v7315 = vld [vmem:[#allocation9 + $0x13e0] sm:$0xff]
    %v7316 = vld [vmem:[#allocation9 + $0x13e8] sm:$0xff]
    %v7317 = vld [vmem:[#allocation9 + $0x13f0] sm:$0xff]
    %v7318 = vld [vmem:[#allocation9 + $0x13f8] sm:$0xff]
    %v7319 = vld [vmem:[#allocation9 + $0x1400] sm:$0xff]
    %v7320 = vld [vmem:[#allocation9 + $0x1408] sm:$0xff]
    %v7321 = vld [vmem:[#allocation9 + $0x1410] sm:$0xff]
    %v7322 = vld [vmem:[#allocation9 + $0x1418] sm:$0xff]
    %v7323 = vld [vmem:[#allocation9 + $0x1420] sm:$0xff]
    %v7324 = vld [vmem:[#allocation9 + $0x1428] sm:$0xff]
    %v7325 = vld [vmem:[#allocation9 + $0x1430] sm:$0xff]
    %v7326 = vld [vmem:[#allocation9 + $0x1438] sm:$0xff]
    %v7327 = vld [vmem:[#allocation9 + $0x1440] sm:$0xff]
    %v7328 = vld [vmem:[#allocation9 + $0x1448] sm:$0xff]
    %v7329 = vld [vmem:[#allocation9 + $0x1450] sm:$0xff]
    %v7330 = vld [vmem:[#allocation9 + $0x1458] sm:$0xff]
    %v7331 = vld [vmem:[#allocation9 + $0x1460] sm:$0xff]
    %v7332 = vld [vmem:[#allocation9 + $0x1468] sm:$0xff]
    %v7333 = vld [vmem:[#allocation9 + $0x1470] sm:$0xff]
    %v7334 = vld [vmem:[#allocation9 + $0x1478] sm:$0xff]
    %v7335 = vld [vmem:[#allocation9 + $0x1480] sm:$0xff]
    %v7336 = vld [vmem:[#allocation9 + $0x1488] sm:$0xff]
    %v7337 = vld [vmem:[#allocation9 + $0x1490] sm:$0xff]
    %v7338 = vld [vmem:[#allocation9 + $0x1498] sm:$0xff]
    %v7339 = vld [vmem:[#allocation9 + $0x14a0] sm:$0xff]
    %v7340 = vld [vmem:[#allocation9 + $0x14a8] sm:$0xff]
    %v7341 = vld [vmem:[#allocation9 + $0x14b0] sm:$0xff]
    %v7342 = vld [vmem:[#allocation9 + $0x14b8] sm:$0xff]
    %v7343 = vld [vmem:[#allocation9 + $0x14c0] sm:$0xff]
    %v7344 = vld [vmem:[#allocation9 + $0x14c8] sm:$0xff]
    %v7345 = vld [vmem:[#allocation9 + $0x14d0] sm:$0xff]
    %v7346 = vld [vmem:[#allocation9 + $0x14d8] sm:$0xff]
    %v7347 = vld [vmem:[#allocation9 + $0x14e0] sm:$0xff]
    %v7348 = vld [vmem:[#allocation9 + $0x14e8] sm:$0xff]
    %v7349 = vld [vmem:[#allocation9 + $0x14f0] sm:$0xff]
    %v7350 = vld [vmem:[#allocation9 + $0x14f8] sm:$0xff]
    %v7351 = vld [vmem:[#allocation9 + $0x1500] sm:$0xff]
    %v7352 = vld [vmem:[#allocation9 + $0x1508] sm:$0xff]
    %v7353 = vld [vmem:[#allocation9 + $0x1510] sm:$0xff]
    %v7354 = vld [vmem:[#allocation9 + $0x1518] sm:$0xff]
    %v7355 = vld [vmem:[#allocation9 + $0x1520] sm:$0xff]
    %v7356 = vld [vmem:[#allocation9 + $0x1528] sm:$0xff]
    %v7357 = vld [vmem:[#allocation9 + $0x1530] sm:$0xff]
    %v7358 = vld [vmem:[#allocation9 + $0x1538] sm:$0xff]
    %v7359 = vld [vmem:[#allocation9 + $0x1540] sm:$0xff]
    %v7360 = vld [vmem:[#allocation9 + $0x1548] sm:$0xff]
    %v7361 = vld [vmem:[#allocation9 + $0x1550] sm:$0xff]
    %v7362 = vld [vmem:[#allocation9 + $0x1558] sm:$0xff]
    %v7363 = vld [vmem:[#allocation9 + $0x1560] sm:$0xff]
    %v7364 = vld [vmem:[#allocation9 + $0x1568] sm:$0xff]
    %v7365 = vld [vmem:[#allocation9 + $0x1570] sm:$0xff]
    %v7366 = vld [vmem:[#allocation9 + $0x1578] sm:$0xff]
    %v7367 = vld [vmem:[#allocation9 + $0x1580] sm:$0xff]
    %v7368 = vld [vmem:[#allocation9 + $0x1588] sm:$0xff]
    %v7369 = vld [vmem:[#allocation9 + $0x1590] sm:$0xff]
    %v7370 = vld [vmem:[#allocation9 + $0x1598] sm:$0xff]
    %v7371 = vld [vmem:[#allocation9 + $0x15a0] sm:$0xff]
    %v7372 = vld [vmem:[#allocation9 + $0x15a8] sm:$0xff]
    %v7373 = vld [vmem:[#allocation9 + $0x15b0] sm:$0xff]
    %v7374 = vld [vmem:[#allocation9 + $0x15b8] sm:$0xff]
    %v7375 = vld [vmem:[#allocation9 + $0x15c0] sm:$0xff]
    %v7376 = vld [vmem:[#allocation9 + $0x15c8] sm:$0xff]
    %v7377 = vld [vmem:[#allocation9 + $0x15d0] sm:$0xff]
    %v7378 = vld [vmem:[#allocation9 + $0x15d8] sm:$0xff]
    %v7379 = vld [vmem:[#allocation9 + $0x15e0] sm:$0xff]
    %v7380 = vld [vmem:[#allocation9 + $0x15e8] sm:$0xff]
    %v7381 = vld [vmem:[#allocation9 + $0x15f0] sm:$0xff]
    %v7382 = vld [vmem:[#allocation9 + $0x15f8] sm:$0xff]
    %v7383 = vld [vmem:[#allocation9 + $0x1600] sm:$0xff]
    %v7384 = vld [vmem:[#allocation9 + $0x1608] sm:$0xff]
    %v7385 = vld [vmem:[#allocation9 + $0x1610] sm:$0xff]
    %v7386 = vld [vmem:[#allocation9 + $0x1618] sm:$0xff]
    %v7387 = vld [vmem:[#allocation9 + $0x1620] sm:$0xff]
    %v7388 = vld [vmem:[#allocation9 + $0x1628] sm:$0xff]
    %v7389 = vld [vmem:[#allocation9 + $0x1630] sm:$0xff]
    %v7390 = vld [vmem:[#allocation9 + $0x1638] sm:$0xff]
    %v7391 = vld [vmem:[#allocation9 + $0x1640] sm:$0xff]
    %v7392 = vld [vmem:[#allocation9 + $0x1648] sm:$0xff]
    %v7393 = vld [vmem:[#allocation9 + $0x1650] sm:$0xff]
    %v7394 = vld [vmem:[#allocation9 + $0x1658] sm:$0xff]
    %v7395 = vld [vmem:[#allocation9 + $0x1660] sm:$0xff]
    %v7396 = vld [vmem:[#allocation9 + $0x1668] sm:$0xff]
    %v7397 = vld [vmem:[#allocation9 + $0x1670] sm:$0xff]
    %v7398 = vld [vmem:[#allocation9 + $0x1678] sm:$0xff]
    %v7399 = vld [vmem:[#allocation9 + $0x1680] sm:$0xff]
    %v7400 = vld [vmem:[#allocation9 + $0x1688] sm:$0xff]
    %v7401 = vld [vmem:[#allocation9 + $0x1690] sm:$0xff]
    %v7402 = vld [vmem:[#allocation9 + $0x1698] sm:$0xff]
    %v7403 = vld [vmem:[#allocation9 + $0x16a0] sm:$0xff]
    %v7404 = vld [vmem:[#allocation9 + $0x16a8] sm:$0xff]
    %v7405 = vld [vmem:[#allocation9 + $0x16b0] sm:$0xff]
    %v7406 = vld [vmem:[#allocation9 + $0x16b8] sm:$0xff]
    %v7407 = vld [vmem:[#allocation9 + $0x16c0] sm:$0xff]
    %v7408 = vld [vmem:[#allocation9 + $0x16c8] sm:$0xff]
    %v7409 = vld [vmem:[#allocation9 + $0x16d0] sm:$0xff]
    %v7410 = vld [vmem:[#allocation9 + $0x16d8] sm:$0xff]
    %v7411 = vld [vmem:[#allocation9 + $0x16e0] sm:$0xff]
    %v7412 = vld [vmem:[#allocation9 + $0x16e8] sm:$0xff]
    %v7413 = vld [vmem:[#allocation9 + $0x16f0] sm:$0xff]
    %v7414 = vld [vmem:[#allocation9 + $0x16f8] sm:$0xff]
    %v7415 = vld [vmem:[#allocation9 + $0x1700] sm:$0xff]
    %v7416 = vld [vmem:[#allocation9 + $0x1708] sm:$0xff]
    %v7417 = vld [vmem:[#allocation9 + $0x1710] sm:$0xff]
    %v7418 = vld [vmem:[#allocation9 + $0x1718] sm:$0xff]
    %v7419 = vld [vmem:[#allocation9 + $0x1720] sm:$0xff]
    %v7420 = vld [vmem:[#allocation9 + $0x1728] sm:$0xff]
    %v7421 = vld [vmem:[#allocation9 + $0x1730] sm:$0xff]
    %v7422 = vld [vmem:[#allocation9 + $0x1738] sm:$0xff]
    %v7423 = vld [vmem:[#allocation9 + $0x1740] sm:$0xff]
    %v7424 = vld [vmem:[#allocation9 + $0x1748] sm:$0xff]
    %v7425 = vld [vmem:[#allocation9 + $0x1750] sm:$0xff]
    %v7426 = vld [vmem:[#allocation9 + $0x1758] sm:$0xff]
    %v7427 = vld [vmem:[#allocation9 + $0x1760] sm:$0xff]
    %v7428 = vld [vmem:[#allocation9 + $0x1768] sm:$0xff]
    %v7429 = vld [vmem:[#allocation9 + $0x1770] sm:$0xff]
    %v7430 = vld [vmem:[#allocation9 + $0x1778] sm:$0xff]
    %v7431 = vld [vmem:[#allocation9 + $0x1780] sm:$0xff]
    %v7432 = vld [vmem:[#allocation9 + $0x1788] sm:$0xff]
    %v7433 = vld [vmem:[#allocation9 + $0x1790] sm:$0xff]
    %v7434 = vld [vmem:[#allocation9 + $0x1798] sm:$0xff]
    %v7435 = vld [vmem:[#allocation9 + $0x17a0] sm:$0xff]
    %v7436 = vld [vmem:[#allocation9 + $0x17a8] sm:$0xff]
    %v7437 = vld [vmem:[#allocation9 + $0x17b0] sm:$0xff]
    %v7438 = vld [vmem:[#allocation9 + $0x17b8] sm:$0xff]
    %v7439 = vld [vmem:[#allocation9 + $0x17c0] sm:$0xff]
    %v7440 = vld [vmem:[#allocation9 + $0x17c8] sm:$0xff]
    %v7441 = vld [vmem:[#allocation9 + $0x17d0] sm:$0xff]
    %v7442 = vld [vmem:[#allocation9 + $0x17d8] sm:$0xff]
    %v7443 = vld [vmem:[#allocation9 + $0x17e0] sm:$0xff]
    %v7444 = vld [vmem:[#allocation9 + $0x17e8] sm:$0xff]
    %v7445 = vld [vmem:[#allocation9 + $0x17f0] sm:$0xff]
    %v7446 = vld [vmem:[#allocation9 + $0x17f8] sm:$0xff]
    %v7447 = vld [vmem:[#allocation9 + $0x1800] sm:$0xff]
    %v7448 = vld [vmem:[#allocation9 + $0x1808] sm:$0xff]
    %v7449 = vld [vmem:[#allocation9 + $0x1810] sm:$0xff]
    %v7450 = vld [vmem:[#allocation9 + $0x1818] sm:$0xff]
    %v7451 = vld [vmem:[#allocation9 + $0x1820] sm:$0xff]
    %v7452 = vld [vmem:[#allocation9 + $0x1828] sm:$0xff]
    %v7453 = vld [vmem:[#allocation9 + $0x1830] sm:$0xff]
    %v7454 = vld [vmem:[#allocation9 + $0x1838] sm:$0xff]
    %v7455 = vld [vmem:[#allocation9 + $0x1840] sm:$0xff]
    %v7456 = vld [vmem:[#allocation9 + $0x1848] sm:$0xff]
    %v7457 = vld [vmem:[#allocation9 + $0x1850] sm:$0xff]
    %v7458 = vld [vmem:[#allocation9 + $0x1858] sm:$0xff]
    %v7459 = vld [vmem:[#allocation9 + $0x1860] sm:$0xff]
    %v7460 = vld [vmem:[#allocation9 + $0x1868] sm:$0xff]
    %v7461 = vld [vmem:[#allocation9 + $0x1870] sm:$0xff]
    %v7462 = vld [vmem:[#allocation9 + $0x1878] sm:$0xff]
    %v7463 = vld [vmem:[#allocation9 + $0x1880] sm:$0xff]
    %v7464 = vld [vmem:[#allocation9 + $0x1888] sm:$0xff]
    %v7465 = vld [vmem:[#allocation9 + $0x1890] sm:$0xff]
    %v7466 = vld [vmem:[#allocation9 + $0x1898] sm:$0xff]
    %v7467 = vld [vmem:[#allocation9 + $0x18a0] sm:$0xff]
    %v7468 = vld [vmem:[#allocation9 + $0x18a8] sm:$0xff]
    %v7469 = vld [vmem:[#allocation9 + $0x18b0] sm:$0xff]
    %v7470 = vld [vmem:[#allocation9 + $0x18b8] sm:$0xff]
    %v7471 = vld [vmem:[#allocation9 + $0x18c0] sm:$0xff]
    %v7472 = vld [vmem:[#allocation9 + $0x18c8] sm:$0xff]
    %v7473 = vld [vmem:[#allocation9 + $0x18d0] sm:$0xff]
    %v7474 = vld [vmem:[#allocation9 + $0x18d8] sm:$0xff]
    %v7475 = vld [vmem:[#allocation9 + $0x18e0] sm:$0xff]
    %v7476 = vld [vmem:[#allocation9 + $0x18e8] sm:$0xff]
    %v7477 = vld [vmem:[#allocation9 + $0x18f0] sm:$0xff]
    %v7478 = vld [vmem:[#allocation9 + $0x18f8] sm:$0xff]
    %v7479 = vld [vmem:[#allocation9 + $0x1900] sm:$0xff]
    %v7480 = vld [vmem:[#allocation9 + $0x1908] sm:$0xff]
    %v7481 = vld [vmem:[#allocation9 + $0x1910] sm:$0xff]
    %v7482 = vld [vmem:[#allocation9 + $0x1918] sm:$0xff]
    %v7483 = vld [vmem:[#allocation9 + $0x1920] sm:$0xff]
    %v7484 = vld [vmem:[#allocation9 + $0x1928] sm:$0xff]
    %v7485 = vld [vmem:[#allocation9 + $0x1930] sm:$0xff]
    %v7486 = vld [vmem:[#allocation9 + $0x1938] sm:$0xff]
    %v7487 = vld [vmem:[#allocation9 + $0x1940] sm:$0xff]
    %v7488 = vld [vmem:[#allocation9 + $0x1948] sm:$0xff]
    %v7489 = vld [vmem:[#allocation9 + $0x1950] sm:$0xff]
    %v7490 = vld [vmem:[#allocation9 + $0x1958] sm:$0xff]
    %v7491 = vld [vmem:[#allocation9 + $0x1960] sm:$0xff]
    %v7492 = vld [vmem:[#allocation9 + $0x1968] sm:$0xff]
    %v7493 = vld [vmem:[#allocation9 + $0x1970] sm:$0xff]
    %v7494 = vld [vmem:[#allocation9 + $0x1978] sm:$0xff]
    %v7495 = vld [vmem:[#allocation9 + $0x1980] sm:$0xff]
    %v7496 = vld [vmem:[#allocation9 + $0x1988] sm:$0xff]
    %v7497 = vld [vmem:[#allocation9 + $0x1990] sm:$0xff]
    %v7498 = vld [vmem:[#allocation9 + $0x1998] sm:$0xff]
    %v7499 = vld [vmem:[#allocation9 + $0x19a0] sm:$0xff]
    %v7500 = vld [vmem:[#allocation9 + $0x19a8] sm:$0xff]
    %v7501 = vld [vmem:[#allocation9 + $0x19b0] sm:$0xff]
    %v7502 = vld [vmem:[#allocation9 + $0x19b8] sm:$0xff]
    %v7503 = vld [vmem:[#allocation9 + $0x19c0] sm:$0xff]
    %v7504 = vld [vmem:[#allocation9 + $0x19c8] sm:$0xff]
    %v7505 = vld [vmem:[#allocation9 + $0x19d0] sm:$0xff]
    %v7506 = vld [vmem:[#allocation9 + $0x19d8] sm:$0xff]
    %v7507 = vld [vmem:[#allocation9 + $0x19e0] sm:$0xff]
    %v7508 = vld [vmem:[#allocation9 + $0x19e8] sm:$0xff]
    %v7509 = vld [vmem:[#allocation9 + $0x19f0] sm:$0xff]
    %v7510 = vld [vmem:[#allocation9 + $0x19f8] sm:$0xff]
    %v7511 = vld [vmem:[#allocation9 + $0x1a00] sm:$0xff]
    %v7512 = vld [vmem:[#allocation9 + $0x1a08] sm:$0xff]
    %v7513 = vld [vmem:[#allocation9 + $0x1a10] sm:$0xff]
    %v7514 = vld [vmem:[#allocation9 + $0x1a18] sm:$0xff]
    %v7515 = vld [vmem:[#allocation9 + $0x1a20] sm:$0xff]
    %v7516 = vld [vmem:[#allocation9 + $0x1a28] sm:$0xff]
    %v7517 = vld [vmem:[#allocation9 + $0x1a30] sm:$0xff]
    %v7518 = vld [vmem:[#allocation9 + $0x1a38] sm:$0xff]
    %v7519 = vld [vmem:[#allocation9 + $0x1a40] sm:$0xff]
    %v7520 = vld [vmem:[#allocation9 + $0x1a48] sm:$0xff]
    %v7521 = vld [vmem:[#allocation9 + $0x1a50] sm:$0xff]
    %v7522 = vld [vmem:[#allocation9 + $0x1a58] sm:$0xff]
    %v7523 = vld [vmem:[#allocation9 + $0x1a60] sm:$0xff]
    %v7524 = vld [vmem:[#allocation9 + $0x1a68] sm:$0xff]
    %v7525 = vld [vmem:[#allocation9 + $0x1a70] sm:$0xff]
    %v7526 = vld [vmem:[#allocation9 + $0x1a78] sm:$0xff]
    %v7527 = vld [vmem:[#allocation9 + $0x1a80] sm:$0xff]
    %v7528 = vld [vmem:[#allocation9 + $0x1a88] sm:$0xff]
    %v7529 = vld [vmem:[#allocation9 + $0x1a90] sm:$0xff]
    %v7530 = vld [vmem:[#allocation9 + $0x1a98] sm:$0xff]
    %v7531 = vld [vmem:[#allocation9 + $0x1aa0] sm:$0xff]
    %v7532 = vld [vmem:[#allocation9 + $0x1aa8] sm:$0xff]
    %v7533 = vld [vmem:[#allocation9 + $0x1ab0] sm:$0xff]
    %v7534 = vld [vmem:[#allocation9 + $0x1ab8] sm:$0xff]
    %v7535 = vld [vmem:[#allocation9 + $0x1ac0] sm:$0xff]
    %v7536 = vld [vmem:[#allocation9 + $0x1ac8] sm:$0xff]
    %v7537 = vld [vmem:[#allocation9 + $0x1ad0] sm:$0xff]
    %v7538 = vld [vmem:[#allocation9 + $0x1ad8] sm:$0xff]
    %v7539 = vld [vmem:[#allocation9 + $0x1ae0] sm:$0xff]
    %v7540 = vld [vmem:[#allocation9 + $0x1ae8] sm:$0xff]
    %v7541 = vld [vmem:[#allocation9 + $0x1af0] sm:$0xff]
    %v7542 = vld [vmem:[#allocation9 + $0x1af8] sm:$0xff]
    %v7543 = vld [vmem:[#allocation9 + $0x1b00] sm:$0xff]
    %v7544 = vld [vmem:[#allocation9 + $0x1b08] sm:$0xff]
    %v7545 = vld [vmem:[#allocation9 + $0x1b10] sm:$0xff]
    %v7546 = vld [vmem:[#allocation9 + $0x1b18] sm:$0xff]
    %v7547 = vld [vmem:[#allocation9 + $0x1b20] sm:$0xff]
    %v7548 = vld [vmem:[#allocation9 + $0x1b28] sm:$0xff]
    %v7549 = vld [vmem:[#allocation9 + $0x1b30] sm:$0xff]
    %v7550 = vld [vmem:[#allocation9 + $0x1b38] sm:$0xff]
    %v7551 = vld [vmem:[#allocation9 + $0x1b40] sm:$0xff]
    %v7552 = vld [vmem:[#allocation9 + $0x1b48] sm:$0xff]
    %v7553 = vld [vmem:[#allocation9 + $0x1b50] sm:$0xff]
    %v7554 = vld [vmem:[#allocation9 + $0x1b58] sm:$0xff]
    %v7555 = vld [vmem:[#allocation9 + $0x1b60] sm:$0xff]
    %v7556 = vld [vmem:[#allocation9 + $0x1b68] sm:$0xff]
    %v7557 = vld [vmem:[#allocation9 + $0x1b70] sm:$0xff]
    %v7558 = vld [vmem:[#allocation9 + $0x1b78] sm:$0xff]
    %v7559 = vld [vmem:[#allocation9 + $0x1b80] sm:$0xff]
    %v7560 = vld [vmem:[#allocation9 + $0x1b88] sm:$0xff]
    %v7561 = vld [vmem:[#allocation9 + $0x1b90] sm:$0xff]
    %v7562 = vld [vmem:[#allocation9 + $0x1b98] sm:$0xff]
    %v7563 = vld [vmem:[#allocation9 + $0x1ba0] sm:$0xff]
    %v7564 = vld [vmem:[#allocation9 + $0x1ba8] sm:$0xff]
    %v7565 = vld [vmem:[#allocation9 + $0x1bb0] sm:$0xff]
    %v7566 = vld [vmem:[#allocation9 + $0x1bb8] sm:$0xff]
    %v7567 = vld [vmem:[#allocation9 + $0x1bc0] sm:$0xff]
    %v7568 = vld [vmem:[#allocation9 + $0x1bc8] sm:$0xff]
    %v7569 = vld [vmem:[#allocation9 + $0x1bd0] sm:$0xff]
    %v7570 = vld [vmem:[#allocation9 + $0x1bd8] sm:$0xff]
    %v7571 = vld [vmem:[#allocation9 + $0x1be0] sm:$0xff]
    %v7572 = vld [vmem:[#allocation9 + $0x1be8] sm:$0xff]
    %v7573 = vld [vmem:[#allocation9 + $0x1bf0] sm:$0xff]
    %v7574 = vld [vmem:[#allocation9 + $0x1bf8] sm:$0xff]
    %v7575 = vpack.c.bf16 %v6668, %v6668
    %v7576 = vpack.c.bf16 %v6669, %v6669
    %v7577 = vpack.c.bf16 %v6670, %v6670
    %v7578 = vpack.c.bf16 %v6671, %v6671
    %v7579 = vpack.c.bf16 %v6672, %v6672
    %v7580 = vpack.c.bf16 %v6673, %v6673
    %v7581 = vpack.c.bf16 %v6674, %v6674
    %v7582 = vpack.c.bf16 %v6675, %v6675
    %v7583 = vld [vmem:[#allocation22] sm:$0xff]
    %v7584 = vld [vmem:[#allocation22 + $0x8] sm:$0x3f]
    %v7587 = vlaneseq
    %v7588 = vshrl.u32 %v7587, 7
    %v7589 = vsub.s32 0, %v7588
    %v7590 = vrot.slane %v7583, %v7589
    %v7591 = vlaneseq
    %v7592 = vshrl.u32 %v7591, 7
    %v7593 = vsub.s32 1, %v7592
    %v7594 = vrot.slane %v7583, %v7593
    %v7595 = vlaneseq
    %v7596 = vshrl.u32 %v7595, 7
    %v7597 = vsub.s32 2, %v7596
    %v7598 = vrot.slane %v7583, %v7597
    %v7599 = vlaneseq
    %v7600 = vshrl.u32 %v7599, 7
    %v7601 = vsub.s32 3, %v7600
    %v7602 = vrot.slane %v7583, %v7601
    %v7603 = vlaneseq
    %v7604 = vshrl.u32 %v7603, 7
    %v7605 = vsub.s32 4, %v7604
    %v7606 = vrot.slane %v7583, %v7605
    %v7607 = vlaneseq
    %v7608 = vshrl.u32 %v7607, 7
    %v7609 = vsub.s32 5, %v7608
    %v7610 = vrot.slane %v7583, %v7609
    %v7611 = vlaneseq
    %v7612 = vshrl.u32 %v7611, 7
    %v7613 = vsub.s32 6, %v7612
    %v7614 = vrot.slane %v7583, %v7613
    %v7615 = vlaneseq
    %v7616 = vshrl.u32 %v7615, 7
    %v7617 = vsub.s32 7, %v7616
    %v7618 = vrot.slane %v7583, %v7617
    %v7619 = vlaneseq
    %v7620 = vshrl.u32 %v7619, 7
    %v7621 = vsub.s32 0, %v7620
    %v7622 = vrot.slane %v7584, %v7621
    %v7623 = vlaneseq
    %v7624 = vshrl.u32 %v7623, 7
    %v7625 = vsub.s32 1, %v7624
    %v7626 = vrot.slane %v7584, %v7625
    %v7627 = vlaneseq
    %v7628 = vshrl.u32 %v7627, 7
    %v7629 = vsub.s32 2, %v7628
    %v7630 = vrot.slane %v7584, %v7629
    %v7631 = vlaneseq
    %v7632 = vshrl.u32 %v7631, 7
    %v7633 = vsub.s32 3, %v7632
    %v7634 = vrot.slane %v7584, %v7633
    %v7635 = vlaneseq
    %v7636 = vshrl.u32 %v7635, 7
    %v7637 = vsub.s32 4, %v7636
    %v7638 = vrot.slane %v7584, %v7637
    %v7639 = vlaneseq
    %v7640 = vshrl.u32 %v7639, 7
    %v7641 = vsub.s32 5, %v7640
    %v7642 = vrot.slane %v7584, %v7641
    %7657 = vmatprep.subr.bf16.mxu0 %v6680
    %7658 = vmatpush1.bf16.msra.mxu0 %v6679
    %7659 = vmatprep.subr.bf16.mxu0 %v6694
    %7660 = vmatpush1.bf16.msra.mxu0 %v6693
    %7661 = vmatprep.subr.bf16.mxu0 %v6708
    %7662 = vmatpush1.bf16.msra.mxu0 %v6707
    %7663 = vmatprep.subr.bf16.mxu0 %v6722
    %7664 = vmatpush1.bf16.msra.mxu0 %v6721
    %7665 = vmatprep.subr.bf16.mxu0 %v6736
    %7666 = vmatpush1.bf16.msra.mxu0 %v6735
    %7667 = vmatprep.subr.bf16.mxu0 %v6750
    %7668 = vmatpush1.bf16.msra.mxu0 %v6749
    %7669 = vmatprep.subr.bf16.mxu0 %v6764
    %7670 = vmatpush1.bf16.msra.mxu0 %v6763
    %7671 = vmatprep.subr.bf16.mxu0 %v6778
    %7672 = vmatpush1.bf16.msra.mxu0 %v6777
    %7673 = vmatprep.subr.bf16.mxu0 %v6792
    %7674 = vmatpush1.bf16.msra.mxu0 %v6791
    %7675 = vmatprep.subr.bf16.mxu0 %v6806
    %7676 = vmatpush1.bf16.msra.mxu0 %v6805
    %7677 = vmatprep.subr.bf16.mxu0 %v6820
    %7678 = vmatpush1.bf16.msra.mxu0 %v6819
    %7679 = vmatprep.subr.bf16.mxu0 %v6834
    %7680 = vmatpush1.bf16.msra.mxu0 %v6833
    %7681 = vmatprep.subr.bf16.mxu0 %v6848
    %7682 = vmatpush1.bf16.msra.mxu0 %v6847
    %7683 = vmatprep.subr.bf16.mxu0 %v6862
    %7684 = vmatpush1.bf16.msra.mxu0 %v6861
    %7685 = vmatprep.subr.bf16.mxu0 %v6876
    %7686 = vmatpush1.bf16.msra.mxu0 %v6875
    %7687 = vmatprep.subr.bf16.mxu0 %v6890
    %7688 = vmatpush1.bf16.msra.mxu0 %v6889
    %7689 = vmatprep.mubr.bf16.mxu0 %v7576
    %7690 = vmatmul.mubr.bf16.gmra.mrb[0].mxu0 %v7575
    %v7691 = vpop.f32.mrb[0].mxu0
    %v7692 = vadd.f32 %v7590, %v7691
    %v7693 = vpop.f32.mrb[0].mxu0
    %v7694 = vadd.f32 %v7594, %v7693
    %v7695 = vpop.f32.mrb[0].mxu0
    %v7696 = vpop.f32.mrb[0].mxu0
    %7697 = vdwg.mxu0
    %7698 = vmatprep.subr.bf16.mxu0 %v6904
    %7699 = vmatpush1.bf16.msra.mxu0 %v6903
    %7700 = vmatprep.subr.bf16.mxu0 %v6918
    %7701 = vmatpush1.bf16.msra.mxu0 %v6917
    %7702 = vmatprep.subr.bf16.mxu0 %v6932
    %7703 = vmatpush1.bf16.msra.mxu0 %v6931
    %7704 = vmatprep.subr.bf16.mxu0 %v6946
    %7705 = vmatpush1.bf16.msra.mxu0 %v6945
    %7706 = vmatprep.subr.bf16.mxu0 %v6960
    %7707 = vmatpush1.bf16.msra.mxu0 %v6959
    %7708 = vmatprep.subr.bf16.mxu0 %v6974
    %7709 = vmatpush1.bf16.msra.mxu0 %v6973
    %7710 = vmatprep.subr.bf16.mxu0 %v6988
    %7711 = vmatpush1.bf16.msra.mxu0 %v6987
    %7712 = vmatprep.subr.bf16.mxu0 %v7002
    %7713 = vmatpush1.bf16.msra.mxu0 %v7001
    %7714 = vmatprep.subr.bf16.mxu0 %v7016
    %7715 = vmatpush1.bf16.msra.mxu0 %v7015
    %7716 = vmatprep.subr.bf16.mxu0 %v7030
    %7717 = vmatpush1.bf16.msra.mxu0 %v7029
    %7718 = vmatprep.subr.bf16.mxu0 %v7044
    %7719 = vmatpush1.bf16.msra.mxu0 %v7043
    %7720 = vmatprep.subr.bf16.mxu0 %v7058
    %7721 = vmatpush1.bf16.msra.mxu0 %v7057
    %7722 = vmatprep.subr.bf16.mxu0 %v7072
    %7723 = vmatpush1.bf16.msra.mxu0 %v7071
    %7724 = vmatprep.subr.bf16.mxu0 %v7086
    %7725 = vmatpush1.bf16.msra.mxu0 %v7085
    %7726 = vmatprep.subr.bf16.mxu0 %v7100
    %7727 = vmatpush1.bf16.msra.mxu0 %v7099
    %7728 = vmatprep.subr.bf16.mxu0 %v7114
    %7729 = vmatpush1.bf16.msra.mxu0 %v7113
    %7730 = vmatprep.mubr.bf16.mxu0 %v7578
    %7731 = vmatmul.mubr.bf16.gmra.mrb[0].mxu0 %v7577
    %v7732 = vpop.f32.mrb[0].mxu0
    %v7733 = vadd.f32 %v7692, %v7732
    %v7734 = vpop.f32.mrb[0].mxu0
    %v7735 = vadd.f32 %v7694, %v7734
    %v7736 = vpop.f32.mrb[0].mxu0
    %v7737 = vpop.f32.mrb[0].mxu0
    %7738 = vdwg.mxu0
    %7739 = vmatprep.subr.bf16.mxu0 %v7128
    %7740 = vmatpush1.bf16.msra.mxu0 %v7127
    %7741 = vmatprep.subr.bf16.mxu0 %v7142
    %7742 = vmatpush1.bf16.msra.mxu0 %v7141
    %7743 = vmatprep.subr.bf16.mxu0 %v7156
    %7744 = vmatpush1.bf16.msra.mxu0 %v7155
    %7745 = vmatprep.subr.bf16.mxu0 %v7170
    %7746 = vmatpush1.bf16.msra.mxu0 %v7169
    %7747 = vmatprep.subr.bf16.mxu0 %v7184
    %7748 = vmatpush1.bf16.msra.mxu0 %v7183
    %7749 = vmatprep.subr.bf16.mxu0 %v7198
    %7750 = vmatpush1.bf16.msra.mxu0 %v7197
    %7751 = vmatprep.subr.bf16.mxu0 %v7212
    %7752 = vmatpush1.bf16.msra.mxu0 %v7211
    %7753 = vmatprep.subr.bf16.mxu0 %v7226
    %7754 = vmatpush1.bf16.msra.mxu0 %v7225
    %7755 = vmatprep.subr.bf16.mxu0 %v7240
    %7756 = vmatpush1.bf16.msra.mxu0 %v7239
    %7757 = vmatprep.subr.bf16.mxu0 %v7254
    %7758 = vmatpush1.bf16.msra.mxu0 %v7253
    %7759 = vmatprep.subr.bf16.mxu0 %v7268
    %7760 = vmatpush1.bf16.msra.mxu0 %v7267
    %7761 = vmatprep.subr.bf16.mxu0 %v7282
    %7762 = vmatpush1.bf16.msra.mxu0 %v7281
    %7763 = vmatprep.subr.bf16.mxu0 %v7296
    %7764 = vmatpush1.bf16.msra.mxu0 %v7295
    %7765 = vmatprep.subr.bf16.mxu0 %v7310
    %7766 = vmatpush1.bf16.msra.mxu0 %v7309
    %7767 = vmatprep.subr.bf16.mxu0 %v7324
    %7768 = vmatpush1.bf16.msra.mxu0 %v7323
    %7769 = vmatprep.subr.bf16.mxu0 %v7338
    %7770 = vmatpush1.bf16.msra.mxu0 %v7337
    %7771 = vmatprep.mubr.bf16.mxu0 %v7580
    %7772 = vmatmul.mubr.bf16.gmra.mrb[0].mxu0 %v7579
    %v7773 = vpop.f32.mrb[0].mxu0
    %v7774 = vadd.f32 %v7733, %v7773
    %v7775 = vpop.f32.mrb[0].mxu0
    %v7776 = vadd.f32 %v7735, %v7775
    %v7777 = vpop.f32.mrb[0].mxu0
    %v7778 = vpop.f32.mrb[0].mxu0
    %7779 = vdwg.mxu0
    %7780 = vmatprep.subr.bf16.mxu0 %v7352
    %7781 = vmatpush1.bf16.msra.mxu0 %v7351
    %7782 = vmatprep.subr.bf16.mxu0 %v7366
    %7783 = vmatpush1.bf16.msra.mxu0 %v7365
    %7784 = vmatprep.subr.bf16.mxu0 %v7380
    %7785 = vmatpush1.bf16.msra.mxu0 %v7379
    %7786 = vmatprep.subr.bf16.mxu0 %v7394
    %7787 = vmatpush1.bf16.msra.mxu0 %v7393
    %7788 = vmatprep.subr.bf16.mxu0 %v7408
    %7789 = vmatpush1.bf16.msra.mxu0 %v7407
    %7790 = vmatprep.subr.bf16.mxu0 %v7422
    %7791 = vmatpush1.bf16.msra.mxu0 %v7421
    %7792 = vmatprep.subr.bf16.mxu0 %v7436
    %7793 = vmatpush1.bf16.msra.mxu0 %v7435
    %7794 = vmatprep.subr.bf16.mxu0 %v7450
    %7795 = vmatpush1.bf16.msra.mxu0 %v7449
    %7796 = vmatprep.subr.bf16.mxu0 %v7464
    %7797 = vmatpush1.bf16.msra.mxu0 %v7463
    %7798 = vmatprep.subr.bf16.mxu0 %v7478
    %7799 = vmatpush1.bf16.msra.mxu0 %v7477
    %7800 = vmatprep.subr.bf16.mxu0 %v7492
    %7801 = vmatpush1.bf16.msra.mxu0 %v7491
    %7802 = vmatprep.subr.bf16.mxu0 %v7506
    %7803 = vmatpush1.bf16.msra.mxu0 %v7505
    %7804 = vmatprep.subr.bf16.mxu0 %v7520
    %7805 = vmatpush1.bf16.msra.mxu0 %v7519
    %7806 = vmatprep.subr.bf16.mxu0 %v7534
    %7807 = vmatpush1.bf16.msra.mxu0 %v7533
    %7808 = vmatprep.subr.bf16.mxu0 %v7548
    %7809 = vmatpush1.bf16.msra.mxu0 %v7547
    %7810 = vmatprep.subr.bf16.mxu0 %v7562
    %7811 = vmatpush1.bf16.msra.mxu0 %v7561
    %7812 = vmatprep.mubr.bf16.mxu0 %v7582
    %7813 = vmatmul.mubr.bf16.gmra.mrb[0].mxu0 %v7581
    %v7814 = vpop.f32.mrb[0].mxu0
    %v7815 = vadd.f32 %v7774, %v7814
    %v7816 = vpop.f32.mrb[0].mxu0
    %v7817 = vadd.f32 %v7776, %v7816
    %v7818 = vpop.f32.mrb[0].mxu0
    %v7819 = vpop.f32.mrb[0].mxu0
    %7820 = vdwg.mxu0
    %7821 = vmatprep.subr.bf16.mxu0 %v6682
    %7822 = vmatpush1.bf16.msra.mxu0 %v6681
    %7823 = vmatprep.subr.bf16.mxu0 %v6696
    %7824 = vmatpush1.bf16.msra.mxu0 %v6695
    %7825 = vmatprep.subr.bf16.mxu0 %v6710
    %7826 = vmatpush1.bf16.msra.mxu0 %v6709
    %7827 = vmatprep.subr.bf16.mxu0 %v6724
    %7828 = vmatpush1.bf16.msra.mxu0 %v6723
    %7829 = vmatprep.subr.bf16.mxu0 %v6738
    %7830 = vmatpush1.bf16.msra.mxu0 %v6737
    %7831 = vmatprep.subr.bf16.mxu0 %v6752
    %7832 = vmatpush1.bf16.msra.mxu0 %v6751
    %7833 = vmatprep.subr.bf16.mxu0 %v6766
    %7834 = vmatpush1.bf16.msra.mxu0 %v6765
    %7835 = vmatprep.subr.bf16.mxu0 %v6780
    %7836 = vmatpush1.bf16.msra.mxu0 %v6779
    %7837 = vmatprep.subr.bf16.mxu0 %v6794
    %7838 = vmatpush1.bf16.msra.mxu0 %v6793
    %7839 = vmatprep.subr.bf16.mxu0 %v6808
    %7840 = vmatpush1.bf16.msra.mxu0 %v6807
    %7841 = vmatprep.subr.bf16.mxu0 %v6822
    %7842 = vmatpush1.bf16.msra.mxu0 %v6821
    %7843 = vmatprep.subr.bf16.mxu0 %v6836
    %7844 = vmatpush1.bf16.msra.mxu0 %v6835
    %7845 = vmatprep.subr.bf16.mxu0 %v6850
    %7846 = vmatpush1.bf16.msra.mxu0 %v6849
    %7847 = vmatprep.subr.bf16.mxu0 %v6864
    %7848 = vmatpush1.bf16.msra.mxu0 %v6863
    %7849 = vmatprep.subr.bf16.mxu0 %v6878
    %7850 = vmatpush1.bf16.msra.mxu0 %v6877
    %7851 = vmatprep.subr.bf16.mxu0 %v6892
    %7852 = vmatpush1.bf16.msra.mxu0 %v6891
    %7853 = vmatprep.mubr.bf16.mxu0 %v7576
    %7854 = vmatmul.mubr.bf16.gmra.mrb[0].mxu0 %v7575
    %v7855 = vpop.f32.mrb[0].mxu0
    %v7856 = vadd.f32 %v7598, %v7855
    %v7857 = vpop.f32.mrb[0].mxu0
    %v7858 = vadd.f32 %v7602, %v7857
    %v7859 = vpop.f32.mrb[0].mxu0
    %v7860 = vpop.f32.mrb[0].mxu0
    %7861 = vdwg.mxu0
    %7862 = vmatprep.subr.bf16.mxu0 %v6906
    %7863 = vmatpush1.bf16.msra.mxu0 %v6905
    %7864 = vmatprep.subr.bf16.mxu0 %v6920
    %7865 = vmatpush1.bf16.msra.mxu0 %v6919
    %7866 = vmatprep.subr.bf16.mxu0 %v6934
    %7867 = vmatpush1.bf16.msra.mxu0 %v6933
    %7868 = vmatprep.subr.bf16.mxu0 %v6948
    %7869 = vmatpush1.bf16.msra.mxu0 %v6947
    %7870 = vmatprep.subr.bf16.mxu0 %v6962
    %7871 = vmatpush1.bf16.msra.mxu0 %v6961
    %7872 = vmatprep.subr.bf16.mxu0 %v6976
    %7873 = vmatpush1.bf16.msra.mxu0 %v6975
    %7874 = vmatprep.subr.bf16.mxu0 %v6990
    %7875 = vmatpush1.bf16.msra.mxu0 %v6989
    %7876 = vmatprep.subr.bf16.mxu0 %v7004
    %7877 = vmatpush1.bf16.msra.mxu0 %v7003
    %7878 = vmatprep.subr.bf16.mxu0 %v7018
    %7879 = vmatpush1.bf16.msra.mxu0 %v7017
    %7880 = vmatprep.subr.bf16.mxu0 %v7032
    %7881 = vmatpush1.bf16.msra.mxu0 %v7031
    %7882 = vmatprep.subr.bf16.mxu0 %v7046
    %7883 = vmatpush1.bf16.msra.mxu0 %v7045
    %7884 = vmatprep.subr.bf16.mxu0 %v7060
    %7885 = vmatpush1.bf16.msra.mxu0 %v7059
    %7886 = vmatprep.subr.bf16.mxu0 %v7074
    %7887 = vmatpush1.bf16.msra.mxu0 %v7073
    %7888 = vmatprep.subr.bf16.mxu0 %v7088
    %7889 = vmatpush1.bf16.msra.mxu0 %v7087
    %7890 = vmatprep.subr.bf16.mxu0 %v7102
    %7891 = vmatpush1.bf16.msra.mxu0 %v7101
    %7892 = vmatprep.subr.bf16.mxu0 %v7116
    %7893 = vmatpush1.bf16.msra.mxu0 %v7115
    %7894 = vmatprep.mubr.bf16.mxu0 %v7578
    %7895 = vmatmul.mubr.bf16.gmra.mrb[0].mxu0 %v7577
    %v7896 = vpop.f32.mrb[0].mxu0
    %v7897 = vadd.f32 %v7856, %v7896
    %v7898 = vpop.f32.mrb[0].mxu0
    %v7899 = vadd.f32 %v7858, %v7898
    %v7900 = vpop.f32.mrb[0].mxu0
    %v7901 = vpop.f32.mrb[0].mxu0
    %7902 = vdwg.mxu0
    %7903 = vmatprep.subr.bf16.mxu0 %v7130
    %7904 = vmatpush1.bf16.msra.mxu0 %v7129
    %7905 = vmatprep.subr.bf16.mxu0 %v7144
    %7906 = vmatpush1.bf16.msra.mxu0 %v7143
    %7907 = vmatprep.subr.bf16.mxu0 %v7158
    %7908 = vmatpush1.bf16.msra.mxu0 %v7157
    %7909 = vmatprep.subr.bf16.mxu0 %v7172
    %7910 = vmatpush1.bf16.msra.mxu0 %v7171
    %7911 = vmatprep.subr.bf16.mxu0 %v7186
    %7912 = vmatpush1.bf16.msra.mxu0 %v7185
    %7913 = vmatprep.subr.bf16.mxu0 %v7200
    %7914 = vmatpush1.bf16.msra.mxu0 %v7199
    %7915 = vmatprep.subr.bf16.mxu0 %v7214
    %7916 = vmatpush1.bf16.msra.mxu0 %v7213
    %7917 = vmatprep.subr.bf16.mxu0 %v7228
    %7918 = vmatpush1.bf16.msra.mxu0 %v7227
    %7919 = vmatprep.subr.bf16.mxu0 %v7242
    %7920 = vmatpush1.bf16.msra.mxu0 %v7241
    %7921 = vmatprep.subr.bf16.mxu0 %v7256
    %7922 = vmatpush1.bf16.msra.mxu0 %v7255
    %7923 = vmatprep.subr.bf16.mxu0 %v7270
    %7924 = vmatpush1.bf16.msra.mxu0 %v7269
    %7925 = vmatprep.subr.bf16.mxu0 %v7284
    %7926 = vmatpush1.bf16.msra.mxu0 %v7283
    %7927 = vmatprep.subr.bf16.mxu0 %v7298
    %7928 = vmatpush1.bf16.msra.mxu0 %v7297
    %7929 = vmatprep.subr.bf16.mxu0 %v7312
    %7930 = vmatpush1.bf16.msra.mxu0 %v7311
    %7931 = vmatprep.subr.bf16.mxu0 %v7326
    %7932 = vmatpush1.bf16.msra.mxu0 %v7325
    %7933 = vmatprep.subr.bf16.mxu0 %v7340
    %7934 = vmatpush1.bf16.msra.mxu0 %v7339
    %7935 = vmatprep.mubr.bf16.mxu0 %v7580
    %7936 = vmatmul.mubr.bf16.gmra.mrb[0].mxu0 %v7579
    %v7937 = vpop.f32.mrb[0].mxu0
    %v7938 = vadd.f32 %v7897, %v7937
    %v7939 = vpop.f32.mrb[0].mxu0
    %v7940 = vadd.f32 %v7899, %v7939
    %v7941 = vpop.f32.mrb[0].mxu0
    %v7942 = vpop.f32.mrb[0].mxu0
    %7943 = vdwg.mxu0
    %7944 = vmatprep.subr.bf16.mxu0 %v7354
    %7945 = vmatpush1.bf16.msra.mxu0 %v7353
    %7946 = vmatprep.subr.bf16.mxu0 %v7368
    %7947 = vmatpush1.bf16.msra.mxu0 %v7367
    %7948 = vmatprep.subr.bf16.mxu0 %v7382
    %7949 = vmatpush1.bf16.msra.mxu0 %v7381
    %7950 = vmatprep.subr.bf16.mxu0 %v7396
    %7951 = vmatpush1.bf16.msra.mxu0 %v7395
    %7952 = vmatprep.subr.bf16.mxu0 %v7410
    %7953 = vmatpush1.bf16.msra.mxu0 %v7409
    %7954 = vmatprep.subr.bf16.mxu0 %v7424
    %7955 = vmatpush1.bf16.msra.mxu0 %v7423
    %7956 = vmatprep.subr.bf16.mxu0 %v7438
    %7957 = vmatpush1.bf16.msra.mxu0 %v7437
    %7958 = vmatprep.subr.bf16.mxu0 %v7452
    %7959 = vmatpush1.bf16.msra.mxu0 %v7451
    %7960 = vmatprep.subr.bf16.mxu0 %v7466
    %7961 = vmatpush1.bf16.msra.mxu0 %v7465
    %7962 = vmatprep.subr.bf16.mxu0 %v7480
    %7963 = vmatpush1.bf16.msra.mxu0 %v7479
    %7964 = vmatprep.subr.bf16.mxu0 %v7494
    %7965 = vmatpush1.bf16.msra.mxu0 %v7493
    %7966 = vmatprep.subr.bf16.mxu0 %v7508
    %7967 = vmatpush1.bf16.msra.mxu0 %v7507
    %7968 = vmatprep.subr.bf16.mxu0 %v7522
    %7969 = vmatpush1.bf16.msra.mxu0 %v7521
    %7970 = vmatprep.subr.bf16.mxu0 %v7536
    %7971 = vmatpush1.bf16.msra.mxu0 %v7535
    %7972 = vmatprep.subr.bf16.mxu0 %v7550
    %7973 = vmatpush1.bf16.msra.mxu0 %v7549
    %7974 = vmatprep.subr.bf16.mxu0 %v7564
    %7975 = vmatpush1.bf16.msra.mxu0 %v7563
    %7976 = vmatprep.mubr.bf16.mxu0 %v7582
    %7977 = vmatmul.mubr.bf16.gmra.mrb[0].mxu0 %v7581
    %v7978 = vpop.f32.mrb[0].mxu0
    %v7979 = vadd.f32 %v7938, %v7978
    %v7980 = vpop.f32.mrb[0].mxu0
    %v7981 = vadd.f32 %v7940, %v7980
    %v7982 = vpop.f32.mrb[0].mxu0
    %v7983 = vpop.f32.mrb[0].mxu0
    %7984 = vdwg.mxu0
    %7985 = vmatprep.subr.bf16.mxu0 %v6684
    %7986 = vmatpush1.bf16.msra.mxu0 %v6683
    %7987 = vmatprep.subr.bf16.mxu0 %v6698
    %7988 = vmatpush1.bf16.msra.mxu0 %v6697
    %7989 = vmatprep.subr.bf16.mxu0 %v6712
    %7990 = vmatpush1.bf16.msra.mxu0 %v6711
    %7991 = vmatprep.subr.bf16.mxu0 %v6726
    %7992 = vmatpush1.bf16.msra.mxu0 %v6725
    %7993 = vmatprep.subr.bf16.mxu0 %v6740
    %7994 = vmatpush1.bf16.msra.mxu0 %v6739
    %7995 = vmatprep.subr.bf16.mxu0 %v6754
    %7996 = vmatpush1.bf16.msra.mxu0 %v6753
    %7997 = vmatprep.subr.bf16.mxu0 %v6768
    %7998 = vmatpush1.bf16.msra.mxu0 %v6767
    %7999 = vmatprep.subr.bf16.mxu0 %v6782
    %8000 = vmatpush1.bf16.msra.mxu0 %v6781
    %8001 = vmatprep.subr.bf16.mxu0 %v6796
    %8002 = vmatpush1.bf16.msra.mxu0 %v6795
    %8003 = vmatprep.subr.bf16.mxu0 %v6810
    %8004 = vmatpush1.bf16.msra.mxu0 %v6809
    %8005 = vmatprep.subr.bf16.mxu0 %v6824
    %8006 = vmatpush1.bf16.msra.mxu0 %v6823
    %8007 = vmatprep.subr.bf16.mxu0 %v6838
    %8008 = vmatpush1.bf16.msra.mxu0 %v6837
    %8009 = vmatprep.subr.bf16.mxu0 %v6852
    %8010 = vmatpush1.bf16.msra.mxu0 %v6851
    %8011 = vmatprep.subr.bf16.mxu0 %v6866
    %8012 = vmatpush1.bf16.msra.mxu0 %v6865
    %8013 = vmatprep.subr.bf16.mxu0 %v6880
    %8014 = vmatpush1.bf16.msra.mxu0 %v6879
    %8015 = vmatprep.subr.bf16.mxu0 %v6894
    %8016 = vmatpush1.bf16.msra.mxu0 %v6893
    %8017 = vmatprep.mubr.bf16.mxu0 %v7576
    %8018 = vmatmul.mubr.bf16.gmra.mrb[0].mxu0 %v7575
    %v8019 = vpop.f32.mrb[0].mxu0
    %v8020 = vadd.f32 %v7606, %v8019
    %v8021 = vpop.f32.mrb[0].mxu0
    %v8022 = vadd.f32 %v7610, %v8021
    %v8023 = vpop.f32.mrb[0].mxu0
    %v8024 = vpop.f32.mrb[0].mxu0
    %8025 = vdwg.mxu0
    %8026 = vmatprep.subr.bf16.mxu0 %v6908
    %8027 = vmatpush1.bf16.msra.mxu0 %v6907
    %8028 = vmatprep.subr.bf16.mxu0 %v6922
    %8029 = vmatpush1.bf16.msra.mxu0 %v6921
    %8030 = vmatprep.subr.bf16.mxu0 %v6936
    %8031 = vmatpush1.bf16.msra.mxu0 %v6935
    %8032 = vmatprep.subr.bf16.mxu0 %v6950
    %8033 = vmatpush1.bf16.msra.mxu0 %v6949
    %8034 = vmatprep.subr.bf16.mxu0 %v6964
    %8035 = vmatpush1.bf16.msra.mxu0 %v6963
    %8036 = vmatprep.subr.bf16.mxu0 %v6978
    %8037 = vmatpush1.bf16.msra.mxu0 %v6977
    %8038 = vmatprep.subr.bf16.mxu0 %v6992
    %8039 = vmatpush1.bf16.msra.mxu0 %v6991
    %8040 = vmatprep.subr.bf16.mxu0 %v7006
    %8041 = vmatpush1.bf16.msra.mxu0 %v7005
    %8042 = vmatprep.subr.bf16.mxu0 %v7020
    %8043 = vmatpush1.bf16.msra.mxu0 %v7019
    %8044 = vmatprep.subr.bf16.mxu0 %v7034
    %8045 = vmatpush1.bf16.msra.mxu0 %v7033
    %8046 = vmatprep.subr.bf16.mxu0 %v7048
    %8047 = vmatpush1.bf16.msra.mxu0 %v7047
    %8048 = vmatprep.subr.bf16.mxu0 %v7062
    %8049 = vmatpush1.bf16.msra.mxu0 %v7061
    %8050 = vmatprep.subr.bf16.mxu0 %v7076
    %8051 = vmatpush1.bf16.msra.mxu0 %v7075
    %8052 = vmatprep.subr.bf16.mxu0 %v7090
    %8053 = vmatpush1.bf16.msra.mxu0 %v7089
    %8054 = vmatprep.subr.bf16.mxu0 %v7104
    %8055 = vmatpush1.bf16.msra.mxu0 %v7103
    %8056 = vmatprep.subr.bf16.mxu0 %v7118
    %8057 = vmatpush1.bf16.msra.mxu0 %v7117
    %8058 = vmatprep.mubr.bf16.mxu0 %v7578
    %8059 = vmatmul.mubr.bf16.gmra.mrb[0].mxu0 %v7577
    %v8060 = vpop.f32.mrb[0].mxu0
    %v8061 = vadd.f32 %v8020, %v8060
    %v8062 = vpop.f32.mrb[0].mxu0
    %v8063 = vadd.f32 %v8022, %v8062
    %v8064 = vpop.f32.mrb[0].mxu0
    %v8065 = vpop.f32.mrb[0].mxu0
    %8066 = vdwg.mxu0
    %8067 = vmatprep.subr.bf16.mxu0 %v7132
    %8068 = vmatpush1.bf16.msra.mxu0 %v7131
    %8069 = vmatprep.subr.bf16.mxu0 %v7146
    %8070 = vmatpush1.bf16.msra.mxu0 %v7145
    %8071 = vmatprep.subr.bf16.mxu0 %v7160
    %8072 = vmatpush1.bf16.msra.mxu0 %v7159
    %8073 = vmatprep.subr.bf16.mxu0 %v7174
    %8074 = vmatpush1.bf16.msra.mxu0 %v7173
    %8075 = vmatprep.subr.bf16.mxu0 %v7188
    %8076 = vmatpush1.bf16.msra.mxu0 %v7187
    %8077 = vmatprep.subr.bf16.mxu0 %v7202
    %8078 = vmatpush1.bf16.msra.mxu0 %v7201
    %8079 = vmatprep.subr.bf16.mxu0 %v7216
    %8080 = vmatpush1.bf16.msra.mxu0 %v7215
    %8081 = vmatprep.subr.bf16.mxu0 %v7230
    %8082 = vmatpush1.bf16.msra.mxu0 %v7229
    %8083 = vmatprep.subr.bf16.mxu0 %v7244
    %8084 = vmatpush1.bf16.msra.mxu0 %v7243
    %8085 = vmatprep.subr.bf16.mxu0 %v7258
    %8086 = vmatpush1.bf16.msra.mxu0 %v7257
    %8087 = vmatprep.subr.bf16.mxu0 %v7272
    %8088 = vmatpush1.bf16.msra.mxu0 %v7271
    %8089 = vmatprep.subr.bf16.mxu0 %v7286
    %8090 = vmatpush1.bf16.msra.mxu0 %v7285
    %8091 = vmatprep.subr.bf16.mxu0 %v7300
    %8092 = vmatpush1.bf16.msra.mxu0 %v7299
    %8093 = vmatprep.subr.bf16.mxu0 %v7314
    %8094 = vmatpush1.bf16.msra.mxu0 %v7313
    %8095 = vmatprep.subr.bf16.mxu0 %v7328
    %8096 = vmatpush1.bf16.msra.mxu0 %v7327
    %8097 = vmatprep.subr.bf16.mxu0 %v7342
    %8098 = vmatpush1.bf16.msra.mxu0 %v7341
    %8099 = vmatprep.mubr.bf16.mxu0 %v7580
    %8100 = vmatmul.mubr.bf16.gmra.mrb[0].mxu0 %v7579
    %v8101 = vpop.f32.mrb[0].mxu0
    %v8102 = vadd.f32 %v8061, %v8101
    %v8103 = vpop.f32.mrb[0].mxu0
    %v8104 = vadd.f32 %v8063, %v8103
    %v8105 = vpop.f32.mrb[0].mxu0
    %v8106 = vpop.f32.mrb[0].mxu0
    %8107 = vdwg.mxu0
    %8108 = vmatprep.subr.bf16.mxu0 %v7356
    %8109 = vmatpush1.bf16.msra.mxu0 %v7355
    %8110 = vmatprep.subr.bf16.mxu0 %v7370
    %8111 = vmatpush1.bf16.msra.mxu0 %v7369
    %8112 = vmatprep.subr.bf16.mxu0 %v7384
    %8113 = vmatpush1.bf16.msra.mxu0 %v7383
    %8114 = vmatprep.subr.bf16.mxu0 %v7398
    %8115 = vmatpush1.bf16.msra.mxu0 %v7397
    %8116 = vmatprep.subr.bf16.mxu0 %v7412
    %8117 = vmatpush1.bf16.msra.mxu0 %v7411
    %8118 = vmatprep.subr.bf16.mxu0 %v7426
    %8119 = vmatpush1.bf16.msra.mxu0 %v7425
    %8120 = vmatprep.subr.bf16.mxu0 %v7440
    %8121 = vmatpush1.bf16.msra.mxu0 %v7439
    %8122 = vmatprep.subr.bf16.mxu0 %v7454
    %8123 = vmatpush1.bf16.msra.mxu0 %v7453
    %8124 = vmatprep.subr.bf16.mxu0 %v7468
    %8125 = vmatpush1.bf16.msra.mxu0 %v7467
    %8126 = vmatprep.subr.bf16.mxu0 %v7482
    %8127 = vmatpush1.bf16.msra.mxu0 %v7481
    %8128 = vmatprep.subr.bf16.mxu0 %v7496
    %8129 = vmatpush1.bf16.msra.mxu0 %v7495
    %8130 = vmatprep.subr.bf16.mxu0 %v7510
    %8131 = vmatpush1.bf16.msra.mxu0 %v7509
    %8132 = vmatprep.subr.bf16.mxu0 %v7524
    %8133 = vmatpush1.bf16.msra.mxu0 %v7523
    %8134 = vmatprep.subr.bf16.mxu0 %v7538
    %8135 = vmatpush1.bf16.msra.mxu0 %v7537
    %8136 = vmatprep.subr.bf16.mxu0 %v7552
    %8137 = vmatpush1.bf16.msra.mxu0 %v7551
    %8138 = vmatprep.subr.bf16.mxu0 %v7566
    %8139 = vmatpush1.bf16.msra.mxu0 %v7565
    %8140 = vmatprep.mubr.bf16.mxu0 %v7582
    %8141 = vmatmul.mubr.bf16.gmra.mrb[0].mxu0 %v7581
    %v8142 = vpop.f32.mrb[0].mxu0
    %v8143 = vadd.f32 %v8102, %v8142
    %v8144 = vpop.f32.mrb[0].mxu0
    %v8145 = vadd.f32 %v8104, %v8144
    %v8146 = vpop.f32.mrb[0].mxu0
    %v8147 = vpop.f32.mrb[0].mxu0
    %8148 = vdwg.mxu0
    %8149 = vmatprep.subr.bf16.mxu0 %v6686
    %8150 = vmatpush1.bf16.msra.mxu0 %v6685
    %8151 = vmatprep.subr.bf16.mxu0 %v6700
    %8152 = vmatpush1.bf16.msra.mxu0 %v6699
    %8153 = vmatprep.subr.bf16.mxu0 %v6714
    %8154 = vmatpush1.bf16.msra.mxu0 %v6713
    %8155 = vmatprep.subr.bf16.mxu0 %v6728
    %8156 = vmatpush1.bf16.msra.mxu0 %v6727
    %8157 = vmatprep.subr.bf16.mxu0 %v6742
    %8158 = vmatpush1.bf16.msra.mxu0 %v6741
    %8159 = vmatprep.subr.bf16.mxu0 %v6756
    %8160 = vmatpush1.bf16.msra.mxu0 %v6755
    %8161 = vmatprep.subr.bf16.mxu0 %v6770
    %8162 = vmatpush1.bf16.msra.mxu0 %v6769
    %8163 = vmatprep.subr.bf16.mxu0 %v6784
    %8164 = vmatpush1.bf16.msra.mxu0 %v6783
    %8165 = vmatprep.subr.bf16.mxu0 %v6798
    %8166 = vmatpush1.bf16.msra.mxu0 %v6797
    %8167 = vmatprep.subr.bf16.mxu0 %v6812
    %8168 = vmatpush1.bf16.msra.mxu0 %v6811
    %8169 = vmatprep.subr.bf16.mxu0 %v6826
    %8170 = vmatpush1.bf16.msra.mxu0 %v6825
    %8171 = vmatprep.subr.bf16.mxu0 %v6840
    %8172 = vmatpush1.bf16.msra.mxu0 %v6839
    %8173 = vmatprep.subr.bf16.mxu0 %v6854
    %8174 = vmatpush1.bf16.msra.mxu0 %v6853
    %8175 = vmatprep.subr.bf16.mxu0 %v6868
    %8176 = vmatpush1.bf16.msra.mxu0 %v6867
    %8177 = vmatprep.subr.bf16.mxu0 %v6882
    %8178 = vmatpush1.bf16.msra.mxu0 %v6881
    %8179 = vmatprep.subr.bf16.mxu0 %v6896
    %8180 = vmatpush1.bf16.msra.mxu0 %v6895
    %8181 = vmatprep.mubr.bf16.mxu0 %v7576
    %8182 = vmatmul.mubr.bf16.gmra.mrb[0].mxu0 %v7575
    %v8183 = vpop.f32.mrb[0].mxu0
    %v8184 = vadd.f32 %v7614, %v8183
    %v8185 = vpop.f32.mrb[0].mxu0
    %v8186 = vadd.f32 %v7618, %v8185
    %v8187 = vpop.f32.mrb[0].mxu0
    %v8188 = vpop.f32.mrb[0].mxu0
    %8189 = vdwg.mxu0
    %8190 = vmatprep.subr.bf16.mxu0 %v6910
    %8191 = vmatpush1.bf16.msra.mxu0 %v6909
    %8192 = vmatprep.subr.bf16.mxu0 %v6924
    %8193 = vmatpush1.bf16.msra.mxu0 %v6923
    %8194 = vmatprep.subr.bf16.mxu0 %v6938
    %8195 = vmatpush1.bf16.msra.mxu0 %v6937
    %8196 = vmatprep.subr.bf16.mxu0 %v6952
    %8197 = vmatpush1.bf16.msra.mxu0 %v6951
    %8198 = vmatprep.subr.bf16.mxu0 %v6966
    %8199 = vmatpush1.bf16.msra.mxu0 %v6965
    %8200 = vmatprep.subr.bf16.mxu0 %v6980
    %8201 = vmatpush1.bf16.msra.mxu0 %v6979
    %8202 = vmatprep.subr.bf16.mxu0 %v6994
    %8203 = vmatpush1.bf16.msra.mxu0 %v6993
    %8204 = vmatprep.subr.bf16.mxu0 %v7008
    %8205 = vmatpush1.bf16.msra.mxu0 %v7007
    %8206 = vmatprep.subr.bf16.mxu0 %v7022
    %8207 = vmatpush1.bf16.msra.mxu0 %v7021
    %8208 = vmatprep.subr.bf16.mxu0 %v7036
    %8209 = vmatpush1.bf16.msra.mxu0 %v7035
    %8210 = vmatprep.subr.bf16.mxu0 %v7050
    %8211 = vmatpush1.bf16.msra.mxu0 %v7049
    %8212 = vmatprep.subr.bf16.mxu0 %v7064
    %8213 = vmatpush1.bf16.msra.mxu0 %v7063
    %8214 = vmatprep.subr.bf16.mxu0 %v7078
    %8215 = vmatpush1.bf16.msra.mxu0 %v7077
    %8216 = vmatprep.subr.bf16.mxu0 %v7092
    %8217 = vmatpush1.bf16.msra.mxu0 %v7091
    %8218 = vmatprep.subr.bf16.mxu0 %v7106
    %8219 = vmatpush1.bf16.msra.mxu0 %v7105
    %8220 = vmatprep.subr.bf16.mxu0 %v7120
    %8221 = vmatpush1.bf16.msra.mxu0 %v7119
    %8222 = vmatprep.mubr.bf16.mxu0 %v7578
    %8223 = vmatmul.mubr.bf16.gmra.mrb[0].mxu0 %v7577
    %v8224 = vpop.f32.mrb[0].mxu0
    %v8225 = vadd.f32 %v8184, %v8224
    %v8226 = vpop.f32.mrb[0].mxu0
    %v8227 = vadd.f32 %v8186, %v8226
    %v8228 = vpop.f32.mrb[0].mxu0
    %v8229 = vpop.f32.mrb[0].mxu0
    %8230 = vdwg.mxu0
    %8231 = vmatprep.subr.bf16.mxu0 %v7134
    %8232 = vmatpush1.bf16.msra.mxu0 %v7133
    %8233 = vmatprep.subr.bf16.mxu0 %v7148
    %8234 = vmatpush1.bf16.msra.mxu0 %v7147
    %8235 = vmatprep.subr.bf16.mxu0 %v7162
    %8236 = vmatpush1.bf16.msra.mxu0 %v7161
    %8237 = vmatprep.subr.bf16.mxu0 %v7176
    %8238 = vmatpush1.bf16.msra.mxu0 %v7175
    %8239 = vmatprep.subr.bf16.mxu0 %v7190
    %8240 = vmatpush1.bf16.msra.mxu0 %v7189
    %8241 = vmatprep.subr.bf16.mxu0 %v7204
    %8242 = vmatpush1.bf16.msra.mxu0 %v7203
    %8243 = vmatprep.subr.bf16.mxu0 %v7218
    %8244 = vmatpush1.bf16.msra.mxu0 %v7217
    %8245 = vmatprep.subr.bf16.mxu0 %v7232
    %8246 = vmatpush1.bf16.msra.mxu0 %v7231
    %8247 = vmatprep.subr.bf16.mxu0 %v7246
    %8248 = vmatpush1.bf16.msra.mxu0 %v7245
    %8249 = vmatprep.subr.bf16.mxu0 %v7260
    %8250 = vmatpush1.bf16.msra.mxu0 %v7259
    %8251 = vmatprep.subr.bf16.mxu0 %v7274
    %8252 = vmatpush1.bf16.msra.mxu0 %v7273
    %8253 = vmatprep.subr.bf16.mxu0 %v7288
    %8254 = vmatpush1.bf16.msra.mxu0 %v7287
    %8255 = vmatprep.subr.bf16.mxu0 %v7302
    %8256 = vmatpush1.bf16.msra.mxu0 %v7301
    %8257 = vmatprep.subr.bf16.mxu0 %v7316
    %8258 = vmatpush1.bf16.msra.mxu0 %v7315
    %8259 = vmatprep.subr.bf16.mxu0 %v7330
    %8260 = vmatpush1.bf16.msra.mxu0 %v7329
    %8261 = vmatprep.subr.bf16.mxu0 %v7344
    %8262 = vmatpush1.bf16.msra.mxu0 %v7343
    %8263 = vmatprep.mubr.bf16.mxu0 %v7580
    %8264 = vmatmul.mubr.bf16.gmra.mrb[0].mxu0 %v7579
    %v8265 = vpop.f32.mrb[0].mxu0
    %v8266 = vadd.f32 %v8225, %v8265
    %v8267 = vpop.f32.mrb[0].mxu0
    %v8268 = vadd.f32 %v8227, %v8267
    %v8269 = vpop.f32.mrb[0].mxu0
    %v8270 = vpop.f32.mrb[0].mxu0
    %8271 = vdwg.mxu0
    %8272 = vmatprep.subr.bf16.mxu0 %v7358
    %8273 = vmatpush1.bf16.msra.mxu0 %v7357
    %8274 = vmatprep.subr.bf16.mxu0 %v7372
    %8275 = vmatpush1.bf16.msra.mxu0 %v7371
    %8276 = vmatprep.subr.bf16.mxu0 %v7386
    %8277 = vmatpush1.bf16.msra.mxu0 %v7385
    %8278 = vmatprep.subr.bf16.mxu0 %v7400
    %8279 = vmatpush1.bf16.msra.mxu0 %v7399
    %8280 = vmatprep.subr.bf16.mxu0 %v7414
    %8281 = vmatpush1.bf16.msra.mxu0 %v7413
    %8282 = vmatprep.subr.bf16.mxu0 %v7428
    %8283 = vmatpush1.bf16.msra.mxu0 %v7427
    %8284 = vmatprep.subr.bf16.mxu0 %v7442
    %8285 = vmatpush1.bf16.msra.mxu0 %v7441
    %8286 = vmatprep.subr.bf16.mxu0 %v7456
    %8287 = vmatpush1.bf16.msra.mxu0 %v7455
    %8288 = vmatprep.subr.bf16.mxu0 %v7470
    %8289 = vmatpush1.bf16.msra.mxu0 %v7469
    %8290 = vmatprep.subr.bf16.mxu0 %v7484
    %8291 = vmatpush1.bf16.msra.mxu0 %v7483
    %8292 = vmatprep.subr.bf16.mxu0 %v7498
    %8293 = vmatpush1.bf16.msra.mxu0 %v7497
    %8294 = vmatprep.subr.bf16.mxu0 %v7512
    %8295 = vmatpush1.bf16.msra.mxu0 %v7511
    %8296 = vmatprep.subr.bf16.mxu0 %v7526
    %8297 = vmatpush1.bf16.msra.mxu0 %v7525
    %8298 = vmatprep.subr.bf16.mxu0 %v7540
    %8299 = vmatpush1.bf16.msra.mxu0 %v7539
    %8300 = vmatprep.subr.bf16.mxu0 %v7554
    %8301 = vmatpush1.bf16.msra.mxu0 %v7553
    %8302 = vmatprep.subr.bf16.mxu0 %v7568
    %8303 = vmatpush1.bf16.msra.mxu0 %v7567
    %8304 = vmatprep.mubr.bf16.mxu0 %v7582
    %8305 = vmatmul.mubr.bf16.gmra.mrb[0].mxu0 %v7581
    %v8306 = vpop.f32.mrb[0].mxu0
    %v8307 = vadd.f32 %v8266, %v8306
    %v8308 = vpop.f32.mrb[0].mxu0
    %v8309 = vadd.f32 %v8268, %v8308
    %v8310 = vpop.f32.mrb[0].mxu0
    %v8311 = vpop.f32.mrb[0].mxu0
    %8312 = vdwg.mxu0
    %8313 = vmatprep.subr.bf16.mxu0 %v6688
    %8314 = vmatpush1.bf16.msra.mxu0 %v6687
    %8315 = vmatprep.subr.bf16.mxu0 %v6702
    %8316 = vmatpush1.bf16.msra.mxu0 %v6701
    %8317 = vmatprep.subr.bf16.mxu0 %v6716
    %8318 = vmatpush1.bf16.msra.mxu0 %v6715
    %8319 = vmatprep.subr.bf16.mxu0 %v6730
    %8320 = vmatpush1.bf16.msra.mxu0 %v6729
    %8321 = vmatprep.subr.bf16.mxu0 %v6744
    %8322 = vmatpush1.bf16.msra.mxu0 %v6743
    %8323 = vmatprep.subr.bf16.mxu0 %v6758
    %8324 = vmatpush1.bf16.msra.mxu0 %v6757
    %8325 = vmatprep.subr.bf16.mxu0 %v6772
    %8326 = vmatpush1.bf16.msra.mxu0 %v6771
    %8327 = vmatprep.subr.bf16.mxu0 %v6786
    %8328 = vmatpush1.bf16.msra.mxu0 %v6785
    %8329 = vmatprep.subr.bf16.mxu0 %v6800
    %8330 = vmatpush1.bf16.msra.mxu0 %v6799
    %8331 = vmatprep.subr.bf16.mxu0 %v6814
    %8332 = vmatpush1.bf16.msra.mxu0 %v6813
    %8333 = vmatprep.subr.bf16.mxu0 %v6828
    %8334 = vmatpush1.bf16.msra.mxu0 %v6827
    %8335 = vmatprep.subr.bf16.mxu0 %v6842
    %8336 = vmatpush1.bf16.msra.mxu0 %v6841
    %8337 = vmatprep.subr.bf16.mxu0 %v6856
    %8338 = vmatpush1.bf16.msra.mxu0 %v6855
    %8339 = vmatprep.subr.bf16.mxu0 %v6870
    %8340 = vmatpush1.bf16.msra.mxu0 %v6869
    %8341 = vmatprep.subr.bf16.mxu0 %v6884
    %8342 = vmatpush1.bf16.msra.mxu0 %v6883
    %8343 = vmatprep.subr.bf16.mxu0 %v6898
    %8344 = vmatpush1.bf16.msra.mxu0 %v6897
    %8345 = vmatprep.mubr.bf16.mxu0 %v7576
    %8346 = vmatmul.mubr.bf16.gmra.mrb[0].mxu0 %v7575
    %v8347 = vpop.f32.mrb[0].mxu0
    %v8348 = vadd.f32 %v7622, %v8347
    %v8349 = vpop.f32.mrb[0].mxu0
    %v8350 = vadd.f32 %v7626, %v8349
    %v8351 = vpop.f32.mrb[0].mxu0
    %v8352 = vpop.f32.mrb[0].mxu0
    %8353 = vdwg.mxu0
    %8354 = vmatprep.subr.bf16.mxu0 %v6912
    %8355 = vmatpush1.bf16.msra.mxu0 %v6911
    %8356 = vmatprep.subr.bf16.mxu0 %v6926
    %8357 = vmatpush1.bf16.msra.mxu0 %v6925
    %8358 = vmatprep.subr.bf16.mxu0 %v6940
    %8359 = vmatpush1.bf16.msra.mxu0 %v6939
    %8360 = vmatprep.subr.bf16.mxu0 %v6954
    %8361 = vmatpush1.bf16.msra.mxu0 %v6953
    %8362 = vmatprep.subr.bf16.mxu0 %v6968
    %8363 = vmatpush1.bf16.msra.mxu0 %v6967
    %8364 = vmatprep.subr.bf16.mxu0 %v6982
    %8365 = vmatpush1.bf16.msra.mxu0 %v6981
    %8366 = vmatprep.subr.bf16.mxu0 %v6996
    %8367 = vmatpush1.bf16.msra.mxu0 %v6995
    %8368 = vmatprep.subr.bf16.mxu0 %v7010
    %8369 = vmatpush1.bf16.msra.mxu0 %v7009
    %8370 = vmatprep.subr.bf16.mxu0 %v7024
    %8371 = vmatpush1.bf16.msra.mxu0 %v7023
    %8372 = vmatprep.subr.bf16.mxu0 %v7038
    %8373 = vmatpush1.bf16.msra.mxu0 %v7037
    %8374 = vmatprep.subr.bf16.mxu0 %v7052
    %8375 = vmatpush1.bf16.msra.mxu0 %v7051
    %8376 = vmatprep.subr.bf16.mxu0 %v7066
    %8377 = vmatpush1.bf16.msra.mxu0 %v7065
    %8378 = vmatprep.subr.bf16.mxu0 %v7080
    %8379 = vmatpush1.bf16.msra.mxu0 %v7079
    %8380 = vmatprep.subr.bf16.mxu0 %v7094
    %8381 = vmatpush1.bf16.msra.mxu0 %v7093
    %8382 = vmatprep.subr.bf16.mxu0 %v7108
    %8383 = vmatpush1.bf16.msra.mxu0 %v7107
    %8384 = vmatprep.subr.bf16.mxu0 %v7122
    %8385 = vmatpush1.bf16.msra.mxu0 %v7121
    %8386 = vmatprep.mubr.bf16.mxu0 %v7578
    %8387 = vmatmul.mubr.bf16.gmra.mrb[0].mxu0 %v7577
    %v8388 = vpop.f32.mrb[0].mxu0
    %v8389 = vadd.f32 %v8348, %v8388
    %v8390 = vpop.f32.mrb[0].mxu0
    %v8391 = vadd.f32 %v8350, %v8390
    %v8392 = vpop.f32.mrb[0].mxu0
    %v8393 = vpop.f32.mrb[0].mxu0
    %8394 = vdwg.mxu0
    %8395 = vmatprep.subr.bf16.mxu0 %v7136
    %8396 = vmatpush1.bf16.msra.mxu0 %v7135
    %8397 = vmatprep.subr.bf16.mxu0 %v7150
    %8398 = vmatpush1.bf16.msra.mxu0 %v7149
    %8399 = vmatprep.subr.bf16.mxu0 %v7164
    %8400 = vmatpush1.bf16.msra.mxu0 %v7163
    %8401 = vmatprep.subr.bf16.mxu0 %v7178
    %8402 = vmatpush1.bf16.msra.mxu0 %v7177
    %8403 = vmatprep.subr.bf16.mxu0 %v7192
    %8404 = vmatpush1.bf16.msra.mxu0 %v7191
    %8405 = vmatprep.subr.bf16.mxu0 %v7206
    %8406 = vmatpush1.bf16.msra.mxu0 %v7205
    %8407 = vmatprep.subr.bf16.mxu0 %v7220
    %8408 = vmatpush1.bf16.msra.mxu0 %v7219
    %8409 = vmatprep.subr.bf16.mxu0 %v7234
    %8410 = vmatpush1.bf16.msra.mxu0 %v7233
    %8411 = vmatprep.subr.bf16.mxu0 %v7248
    %8412 = vmatpush1.bf16.msra.mxu0 %v7247
    %8413 = vmatprep.subr.bf16.mxu0 %v7262
    %8414 = vmatpush1.bf16.msra.mxu0 %v7261
    %8415 = vmatprep.subr.bf16.mxu0 %v7276
    %8416 = vmatpush1.bf16.msra.mxu0 %v7275
    %8417 = vmatprep.subr.bf16.mxu0 %v7290
    %8418 = vmatpush1.bf16.msra.mxu0 %v7289
    %8419 = vmatprep.subr.bf16.mxu0 %v7304
    %8420 = vmatpush1.bf16.msra.mxu0 %v7303
    %8421 = vmatprep.subr.bf16.mxu0 %v7318
    %8422 = vmatpush1.bf16.msra.mxu0 %v7317
    %8423 = vmatprep.subr.bf16.mxu0 %v7332
    %8424 = vmatpush1.bf16.msra.mxu0 %v7331
    %8425 = vmatprep.subr.bf16.mxu0 %v7346
    %8426 = vmatpush1.bf16.msra.mxu0 %v7345
    %8427 = vmatprep.mubr.bf16.mxu0 %v7580
    %8428 = vmatmul.mubr.bf16.gmra.mrb[0].mxu0 %v7579
    %v8429 = vpop.f32.mrb[0].mxu0
    %v8430 = vadd.f32 %v8389, %v8429
    %v8431 = vpop.f32.mrb[0].mxu0
    %v8432 = vadd.f32 %v8391, %v8431
    %v8433 = vpop.f32.mrb[0].mxu0
    %v8434 = vpop.f32.mrb[0].mxu0
    %8435 = vdwg.mxu0
    %8436 = vmatprep.subr.bf16.mxu0 %v7360
    %8437 = vmatpush1.bf16.msra.mxu0 %v7359
    %8438 = vmatprep.subr.bf16.mxu0 %v7374
    %8439 = vmatpush1.bf16.msra.mxu0 %v7373
    %8440 = vmatprep.subr.bf16.mxu0 %v7388
    %8441 = vmatpush1.bf16.msra.mxu0 %v7387
    %8442 = vmatprep.subr.bf16.mxu0 %v7402
    %8443 = vmatpush1.bf16.msra.mxu0 %v7401
    %8444 = vmatprep.subr.bf16.mxu0 %v7416
    %8445 = vmatpush1.bf16.msra.mxu0 %v7415
    %8446 = vmatprep.subr.bf16.mxu0 %v7430
    %8447 = vmatpush1.bf16.msra.mxu0 %v7429
    %8448 = vmatprep.subr.bf16.mxu0 %v7444
    %8449 = vmatpush1.bf16.msra.mxu0 %v7443
    %8450 = vmatprep.subr.bf16.mxu0 %v7458
    %8451 = vmatpush1.bf16.msra.mxu0 %v7457
    %8452 = vmatprep.subr.bf16.mxu0 %v7472
    %8453 = vmatpush1.bf16.msra.mxu0 %v7471
    %8454 = vmatprep.subr.bf16.mxu0 %v7486
    %8455 = vmatpush1.bf16.msra.mxu0 %v7485
    %8456 = vmatprep.subr.bf16.mxu0 %v7500
    %8457 = vmatpush1.bf16.msra.mxu0 %v7499
    %8458 = vmatprep.subr.bf16.mxu0 %v7514
    %8459 = vmatpush1.bf16.msra.mxu0 %v7513
    %8460 = vmatprep.subr.bf16.mxu0 %v7528
    %8461 = vmatpush1.bf16.msra.mxu0 %v7527
    %8462 = vmatprep.subr.bf16.mxu0 %v7542
    %8463 = vmatpush1.bf16.msra.mxu0 %v7541
    %8464 = vmatprep.subr.bf16.mxu0 %v7556
    %8465 = vmatpush1.bf16.msra.mxu0 %v7555
    %8466 = vmatprep.subr.bf16.mxu0 %v7570
    %8467 = vmatpush1.bf16.msra.mxu0 %v7569
    %8468 = vmatprep.mubr.bf16.mxu0 %v7582
    %8469 = vmatmul.mubr.bf16.gmra.mrb[0].mxu0 %v7581
    %v8470 = vpop.f32.mrb[0].mxu0
    %v8471 = vadd.f32 %v8430, %v8470
    %v8472 = vpop.f32.mrb[0].mxu0
    %v8473 = vadd.f32 %v8432, %v8472
    %v8474 = vpop.f32.mrb[0].mxu0
    %v8475 = vpop.f32.mrb[0].mxu0
    %8476 = vdwg.mxu0
    %8477 = vmatprep.subr.bf16.mxu0 %v6690
    %8478 = vmatpush1.bf16.msra.mxu0 %v6689
    %8479 = vmatprep.subr.bf16.mxu0 %v6704
    %8480 = vmatpush1.bf16.msra.mxu0 %v6703
    %8481 = vmatprep.subr.bf16.mxu0 %v6718
    %8482 = vmatpush1.bf16.msra.mxu0 %v6717
    %8483 = vmatprep.subr.bf16.mxu0 %v6732
    %8484 = vmatpush1.bf16.msra.mxu0 %v6731
    %8485 = vmatprep.subr.bf16.mxu0 %v6746
    %8486 = vmatpush1.bf16.msra.mxu0 %v6745
    %8487 = vmatprep.subr.bf16.mxu0 %v6760
    %8488 = vmatpush1.bf16.msra.mxu0 %v6759
    %8489 = vmatprep.subr.bf16.mxu0 %v6774
    %8490 = vmatpush1.bf16.msra.mxu0 %v6773
    %8491 = vmatprep.subr.bf16.mxu0 %v6788
    %8492 = vmatpush1.bf16.msra.mxu0 %v6787
    %8493 = vmatprep.subr.bf16.mxu0 %v6802
    %8494 = vmatpush1.bf16.msra.mxu0 %v6801
    %8495 = vmatprep.subr.bf16.mxu0 %v6816
    %8496 = vmatpush1.bf16.msra.mxu0 %v6815
    %8497 = vmatprep.subr.bf16.mxu0 %v6830
    %8498 = vmatpush1.bf16.msra.mxu0 %v6829
    %8499 = vmatprep.subr.bf16.mxu0 %v6844
    %8500 = vmatpush1.bf16.msra.mxu0 %v6843
    %8501 = vmatprep.subr.bf16.mxu0 %v6858
    %8502 = vmatpush1.bf16.msra.mxu0 %v6857
    %8503 = vmatprep.subr.bf16.mxu0 %v6872
    %8504 = vmatpush1.bf16.msra.mxu0 %v6871
    %8505 = vmatprep.subr.bf16.mxu0 %v6886
    %8506 = vmatpush1.bf16.msra.mxu0 %v6885
    %8507 = vmatprep.subr.bf16.mxu0 %v6900
    %8508 = vmatpush1.bf16.msra.mxu0 %v6899
    %8509 = vmatprep.mubr.bf16.mxu0 %v7576
    %8510 = vmatmul.mubr.bf16.gmra.mrb[0].mxu0 %v7575
    %v8511 = vpop.f32.mrb[0].mxu0
    %v8512 = vadd.f32 %v7630, %v8511
    %v8513 = vpop.f32.mrb[0].mxu0
    %v8514 = vadd.f32 %v7634, %v8513
    %v8515 = vpop.f32.mrb[0].mxu0
    %v8516 = vpop.f32.mrb[0].mxu0
    %8517 = vdwg.mxu0
    %8518 = vmatprep.subr.bf16.mxu0 %v6914
    %8519 = vmatpush1.bf16.msra.mxu0 %v6913
    %8520 = vmatprep.subr.bf16.mxu0 %v6928
    %8521 = vmatpush1.bf16.msra.mxu0 %v6927
    %8522 = vmatprep.subr.bf16.mxu0 %v6942
    %8523 = vmatpush1.bf16.msra.mxu0 %v6941
    %8524 = vmatprep.subr.bf16.mxu0 %v6956
    %8525 = vmatpush1.bf16.msra.mxu0 %v6955
    %8526 = vmatprep.subr.bf16.mxu0 %v6970
    %8527 = vmatpush1.bf16.msra.mxu0 %v6969
    %8528 = vmatprep.subr.bf16.mxu0 %v6984
    %8529 = vmatpush1.bf16.msra.mxu0 %v6983
    %8530 = vmatprep.subr.bf16.mxu0 %v6998
    %8531 = vmatpush1.bf16.msra.mxu0 %v6997
    %8532 = vmatprep.subr.bf16.mxu0 %v7012
    %8533 = vmatpush1.bf16.msra.mxu0 %v7011
    %8534 = vmatprep.subr.bf16.mxu0 %v7026
    %8535 = vmatpush1.bf16.msra.mxu0 %v7025
    %8536 = vmatprep.subr.bf16.mxu0 %v7040
    %8537 = vmatpush1.bf16.msra.mxu0 %v7039
    %8538 = vmatprep.subr.bf16.mxu0 %v7054
    %8539 = vmatpush1.bf16.msra.mxu0 %v7053
    %8540 = vmatprep.subr.bf16.mxu0 %v7068
    %8541 = vmatpush1.bf16.msra.mxu0 %v7067
    %8542 = vmatprep.subr.bf16.mxu0 %v7082
    %8543 = vmatpush1.bf16.msra.mxu0 %v7081
    %8544 = vmatprep.subr.bf16.mxu0 %v7096
    %8545 = vmatpush1.bf16.msra.mxu0 %v7095
    %8546 = vmatprep.subr.bf16.mxu0 %v7110
    %8547 = vmatpush1.bf16.msra.mxu0 %v7109
    %8548 = vmatprep.subr.bf16.mxu0 %v7124
    %8549 = vmatpush1.bf16.msra.mxu0 %v7123
    %8550 = vmatprep.mubr.bf16.mxu0 %v7578
    %8551 = vmatmul.mubr.bf16.gmra.mrb[0].mxu0 %v7577
    %v8552 = vpop.f32.mrb[0].mxu0
    %v8553 = vadd.f32 %v8512, %v8552
    %v8554 = vpop.f32.mrb[0].mxu0
    %v8555 = vadd.f32 %v8514, %v8554
    %v8556 = vpop.f32.mrb[0].mxu0
    %v8557 = vpop.f32.mrb[0].mxu0
    %8558 = vdwg.mxu0
    %8559 = vmatprep.subr.bf16.mxu0 %v7138
    %8560 = vmatpush1.bf16.msra.mxu0 %v7137
    %8561 = vmatprep.subr.bf16.mxu0 %v7152
    %8562 = vmatpush1.bf16.msra.mxu0 %v7151
    %8563 = vmatprep.subr.bf16.mxu0 %v7166
    %8564 = vmatpush1.bf16.msra.mxu0 %v7165
    %8565 = vmatprep.subr.bf16.mxu0 %v7180
    %8566 = vmatpush1.bf16.msra.mxu0 %v7179
    %8567 = vmatprep.subr.bf16.mxu0 %v7194
    %8568 = vmatpush1.bf16.msra.mxu0 %v7193
    %8569 = vmatprep.subr.bf16.mxu0 %v7208
    %8570 = vmatpush1.bf16.msra.mxu0 %v7207
    %8571 = vmatprep.subr.bf16.mxu0 %v7222
    %8572 = vmatpush1.bf16.msra.mxu0 %v7221
    %8573 = vmatprep.subr.bf16.mxu0 %v7236
    %8574 = vmatpush1.bf16.msra.mxu0 %v7235
    %8575 = vmatprep.subr.bf16.mxu0 %v7250
    %8576 = vmatpush1.bf16.msra.mxu0 %v7249
    %8577 = vmatprep.subr.bf16.mxu0 %v7264
    %8578 = vmatpush1.bf16.msra.mxu0 %v7263
    %8579 = vmatprep.subr.bf16.mxu0 %v7278
    %8580 = vmatpush1.bf16.msra.mxu0 %v7277
    %8581 = vmatprep.subr.bf16.mxu0 %v7292
    %8582 = vmatpush1.bf16.msra.mxu0 %v7291
    %8583 = vmatprep.subr.bf16.mxu0 %v7306
    %8584 = vmatpush1.bf16.msra.mxu0 %v7305
    %8585 = vmatprep.subr.bf16.mxu0 %v7320
    %8586 = vmatpush1.bf16.msra.mxu0 %v7319
    %8587 = vmatprep.subr.bf16.mxu0 %v7334
    %8588 = vmatpush1.bf16.msra.mxu0 %v7333
    %8589 = vmatprep.subr.bf16.mxu0 %v7348
    %8590 = vmatpush1.bf16.msra.mxu0 %v7347
    %8591 = vmatprep.mubr.bf16.mxu0 %v7580
    %8592 = vmatmul.mubr.bf16.gmra.mrb[0].mxu0 %v7579
    %v8593 = vpop.f32.mrb[0].mxu0
    %v8594 = vadd.f32 %v8553, %v8593
    %v8595 = vpop.f32.mrb[0].mxu0
    %v8596 = vadd.f32 %v8555, %v8595
    %v8597 = vpop.f32.mrb[0].mxu0
    %v8598 = vpop.f32.mrb[0].mxu0
    %8599 = vdwg.mxu0
    %8600 = vmatprep.subr.bf16.mxu0 %v7362
    %8601 = vmatpush1.bf16.msra.mxu0 %v7361
    %8602 = vmatprep.subr.bf16.mxu0 %v7376
    %8603 = vmatpush1.bf16.msra.mxu0 %v7375
    %8604 = vmatprep.subr.bf16.mxu0 %v7390
    %8605 = vmatpush1.bf16.msra.mxu0 %v7389
    %8606 = vmatprep.subr.bf16.mxu0 %v7404
    %8607 = vmatpush1.bf16.msra.mxu0 %v7403
    %8608 = vmatprep.subr.bf16.mxu0 %v7418
    %8609 = vmatpush1.bf16.msra.mxu0 %v7417
    %8610 = vmatprep.subr.bf16.mxu0 %v7432
    %8611 = vmatpush1.bf16.msra.mxu0 %v7431
    %8612 = vmatprep.subr.bf16.mxu0 %v7446
    %8613 = vmatpush1.bf16.msra.mxu0 %v7445
    %8614 = vmatprep.subr.bf16.mxu0 %v7460
    %8615 = vmatpush1.bf16.msra.mxu0 %v7459
    %8616 = vmatprep.subr.bf16.mxu0 %v7474
    %8617 = vmatpush1.bf16.msra.mxu0 %v7473
    %8618 = vmatprep.subr.bf16.mxu0 %v7488
    %8619 = vmatpush1.bf16.msra.mxu0 %v7487
    %8620 = vmatprep.subr.bf16.mxu0 %v7502
    %8621 = vmatpush1.bf16.msra.mxu0 %v7501
    %8622 = vmatprep.subr.bf16.mxu0 %v7516
    %8623 = vmatpush1.bf16.msra.mxu0 %v7515
    %8624 = vmatprep.subr.bf16.mxu0 %v7530
    %8625 = vmatpush1.bf16.msra.mxu0 %v7529
    %8626 = vmatprep.subr.bf16.mxu0 %v7544
    %8627 = vmatpush1.bf16.msra.mxu0 %v7543
    %8628 = vmatprep.subr.bf16.mxu0 %v7558
    %8629 = vmatpush1.bf16.msra.mxu0 %v7557
    %8630 = vmatprep.subr.bf16.mxu0 %v7572
    %8631 = vmatpush1.bf16.msra.mxu0 %v7571
    %8632 = vmatprep.mubr.bf16.mxu0 %v7582
    %8633 = vmatmul.mubr.bf16.gmra.mrb[0].mxu0 %v7581
    %v8634 = vpop.f32.mrb[0].mxu0
    %v8635 = vadd.f32 %v8594, %v8634
    %v8636 = vpop.f32.mrb[0].mxu0
    %v8637 = vadd.f32 %v8596, %v8636
    %v8638 = vpop.f32.mrb[0].mxu0
    %v8639 = vpop.f32.mrb[0].mxu0
    %8640 = vdwg.mxu0
    %8641 = vmatprep.subr.bf16.mxu0 %v6692
    %8642 = vmatpush1.bf16.msra.mxu0 %v6691
    %8643 = vmatprep.subr.bf16.mxu0 %v6706
    %8644 = vmatpush1.bf16.msra.mxu0 %v6705
    %8645 = vmatprep.subr.bf16.mxu0 %v6720
    %8646 = vmatpush1.bf16.msra.mxu0 %v6719
    %8647 = vmatprep.subr.bf16.mxu0 %v6734
    %8648 = vmatpush1.bf16.msra.mxu0 %v6733
    %8649 = vmatprep.subr.bf16.mxu0 %v6748
    %8650 = vmatpush1.bf16.msra.mxu0 %v6747
    %8651 = vmatprep.subr.bf16.mxu0 %v6762
    %8652 = vmatpush1.bf16.msra.mxu0 %v6761
    %8653 = vmatprep.subr.bf16.mxu0 %v6776
    %8654 = vmatpush1.bf16.msra.mxu0 %v6775
    %8655 = vmatprep.subr.bf16.mxu0 %v6790
    %8656 = vmatpush1.bf16.msra.mxu0 %v6789
    %8657 = vmatprep.subr.bf16.mxu0 %v6804
    %8658 = vmatpush1.bf16.msra.mxu0 %v6803
    %8659 = vmatprep.subr.bf16.mxu0 %v6818
    %8660 = vmatpush1.bf16.msra.mxu0 %v6817
    %8661 = vmatprep.subr.bf16.mxu0 %v6832
    %8662 = vmatpush1.bf16.msra.mxu0 %v6831
    %8663 = vmatprep.subr.bf16.mxu0 %v6846
    %8664 = vmatpush1.bf16.msra.mxu0 %v6845
    %8665 = vmatprep.subr.bf16.mxu0 %v6860
    %8666 = vmatpush1.bf16.msra.mxu0 %v6859
    %8667 = vmatprep.subr.bf16.mxu0 %v6874
    %8668 = vmatpush1.bf16.msra.mxu0 %v6873
    %8669 = vmatprep.subr.bf16.mxu0 %v6888
    %8670 = vmatpush1.bf16.msra.mxu0 %v6887
    %8671 = vmatprep.subr.bf16.mxu0 %v6902
    %8672 = vmatpush1.bf16.msra.mxu0 %v6901
    %8673 = vmatprep.mubr.bf16.mxu0 %v7576
    %8674 = vmatmul.mubr.bf16.gmra.mrb[0].mxu0 %v7575
    %v8675 = vpop.f32.mrb[0].mxu0
    %v8676 = vadd.f32 %v7638, %v8675
    %v8677 = vpop.f32.mrb[0].mxu0
    %v8678 = vadd.f32 %v7642, %v8677
    %v8679 = vpop.f32.mrb[0].mxu0
    %v8680 = vpop.f32.mrb[0].mxu0
    %8681 = vdwg.mxu0
    %8682 = vmatprep.subr.bf16.mxu0 %v6916
    %8683 = vmatpush1.bf16.msra.mxu0 %v6915
    %8684 = vmatprep.subr.bf16.mxu0 %v6930
    %8685 = vmatpush1.bf16.msra.mxu0 %v6929
    %8686 = vmatprep.subr.bf16.mxu0 %v6944
    %8687 = vmatpush1.bf16.msra.mxu0 %v6943
    %8688 = vmatprep.subr.bf16.mxu0 %v6958
    %8689 = vmatpush1.bf16.msra.mxu0 %v6957
    %8690 = vmatprep.subr.bf16.mxu0 %v6972
    %8691 = vmatpush1.bf16.msra.mxu0 %v6971
    %8692 = vmatprep.subr.bf16.mxu0 %v6986
    %8693 = vmatpush1.bf16.msra.mxu0 %v6985
    %8694 = vmatprep.subr.bf16.mxu0 %v7000
    %8695 = vmatpush1.bf16.msra.mxu0 %v6999
    %8696 = vmatprep.subr.bf16.mxu0 %v7014
    %8697 = vmatpush1.bf16.msra.mxu0 %v7013
    %8698 = vmatprep.subr.bf16.mxu0 %v7028
    %8699 = vmatpush1.bf16.msra.mxu0 %v7027
    %8700 = vmatprep.subr.bf16.mxu0 %v7042
    %8701 = vmatpush1.bf16.msra.mxu0 %v7041
    %8702 = vmatprep.subr.bf16.mxu0 %v7056
    %8703 = vmatpush1.bf16.msra.mxu0 %v7055
    %8704 = vmatprep.subr.bf16.mxu0 %v7070
    %8705 = vmatpush1.bf16.msra.mxu0 %v7069
    %8706 = vmatprep.subr.bf16.mxu0 %v7084
    %8707 = vmatpush1.bf16.msra.mxu0 %v7083
    %8708 = vmatprep.subr.bf16.mxu0 %v7098
    %8709 = vmatpush1.bf16.msra.mxu0 %v7097
    %8710 = vmatprep.subr.bf16.mxu0 %v7112
    %8711 = vmatpush1.bf16.msra.mxu0 %v7111
    %8712 = vmatprep.subr.bf16.mxu0 %v7126
    %8713 = vmatpush1.bf16.msra.mxu0 %v7125
    %8714 = vmatprep.mubr.bf16.mxu0 %v7578
    %8715 = vmatmul.mubr.bf16.gmra.mrb[0].mxu0 %v7577
    %v8716 = vpop.f32.mrb[0].mxu0
    %v8717 = vadd.f32 %v8676, %v8716
    %v8718 = vpop.f32.mrb[0].mxu0
    %v8719 = vadd.f32 %v8678, %v8718
    %v8720 = vpop.f32.mrb[0].mxu0
    %v8721 = vpop.f32.mrb[0].mxu0
    %8722 = vdwg.mxu0
    %8723 = vmatprep.subr.bf16.mxu0 %v7140
    %8724 = vmatpush1.bf16.msra.mxu0 %v7139
    %8725 = vmatprep.subr.bf16.mxu0 %v7154
    %8726 = vmatpush1.bf16.msra.mxu0 %v7153
    %8727 = vmatprep.subr.bf16.mxu0 %v7168
    %8728 = vmatpush1.bf16.msra.mxu0 %v7167
    %8729 = vmatprep.subr.bf16.mxu0 %v7182
    %8730 = vmatpush1.bf16.msra.mxu0 %v7181
    %8731 = vmatprep.subr.bf16.mxu0 %v7196
    %8732 = vmatpush1.bf16.msra.mxu0 %v7195
    %8733 = vmatprep.subr.bf16.mxu0 %v7210
    %8734 = vmatpush1.bf16.msra.mxu0 %v7209
    %8735 = vmatprep.subr.bf16.mxu0 %v7224
    %8736 = vmatpush1.bf16.msra.mxu0 %v7223
    %8737 = vmatprep.subr.bf16.mxu0 %v7238
    %8738 = vmatpush1.bf16.msra.mxu0 %v7237
    %8739 = vmatprep.subr.bf16.mxu0 %v7252
    %8740 = vmatpush1.bf16.msra.mxu0 %v7251
    %8741 = vmatprep.subr.bf16.mxu0 %v7266
    %8742 = vmatpush1.bf16.msra.mxu0 %v7265
    %8743 = vmatprep.subr.bf16.mxu0 %v7280
    %8744 = vmatpush1.bf16.msra.mxu0 %v7279
    %8745 = vmatprep.subr.bf16.mxu0 %v7294
    %8746 = vmatpush1.bf16.msra.mxu0 %v7293
    %8747 = vmatprep.subr.bf16.mxu0 %v7308
    %8748 = vmatpush1.bf16.msra.mxu0 %v7307
    %8749 = vmatprep.subr.bf16.mxu0 %v7322
    %8750 = vmatpush1.bf16.msra.mxu0 %v7321
    %8751 = vmatprep.subr.bf16.mxu0 %v7336
    %8752 = vmatpush1.bf16.msra.mxu0 %v7335
    %8753 = vmatprep.subr.bf16.mxu0 %v7350
    %8754 = vmatpush1.bf16.msra.mxu0 %v7349
    %8755 = vmatprep.mubr.bf16.mxu0 %v7580
    %8756 = vmatmul.mubr.bf16.gmra.mrb[0].mxu0 %v7579
    %v8757 = vpop.f32.mrb[0].mxu0
    %v8758 = vadd.f32 %v8717, %v8757
    %v8759 = vpop.f32.mrb[0].mxu0
    %v8760 = vadd.f32 %v8719, %v8759
    %v8761 = vpop.f32.mrb[0].mxu0
    %v8762 = vpop.f32.mrb[0].mxu0
    %8763 = vdwg.mxu0
    %8764 = vmatprep.subr.bf16.mxu0 %v7364
    %8765 = vmatpush1.bf16.msra.mxu0 %v7363
    %8766 = vmatprep.subr.bf16.mxu0 %v7378
    %8767 = vmatpush1.bf16.msra.mxu0 %v7377
    %8768 = vmatprep.subr.bf16.mxu0 %v7392
    %8769 = vmatpush1.bf16.msra.mxu0 %v7391
    %8770 = vmatprep.subr.bf16.mxu0 %v7406
    %8771 = vmatpush1.bf16.msra.mxu0 %v7405
    %8772 = vmatprep.subr.bf16.mxu0 %v7420
    %8773 = vmatpush1.bf16.msra.mxu0 %v7419
    %8774 = vmatprep.subr.bf16.mxu0 %v7434
    %8775 = vmatpush1.bf16.msra.mxu0 %v7433
    %8776 = vmatprep.subr.bf16.mxu0 %v7448
    %8777 = vmatpush1.bf16.msra.mxu0 %v7447
    %8778 = vmatprep.subr.bf16.mxu0 %v7462
    %8779 = vmatpush1.bf16.msra.mxu0 %v7461
    %8780 = vmatprep.subr.bf16.mxu0 %v7476
    %8781 = vmatpush1.bf16.msra.mxu0 %v7475
    %8782 = vmatprep.subr.bf16.mxu0 %v7490
    %8783 = vmatpush1.bf16.msra.mxu0 %v7489
    %8784 = vmatprep.subr.bf16.mxu0 %v7504
    %8785 = vmatpush1.bf16.msra.mxu0 %v7503
    %8786 = vmatprep.subr.bf16.mxu0 %v7518
    %8787 = vmatpush1.bf16.msra.mxu0 %v7517
    %8788 = vmatprep.subr.bf16.mxu0 %v7532
    %8789 = vmatpush1.bf16.msra.mxu0 %v7531
    %8790 = vmatprep.subr.bf16.mxu0 %v7546
    %8791 = vmatpush1.bf16.msra.mxu0 %v7545
    %8792 = vmatprep.subr.bf16.mxu0 %v7560
    %8793 = vmatpush1.bf16.msra.mxu0 %v7559
    %8794 = vmatprep.subr.bf16.mxu0 %v7574
    %8795 = vmatpush1.bf16.msra.mxu0 %v7573
    %8796 = vmatprep.mubr.bf16.mxu0 %v7582
    %8797 = vmatmul.mubr.bf16.gmra.mrb[0].mxu0 %v7581
    %v8798 = vpop.f32.mrb[0].mxu0
    %v8799 = vadd.f32 %v8758, %v8798
    %v8800 = vpop.f32.mrb[0].mxu0
    %v8801 = vadd.f32 %v8760, %v8800
    %v8802 = vpop.f32.mrb[0].mxu0
    %v8803 = vpop.f32.mrb[0].mxu0
    %8804 = vdwg.mxu0
    %8805 = vst [vmem:[%s63] sm:$0xff] %v7815
    %8806 = vst [vmem:[%s63 + $0x8] sm:$0xff] %v7817
    %8807 = vst [vmem:[%s63 + $0x10] sm:$0xff] %v7979
    %8808 = vst [vmem:[%s63 + $0x18] sm:$0xff] %v7981
    %8809 = vst [vmem:[%s63 + $0x20] sm:$0xff] %v8143
    %8810 = vst [vmem:[%s63 + $0x28] sm:$0xff] %v8145
    %8811 = vst [vmem:[%s65] sm:$0xff] %v8307
    %8812 = vst [vmem:[%s65 + $0x8] sm:$0xff] %v8309
    %8813 = vst [vmem:[%s65 + $0x10] sm:$0xff] %v8471
    %8814 = vst [vmem:[%s65 + $0x18] sm:$0xff] %v8473
    %8815 = vst [vmem:[%s65 + $0x20] sm:$0xff] %v8635
    %8816 = vst [vmem:[%s65 + $0x28] sm:$0xff] %v8637
    %8817 = vst [vmem:[%s65 + $0x30] sm:$0xff] %v8799
    %8818 = vst [vmem:[%s65 + $0x38] sm:$0xff] %v8801
    // Predicated region
    $region78: #{cufusion_forward.1} parent=1 // pred_check
      _
    $region79: #{cufusion_forward.1} parent=1 // pred_check_branch
      %8820 = sbr.rel (0) target = $region81
    $region80: #{cufusion_forward.1} parent=1 // pred_region
      _
    $region81: #{cufusion_forward.1} parent=1 // pred_fallthru
      _
    // Predicated region
    $region82: #{cufusion_forward.1} parent=1 // pred_check
      _
    $region83: #{cufusion_forward.1} parent=1 // pred_check_branch
      %8822 = sbr.rel (0) target = $region85
    $region84: #{cufusion_forward.1} parent=1 // pred_region
      _
    $region85: #{cufusion_forward.1} parent=1 // pred_fallthru
      _
    // Predicated region
    $region86: #{cufusion_forward.1} parent=1 // pred_check
      _
    $region87: #{cufusion_forward.1} parent=1 // pred_check_branch
      %8824 = sbr.rel (0) target = $region89
    $region88: #{cufusion_forward.1} parent=1 // pred_region
      _
    $region89: #{cufusion_forward.1} parent=1 // pred_fallthru
      _
    // Predicated region
    $region90: #{cufusion_forward.1} parent=1 // pred_check
      _
    $region91: #{cufusion_forward.1} parent=1 // pred_check_branch
      %8826 = sbr.rel (0) target = $region93
    $region92: #{cufusion_forward.1} parent=1 // pred_region
      _
    $region93: #{cufusion_forward.1} parent=1 // pred_fallthru
      _
    // Predicated region
    $region94: #{cufusion_forward.1} parent=1 // pred_check
      _
    $region95: #{cufusion_forward.1} parent=1 // pred_check_branch
      %8828 = sbr.rel (0) target = $region97
    $region96: #{cufusion_forward.1} parent=1 // pred_region
      _
    $region97: #{cufusion_forward.1} parent=1 // pred_fallthru
      _
    // Predicated region
    $region98: #{cufusion_forward.1} parent=1 // pred_check
      _
    $region99: #{cufusion_forward.1} parent=1 // pred_check_branch
      %8830 = sbr.rel (0) target = $region101
    $region100: #{cufusion_forward.1} parent=1 // pred_region
      _
    $region101: #{cufusion_forward.1} parent=1 // pred_fallthru
      _
    // Predicated region
    $region102: #{cufusion_forward.1} parent=1 // pred_check
      _
    $region103: #{cufusion_forward.1} parent=1 // pred_check_branch
      %8832 = sbr.rel (0) target = $region105
    $region104: #{cufusion_forward.1} parent=1 // pred_region
      _
    $region105: #{cufusion_forward.1} parent=1 // pred_fallthru
      _
    // Predicated region
    $region106: #{cufusion_forward.1} parent=1 // pred_check
      _
    $region107: #{cufusion_forward.1} parent=1 // pred_check_branch
      %8834 = sbr.rel (0) target = $region109
    $region108: #{cufusion_forward.1} parent=1 // pred_region
      _
    $region109: #{cufusion_forward.1} parent=1 // pred_fallthru
      _
    // Predicated region
    $region110: #{cufusion_forward.1} parent=1 // pred_check
      _
    $region111: #{cufusion_forward.1} parent=1 // pred_check_branch
      %8836 = sbr.rel (0) target = $region113
    $region112: #{cufusion_forward.1} parent=1 // pred_region
      _
    $region113: #{cufusion_forward.1} parent=1 // pred_fallthru
      _
    // Predicated region
    $region114: #{cufusion_forward.1} parent=1 // pred_check
      _
    $region115: #{cufusion_forward.1} parent=1 // pred_check_branch
      %8838 = sbr.rel (0) target = $region117
    $region116: #{cufusion_forward.1} parent=1 // pred_region
      _
    $region117: #{cufusion_forward.1} parent=1 // pred_fallthru
      _
    // Predicated region
    $region118: #{cufusion_forward.1} parent=1 // pred_check
      _
    $region119: #{cufusion_forward.1} parent=1 // pred_check_branch
      %8840 = sbr.rel (0) target = $region121
    $region120: #{cufusion_forward.1} parent=1 // pred_region
      _
    $region121: #{cufusion_forward.1} parent=1 // pred_fallthru
      _
    // Predicated region
    $region122: #{cufusion_forward.1} parent=1 // pred_check
      _
    $region123: #{cufusion_forward.1} parent=1 // pred_check_branch
      %8842 = sbr.rel (0) target = $region125
    $region124: #{cufusion_forward.1} parent=1 // pred_region
      _
    $region125: #{cufusion_forward.1} parent=1 // pred_fallthru
      _
    // Predicated region
    $region126: #{cufusion_forward.1} parent=1 // pred_check
      _
    $region127: #{cufusion_forward.1} parent=1 // pred_check_branch
      %8844 = sbr.rel (0) target = $region129
    $region128: #{cufusion_forward.1} parent=1 // pred_region
      _
    $region129: #{cufusion_forward.1} parent=1 // pred_fallthru
      _
    // Predicated region
    $region130: #{cufusion_forward.1} parent=1 // pred_check
      _
    $region131: #{cufusion_forward.1} parent=1 // pred_check_branch
      %8846 = sbr.rel (0) target = $region133
    $region132: #{cufusion_forward.1} parent=1 // pred_region
      _
    $region133: #{cufusion_forward.1} parent=1 // pred_fallthru
      _
    // Predicated region
    $region134: #{cufusion_forward.1} parent=1 // pred_check
      _
    $region135: #{cufusion_forward.1} parent=1 // pred_check_branch
      %8848 = sbr.rel (0) target = $region137
    $region136: #{cufusion_forward.1} parent=1 // pred_region
      _
    $region137: #{cufusion_forward.1} parent=1 // pred_fallthru
      _
    // Predicated region
    $region138: #{cufusion_forward.1} parent=1 // pred_check
      _
    $region139: #{cufusion_forward.1} parent=1 // pred_check_branch
      %8850 = sbr.rel (0) target = $region141
    $region140: #{cufusion_forward.1} parent=1 // pred_region
      _
    $region141: #{cufusion_forward.1} parent=1 // pred_fallthru
      _
    // Predicated region
    $region142: #{cufusion_forward.1} parent=1 // pred_check
      _
    $region143: #{cufusion_forward.1} parent=1 // pred_check_branch
      %8852 = sbr.rel (0) target = $region145
    $region144: #{cufusion_forward.1} parent=1 // pred_region
      _
    $region145: #{cufusion_forward.1} parent=1 // pred_fallthru
      _
    // Predicated region
    $region146: #{cufusion_forward.1} parent=1 // pred_check
      _
    $region147: #{cufusion_forward.1} parent=1 // pred_check_branch
      %8854 = sbr.rel (0) target = $region149
    $region148: #{cufusion_forward.1} parent=1 // pred_region
      _
    $region149: #{cufusion_forward.1} parent=1 // pred_fallthru
      _
    // Predicated region
    $region150: #{cufusion_forward.1} parent=1 // pred_check
      _
    $region151: #{cufusion_forward.1} parent=1 // pred_check_branch
      %8856 = sbr.rel (0) target = $region153
    $region152: #{cufusion_forward.1} parent=1 // pred_region
      _
    $region153: #{cufusion_forward.1} parent=1 // pred_fallthru
      _
    // Predicated region
    $region154: #{cufusion_forward.1} parent=1 // pred_check
      _
    $region155: #{cufusion_forward.1} parent=1 // pred_check_branch
      %8858 = sbr.rel (0) target = $region157
    $region156: #{cufusion_forward.1} parent=1 // pred_region
      _
    $region157: #{cufusion_forward.1} parent=1 // pred_fallthru
      _
    // Predicated region
    $region158: #{cufusion_forward.1} parent=1 // pred_check
      _
    $region159: #{cufusion_forward.1} parent=1 // pred_check_branch
      %8860 = sbr.rel (0) target = $region161
    $region160: #{cufusion_forward.1} parent=1 // pred_region
      _
    $region161: #{cufusion_forward.1} parent=1 // pred_fallthru
      _
    // Predicated region
    $region162: #{cufusion_forward.1} parent=1 // pred_check
      _
    $region163: #{cufusion_forward.1} parent=1 // pred_check_branch
      %8862 = sbr.rel (0) target = $region165
    $region164: #{cufusion_forward.1} parent=1 // pred_region
      _
    $region165: #{cufusion_forward.1} parent=1 // pred_fallthru
      _
    // Predicated region
    $region166: #{cufusion_forward.1} parent=1 // pred_check
      _
    $region167: #{cufusion_forward.1} parent=1 // pred_check_branch
      %8864 = sbr.rel (0) target = $region169
    $region168: #{cufusion_forward.1} parent=1 // pred_region
      _
    $region169: #{cufusion_forward.1} parent=1 // pred_fallthru
      _
    // Predicated region
    $region170: #{cufusion_forward.1} parent=1 // pred_check
      _
    $region171: #{cufusion_forward.1} parent=1 // pred_check_branch
      %8866 = sbr.rel (0) target = $region173
    $region172: #{cufusion_forward.1} parent=1 // pred_region
      _
    $region173: #{cufusion_forward.1} parent=1 // pred_fallthru
      _
    // Predicated region
    $region174: #{cufusion_forward.1} parent=1 // pred_check
      _
    $region175: #{cufusion_forward.1} parent=1 // pred_check_branch
      %8868 = sbr.rel (0) target = $region177
    $region176: #{cufusion_forward.1} parent=1 // pred_region
      _
    $region177: #{cufusion_forward.1} parent=1 // pred_fallthru
      _
    // Predicated region
    $region178: #{cufusion_forward.1} parent=1 // pred_check
      _
    $region179: #{cufusion_forward.1} parent=1 // pred_check_branch
      %8870 = sbr.rel (0) target = $region181
    $region180: #{cufusion_forward.1} parent=1 // pred_region
      _
    $region181: #{cufusion_forward.1} parent=1 // pred_fallthru
      _
    // Predicated region
    $region182: #{cufusion_forward.1} parent=1 // pred_check
      _
    $region183: #{cufusion_forward.1} parent=1 // pred_check_branch
      %8872 = sbr.rel (0) target = $region185
    $region184: #{cufusion_forward.1} parent=1 // pred_region
      _
    $region185: #{cufusion_forward.1} parent=1 // pred_fallthru
      _
    // Predicated region
    $region186: #{cufusion_forward.1} parent=1 // pred_check
      _
    $region187: #{cufusion_forward.1} parent=1 // pred_check_branch
      %8874 = sbr.rel (0) target = $region189
    $region188: #{cufusion_forward.1} parent=1 // pred_region
      _
    $region189: #{cufusion_forward.1} parent=1 // pred_fallthru
      _
    %8875 = vsyncpa [#allocation12], 1
    %8876 = vsyncpa [#allocation14], 1
    %8877 = vsyncpa [#allocation17], 1
    %8878 = vsyncpa [#allocation20], 1
    %8879 = vsyncpa [#allocation23], 1
  %8880 = vsyncmov [#allocation10]
  %s8881 = vpop.sfrf %8880
  %p8882 = scmp.eq.s32.totalorder %s8881, 0
  %p8883 = pneg %p8882
  %8885 = shalt.err (%p8883)
  %s8886 = scalar_lea.sflag [#allocation10], 1
  %8887 = vsyncmov %s8886
  %s8888 = vpop.sfrf %8887
  %p8889 = scmp.eq.s32.totalorder %s8888, 0
  %p8890 = pneg %p8889
  %8892 = shalt.err (%p8890)
  %s8893 = scalar_lea.sflag [#allocation10], 2
  %8894 = vsyncmov %s8893
  %s8895 = vpop.sfrf %8894
  %p8896 = scmp.eq.s32.totalorder %s8895, 0
  %p8897 = pneg %p8896
  %8899 = shalt.err (%p8897)
  %s8900 = scalar_lea.sflag [#allocation10], 3
  %8901 = vsyncmov %s8900
  %s8902 = vpop.sfrf %8901
  %p8903 = scmp.eq.s32.totalorder %s8902, 0
  %p8904 = pneg %p8903
  %8906 = shalt.err (%p8904)
  %s8907 = scalar_lea.sflag [#allocation10], 4
  %8908 = vsyncmov %s8907
  %s8909 = vpop.sfrf %8908
  %p8910 = scmp.eq.s32.totalorder %s8909, 0
  %p8911 = pneg %p8910
  %8913 = shalt.err (%p8911)
  %s8914 = scalar_lea.sflag [#allocation10], 5
  %8915 = vsyncmov %s8914
  %s8916 = vpop.sfrf %8915
  %p8917 = scmp.eq.s32.totalorder %s8916, 0
  %p8918 = pneg %p8917
  %8920 = shalt.err (%p8918)
  %s8921 = scalar_lea.sflag [#allocation10], 6
  %8922 = vsyncmov %s8921
  %s8923 = vpop.sfrf %8922
  %p8924 = scmp.eq.s32.totalorder %s8923, 0
  %p8925 = pneg %p8924
  %8927 = shalt.err (%p8925)
  %s8928 = scalar_lea.sflag [#allocation10], 7
  %8929 = vsyncmov %s8928
  %s8930 = vpop.sfrf %8929
  %p8931 = scmp.eq.s32.totalorder %s8930, 0
  %p8932 = pneg %p8931
  %8934 = shalt.err (%p8932)

</llo_original>
